<compile_context>
chip_gen: v6e
topology: v6e:2x2x1
jax: 0.10.0
libtpu: 0.0.40
codegen_flags: <defaults>
</compile_context>

<pallas_src>
import jax
import jax.numpy as jnp
from jax.experimental import pallas as pl
from jax.experimental.pallas import tpu as pltpu


def dmm_kernel(x_ref, ut_ref, wt_ref, c_ref, cb_ref, vt_ref, vb_ref, h0_ref,
               y_ref, h_scratch):
    Bb, T, n = x_ref.shape
    m = ut_ref.shape[1]
    K1 = c_ref.shape[0]            # K + 1 memory addresses (address 0 == "no memory op")
    L = vt_ref.shape[1]

    # ---- Hoist every weight / bias load and every broadcast out of the time loop ----
    Ut = ut_ref[...]                                    # (n, m)  = U^T
    Wt = wt_ref[...]                                    # (m, m)  = W^T
    C3 = c_ref[...][None, :, :]                         # (1, K1, m)
    cb_b = jnp.broadcast_to(cb_ref[...], (Bb, K1))      # (Bb, K1)
    Vt = vt_ref[...]                                    # (m, L)  = V^T
    vb = vb_ref[...]                                    # (1, L)

    # Input projection for every (b, t) in a single MXU matmul.
    # (default MXU precision matched the f32 reference at these sizes; switch to
    #  precision=jax.lax.Precision.HIGHEST if drift shows up at larger T/m)
    ux = jnp.dot(x_ref[...].reshape(Bb * T, n), Ut,
                 preferred_element_type=jnp.float32).reshape(Bb, T, m)

    # Recurrent carry hw = [h | h @ W^T]: carrying the W-product means no MXU matmul
    # ever sits between h_t and h_{t+1} on the serial dependency chain.
    h0 = jnp.broadcast_to(h0_ref[...], (Bb, m))
    hw = jnp.concatenate(
        [h0, jnp.dot(h0, Wt, preferred_element_type=jnp.float32)], axis=1)   # (Bb, 2m)

    # Fused write-once memory: row q holds [stored_h | stored_h @ W^T].
    # One buffer -> ONE one-hot gather, ONE recall select and ONE masked write per
    # step (instead of two each on half-empty 32-lane tiles).
    Mf = jnp.zeros((Bb, K1, 2 * m), jnp.float32)
    written = jnp.zeros((Bb, K1), jnp.float32)
    col_iota = jax.lax.broadcasted_iota(jnp.int32, (Bb, K1), 1)

    # Sequential recurrence; T is small & static here -> unrolled Python loop.
    # TODO(synk): for large T / Bb switch to lax.fori_loop + VMEM state scratch to
    #             bound live ranges / register pressure.
    for t in range(T):
        h_new = jnp.tanh(ux[:, t, :] + hw[:, m:])                    # (Bb, m)

        # Speculative next-step W matmul (MXU) overlaps the VPU classifier.
        wh_next = jnp.dot(h_new, Wt, preferred_element_type=jnp.float32)   # (Bb, m)
        # Classifier logits in full f32 on the VPU (argmax robustness vs. reference).
        logits = jnp.sum(h_new[:, None, :] * C3, axis=2) + cb_b      # (Bb, K1)

        # Per-row argmax with first-occurrence tie-breaking (matches np.argmax).
        maxv = jnp.max(logits, axis=1, keepdims=True)                # (Bb, 1)
        q = jnp.min(jnp.where(logits == maxv, col_iota, K1),
                    axis=1, keepdims=True)                           # (Bb, 1) int32
        onehot = (col_iota == q).astype(jnp.float32)                 # (Bb, K1)
        oh3 = onehot[:, :, None]                                     # (Bb, K1, 1)

        mem = jnp.sum(Mf * oh3, axis=1)                              # (Bb, 2m) = [h|wh]
        is_written = jnp.sum(written * onehot, axis=1, keepdims=True) > 0.5  # (Bb, 1)
        q_pos = q > 0                                                # (Bb, 1)
        recall = jnp.logical_and(q_pos, is_written)                  # (Bb, 1)

        # q > 0 and already written -> recall [h | h@W^T] from memory; otherwise keep
        # the fresh state.  Single 2m-lane select covers both halves at once.
        hw_new = jnp.concatenate([h_new, wh_next], axis=1)           # (Bb, 2m)
        hw = jnp.where(recall, mem, hw_new)

        # q > 0 and not yet written -> store [h_new | wh_next] into row q.
        write_f = jnp.where(jnp.logical_and(q_pos, jnp.logical_not(is_written)),
                            1.0, 0.0)                                # (Bb, 1)
        wf3 = (onehot * write_f)[:, :, None]                         # (Bb, K1, 1)
        Mf = Mf + wf3 * hw_new[:, None, :]
        written = written + onehot * write_f

        # Stash h_t (post memory op); the V readout happens once after the loop.
        h_scratch[pl.ds(t * Bb, Bb), :] = hw[:, :m]                  # rows t*Bb..+Bb

    # ---- Readout: one (T*Bb, m) @ (m, L) matmul + one lane-dense output slab ----
    y = jnp.dot(h_scratch[...], Vt, preferred_element_type=jnp.float32) + vb  # (T*Bb, L)
    y2d = jnp.concatenate([y[t * Bb:(t + 1) * Bb, :] for t in range(T)], axis=1)
    y_ref[...] = y2d                                                  # (Bb, T*L)


def deep_memory_machine(X, U, W, C_w, C_b, V_w, V_b, init_state, *, block_b=None):
    """X: [B, T, n] (or [T, n]), U: [m, n], W: [m, m], C_w: [K+1, m], C_b: [K+1],
    V_w: [L, m], V_b: [L], init_state: [m]  ->  Y: [B, T, L] (or [T, L])."""
    X = jnp.asarray(X, jnp.float32)
    single = X.ndim == 2
    if single:
        X = X[None]
    B, T, n = X.shape
    m = U.shape[0]
    K1 = C_w.shape[0]
    L = V_w.shape[0]

    # The grid is a SERIAL loop on a single TensorCore: one big batch block amortizes
    # all per-step pipeline overhead and weight re-presentation (best on v5e/v6e).
    # On v7x (2 TCs) pass block_b = B // 2 to split the batch axis across cores.
    # (At scaled-up Bb*T, budget ~32 MiB scoped VMEM / 64 MiB total on v7x.)
    if block_b is None:
        block_b = B
    if block_b <= 0 or B % block_b != 0:
        block_b = B
    grid = (B // block_b,)

    in_specs = [
        pl.BlockSpec((block_b, T, n), lambda i: (i, 0, 0)),   # X (batch-blocked)
        pl.BlockSpec((n, m), lambda i: (0, 0)),               # U^T
        pl.BlockSpec((m, m), lambda i: (0, 0)),               # W^T
        pl.BlockSpec((K1, m), lambda i: (0, 0)),              # C
        pl.BlockSpec((1, K1), lambda i: (0, 0)),              # c_b
        pl.BlockSpec((m, L), lambda i: (0, 0)),               # V^T
        pl.BlockSpec((1, L), lambda i: (0, 0)),               # v_b
        pl.BlockSpec((1, m), lambda i: (0, 0)),               # init_state
    ]
    # Lane-dense output: last dim T*L (= 128 in the demo config) -> dense stores and a
    # dense writeback DMA; reshaped to (B, T, L) outside the kernel.
    out_spec = pl.BlockSpec((block_b, T * L), lambda i: (i, 0))

    args = (
        X,
        jnp.asarray(U, jnp.float32).T,                   # (n, m)
        jnp.asarray(W, jnp.float32).T,                   # (m, m)
        jnp.asarray(C_w, jnp.float32),                   # (K1, m)
        jnp.asarray(C_b, jnp.float32).reshape(1, K1),    # (1, K1)
        jnp.asarray(V_w, jnp.float32).T,                 # (m, L)
        jnp.asarray(V_b, jnp.float32).reshape(1, L),     # (1, L)
        jnp.asarray(init_state, jnp.float32).reshape(1, m),  # (1, m)
    )

    Y = pl.pallas_call(
        dmm_kernel,
        out_shape=jax.ShapeDtypeStruct((B, T * L), jnp.float32),
        grid=grid,
        in_specs=in_specs,
        out_specs=out_spec,
        scratch_shapes=[pltpu.VMEM((T * block_b, m), jnp.float32)],   # per-step h stash
        compiler_params=pltpu.CompilerParams(dimension_semantics=("parallel",)),
    )(*args)
    Y = Y.reshape(B, T, L)
    return Y[0] if single else Y


if __name__ == "__main__":
    import numpy as np

    # B independent sequences, T time steps, n inputs, m neurons, K memory rows,
    # L outputs.  q_0 = 0 (default), init_state = zeros.  T*L = 128 (lane-dense out).
    B, T, n, m, K, L = 8, 8, 8, 32, 8, 16

    key = jax.random.PRNGKey(0)
    ks = jax.random.split(key, 7)
    X = jax.random.normal(ks[0], (B, T, n), jnp.float32)
    U = jax.random.normal(ks[1], (m, n), jnp.float32) * 0.5
    W = jax.random.normal(ks[2], (m, m), jnp.float32) * (0.9 / jnp.sqrt(m))
    C_w = jax.random.normal(ks[3], (K + 1, m), jnp.float32) * (1.0 / jnp.sqrt(m))
    C_b = jax.random.normal(ks[4], (K + 1,), jnp.float32) * 0.1
    V_w = jax.random.normal(ks[5], (L, m), jnp.float32) * (1.0 / jnp.sqrt(m))
    V_b = jax.random.normal(ks[6], (L,), jnp.float32) * 0.1
    init_state = jnp.zeros((m,), jnp.float32)

    Y = deep_memory_machine(X, U, W, C_w, C_b, V_w, V_b, init_state)
    jax.block_until_ready(Y)

    # Pure-numpy reference mirroring the PyTorch forward (W acting as a matvec,
    # i.e. the scipy.sparse.csr interpretation of `W * h`), per sequence.
    Xn, Un, Wn = np.array(X), np.array(U), np.array(W)
    Cw, Cb, Vw, Vb = np.array(C_w), np.array(C_b), np.array(V_w), np.array(V_b)
    Y_ref = np.zeros((B, T, L), np.float32)
    for b in range(B):
        h = np.zeros(m, np.float32)
        Mem = {}
        H = []
        for t in range(T):
            h = np.tanh(Un @ Xn[b, t] + Wn @ h).astype(np.float32)
            q = int(np.argmax(Cw @ h + Cb))
            if q > 0:
                if q in Mem:
                    h = Mem[q]
                else:
                    Mem[q] = h
            H.append(h)
        Y_ref[b] = np.stack(H, 0) @ Vw.T + Vb

    np.testing.assert_allclose(np.array(Y), Y_ref, rtol=1e-3, atol=1e-3)
    print("KERNEL_OK")
</pallas_src>

<mosaic_0001>
module attributes {stable_mosaic.version = 11 : i64} {
  func.func @dmm_kernel(%arg0: i32, %arg1: memref<8x8x8xf32, #tpu.memory_space<vmem>>, %arg2: memref<8x32xf32, #tpu.memory_space<vmem>>, %arg3: memref<32x32xf32, #tpu.memory_space<vmem>>, %arg4: memref<9x32xf32, #tpu.memory_space<vmem>>, %arg5: memref<1x9xf32, #tpu.memory_space<vmem>>, %arg6: memref<32x16xf32, #tpu.memory_space<vmem>>, %arg7: memref<1x16xf32, #tpu.memory_space<vmem>>, %arg8: memref<1x32xf32, #tpu.memory_space<vmem>>, %arg9: memref<8x128xf32, #tpu.memory_space<vmem>>, %arg10: memref<64x32xf32, #tpu.memory_space<vmem>>) attributes {dimension_semantics = [#tpu.dimension_semantics<parallel>], iteration_bounds = array<i64: 1>, scalar_prefetch = 0 : i64, scratch_operands = 1 : i64, tpu.core_type = #tpu.core_type<tc>, window_params = [{transform_indices = @transform_0, window_bounds = array<i64: 8, 8, 8>}, {pipeline_mode = #tpu.pipeline_mode<synchronous>, transform_indices = @transform_1, window_bounds = array<i64: 8, 32>}, {pipeline_mode = #tpu.pipeline_mode<synchronous>, transform_indices = @transform_2, window_bounds = array<i64: 32, 32>}, {pipeline_mode = #tpu.pipeline_mode<synchronous>, transform_indices = @transform_3, window_bounds = array<i64: 9, 32>}, {pipeline_mode = #tpu.pipeline_mode<synchronous>, transform_indices = @transform_4, window_bounds = array<i64: 1, 9>}, {pipeline_mode = #tpu.pipeline_mode<synchronous>, transform_indices = @transform_5, window_bounds = array<i64: 32, 16>}, {pipeline_mode = #tpu.pipeline_mode<synchronous>, transform_indices = @transform_6, window_bounds = array<i64: 1, 16>}, {pipeline_mode = #tpu.pipeline_mode<synchronous>, transform_indices = @transform_7, window_bounds = array<i64: 1, 32>}, {transform_indices = @transform_8, window_bounds = array<i64: 8, 128>}]} {
    %c0 = arith.constant 0 : index
    %c0_0 = arith.constant 0 : index
    %0 = vector.load %arg2[%c0, %c0_0] : memref<8x32xf32, #tpu.memory_space<vmem>>, vector<8x32xf32>
    %c0_1 = arith.constant 0 : index
    %c0_2 = arith.constant 0 : index
    %1 = vector.load %arg3[%c0_1, %c0_2] : memref<32x32xf32, #tpu.memory_space<vmem>>, vector<32x32xf32>
    %c0_3 = arith.constant 0 : index
    %c0_4 = arith.constant 0 : index
    %2 = vector.load %arg4[%c0_3, %c0_4] : memref<9x32xf32, #tpu.memory_space<vmem>>, vector<9x32xf32>
    %3 = vector.shape_cast %2 : vector<9x32xf32> to vector<1x9x32xf32>
    %c0_5 = arith.constant 0 : index
    %c0_6 = arith.constant 0 : index
    %4 = vector.load %arg5[%c0_5, %c0_6] : memref<1x9xf32, #tpu.memory_space<vmem>>, vector<1x9xf32>
    %5 = vector.shape_cast %4 : vector<1x9xf32> to vector<1x9xf32>
    %6 = vector.broadcast %5 : vector<1x9xf32> to vector<8x9xf32>
    %c0_7 = arith.constant 0 : index
    %c0_8 = arith.constant 0 : index
    %7 = vector.load %arg6[%c0_7, %c0_8] : memref<32x16xf32, #tpu.memory_space<vmem>>, vector<32x16xf32>
    %c0_9 = arith.constant 0 : index
    %c0_10 = arith.constant 0 : index
    %8 = vector.load %arg7[%c0_9, %c0_10] : memref<1x16xf32, #tpu.memory_space<vmem>>, vector<1x16xf32>
    %c0_11 = arith.constant 0 : index
    %c0_12 = arith.constant 0 : index
    %c0_13 = arith.constant 0 : index
    %9 = vector.load %arg1[%c0_11, %c0_12, %c0_13] : memref<8x8x8xf32, #tpu.memory_space<vmem>>, vector<8x8x8xf32>
    %10 = vector.shape_cast %9 : vector<8x8x8xf32> to vector<64x8xf32>
    %cst = arith.constant dense<0.000000e+00> : vector<64x32xf32>
    %11 = tpu.matmul %10, %0, %cst {dimension_numbers = #tpu.dot_dimension_numbers<[1], [0], [0], [1], [0, 0, 1, 1], [], []>} : vector<64x8xf32>, vector<8x32xf32>, vector<64x32xf32> -> vector<64x32xf32>
    %12 = vector.shape_cast %11 : vector<64x32xf32> to vector<8x8x32xf32>
    %c0_14 = arith.constant 0 : index
    %c0_15 = arith.constant 0 : index
    %13 = vector.load %arg8[%c0_14, %c0_15] : memref<1x32xf32, #tpu.memory_space<vmem>>, vector<1x32xf32>
    %14 = vector.shape_cast %13 : vector<1x32xf32> to vector<1x32xf32>
    %15 = vector.broadcast %14 : vector<1x32xf32> to vector<8x32xf32>
    %cst_16 = arith.constant dense<0.000000e+00> : vector<8x32xf32>
    %16 = tpu.matmul %15, %1, %cst_16 {dimension_numbers = #tpu.dot_dimension_numbers<[1], [0], [0], [1], [0, 0, 1, 1], [], []>} : vector<8x32xf32>, vector<32x32xf32>, vector<8x32xf32> -> vector<8x32xf32>
    %17 = tpu.concatenate %15, %16 in 1 : vector<8x32xf32>, vector<8x32xf32> -> vector<8x64xf32>
    %cst_17 = arith.constant 0.000000e+00 : f32
    %18 = vector.broadcast %cst_17 : f32 to vector<8x9x64xf32>
    %cst_18 = arith.constant 0.000000e+00 : f32
    %19 = vector.broadcast %cst_18 : f32 to vector<8x9xf32>
    %20 = tpu.iota {dimensions = array<i32: 1>} : vector<8x9xi32>
    %21 = vector.extract_strided_slice %12 {offsets = [0, 0, 0], sizes = [8, 1, 32], strides = [1, 1, 1]} : vector<8x8x32xf32> to vector<8x1x32xf32>
    %22 = vector.shape_cast %21 : vector<8x1x32xf32> to vector<8x32xf32>
    %23 = vector.extract_strided_slice %17 {offsets = [0, 32], sizes = [8, 32], strides = [1, 1]} : vector<8x64xf32> to vector<8x32xf32>
    %24 = arith.addf %22, %23 : vector<8x32xf32>
    %25 = math.tanh %24 : vector<8x32xf32>
    %cst_19 = arith.constant dense<0.000000e+00> : vector<8x32xf32>
    %26 = tpu.matmul %25, %1, %cst_19 {dimension_numbers = #tpu.dot_dimension_numbers<[1], [0], [0], [1], [0, 0, 1, 1], [], []>} : vector<8x32xf32>, vector<32x32xf32>, vector<8x32xf32> -> vector<8x32xf32>
    %27 = vector.shape_cast %25 : vector<8x32xf32> to vector<8x1x32xf32>
    %28 = vector.broadcast %27 : vector<8x1x32xf32> to vector<8x9x32xf32>
    %29 = vector.broadcast %3 : vector<1x9x32xf32> to vector<8x9x32xf32>
    %30 = arith.mulf %28, %29 : vector<8x9x32xf32>
    %cst_20 = arith.constant dense<0.000000e+00> : vector<8x9xf32>
    %31 = vector.multi_reduction <add>, %30, %cst_20 [2] : vector<8x9x32xf32> to vector<8x9xf32>
    %32 = arith.addf %31, %6 : vector<8x9xf32>
    %cst_21 = arith.constant dense<0xFF800000> : vector<8xf32>
    %33 = vector.multi_reduction <maximumf>, %32, %cst_21 [1] : vector<8x9xf32> to vector<8xf32>
    %34 = vector.shape_cast %33 : vector<8xf32> to vector<8x1xf32>
    %35 = vector.broadcast %34 : vector<8x1xf32> to vector<8x9xf32>
    %36 = arith.cmpf oeq, %32, %35 : vector<8x9xf32>
    %c9_i32 = arith.constant 9 : i32
    %37 = vector.broadcast %c9_i32 : i32 to vector<8x9xi32>
    %38 = arith.select %36, %20, %37 : vector<8x9xi1>, vector<8x9xi32>
    %cst_22 = arith.constant dense<2147483647> : vector<8xi32>
    %39 = vector.multi_reduction <minsi>, %38, %cst_22 [1] : vector<8x9xi32> to vector<8xi32>
    %40 = vector.shape_cast %39 : vector<8xi32> to vector<8x1xi32>
    %41 = vector.broadcast %40 : vector<8x1xi32> to vector<8x9xi32>
    %42 = arith.cmpi eq, %20, %41 : vector<8x9xi32>
    %43 = arith.extui %42 : vector<8x9xi1> to vector<8x9xi32>
    %44 = arith.sitofp %43 : vector<8x9xi32> to vector<8x9xf32>
    %45 = vector.shape_cast %44 : vector<8x9xf32> to vector<8x9x1xf32>
    %46 = vector.broadcast %45 : vector<8x9x1xf32> to vector<8x9x64xf32>
    %47 = arith.mulf %18, %46 : vector<8x9x64xf32>
    %cst_23 = arith.constant dense<0.000000e+00> : vector<8x64xf32>
    %48 = vector.multi_reduction <add>, %47, %cst_23 [1] : vector<8x9x64xf32> to vector<8x64xf32>
    %49 = arith.mulf %19, %44 : vector<8x9xf32>
    %cst_24 = arith.constant dense<0.000000e+00> : vector<8xf32>
    %50 = vector.multi_reduction <add>, %49, %cst_24 [1] : vector<8x9xf32> to vector<8xf32>
    %51 = vector.shape_cast %50 : vector<8xf32> to vector<8x1xf32>
    %cst_25 = arith.constant 5.000000e-01 : f32
    %52 = vector.broadcast %cst_25 : f32 to vector<8x1xf32>
    %53 = arith.cmpf ogt, %51, %52 : vector<8x1xf32>
    %c0_i32 = arith.constant 0 : i32
    %54 = vector.broadcast %c0_i32 : i32 to vector<8x1xi32>
    %55 = arith.cmpi sgt, %40, %54 : vector<8x1xi32>
    %56 = arith.andi %55, %53 : vector<8x1xi1>
    %57 = tpu.concatenate %25, %26 in 1 : vector<8x32xf32>, vector<8x32xf32> -> vector<8x64xf32>
    %58 = vector.shape_cast %56 : vector<8x1xi1> to vector<8x1xi1>
    %59 = vector.broadcast %58 : vector<8x1xi1> to vector<8x64xi1>
    %60 = arith.select %59, %48, %57 : vector<8x64xi1>, vector<8x64xf32>
    %cst_26 = arith.constant dense<true> : vector<8x1xi1>
    %61 = arith.xori %53, %cst_26 : vector<8x1xi1>
    %62 = arith.andi %55, %61 : vector<8x1xi1>
    %cst_27 = arith.constant 1.000000e+00 : f32
    %cst_28 = arith.constant 0.000000e+00 : f32
    %63 = vector.broadcast %cst_27 : f32 to vector<8x1xf32>
    %64 = vector.broadcast %cst_28 : f32 to vector<8x1xf32>
    %65 = arith.select %62, %63, %64 : vector<8x1xi1>, vector<8x1xf32>
    %66 = vector.broadcast %65 : vector<8x1xf32> to vector<8x9xf32>
    %67 = arith.mulf %44, %66 : vector<8x9xf32>
    %68 = vector.shape_cast %67 : vector<8x9xf32> to vector<8x9x1xf32>
    %69 = vector.shape_cast %57 : vector<8x64xf32> to vector<8x1x64xf32>
    %70 = vector.broadcast %68 : vector<8x9x1xf32> to vector<8x9x64xf32>
    %71 = vector.broadcast %69 : vector<8x1x64xf32> to vector<8x9x64xf32>
    %72 = arith.mulf %70, %71 : vector<8x9x64xf32>
    %73 = arith.addf %18, %72 : vector<8x9x64xf32>
    %74 = vector.broadcast %65 : vector<8x1xf32> to vector<8x9xf32>
    %75 = arith.mulf %44, %74 : vector<8x9xf32>
    %76 = arith.addf %19, %75 : vector<8x9xf32>
    %77 = vector.extract_strided_slice %60 {offsets = [0, 0], sizes = [8, 32], strides = [1, 1]} : vector<8x64xf32> to vector<8x32xf32>
    %c0_29 = arith.constant 0 : index
    %c0_30 = arith.constant 0 : index
    %78 = vector.load %arg10[%c0_29, %c0_30] : memref<64x32xf32, #tpu.memory_space<vmem>>, vector<8x32xf32>
    tpu.vector_store %arg10[%c0_29, %c0_30], %77 {strides = array<i32>} : memref<64x32xf32, #tpu.memory_space<vmem>>, vector<8x32xf32>,
    %79 = vector.extract_strided_slice %12 {offsets = [0, 1, 0], sizes = [8, 1, 32], strides = [1, 1, 1]} : vector<8x8x32xf32> to vector<8x1x32xf32>
    %80 = vector.shape_cast %79 : vector<8x1x32xf32> to vector<8x32xf32>
    %81 = vector.extract_strided_slice %60 {offsets = [0, 32], sizes = [8, 32], strides = [1, 1]} : vector<8x64xf32> to vector<8x32xf32>
    %82 = arith.addf %80, %81 : vector<8x32xf32>
    %83 = math.tanh %82 : vector<8x32xf32>
    %cst_31 = arith.constant dense<0.000000e+00> : vector<8x32xf32>
    %84 = tpu.matmul %83, %1, %cst_31 {dimension_numbers = #tpu.dot_dimension_numbers<[1], [0], [0], [1], [0, 0, 1, 1], [], []>} : vector<8x32xf32>, vector<32x32xf32>, vector<8x32xf32> -> vector<8x32xf32>
    %85 = vector.shape_cast %83 : vector<8x32xf32> to vector<8x1x32xf32>
    %86 = vector.broadcast %85 : vector<8x1x32xf32> to vector<8x9x32xf32>
    %87 = vector.broadcast %3 : vector<1x9x32xf32> to vector<8x9x32xf32>
    %88 = arith.mulf %86, %87 : vector<8x9x32xf32>
    %cst_32 = arith.constant dense<0.000000e+00> : vector<8x9xf32>
    %89 = vector.multi_reduction <add>, %88, %cst_32 [2] : vector<8x9x32xf32> to vector<8x9xf32>
    %90 = arith.addf %89, %6 : vector<8x9xf32>
    %cst_33 = arith.constant dense<0xFF800000> : vector<8xf32>
    %91 = vector.multi_reduction <maximumf>, %90, %cst_33 [1] : vector<8x9xf32> to vector<8xf32>
    %92 = vector.shape_cast %91 : vector<8xf32> to vector<8x1xf32>
    %93 = vector.broadcast %92 : vector<8x1xf32> to vector<8x9xf32>
    %94 = arith.cmpf oeq, %90, %93 : vector<8x9xf32>
    %c9_i32_34 = arith.constant 9 : i32
    %95 = vector.broadcast %c9_i32_34 : i32 to vector<8x9xi32>
    %96 = arith.select %94, %20, %95 : vector<8x9xi1>, vector<8x9xi32>
    %cst_35 = arith.constant dense<2147483647> : vector<8xi32>
    %97 = vector.multi_reduction <minsi>, %96, %cst_35 [1] : vector<8x9xi32> to vector<8xi32>
    %98 = vector.shape_cast %97 : vector<8xi32> to vector<8x1xi32>
    %99 = vector.broadcast %98 : vector<8x1xi32> to vector<8x9xi32>
    %100 = arith.cmpi eq, %20, %99 : vector<8x9xi32>
    %101 = arith.extui %100 : vector<8x9xi1> to vector<8x9xi32>
    %102 = arith.sitofp %101 : vector<8x9xi32> to vector<8x9xf32>
    %103 = vector.shape_cast %102 : vector<8x9xf32> to vector<8x9x1xf32>
    %104 = vector.broadcast %103 : vector<8x9x1xf32> to vector<8x9x64xf32>
    %105 = arith.mulf %73, %104 : vector<8x9x64xf32>
    %cst_36 = arith.constant dense<0.000000e+00> : vector<8x64xf32>
    %106 = vector.multi_reduction <add>, %105, %cst_36 [1] : vector<8x9x64xf32> to vector<8x64xf32>
    %107 = arith.mulf %76, %102 : vector<8x9xf32>
    %cst_37 = arith.constant dense<0.000000e+00> : vector<8xf32>
    %108 = vector.multi_reduction <add>, %107, %cst_37 [1] : vector<8x9xf32> to vector<8xf32>
    %109 = vector.shape_cast %108 : vector<8xf32> to vector<8x1xf32>
    %cst_38 = arith.constant 5.000000e-01 : f32
    %110 = vector.broadcast %cst_38 : f32 to vector<8x1xf32>
    %111 = arith.cmpf ogt, %109, %110 : vector<8x1xf32>
    %c0_i32_39 = arith.constant 0 : i32
    %112 = vector.broadcast %c0_i32_39 : i32 to vector<8x1xi32>
    %113 = arith.cmpi sgt, %98, %112 : vector<8x1xi32>
    %114 = arith.andi %113, %111 : vector<8x1xi1>
    %115 = tpu.concatenate %83, %84 in 1 : vector<8x32xf32>, vector<8x32xf32> -> vector<8x64xf32>
    %116 = vector.shape_cast %114 : vector<8x1xi1> to vector<8x1xi1>
    %117 = vector.broadcast %116 : vector<8x1xi1> to vector<8x64xi1>
    %118 = arith.select %117, %106, %115 : vector<8x64xi1>, vector<8x64xf32>
    %cst_40 = arith.constant dense<true> : vector<8x1xi1>
    %119 = arith.xori %111, %cst_40 : vector<8x1xi1>
    %120 = arith.andi %113, %119 : vector<8x1xi1>
    %cst_41 = arith.constant 1.000000e+00 : f32
    %cst_42 = arith.constant 0.000000e+00 : f32
    %121 = vector.broadcast %cst_41 : f32 to vector<8x1xf32>
    %122 = vector.broadcast %cst_42 : f32 to vector<8x1xf32>
    %123 = arith.select %120, %121, %122 : vector<8x1xi1>, vector<8x1xf32>
    %124 = vector.broadcast %123 : vector<8x1xf32> to vector<8x9xf32>
    %125 = arith.mulf %102, %124 : vector<8x9xf32>
    %126 = vector.shape_cast %125 : vector<8x9xf32> to vector<8x9x1xf32>
    %127 = vector.shape_cast %115 : vector<8x64xf32> to vector<8x1x64xf32>
    %128 = vector.broadcast %126 : vector<8x9x1xf32> to vector<8x9x64xf32>
    %129 = vector.broadcast %127 : vector<8x1x64xf32> to vector<8x9x64xf32>
    %130 = arith.mulf %128, %129 : vector<8x9x64xf32>
    %131 = arith.addf %73, %130 : vector<8x9x64xf32>
    %132 = vector.broadcast %123 : vector<8x1xf32> to vector<8x9xf32>
    %133 = arith.mulf %102, %132 : vector<8x9xf32>
    %134 = arith.addf %76, %133 : vector<8x9xf32>
    %135 = vector.extract_strided_slice %118 {offsets = [0, 0], sizes = [8, 32], strides = [1, 1]} : vector<8x64xf32> to vector<8x32xf32>
    %c8 = arith.constant 8 : index
    %c0_43 = arith.constant 0 : index
    %136 = vector.load %arg10[%c8, %c0_43] : memref<64x32xf32, #tpu.memory_space<vmem>>, vector<8x32xf32>
    tpu.vector_store %arg10[%c8, %c0_43], %135 {strides = array<i32>} : memref<64x32xf32, #tpu.memory_space<vmem>>, vector<8x32xf32>,
    %137 = vector.extract_strided_slice %12 {offsets = [0, 2, 0], sizes = [8, 1, 32], strides = [1, 1, 1]} : vector<8x8x32xf32> to vector<8x1x32xf32>
    %138 = vector.shape_cast %137 : vector<8x1x32xf32> to vector<8x32xf32>
    %139 = vector.extract_strided_slice %118 {offsets = [0, 32], sizes = [8, 32], strides = [1, 1]} : vector<8x64xf32> to vector<8x32xf32>
    %140 = arith.addf %138, %139 : vector<8x32xf32>
    %141 = math.tanh %140 : vector<8x32xf32>
    %cst_44 = arith.constant dense<0.000000e+00> : vector<8x32xf32>
    %142 = tpu.matmul %141, %1, %cst_44 {dimension_numbers = #tpu.dot_dimension_numbers<[1], [0], [0], [1], [0, 0, 1, 1], [], []>} : vector<8x32xf32>, vector<32x32xf32>, vector<8x32xf32> -> vector<8x32xf32>
    %143 = vector.shape_cast %141 : vector<8x32xf32> to vector<8x1x32xf32>
    %144 = vector.broadcast %143 : vector<8x1x32xf32> to vector<8x9x32xf32>
    %145 = vector.broadcast %3 : vector<1x9x32xf32> to vector<8x9x32xf32>
    %146 = arith.mulf %144, %145 : vector<8x9x32xf32>
    %cst_45 = arith.constant dense<0.000000e+00> : vector<8x9xf32>
    %147 = vector.multi_reduction <add>, %146, %cst_45 [2] : vector<8x9x32xf32> to vector<8x9xf32>
    %148 = arith.addf %147, %6 : vector<8x9xf32>
    %cst_46 = arith.constant dense<0xFF800000> : vector<8xf32>
    %149 = vector.multi_reduction <maximumf>, %148, %cst_46 [1] : vector<8x9xf32> to vector<8xf32>
    %150 = vector.shape_cast %149 : vector<8xf32> to vector<8x1xf32>
    %151 = vector.broadcast %150 : vector<8x1xf32> to vector<8x9xf32>
    %152 = arith.cmpf oeq, %148, %151 : vector<8x9xf32>
    %c9_i32_47 = arith.constant 9 : i32
    %153 = vector.broadcast %c9_i32_47 : i32 to vector<8x9xi32>
    %154 = arith.select %152, %20, %153 : vector<8x9xi1>, vector<8x9xi32>
    %cst_48 = arith.constant dense<2147483647> : vector<8xi32>
    %155 = vector.multi_reduction <minsi>, %154, %cst_48 [1] : vector<8x9xi32> to vector<8xi32>
    %156 = vector.shape_cast %155 : vector<8xi32> to vector<8x1xi32>
    %157 = vector.broadcast %156 : vector<8x1xi32> to vector<8x9xi32>
    %158 = arith.cmpi eq, %20, %157 : vector<8x9xi32>
    %159 = arith.extui %158 : vector<8x9xi1> to vector<8x9xi32>
    %160 = arith.sitofp %159 : vector<8x9xi32> to vector<8x9xf32>
    %161 = vector.shape_cast %160 : vector<8x9xf32> to vector<8x9x1xf32>
    %162 = vector.broadcast %161 : vector<8x9x1xf32> to vector<8x9x64xf32>
    %163 = arith.mulf %131, %162 : vector<8x9x64xf32>
    %cst_49 = arith.constant dense<0.000000e+00> : vector<8x64xf32>
    %164 = vector.multi_reduction <add>, %163, %cst_49 [1] : vector<8x9x64xf32> to vector<8x64xf32>
    %165 = arith.mulf %134, %160 : vector<8x9xf32>
    %cst_50 = arith.constant dense<0.000000e+00> : vector<8xf32>
    %166 = vector.multi_reduction <add>, %165, %cst_50 [1] : vector<8x9xf32> to vector<8xf32>
    %167 = vector.shape_cast %166 : vector<8xf32> to vector<8x1xf32>
    %cst_51 = arith.constant 5.000000e-01 : f32
    %168 = vector.broadcast %cst_51 : f32 to vector<8x1xf32>
    %169 = arith.cmpf ogt, %167, %168 : vector<8x1xf32>
    %c0_i32_52 = arith.constant 0 : i32
    %170 = vector.broadcast %c0_i32_52 : i32 to vector<8x1xi32>
    %171 = arith.cmpi sgt, %156, %170 : vector<8x1xi32>
    %172 = arith.andi %171, %169 : vector<8x1xi1>
    %173 = tpu.concatenate %141, %142 in 1 : vector<8x32xf32>, vector<8x32xf32> -> vector<8x64xf32>
    %174 = vector.shape_cast %172 : vector<8x1xi1> to vector<8x1xi1>
    %175 = vector.broadcast %174 : vector<8x1xi1> to vector<8x64xi1>
    %176 = arith.select %175, %164, %173 : vector<8x64xi1>, vector<8x64xf32>
    %cst_53 = arith.constant dense<true> : vector<8x1xi1>
    %177 = arith.xori %169, %cst_53 : vector<8x1xi1>
    %178 = arith.andi %171, %177 : vector<8x1xi1>
    %cst_54 = arith.constant 1.000000e+00 : f32
    %cst_55 = arith.constant 0.000000e+00 : f32
    %179 = vector.broadcast %cst_54 : f32 to vector<8x1xf32>
    %180 = vector.broadcast %cst_55 : f32 to vector<8x1xf32>
    %181 = arith.select %178, %179, %180 : vector<8x1xi1>, vector<8x1xf32>
    %182 = vector.broadcast %181 : vector<8x1xf32> to vector<8x9xf32>
    %183 = arith.mulf %160, %182 : vector<8x9xf32>
    %184 = vector.shape_cast %183 : vector<8x9xf32> to vector<8x9x1xf32>
    %185 = vector.shape_cast %173 : vector<8x64xf32> to vector<8x1x64xf32>
    %186 = vector.broadcast %184 : vector<8x9x1xf32> to vector<8x9x64xf32>
    %187 = vector.broadcast %185 : vector<8x1x64xf32> to vector<8x9x64xf32>
    %188 = arith.mulf %186, %187 : vector<8x9x64xf32>
    %189 = arith.addf %131, %188 : vector<8x9x64xf32>
    %190 = vector.broadcast %181 : vector<8x1xf32> to vector<8x9xf32>
    %191 = arith.mulf %160, %190 : vector<8x9xf32>
    %192 = arith.addf %134, %191 : vector<8x9xf32>
    %193 = vector.extract_strided_slice %176 {offsets = [0, 0], sizes = [8, 32], strides = [1, 1]} : vector<8x64xf32> to vector<8x32xf32>
    %c16 = arith.constant 16 : index
    %c0_56 = arith.constant 0 : index
    %194 = vector.load %arg10[%c16, %c0_56] : memref<64x32xf32, #tpu.memory_space<vmem>>, vector<8x32xf32>
    tpu.vector_store %arg10[%c16, %c0_56], %193 {strides = array<i32>} : memref<64x32xf32, #tpu.memory_space<vmem>>, vector<8x32xf32>,
    %195 = vector.extract_strided_slice %12 {offsets = [0, 3, 0], sizes = [8, 1, 32], strides = [1, 1, 1]} : vector<8x8x32xf32> to vector<8x1x32xf32>
    %196 = vector.shape_cast %195 : vector<8x1x32xf32> to vector<8x32xf32>
    %197 = vector.extract_strided_slice %176 {offsets = [0, 32], sizes = [8, 32], strides = [1, 1]} : vector<8x64xf32> to vector<8x32xf32>
    %198 = arith.addf %196, %197 : vector<8x32xf32>
    %199 = math.tanh %198 : vector<8x32xf32>
    %cst_57 = arith.constant dense<0.000000e+00> : vector<8x32xf32>
    %200 = tpu.matmul %199, %1, %cst_57 {dimension_numbers = #tpu.dot_dimension_numbers<[1], [0], [0], [1], [0, 0, 1, 1], [], []>} : vector<8x32xf32>, vector<32x32xf32>, vector<8x32xf32> -> vector<8x32xf32>
    %201 = vector.shape_cast %199 : vector<8x32xf32> to vector<8x1x32xf32>
    %202 = vector.broadcast %201 : vector<8x1x32xf32> to vector<8x9x32xf32>
    %203 = vector.broadcast %3 : vector<1x9x32xf32> to vector<8x9x32xf32>
    %204 = arith.mulf %202, %203 : vector<8x9x32xf32>
    %cst_58 = arith.constant dense<0.000000e+00> : vector<8x9xf32>
    %205 = vector.multi_reduction <add>, %204, %cst_58 [2] : vector<8x9x32xf32> to vector<8x9xf32>
    %206 = arith.addf %205, %6 : vector<8x9xf32>
    %cst_59 = arith.constant dense<0xFF800000> : vector<8xf32>
    %207 = vector.multi_reduction <maximumf>, %206, %cst_59 [1] : vector<8x9xf32> to vector<8xf32>
    %208 = vector.shape_cast %207 : vector<8xf32> to vector<8x1xf32>
    %209 = vector.broadcast %208 : vector<8x1xf32> to vector<8x9xf32>
    %210 = arith.cmpf oeq, %206, %209 : vector<8x9xf32>
    %c9_i32_60 = arith.constant 9 : i32
    %211 = vector.broadcast %c9_i32_60 : i32 to vector<8x9xi32>
    %212 = arith.select %210, %20, %211 : vector<8x9xi1>, vector<8x9xi32>
    %cst_61 = arith.constant dense<2147483647> : vector<8xi32>
    %213 = vector.multi_reduction <minsi>, %212, %cst_61 [1] : vector<8x9xi32> to vector<8xi32>
    %214 = vector.shape_cast %213 : vector<8xi32> to vector<8x1xi32>
    %215 = vector.broadcast %214 : vector<8x1xi32> to vector<8x9xi32>
    %216 = arith.cmpi eq, %20, %215 : vector<8x9xi32>
    %217 = arith.extui %216 : vector<8x9xi1> to vector<8x9xi32>
    %218 = arith.sitofp %217 : vector<8x9xi32> to vector<8x9xf32>
    %219 = vector.shape_cast %218 : vector<8x9xf32> to vector<8x9x1xf32>
    %220 = vector.broadcast %219 : vector<8x9x1xf32> to vector<8x9x64xf32>
    %221 = arith.mulf %189, %220 : vector<8x9x64xf32>
    %cst_62 = arith.constant dense<0.000000e+00> : vector<8x64xf32>
    %222 = vector.multi_reduction <add>, %221, %cst_62 [1] : vector<8x9x64xf32> to vector<8x64xf32>
    %223 = arith.mulf %192, %218 : vector<8x9xf32>
    %cst_63 = arith.constant dense<0.000000e+00> : vector<8xf32>
    %224 = vector.multi_reduction <add>, %223, %cst_63 [1] : vector<8x9xf32> to vector<8xf32>
    %225 = vector.shape_cast %224 : vector<8xf32> to vector<8x1xf32>
    %cst_64 = arith.constant 5.000000e-01 : f32
    %226 = vector.broadcast %cst_64 : f32 to vector<8x1xf32>
    %227 = arith.cmpf ogt, %225, %226 : vector<8x1xf32>
    %c0_i32_65 = arith.constant 0 : i32
    %228 = vector.broadcast %c0_i32_65 : i32 to vector<8x1xi32>
    %229 = arith.cmpi sgt, %214, %228 : vector<8x1xi32>
    %230 = arith.andi %229, %227 : vector<8x1xi1>
    %231 = tpu.concatenate %199, %200 in 1 : vector<8x32xf32>, vector<8x32xf32> -> vector<8x64xf32>
    %232 = vector.shape_cast %230 : vector<8x1xi1> to vector<8x1xi1>
    %233 = vector.broadcast %232 : vector<8x1xi1> to vector<8x64xi1>
    %234 = arith.select %233, %222, %231 : vector<8x64xi1>, vector<8x64xf32>
    %cst_66 = arith.constant dense<true> : vector<8x1xi1>
    %235 = arith.xori %227, %cst_66 : vector<8x1xi1>
    %236 = arith.andi %229, %235 : vector<8x1xi1>
    %cst_67 = arith.constant 1.000000e+00 : f32
    %cst_68 = arith.constant 0.000000e+00 : f32
    %237 = vector.broadcast %cst_67 : f32 to vector<8x1xf32>
    %238 = vector.broadcast %cst_68 : f32 to vector<8x1xf32>
    %239 = arith.select %236, %237, %238 : vector<8x1xi1>, vector<8x1xf32>
    %240 = vector.broadcast %239 : vector<8x1xf32> to vector<8x9xf32>
    %241 = arith.mulf %218, %240 : vector<8x9xf32>
    %242 = vector.shape_cast %241 : vector<8x9xf32> to vector<8x9x1xf32>
    %243 = vector.shape_cast %231 : vector<8x64xf32> to vector<8x1x64xf32>
    %244 = vector.broadcast %242 : vector<8x9x1xf32> to vector<8x9x64xf32>
    %245 = vector.broadcast %243 : vector<8x1x64xf32> to vector<8x9x64xf32>
    %246 = arith.mulf %244, %245 : vector<8x9x64xf32>
    %247 = arith.addf %189, %246 : vector<8x9x64xf32>
    %248 = vector.broadcast %239 : vector<8x1xf32> to vector<8x9xf32>
    %249 = arith.mulf %218, %248 : vector<8x9xf32>
    %250 = arith.addf %192, %249 : vector<8x9xf32>
    %251 = vector.extract_strided_slice %234 {offsets = [0, 0], sizes = [8, 32], strides = [1, 1]} : vector<8x64xf32> to vector<8x32xf32>
    %c24 = arith.constant 24 : index
    %c0_69 = arith.constant 0 : index
    %252 = vector.load %arg10[%c24, %c0_69] : memref<64x32xf32, #tpu.memory_space<vmem>>, vector<8x32xf32>
    tpu.vector_store %arg10[%c24, %c0_69], %251 {strides = array<i32>} : memref<64x32xf32, #tpu.memory_space<vmem>>, vector<8x32xf32>,
    %253 = vector.extract_strided_slice %12 {offsets = [0, 4, 0], sizes = [8, 1, 32], strides = [1, 1, 1]} : vector<8x8x32xf32> to vector<8x1x32xf32>
    %254 = vector.shape_cast %253 : vector<8x1x32xf32> to vector<8x32xf32>
    %255 = vector.extract_strided_slice %234 {offsets = [0, 32], sizes = [8, 32], strides = [1, 1]} : vector<8x64xf32> to vector<8x32xf32>
    %256 = arith.addf %254, %255 : vector<8x32xf32>
    %257 = math.tanh %256 : vector<8x32xf32>
    %cst_70 = arith.constant dense<0.000000e+00> : vector<8x32xf32>
    %258 = tpu.matmul %257, %1, %cst_70 {dimension_numbers = #tpu.dot_dimension_numbers<[1], [0], [0], [1], [0, 0, 1, 1], [], []>} : vector<8x32xf32>, vector<32x32xf32>, vector<8x32xf32> -> vector<8x32xf32>
    %259 = vector.shape_cast %257 : vector<8x32xf32> to vector<8x1x32xf32>
    %260 = vector.broadcast %259 : vector<8x1x32xf32> to vector<8x9x32xf32>
    %261 = vector.broadcast %3 : vector<1x9x32xf32> to vector<8x9x32xf32>
    %262 = arith.mulf %260, %261 : vector<8x9x32xf32>
    %cst_71 = arith.constant dense<0.000000e+00> : vector<8x9xf32>
    %263 = vector.multi_reduction <add>, %262, %cst_71 [2] : vector<8x9x32xf32> to vector<8x9xf32>
    %264 = arith.addf %263, %6 : vector<8x9xf32>
    %cst_72 = arith.constant dense<0xFF800000> : vector<8xf32>
    %265 = vector.multi_reduction <maximumf>, %264, %cst_72 [1] : vector<8x9xf32> to vector<8xf32>
    %266 = vector.shape_cast %265 : vector<8xf32> to vector<8x1xf32>
    %267 = vector.broadcast %266 : vector<8x1xf32> to vector<8x9xf32>
    %268 = arith.cmpf oeq, %264, %267 : vector<8x9xf32>
    %c9_i32_73 = arith.constant 9 : i32
    %269 = vector.broadcast %c9_i32_73 : i32 to vector<8x9xi32>
    %270 = arith.select %268, %20, %269 : vector<8x9xi1>, vector<8x9xi32>
    %cst_74 = arith.constant dense<2147483647> : vector<8xi32>
    %271 = vector.multi_reduction <minsi>, %270, %cst_74 [1] : vector<8x9xi32> to vector<8xi32>
    %272 = vector.shape_cast %271 : vector<8xi32> to vector<8x1xi32>
    %273 = vector.broadcast %272 : vector<8x1xi32> to vector<8x9xi32>
    %274 = arith.cmpi eq, %20, %273 : vector<8x9xi32>
    %275 = arith.extui %274 : vector<8x9xi1> to vector<8x9xi32>
    %276 = arith.sitofp %275 : vector<8x9xi32> to vector<8x9xf32>
    %277 = vector.shape_cast %276 : vector<8x9xf32> to vector<8x9x1xf32>
    %278 = vector.broadcast %277 : vector<8x9x1xf32> to vector<8x9x64xf32>
    %279 = arith.mulf %247, %278 : vector<8x9x64xf32>
    %cst_75 = arith.constant dense<0.000000e+00> : vector<8x64xf32>
    %280 = vector.multi_reduction <add>, %279, %cst_75 [1] : vector<8x9x64xf32> to vector<8x64xf32>
    %281 = arith.mulf %250, %276 : vector<8x9xf32>
    %cst_76 = arith.constant dense<0.000000e+00> : vector<8xf32>
    %282 = vector.multi_reduction <add>, %281, %cst_76 [1] : vector<8x9xf32> to vector<8xf32>
    %283 = vector.shape_cast %282 : vector<8xf32> to vector<8x1xf32>
    %cst_77 = arith.constant 5.000000e-01 : f32
    %284 = vector.broadcast %cst_77 : f32 to vector<8x1xf32>
    %285 = arith.cmpf ogt, %283, %284 : vector<8x1xf32>
    %c0_i32_78 = arith.constant 0 : i32
    %286 = vector.broadcast %c0_i32_78 : i32 to vector<8x1xi32>
    %287 = arith.cmpi sgt, %272, %286 : vector<8x1xi32>
    %288 = arith.andi %287, %285 : vector<8x1xi1>
    %289 = tpu.concatenate %257, %258 in 1 : vector<8x32xf32>, vector<8x32xf32> -> vector<8x64xf32>
    %290 = vector.shape_cast %288 : vector<8x1xi1> to vector<8x1xi1>
    %291 = vector.broadcast %290 : vector<8x1xi1> to vector<8x64xi1>
    %292 = arith.select %291, %280, %289 : vector<8x64xi1>, vector<8x64xf32>
    %cst_79 = arith.constant dense<true> : vector<8x1xi1>
    %293 = arith.xori %285, %cst_79 : vector<8x1xi1>
    %294 = arith.andi %287, %293 : vector<8x1xi1>
    %cst_80 = arith.constant 1.000000e+00 : f32
    %cst_81 = arith.constant 0.000000e+00 : f32
    %295 = vector.broadcast %cst_80 : f32 to vector<8x1xf32>
    %296 = vector.broadcast %cst_81 : f32 to vector<8x1xf32>
    %297 = arith.select %294, %295, %296 : vector<8x1xi1>, vector<8x1xf32>
    %298 = vector.broadcast %297 : vector<8x1xf32> to vector<8x9xf32>
    %299 = arith.mulf %276, %298 : vector<8x9xf32>
    %300 = vector.shape_cast %299 : vector<8x9xf32> to vector<8x9x1xf32>
    %301 = vector.shape_cast %289 : vector<8x64xf32> to vector<8x1x64xf32>
    %302 = vector.broadcast %300 : vector<8x9x1xf32> to vector<8x9x64xf32>
    %303 = vector.broadcast %301 : vector<8x1x64xf32> to vector<8x9x64xf32>
    %304 = arith.mulf %302, %303 : vector<8x9x64xf32>
    %305 = arith.addf %247, %304 : vector<8x9x64xf32>
    %306 = vector.broadcast %297 : vector<8x1xf32> to vector<8x9xf32>
    %307 = arith.mulf %276, %306 : vector<8x9xf32>
    %308 = arith.addf %250, %307 : vector<8x9xf32>
    %309 = vector.extract_strided_slice %292 {offsets = [0, 0], sizes = [8, 32], strides = [1, 1]} : vector<8x64xf32> to vector<8x32xf32>
    %c32 = arith.constant 32 : index
    %c0_82 = arith.constant 0 : index
    %310 = vector.load %arg10[%c32, %c0_82] : memref<64x32xf32, #tpu.memory_space<vmem>>, vector<8x32xf32>
    tpu.vector_store %arg10[%c32, %c0_82], %309 {strides = array<i32>} : memref<64x32xf32, #tpu.memory_space<vmem>>, vector<8x32xf32>,
    %311 = vector.extract_strided_slice %12 {offsets = [0, 5, 0], sizes = [8, 1, 32], strides = [1, 1, 1]} : vector<8x8x32xf32> to vector<8x1x32xf32>
    %312 = vector.shape_cast %311 : vector<8x1x32xf32> to vector<8x32xf32>
    %313 = vector.extract_strided_slice %292 {offsets = [0, 32], sizes = [8, 32], strides = [1, 1]} : vector<8x64xf32> to vector<8x32xf32>
    %314 = arith.addf %312, %313 : vector<8x32xf32>
    %315 = math.tanh %314 : vector<8x32xf32>
    %cst_83 = arith.constant dense<0.000000e+00> : vector<8x32xf32>
    %316 = tpu.matmul %315, %1, %cst_83 {dimension_numbers = #tpu.dot_dimension_numbers<[1], [0], [0], [1], [0, 0, 1, 1], [], []>} : vector<8x32xf32>, vector<32x32xf32>, vector<8x32xf32> -> vector<8x32xf32>
    %317 = vector.shape_cast %315 : vector<8x32xf32> to vector<8x1x32xf32>
    %318 = vector.broadcast %317 : vector<8x1x32xf32> to vector<8x9x32xf32>
    %319 = vector.broadcast %3 : vector<1x9x32xf32> to vector<8x9x32xf32>
    %320 = arith.mulf %318, %319 : vector<8x9x32xf32>
    %cst_84 = arith.constant dense<0.000000e+00> : vector<8x9xf32>
    %321 = vector.multi_reduction <add>, %320, %cst_84 [2] : vector<8x9x32xf32> to vector<8x9xf32>
    %322 = arith.addf %321, %6 : vector<8x9xf32>
    %cst_85 = arith.constant dense<0xFF800000> : vector<8xf32>
    %323 = vector.multi_reduction <maximumf>, %322, %cst_85 [1] : vector<8x9xf32> to vector<8xf32>
    %324 = vector.shape_cast %323 : vector<8xf32> to vector<8x1xf32>
    %325 = vector.broadcast %324 : vector<8x1xf32> to vector<8x9xf32>
    %326 = arith.cmpf oeq, %322, %325 : vector<8x9xf32>
    %c9_i32_86 = arith.constant 9 : i32
    %327 = vector.broadcast %c9_i32_86 : i32 to vector<8x9xi32>
    %328 = arith.select %326, %20, %327 : vector<8x9xi1>, vector<8x9xi32>
    %cst_87 = arith.constant dense<2147483647> : vector<8xi32>
    %329 = vector.multi_reduction <minsi>, %328, %cst_87 [1] : vector<8x9xi32> to vector<8xi32>
    %330 = vector.shape_cast %329 : vector<8xi32> to vector<8x1xi32>
    %331 = vector.broadcast %330 : vector<8x1xi32> to vector<8x9xi32>
    %332 = arith.cmpi eq, %20, %331 : vector<8x9xi32>
    %333 = arith.extui %332 : vector<8x9xi1> to vector<8x9xi32>
    %334 = arith.sitofp %333 : vector<8x9xi32> to vector<8x9xf32>
    %335 = vector.shape_cast %334 : vector<8x9xf32> to vector<8x9x1xf32>
    %336 = vector.broadcast %335 : vector<8x9x1xf32> to vector<8x9x64xf32>
    %337 = arith.mulf %305, %336 : vector<8x9x64xf32>
    %cst_88 = arith.constant dense<0.000000e+00> : vector<8x64xf32>
    %338 = vector.multi_reduction <add>, %337, %cst_88 [1] : vector<8x9x64xf32> to vector<8x64xf32>
    %339 = arith.mulf %308, %334 : vector<8x9xf32>
    %cst_89 = arith.constant dense<0.000000e+00> : vector<8xf32>
    %340 = vector.multi_reduction <add>, %339, %cst_89 [1] : vector<8x9xf32> to vector<8xf32>
    %341 = vector.shape_cast %340 : vector<8xf32> to vector<8x1xf32>
    %cst_90 = arith.constant 5.000000e-01 : f32
    %342 = vector.broadcast %cst_90 : f32 to vector<8x1xf32>
    %343 = arith.cmpf ogt, %341, %342 : vector<8x1xf32>
    %c0_i32_91 = arith.constant 0 : i32
    %344 = vector.broadcast %c0_i32_91 : i32 to vector<8x1xi32>
    %345 = arith.cmpi sgt, %330, %344 : vector<8x1xi32>
    %346 = arith.andi %345, %343 : vector<8x1xi1>
    %347 = tpu.concatenate %315, %316 in 1 : vector<8x32xf32>, vector<8x32xf32> -> vector<8x64xf32>
    %348 = vector.shape_cast %346 : vector<8x1xi1> to vector<8x1xi1>
    %349 = vector.broadcast %348 : vector<8x1xi1> to vector<8x64xi1>
    %350 = arith.select %349, %338, %347 : vector<8x64xi1>, vector<8x64xf32>
    %cst_92 = arith.constant dense<true> : vector<8x1xi1>
    %351 = arith.xori %343, %cst_92 : vector<8x1xi1>
    %352 = arith.andi %345, %351 : vector<8x1xi1>
    %cst_93 = arith.constant 1.000000e+00 : f32
    %cst_94 = arith.constant 0.000000e+00 : f32
    %353 = vector.broadcast %cst_93 : f32 to vector<8x1xf32>
    %354 = vector.broadcast %cst_94 : f32 to vector<8x1xf32>
    %355 = arith.select %352, %353, %354 : vector<8x1xi1>, vector<8x1xf32>
    %356 = vector.broadcast %355 : vector<8x1xf32> to vector<8x9xf32>
    %357 = arith.mulf %334, %356 : vector<8x9xf32>
    %358 = vector.shape_cast %357 : vector<8x9xf32> to vector<8x9x1xf32>
    %359 = vector.shape_cast %347 : vector<8x64xf32> to vector<8x1x64xf32>
    %360 = vector.broadcast %358 : vector<8x9x1xf32> to vector<8x9x64xf32>
    %361 = vector.broadcast %359 : vector<8x1x64xf32> to vector<8x9x64xf32>
    %362 = arith.mulf %360, %361 : vector<8x9x64xf32>
    %363 = arith.addf %305, %362 : vector<8x9x64xf32>
    %364 = vector.broadcast %355 : vector<8x1xf32> to vector<8x9xf32>
    %365 = arith.mulf %334, %364 : vector<8x9xf32>
    %366 = arith.addf %308, %365 : vector<8x9xf32>
    %367 = vector.extract_strided_slice %350 {offsets = [0, 0], sizes = [8, 32], strides = [1, 1]} : vector<8x64xf32> to vector<8x32xf32>
    %c40 = arith.constant 40 : index
    %c0_95 = arith.constant 0 : index
    %368 = vector.load %arg10[%c40, %c0_95] : memref<64x32xf32, #tpu.memory_space<vmem>>, vector<8x32xf32>
    tpu.vector_store %arg10[%c40, %c0_95], %367 {strides = array<i32>} : memref<64x32xf32, #tpu.memory_space<vmem>>, vector<8x32xf32>,
    %369 = vector.extract_strided_slice %12 {offsets = [0, 6, 0], sizes = [8, 1, 32], strides = [1, 1, 1]} : vector<8x8x32xf32> to vector<8x1x32xf32>
    %370 = vector.shape_cast %369 : vector<8x1x32xf32> to vector<8x32xf32>
    %371 = vector.extract_strided_slice %350 {offsets = [0, 32], sizes = [8, 32], strides = [1, 1]} : vector<8x64xf32> to vector<8x32xf32>
    %372 = arith.addf %370, %371 : vector<8x32xf32>
    %373 = math.tanh %372 : vector<8x32xf32>
    %cst_96 = arith.constant dense<0.000000e+00> : vector<8x32xf32>
    %374 = tpu.matmul %373, %1, %cst_96 {dimension_numbers = #tpu.dot_dimension_numbers<[1], [0], [0], [1], [0, 0, 1, 1], [], []>} : vector<8x32xf32>, vector<32x32xf32>, vector<8x32xf32> -> vector<8x32xf32>
    %375 = vector.shape_cast %373 : vector<8x32xf32> to vector<8x1x32xf32>
    %376 = vector.broadcast %375 : vector<8x1x32xf32> to vector<8x9x32xf32>
    %377 = vector.broadcast %3 : vector<1x9x32xf32> to vector<8x9x32xf32>
    %378 = arith.mulf %376, %377 : vector<8x9x32xf32>
    %cst_97 = arith.constant dense<0.000000e+00> : vector<8x9xf32>
    %379 = vector.multi_reduction <add>, %378, %cst_97 [2] : vector<8x9x32xf32> to vector<8x9xf32>
    %380 = arith.addf %379, %6 : vector<8x9xf32>
    %cst_98 = arith.constant dense<0xFF800000> : vector<8xf32>
    %381 = vector.multi_reduction <maximumf>, %380, %cst_98 [1] : vector<8x9xf32> to vector<8xf32>
    %382 = vector.shape_cast %381 : vector<8xf32> to vector<8x1xf32>
    %383 = vector.broadcast %382 : vector<8x1xf32> to vector<8x9xf32>
    %384 = arith.cmpf oeq, %380, %383 : vector<8x9xf32>
    %c9_i32_99 = arith.constant 9 : i32
    %385 = vector.broadcast %c9_i32_99 : i32 to vector<8x9xi32>
    %386 = arith.select %384, %20, %385 : vector<8x9xi1>, vector<8x9xi32>
    %cst_100 = arith.constant dense<2147483647> : vector<8xi32>
    %387 = vector.multi_reduction <minsi>, %386, %cst_100 [1] : vector<8x9xi32> to vector<8xi32>
    %388 = vector.shape_cast %387 : vector<8xi32> to vector<8x1xi32>
    %389 = vector.broadcast %388 : vector<8x1xi32> to vector<8x9xi32>
    %390 = arith.cmpi eq, %20, %389 : vector<8x9xi32>
    %391 = arith.extui %390 : vector<8x9xi1> to vector<8x9xi32>
    %392 = arith.sitofp %391 : vector<8x9xi32> to vector<8x9xf32>
    %393 = vector.shape_cast %392 : vector<8x9xf32> to vector<8x9x1xf32>
    %394 = vector.broadcast %393 : vector<8x9x1xf32> to vector<8x9x64xf32>
    %395 = arith.mulf %363, %394 : vector<8x9x64xf32>
    %cst_101 = arith.constant dense<0.000000e+00> : vector<8x64xf32>
    %396 = vector.multi_reduction <add>, %395, %cst_101 [1] : vector<8x9x64xf32> to vector<8x64xf32>
    %397 = arith.mulf %366, %392 : vector<8x9xf32>
    %cst_102 = arith.constant dense<0.000000e+00> : vector<8xf32>
    %398 = vector.multi_reduction <add>, %397, %cst_102 [1] : vector<8x9xf32> to vector<8xf32>
    %399 = vector.shape_cast %398 : vector<8xf32> to vector<8x1xf32>
    %cst_103 = arith.constant 5.000000e-01 : f32
    %400 = vector.broadcast %cst_103 : f32 to vector<8x1xf32>
    %401 = arith.cmpf ogt, %399, %400 : vector<8x1xf32>
    %c0_i32_104 = arith.constant 0 : i32
    %402 = vector.broadcast %c0_i32_104 : i32 to vector<8x1xi32>
    %403 = arith.cmpi sgt, %388, %402 : vector<8x1xi32>
    %404 = arith.andi %403, %401 : vector<8x1xi1>
    %405 = tpu.concatenate %373, %374 in 1 : vector<8x32xf32>, vector<8x32xf32> -> vector<8x64xf32>
    %406 = vector.shape_cast %404 : vector<8x1xi1> to vector<8x1xi1>
    %407 = vector.broadcast %406 : vector<8x1xi1> to vector<8x64xi1>
    %408 = arith.select %407, %396, %405 : vector<8x64xi1>, vector<8x64xf32>
    %cst_105 = arith.constant dense<true> : vector<8x1xi1>
    %409 = arith.xori %401, %cst_105 : vector<8x1xi1>
    %410 = arith.andi %403, %409 : vector<8x1xi1>
    %cst_106 = arith.constant 1.000000e+00 : f32
    %cst_107 = arith.constant 0.000000e+00 : f32
    %411 = vector.broadcast %cst_106 : f32 to vector<8x1xf32>
    %412 = vector.broadcast %cst_107 : f32 to vector<8x1xf32>
    %413 = arith.select %410, %411, %412 : vector<8x1xi1>, vector<8x1xf32>
    %414 = vector.broadcast %413 : vector<8x1xf32> to vector<8x9xf32>
    %415 = arith.mulf %392, %414 : vector<8x9xf32>
    %416 = vector.shape_cast %415 : vector<8x9xf32> to vector<8x9x1xf32>
    %417 = vector.shape_cast %405 : vector<8x64xf32> to vector<8x1x64xf32>
    %418 = vector.broadcast %416 : vector<8x9x1xf32> to vector<8x9x64xf32>
    %419 = vector.broadcast %417 : vector<8x1x64xf32> to vector<8x9x64xf32>
    %420 = arith.mulf %418, %419 : vector<8x9x64xf32>
    %421 = arith.addf %363, %420 : vector<8x9x64xf32>
    %422 = vector.broadcast %413 : vector<8x1xf32> to vector<8x9xf32>
    %423 = arith.mulf %392, %422 : vector<8x9xf32>
    %424 = arith.addf %366, %423 : vector<8x9xf32>
    %425 = vector.extract_strided_slice %408 {offsets = [0, 0], sizes = [8, 32], strides = [1, 1]} : vector<8x64xf32> to vector<8x32xf32>
    %c48 = arith.constant 48 : index
    %c0_108 = arith.constant 0 : index
    %426 = vector.load %arg10[%c48, %c0_108] : memref<64x32xf32, #tpu.memory_space<vmem>>, vector<8x32xf32>
    tpu.vector_store %arg10[%c48, %c0_108], %425 {strides = array<i32>} : memref<64x32xf32, #tpu.memory_space<vmem>>, vector<8x32xf32>,
    %427 = vector.extract_strided_slice %12 {offsets = [0, 7, 0], sizes = [8, 1, 32], strides = [1, 1, 1]} : vector<8x8x32xf32> to vector<8x1x32xf32>
    %428 = vector.shape_cast %427 : vector<8x1x32xf32> to vector<8x32xf32>
    %429 = vector.extract_strided_slice %408 {offsets = [0, 32], sizes = [8, 32], strides = [1, 1]} : vector<8x64xf32> to vector<8x32xf32>
    %430 = arith.addf %428, %429 : vector<8x32xf32>
    %431 = math.tanh %430 : vector<8x32xf32>
    %cst_109 = arith.constant dense<0.000000e+00> : vector<8x32xf32>
    %432 = tpu.matmul %431, %1, %cst_109 {dimension_numbers = #tpu.dot_dimension_numbers<[1], [0], [0], [1], [0, 0, 1, 1], [], []>} : vector<8x32xf32>, vector<32x32xf32>, vector<8x32xf32> -> vector<8x32xf32>
    %433 = vector.shape_cast %431 : vector<8x32xf32> to vector<8x1x32xf32>
    %434 = vector.broadcast %433 : vector<8x1x32xf32> to vector<8x9x32xf32>
    %435 = vector.broadcast %3 : vector<1x9x32xf32> to vector<8x9x32xf32>
    %436 = arith.mulf %434, %435 : vector<8x9x32xf32>
    %cst_110 = arith.constant dense<0.000000e+00> : vector<8x9xf32>
    %437 = vector.multi_reduction <add>, %436, %cst_110 [2] : vector<8x9x32xf32> to vector<8x9xf32>
    %438 = arith.addf %437, %6 : vector<8x9xf32>
    %cst_111 = arith.constant dense<0xFF800000> : vector<8xf32>
    %439 = vector.multi_reduction <maximumf>, %438, %cst_111 [1] : vector<8x9xf32> to vector<8xf32>
    %440 = vector.shape_cast %439 : vector<8xf32> to vector<8x1xf32>
    %441 = vector.broadcast %440 : vector<8x1xf32> to vector<8x9xf32>
    %442 = arith.cmpf oeq, %438, %441 : vector<8x9xf32>
    %c9_i32_112 = arith.constant 9 : i32
    %443 = vector.broadcast %c9_i32_112 : i32 to vector<8x9xi32>
    %444 = arith.select %442, %20, %443 : vector<8x9xi1>, vector<8x9xi32>
    %cst_113 = arith.constant dense<2147483647> : vector<8xi32>
    %445 = vector.multi_reduction <minsi>, %444, %cst_113 [1] : vector<8x9xi32> to vector<8xi32>
    %446 = vector.shape_cast %445 : vector<8xi32> to vector<8x1xi32>
    %447 = vector.broadcast %446 : vector<8x1xi32> to vector<8x9xi32>
    %448 = arith.cmpi eq, %20, %447 : vector<8x9xi32>
    %449 = arith.extui %448 : vector<8x9xi1> to vector<8x9xi32>
    %450 = arith.sitofp %449 : vector<8x9xi32> to vector<8x9xf32>
    %451 = vector.shape_cast %450 : vector<8x9xf32> to vector<8x9x1xf32>
    %452 = vector.broadcast %451 : vector<8x9x1xf32> to vector<8x9x64xf32>
    %453 = arith.mulf %421, %452 : vector<8x9x64xf32>
    %cst_114 = arith.constant dense<0.000000e+00> : vector<8x64xf32>
    %454 = vector.multi_reduction <add>, %453, %cst_114 [1] : vector<8x9x64xf32> to vector<8x64xf32>
    %455 = arith.mulf %424, %450 : vector<8x9xf32>
    %cst_115 = arith.constant dense<0.000000e+00> : vector<8xf32>
    %456 = vector.multi_reduction <add>, %455, %cst_115 [1] : vector<8x9xf32> to vector<8xf32>
    %457 = vector.shape_cast %456 : vector<8xf32> to vector<8x1xf32>
    %cst_116 = arith.constant 5.000000e-01 : f32
    %458 = vector.broadcast %cst_116 : f32 to vector<8x1xf32>
    %459 = arith.cmpf ogt, %457, %458 : vector<8x1xf32>
    %c0_i32_117 = arith.constant 0 : i32
    %460 = vector.broadcast %c0_i32_117 : i32 to vector<8x1xi32>
    %461 = arith.cmpi sgt, %446, %460 : vector<8x1xi32>
    %462 = arith.andi %461, %459 : vector<8x1xi1>
    %463 = tpu.concatenate %431, %432 in 1 : vector<8x32xf32>, vector<8x32xf32> -> vector<8x64xf32>
    %464 = vector.shape_cast %462 : vector<8x1xi1> to vector<8x1xi1>
    %465 = vector.broadcast %464 : vector<8x1xi1> to vector<8x64xi1>
    %466 = arith.select %465, %454, %463 : vector<8x64xi1>, vector<8x64xf32>
    %467 = vector.extract_strided_slice %466 {offsets = [0, 0], sizes = [8, 32], strides = [1, 1]} : vector<8x64xf32> to vector<8x32xf32>
    %c56 = arith.constant 56 : index
    %c0_118 = arith.constant 0 : index
    %468 = vector.load %arg10[%c56, %c0_118] : memref<64x32xf32, #tpu.memory_space<vmem>>, vector<8x32xf32>
    tpu.vector_store %arg10[%c56, %c0_118], %467 {strides = array<i32>} : memref<64x32xf32, #tpu.memory_space<vmem>>, vector<8x32xf32>,
    %c0_119 = arith.constant 0 : index
    %c0_120 = arith.constant 0 : index
    %469 = vector.load %arg10[%c0_119, %c0_120] : memref<64x32xf32, #tpu.memory_space<vmem>>, vector<64x32xf32>
    %cst_121 = arith.constant dense<0.000000e+00> : vector<64x16xf32>
    %470 = tpu.matmul %469, %7, %cst_121 {dimension_numbers = #tpu.dot_dimension_numbers<[1], [0], [0], [1], [0, 0, 1, 1], [], []>} : vector<64x32xf32>, vector<32x16xf32>, vector<64x16xf32> -> vector<64x16xf32>
    %471 = vector.broadcast %8 : vector<1x16xf32> to vector<64x16xf32>
    %472 = arith.addf %470, %471 : vector<64x16xf32>
    %473 = vector.extract_strided_slice %472 {offsets = [0, 0], sizes = [8, 16], strides = [1, 1]} : vector<64x16xf32> to vector<8x16xf32>
    %474 = vector.extract_strided_slice %472 {offsets = [8, 0], sizes = [8, 16], strides = [1, 1]} : vector<64x16xf32> to vector<8x16xf32>
    %475 = vector.extract_strided_slice %472 {offsets = [16, 0], sizes = [8, 16], strides = [1, 1]} : vector<64x16xf32> to vector<8x16xf32>
    %476 = vector.extract_strided_slice %472 {offsets = [24, 0], sizes = [8, 16], strides = [1, 1]} : vector<64x16xf32> to vector<8x16xf32>
    %477 = vector.extract_strided_slice %472 {offsets = [32, 0], sizes = [8, 16], strides = [1, 1]} : vector<64x16xf32> to vector<8x16xf32>
    %478 = vector.extract_strided_slice %472 {offsets = [40, 0], sizes = [8, 16], strides = [1, 1]} : vector<64x16xf32> to vector<8x16xf32>
    %479 = vector.extract_strided_slice %472 {offsets = [48, 0], sizes = [8, 16], strides = [1, 1]} : vector<64x16xf32> to vector<8x16xf32>
    %480 = vector.extract_strided_slice %472 {offsets = [56, 0], sizes = [8, 16], strides = [1, 1]} : vector<64x16xf32> to vector<8x16xf32>
    %481 = tpu.concatenate %473, %474, %475, %476, %477, %478, %479, %480 in 1 : vector<8x16xf32>, vector<8x16xf32>, vector<8x16xf32>, vector<8x16xf32>, vector<8x16xf32>, vector<8x16xf32>, vector<8x16xf32>, vector<8x16xf32> -> vector<8x128xf32>
    %c0_122 = arith.constant 0 : index
    %c0_123 = arith.constant 0 : index
    %482 = vector.load %arg9[%c0_122, %c0_123] : memref<8x128xf32, #tpu.memory_space<vmem>>, vector<8x128xf32>
    tpu.vector_store %arg9[%c0_122, %c0_123], %481 {strides = array<i32>} : memref<8x128xf32, #tpu.memory_space<vmem>>, vector<8x128xf32>,
    return
  }
  func.func @transform_0(%arg0: i32) -> (i32, i32, i32) {
    %c0_i32 = arith.constant 0 : i32
    %c0_i32_0 = arith.constant 0 : i32
    %c0_i32_1 = arith.constant 0 : i32
    return %arg0, %c0_i32, %c0_i32_0 : i32, i32, i32
  }
  func.func @transform_1(%arg0: i32) -> (i32, i32) {
    %c0_i32 = arith.constant 0 : i32
    %c0_i32_0 = arith.constant 0 : i32
    %c0_i32_1 = arith.constant 0 : i32
    return %c0_i32, %c0_i32_0 : i32, i32
  }
  func.func @transform_2(%arg0: i32) -> (i32, i32) {
    %c0_i32 = arith.constant 0 : i32
    %c0_i32_0 = arith.constant 0 : i32
    %c0_i32_1 = arith.constant 0 : i32
    return %c0_i32, %c0_i32_0 : i32, i32
  }
  func.func @transform_3(%arg0: i32) -> (i32, i32) {
    %c0_i32 = arith.constant 0 : i32
    %c0_i32_0 = arith.constant 0 : i32
    %c0_i32_1 = arith.constant 0 : i32
    return %c0_i32, %c0_i32_0 : i32, i32
  }
  func.func @transform_4(%arg0: i32) -> (i32, i32) {
    %c0_i32 = arith.constant 0 : i32
    %c0_i32_0 = arith.constant 0 : i32
    %c0_i32_1 = arith.constant 0 : i32
    return %c0_i32, %c0_i32_0 : i32, i32
  }
  func.func @transform_5(%arg0: i32) -> (i32, i32) {
    %c0_i32 = arith.constant 0 : i32
    %c0_i32_0 = arith.constant 0 : i32
    %c0_i32_1 = arith.constant 0 : i32
    return %c0_i32, %c0_i32_0 : i32, i32
  }
  func.func @transform_6(%arg0: i32) -> (i32, i32) {
    %c0_i32 = arith.constant 0 : i32
    %c0_i32_0 = arith.constant 0 : i32
    %c0_i32_1 = arith.constant 0 : i32
    return %c0_i32, %c0_i32_0 : i32, i32
  }
  func.func @transform_7(%arg0: i32) -> (i32, i32) {
    %c0_i32 = arith.constant 0 : i32
    %c0_i32_0 = arith.constant 0 : i32
    %c0_i32_1 = arith.constant 0 : i32
    return %c0_i32, %c0_i32_0 : i32, i32
  }
  func.func @transform_8(%arg0: i32) -> (i32, i32) {
    %c0_i32 = arith.constant 0 : i32
    %c0_i32_0 = arith.constant 0 : i32
    return %arg0, %c0_i32 : i32, i32
  }
}

</mosaic_0001>

<llo_original>
// kernel: tpu_custom_call.1
$region0: #{tpu_custom_call.1}
  #allocation0 [shape = 'u32[]', space=smem, size = 0x4, offset = 0x4, fixed_abs, tag = 'smem constant byte address 0x4 - core index']
  #allocation1 [shape = 'u32[144,128]{1,0:T(1,128)}', space=vmem, size = 0x12000, scoped, tag = 'internal scratch']
  #allocation2 [shape = 'f32[64,32]{1,0:T(8,128)}', space=vmem, size = 0x8000, scoped, tag = 'scratch operand']
  %s0 = inlined_call_operand.hbm [shape: f32[8,8,8], index: 0, kind: input, shape index: {}]
  %s1 = inlined_call_operand.hbm [shape: f32[8,32], index: 1, kind: input, shape index: {}]
  %s2 = inlined_call_operand.vmem [shape: f32[32,32], index: 2, kind: input, shape index: {}]
  %s3 = inlined_call_operand.vmem [shape: f32[9,32], index: 3, kind: input, shape index: {}]
  %s4 = inlined_call_operand.vmem [shape: f32[1,9], index: 4, kind: input, shape index: {}]
  %s5 = inlined_call_operand.vmem [shape: f32[32,16], index: 5, kind: input, shape index: {}]
  %s6 = inlined_call_operand.vmem [shape: f32[1,16], index: 6, kind: input, shape index: {}]
  %s7 = inlined_call_operand.vmem [shape: f32[1,32], index: 7, kind: input, shape index: {}]
  %s8 = inlined_call_operand.hbm [shape: f32[8,128], index: 8, kind: output, shape index: {}]
  %s9 = sld [smem:[#allocation0]]
  $region50: #{tpu_custom_call.1} parent=0
    _
  %s11 = ssub.s32 1, %s9
  %s12 = scalar_select 0, %s11, %s9
  $region1: #{tpu_custom_call.1} parent=0
    #allocation3 [shape = 'u8[32768]{0}', space=vmem, size = 0x8000, scoped, tag = 'input window, operand 0, single buffered']
    #allocation4 [shape = 's32[1]{0}', space=sflag, size = 0x4, scoped, tag = 'scoped memory for tpu_custom_call.1']
    #allocation5 [shape = 's32[1]{0}', space=sflag, size = 0x4, scoped, tag = 'scoped memory for tpu_custom_call.1']
    #allocation6 [shape = 'u8[4096]{0}', space=vmem, size = 0x1000, scoped, tag = 'input window, operand 1, single buffered']
    #allocation7 [shape = 's32[1]{0}', space=sflag, size = 0x4, scoped, tag = 'scoped memory for tpu_custom_call.1']
    #allocation8 [shape = 'u8[4096]{0}', space=vmem, size = 0x1000, scoped, tag = 'output window, operand 0, single buffered']
    %13 = vsyncpa [#allocation4], 0
    %14 = vsyncpa [#allocation7], 0
    %15 = vsyncpa [#allocation5], 0
    // Predicated region
    $region2: #{tpu_custom_call.1} parent=1 // pred_check
      _
    $region3: #{tpu_custom_call.1} parent=1 // pred_check_branch
      %17 = sbr.rel (0) target = $region5
    $region4: #{tpu_custom_call.1} parent=1 // pred_region
      %s19 = ssub.s32 1024, 1024
      %20 = vsyncadd [#allocation4], %s19
      %s21 = sshll.u32 [#allocation3], 4
      %s22 = int_to_ptr.vmem [resolvable:$true] %s21
      %27 = dma.hbm_to_vmem [thread:$0]  %s0, 1024, %s22, [#allocation4], 128, 128, 8
    $region5: #{tpu_custom_call.1} parent=1 // pred_fallthru
      _
    // Predicated region
    $region6: #{tpu_custom_call.1} parent=1 // pred_check
      _
    $region7: #{tpu_custom_call.1} parent=1 // pred_check_branch
      %29 = sbr.rel (0) target = $region9
    $region8: #{tpu_custom_call.1} parent=1 // pred_region
      %s31 = ssub.s32 128, 128
      %32 = vsyncadd [#allocation7], %s31
      %s34 = sshll.u32 [#allocation6], 4
      %s35 = int_to_ptr.vmem [resolvable:$true] %s34
      %37 = dma.hbm_to_vmem [thread:$0]  %s1, 128, %s35, [#allocation7]
    $region9: #{tpu_custom_call.1} parent=1 // pred_fallthru
      _
    // Predicated region
    $region10: #{tpu_custom_call.1} parent=1 // pred_check
      _
    $region11: #{tpu_custom_call.1} parent=1 // pred_check_branch
      %39 = sbr.rel (0) target = $region13
    $region12: #{tpu_custom_call.1} parent=1 // pred_region
      _
    $region13: #{tpu_custom_call.1} parent=1 // pred_fallthru
      _
    // Predicated region
    $region14: #{tpu_custom_call.1} parent=1 // pred_check
      _
    $region15: #{tpu_custom_call.1} parent=1 // pred_check_branch
      %41 = sbr.rel (0) target = $region17
    $region16: #{tpu_custom_call.1} parent=1 // pred_region
      _
    $region17: #{tpu_custom_call.1} parent=1 // pred_fallthru
      _
    // Predicated region
    $region18: #{tpu_custom_call.1} parent=1 // pred_check
      _
    $region19: #{tpu_custom_call.1} parent=1 // pred_check_branch
      %43 = sbr.rel (0) target = $region21
    $region20: #{tpu_custom_call.1} parent=1 // pred_region
      _
    $region21: #{tpu_custom_call.1} parent=1 // pred_fallthru
      _
    // Predicated region
    $region22: #{tpu_custom_call.1} parent=1 // pred_check
      _
    $region23: #{tpu_custom_call.1} parent=1 // pred_check_branch
      %45 = sbr.rel (0) target = $region25
    $region24: #{tpu_custom_call.1} parent=1 // pred_region
      _
    $region25: #{tpu_custom_call.1} parent=1 // pred_fallthru
      _
    // Predicated region
    $region26: #{tpu_custom_call.1} parent=1 // pred_check
      _
    $region27: #{tpu_custom_call.1} parent=1 // pred_check_branch
      %47 = sbr.rel (0) target = $region29
    $region28: #{tpu_custom_call.1} parent=1 // pred_region
      _
    $region29: #{tpu_custom_call.1} parent=1 // pred_fallthru
      _
    // Predicated region
    $region30: #{tpu_custom_call.1} parent=1 // pred_check
      _
    $region31: #{tpu_custom_call.1} parent=1 // pred_check_branch
      %49 = sbr.rel (0) target = $region33
    $region32: #{tpu_custom_call.1} parent=1 // pred_region
      _
    $region33: #{tpu_custom_call.1} parent=1 // pred_fallthru
      _
    // Predicated region
    $region34: #{tpu_custom_call.1} parent=1 // pred_check
      _
    $region35: #{tpu_custom_call.1} parent=1 // pred_check_branch
      %51 = sbr.rel (0) target = $region37
    $region36: #{tpu_custom_call.1} parent=1 // pred_region
      %52 = dma.done [#allocation4], 1024
    $region37: #{tpu_custom_call.1} parent=1 // pred_fallthru
      _
    // Predicated region
    $region38: #{tpu_custom_call.1} parent=1 // pred_check
      _
    $region39: #{tpu_custom_call.1} parent=1 // pred_check_branch
      %54 = sbr.rel (0) target = $region41
    $region40: #{tpu_custom_call.1} parent=1 // pred_region
      %55 = dma.done [#allocation7], 128
    $region41: #{tpu_custom_call.1} parent=1 // pred_fallthru
      _
    %v56 = vld [vmem:[#allocation6] sm:$0xff]
    %v57 = vld [vmem:[%s2] sm:$0xff]
    %v58 = vld [vmem:[%s2 + $0x8] sm:$0xff]
    %v59 = vld [vmem:[%s2 + $0x10] sm:$0xff]
    %v60 = vld [vmem:[%s2 + $0x18] sm:$0xff]
    %v61 = vld [vmem:[%s3] sm:$0xff]
    %v62 = vld [vmem:[%s3 + $0x8] sm:$0x1]
    %v63 = vld [vmem:[%s4] sm:$0x1]
    %v65 = vlaneseq
    %v66 = vshrl.u32 %v65, 7
    %v67 = vsub.s32 0, %v66
    %v68 = vrot.slane %v63, %v67
    %v69 = vld [vmem:[%s5] sm:$0xff]
    %v70 = vld [vmem:[%s5 + $0x8] sm:$0xff]
    %v71 = vld [vmem:[%s5 + $0x10] sm:$0xff]
    %v72 = vld [vmem:[%s5 + $0x18] sm:$0xff]
    %v73 = vld [vmem:[%s6] sm:$0x1]
    %v74 = vld [vmem:[#allocation3] sm:$0xff]
    %v75 = vld [vmem:[#allocation3 + $0x8] sm:$0xff]
    %v76 = vld [vmem:[#allocation3 + $0x10] sm:$0xff]
    %v77 = vld [vmem:[#allocation3 + $0x18] sm:$0xff]
    %v78 = vld [vmem:[#allocation3 + $0x20] sm:$0xff]
    %v79 = vld [vmem:[#allocation3 + $0x28] sm:$0xff]
    %v80 = vld [vmem:[#allocation3 + $0x30] sm:$0xff]
    %v81 = vld [vmem:[#allocation3 + $0x38] sm:$0xff]
    %vm82 = vcmask 64512
    %v84 = vsel %vm82, %v74, 0
    %v87 = vsel %vm82, %v75, 0
    %v90 = vsel %vm82, %v76, 0
    %v93 = vsel %vm82, %v77, 0
    %v96 = vsel %vm82, %v78, 0
    %v99 = vsel %vm82, %v79, 0
    %v102 = vsel %vm82, %v80, 0
    %v105 = vsel %vm82, %v81, 0
    %107 = vmatprep.subr.mxu0 0.0
    %108 = vmatpush1.msra.mxu0 0.0
    %109 = vmatprep.subr.mxu0 0.0
    %110 = vmatpush1.msra.mxu0 0.0
    %111 = vmatprep.subr.mxu0 0.0
    %112 = vmatpush1.msra.mxu0 0.0
    %113 = vmatprep.subr.mxu0 0.0
    %114 = vmatpush1.msra.mxu0 0.0
    %115 = vmatprep.subr.mxu0 0.0
    %116 = vmatpush1.msra.mxu0 0.0
    %117 = vmatprep.subr.mxu0 0.0
    %118 = vmatpush1.msra.mxu0 0.0
    %119 = vmatprep.subr.mxu0 0.0
    %120 = vmatpush1.msra.mxu0 0.0
    %121 = vmatprep.subr.mxu0 0.0
    %122 = vmatpush1.msra.mxu0 0.0
    %123 = vmatprep.subr.mxu0 0.0
    %124 = vmatpush1.msra.mxu0 0.0
    %125 = vmatprep.subr.mxu0 0.0
    %126 = vmatpush1.msra.mxu0 0.0
    %127 = vmatprep.subr.mxu0 0.0
    %128 = vmatpush1.msra.mxu0 0.0
    %129 = vmatprep.subr.mxu0 0.0
    %130 = vmatpush1.msra.mxu0 0.0
    %131 = vmatprep.subr.mxu0 0.0
    %132 = vmatpush1.msra.mxu0 0.0
    %133 = vmatprep.subr.mxu0 0.0
    %134 = vmatpush1.msra.mxu0 0.0
    %135 = vmatprep.subr.mxu0 0.0
    %136 = vmatpush1.msra.mxu0 0.0
    %137 = vmatprep.subr.mxu0 0.0
    %138 = vmatpush1.msra.mxu0 %v56
    %139 = vmatprep.subr.mxu0 0.0
    %140 = vmatpush2.msra.mxu0 0.0
    %141 = vmatprep.subr.mxu0 0.0
    %142 = vmatpush2.msra.mxu0 0.0
    %143 = vmatprep.subr.mxu0 0.0
    %144 = vmatpush2.msra.mxu0 0.0
    %145 = vmatprep.subr.mxu0 0.0
    %146 = vmatpush2.msra.mxu0 0.0
    %147 = vmatprep.subr.mxu0 0.0
    %148 = vmatpush2.msra.mxu0 0.0
    %149 = vmatprep.subr.mxu0 0.0
    %150 = vmatpush2.msra.mxu0 0.0
    %151 = vmatprep.subr.mxu0 0.0
    %152 = vmatpush2.msra.mxu0 0.0
    %153 = vmatprep.subr.mxu0 0.0
    %154 = vmatpush2.msra.mxu0 0.0
    %155 = vmatprep.subr.mxu0 0.0
    %156 = vmatpush2.msra.mxu0 0.0
    %157 = vmatprep.subr.mxu0 0.0
    %158 = vmatpush2.msra.mxu0 0.0
    %159 = vmatprep.subr.mxu0 0.0
    %160 = vmatpush2.msra.mxu0 0.0
    %161 = vmatprep.subr.mxu0 0.0
    %162 = vmatpush2.msra.mxu0 0.0
    %163 = vmatprep.subr.mxu0 0.0
    %164 = vmatpush2.msra.mxu0 0.0
    %165 = vmatprep.subr.mxu0 0.0
    %166 = vmatpush2.msra.mxu0 0.0
    %167 = vmatprep.subr.mxu0 0.0
    %168 = vmatpush2.msra.mxu0 0.0
    %169 = vmatprep.subr.mxu0 0.0
    %170 = vmatpush2.msra.mxu0 0.0
    %171 = vmatprep.mubr.f32.mxu0 0.0
    %172 = vmatmul.mubr.f32.gmra.mxu0 %v84
    %v173 = vpop.f32.mrf.mxu0
    %v174 = vadd.f32 0.0, %v173
    %v175 = vpop.f32.mrf.mxu0
    %176 = vmatprep.mubr.f32.mxu0 0.0
    %177 = vmatmul.mubr.f32.gmra.mxu0 %v87
    %v178 = vpop.f32.mrf.mxu0
    %v179 = vadd.f32 0.0, %v178
    %v180 = vpop.f32.mrf.mxu0
    %181 = vmatprep.mubr.f32.mxu0 0.0
    %182 = vmatmul.mubr.f32.gmra.mxu0 %v90
    %v183 = vpop.f32.mrf.mxu0
    %v184 = vadd.f32 0.0, %v183
    %v185 = vpop.f32.mrf.mxu0
    %186 = vmatprep.mubr.f32.mxu0 0.0
    %187 = vmatmul.mubr.f32.gmra.mxu0 %v93
    %v188 = vpop.f32.mrf.mxu0
    %v189 = vadd.f32 0.0, %v188
    %v190 = vpop.f32.mrf.mxu0
    %191 = vmatprep.mubr.f32.mxu0 0.0
    %192 = vmatmul.mubr.f32.gmra.mxu0 %v96
    %v193 = vpop.f32.mrf.mxu0
    %v194 = vadd.f32 0.0, %v193
    %v195 = vpop.f32.mrf.mxu0
    %196 = vmatprep.mubr.f32.mxu0 0.0
    %197 = vmatmul.mubr.f32.gmra.mxu0 %v99
    %v198 = vpop.f32.mrf.mxu0
    %v199 = vadd.f32 0.0, %v198
    %v200 = vpop.f32.mrf.mxu0
    %201 = vmatprep.mubr.f32.mxu0 0.0
    %202 = vmatmul.mubr.f32.gmra.mxu0 %v102
    %v203 = vpop.f32.mrf.mxu0
    %v204 = vadd.f32 0.0, %v203
    %v205 = vpop.f32.mrf.mxu0
    %206 = vmatprep.mubr.f32.mxu0 0.0
    %207 = vmatmul.mubr.f32.gmra.mxu0 %v105
    %v208 = vpop.f32.mrf.mxu0
    %v209 = vadd.f32 0.0, %v208
    %v210 = vpop.f32.mrf.mxu0
    %211 = vdwg.mxu0
    %v212 = vld [vmem:[%s7] sm:$0x1]
    %v214 = vlaneseq
    %v215 = vshrl.u32 %v214, 7
    %v216 = vsub.s32 0, %v215
    %v217 = vrot.slane %v212, %v216
    %vm219 = vcmask 261120
    %v220 = vsel %vm219, %v217, 0
    %222 = vmatprep.subr.mxu0 0.0
    %223 = vmatpush1.msra.mxu0 0.0
    %224 = vmatprep.subr.mxu0 0.0
    %225 = vmatpush1.msra.mxu0 0.0
    %226 = vmatprep.subr.mxu0 0.0
    %227 = vmatpush1.msra.mxu0 0.0
    %228 = vmatprep.subr.mxu0 0.0
    %229 = vmatpush1.msra.mxu0 0.0
    %230 = vmatprep.subr.mxu0 0.0
    %231 = vmatpush1.msra.mxu0 0.0
    %232 = vmatprep.subr.mxu0 0.0
    %233 = vmatpush1.msra.mxu0 0.0
    %234 = vmatprep.subr.mxu0 0.0
    %235 = vmatpush1.msra.mxu0 0.0
    %236 = vmatprep.subr.mxu0 0.0
    %237 = vmatpush1.msra.mxu0 0.0
    %238 = vmatprep.subr.mxu0 0.0
    %239 = vmatpush1.msra.mxu0 0.0
    %240 = vmatprep.subr.mxu0 0.0
    %241 = vmatpush1.msra.mxu0 0.0
    %242 = vmatprep.subr.mxu0 0.0
    %243 = vmatpush1.msra.mxu0 0.0
    %244 = vmatprep.subr.mxu0 0.0
    %245 = vmatpush1.msra.mxu0 0.0
    %246 = vmatprep.subr.mxu0 0.0
    %247 = vmatpush1.msra.mxu0 %v60
    %248 = vmatprep.subr.mxu0 0.0
    %249 = vmatpush1.msra.mxu0 %v59
    %250 = vmatprep.subr.mxu0 0.0
    %251 = vmatpush1.msra.mxu0 %v58
    %252 = vmatprep.subr.mxu0 0.0
    %253 = vmatpush1.msra.mxu0 %v57
    %254 = vmatprep.subr.mxu0 0.0
    %255 = vmatpush2.msra.mxu0 0.0
    %256 = vmatprep.subr.mxu0 0.0
    %257 = vmatpush2.msra.mxu0 0.0
    %258 = vmatprep.subr.mxu0 0.0
    %259 = vmatpush2.msra.mxu0 0.0
    %260 = vmatprep.subr.mxu0 0.0
    %261 = vmatpush2.msra.mxu0 0.0
    %262 = vmatprep.subr.mxu0 0.0
    %263 = vmatpush2.msra.mxu0 0.0
    %264 = vmatprep.subr.mxu0 0.0
    %265 = vmatpush2.msra.mxu0 0.0
    %266 = vmatprep.subr.mxu0 0.0
    %267 = vmatpush2.msra.mxu0 0.0
    %268 = vmatprep.subr.mxu0 0.0
    %269 = vmatpush2.msra.mxu0 0.0
    %270 = vmatprep.subr.mxu0 0.0
    %271 = vmatpush2.msra.mxu0 0.0
    %272 = vmatprep.subr.mxu0 0.0
    %273 = vmatpush2.msra.mxu0 0.0
    %274 = vmatprep.subr.mxu0 0.0
    %275 = vmatpush2.msra.mxu0 0.0
    %276 = vmatprep.subr.mxu0 0.0
    %277 = vmatpush2.msra.mxu0 0.0
    %278 = vmatprep.subr.mxu0 0.0
    %279 = vmatpush2.msra.mxu0 0.0
    %280 = vmatprep.subr.mxu0 0.0
    %281 = vmatpush2.msra.mxu0 0.0
    %282 = vmatprep.subr.mxu0 0.0
    %283 = vmatpush2.msra.mxu0 0.0
    %284 = vmatprep.subr.mxu0 0.0
    %285 = vmatpush2.msra.mxu0 0.0
    %286 = vmatprep.mubr.f32.mxu0 0.0
    %287 = vmatmul.mubr.f32.gmra.mxu0 %v220
    %v288 = vpop.f32.mrf.mxu0
    %v289 = vadd.f32 0.0, %v288
    %v290 = vpop.f32.mrf.mxu0
    %291 = vdwg.mxu0
    %293 = vrot.lane.b32.xlu0 %v289, 32
    %v294 = vpop.permute.xlu0 %293
    %v296 = vsel %vm219, %v217, %v294
    %v297 = vlaneseq
    %v298 = vand.u32 %v297, 127
    %v300 = vrot.slane %v296, 1
    %v301 = vrot.slane %v296, 2
    %v302 = vrot.slane %v296, 3
    %v303 = vrot.slane %v296, 4
    %v304 = vrot.slane %v296, 5
    %v305 = vrot.slane %v296, 6
    %v306 = vrot.slane %v296, 7
    %307 = vrot.lane.b32.xlu0 %v296, 96
    %v308 = vpop.permute.xlu0 %307
    %309 = vrot.lane.b32.xlu0 %v300, 96
    %v310 = vpop.permute.xlu0 %309
    %311 = vrot.lane.b32.xlu0 %v301, 96
    %v312 = vpop.permute.xlu0 %311
    %313 = vrot.lane.b32.xlu0 %v302, 96
    %v314 = vpop.permute.xlu0 %313
    %315 = vrot.lane.b32.xlu0 %v303, 96
    %v316 = vpop.permute.xlu0 %315
    %317 = vrot.lane.b32.xlu0 %v304, 96
    %v318 = vpop.permute.xlu0 %317
    %319 = vrot.lane.b32.xlu0 %v305, 96
    %v320 = vpop.permute.xlu0 %319
    %321 = vrot.lane.b32.xlu0 %v306, 96
    %v322 = vpop.permute.xlu0 %321
    %v331 = vadd.f32 %v174, %v308
    %v332 = vadd.f32 %v179, %v310
    %v333 = vadd.f32 %v184, %v312
    %v334 = vadd.f32 %v189, %v314
    %v335 = vadd.f32 %v194, %v316
    %v336 = vadd.f32 %v199, %v318
    %v337 = vadd.f32 %v204, %v320
    %v338 = vadd.f32 %v209, %v322
    %v339 = vtanh.pop %v331
    %v340 = vtanh.pop %v332
    %v341 = vtanh.pop %v333
    %v342 = vtanh.pop %v334
    %v343 = vtanh.pop %v335
    %v344 = vtanh.pop %v336
    %v345 = vtanh.pop %v337
    %v346 = vtanh.pop %v338
    %v355 = vrot.slane %v340, 7
    %vm356 = vcmask 1041409
    %v357 = vsel %vm356, %v355, %v339
    %v358 = vrot.slane %v341, 6
    %vm359 = vcmask 1042434
    %v360 = vsel %vm359, %v358, %v357
    %v361 = vrot.slane %v342, 5
    %vm362 = vcmask 1043459
    %v363 = vsel %vm362, %v361, %v360
    %v364 = vrot.slane %v343, 4
    %vm365 = vcmask 1044484
    %v366 = vsel %vm365, %v364, %v363
    %v367 = vrot.slane %v344, 3
    %vm368 = vcmask 1045509
    %v369 = vsel %vm368, %v367, %v366
    %v370 = vrot.slane %v345, 2
    %vm371 = vcmask 1046534
    %v372 = vsel %vm371, %v370, %v369
    %v373 = vrot.slane %v346, 1
    %vm374 = vcmask 1047559
    %v375 = vsel %vm374, %v373, %v372
    %v376 = vsel %vm219, %v375, 0
    %378 = vmatprep.subr.mxu0 0.0
    %379 = vmatpush1.msra.mxu0 0.0
    %380 = vmatprep.subr.mxu0 0.0
    %381 = vmatpush1.msra.mxu0 0.0
    %382 = vmatprep.subr.mxu0 0.0
    %383 = vmatpush1.msra.mxu0 0.0
    %384 = vmatprep.subr.mxu0 0.0
    %385 = vmatpush1.msra.mxu0 0.0
    %386 = vmatprep.subr.mxu0 0.0
    %387 = vmatpush1.msra.mxu0 0.0
    %388 = vmatprep.subr.mxu0 0.0
    %389 = vmatpush1.msra.mxu0 0.0
    %390 = vmatprep.subr.mxu0 0.0
    %391 = vmatpush1.msra.mxu0 0.0
    %392 = vmatprep.subr.mxu0 0.0
    %393 = vmatpush1.msra.mxu0 0.0
    %394 = vmatprep.subr.mxu0 0.0
    %395 = vmatpush1.msra.mxu0 0.0
    %396 = vmatprep.subr.mxu0 0.0
    %397 = vmatpush1.msra.mxu0 0.0
    %398 = vmatprep.subr.mxu0 0.0
    %399 = vmatpush1.msra.mxu0 0.0
    %400 = vmatprep.subr.mxu0 0.0
    %401 = vmatpush1.msra.mxu0 0.0
    %402 = vmatprep.subr.mxu0 0.0
    %403 = vmatpush1.msra.mxu0 %v60
    %404 = vmatprep.subr.mxu0 0.0
    %405 = vmatpush1.msra.mxu0 %v59
    %406 = vmatprep.subr.mxu0 0.0
    %407 = vmatpush1.msra.mxu0 %v58
    %408 = vmatprep.subr.mxu0 0.0
    %409 = vmatpush1.msra.mxu0 %v57
    %410 = vmatprep.subr.mxu0 0.0
    %411 = vmatpush2.msra.mxu0 0.0
    %412 = vmatprep.subr.mxu0 0.0
    %413 = vmatpush2.msra.mxu0 0.0
    %414 = vmatprep.subr.mxu0 0.0
    %415 = vmatpush2.msra.mxu0 0.0
    %416 = vmatprep.subr.mxu0 0.0
    %417 = vmatpush2.msra.mxu0 0.0
    %418 = vmatprep.subr.mxu0 0.0
    %419 = vmatpush2.msra.mxu0 0.0
    %420 = vmatprep.subr.mxu0 0.0
    %421 = vmatpush2.msra.mxu0 0.0
    %422 = vmatprep.subr.mxu0 0.0
    %423 = vmatpush2.msra.mxu0 0.0
    %424 = vmatprep.subr.mxu0 0.0
    %425 = vmatpush2.msra.mxu0 0.0
    %426 = vmatprep.subr.mxu0 0.0
    %427 = vmatpush2.msra.mxu0 0.0
    %428 = vmatprep.subr.mxu0 0.0
    %429 = vmatpush2.msra.mxu0 0.0
    %430 = vmatprep.subr.mxu0 0.0
    %431 = vmatpush2.msra.mxu0 0.0
    %432 = vmatprep.subr.mxu0 0.0
    %433 = vmatpush2.msra.mxu0 0.0
    %434 = vmatprep.subr.mxu0 0.0
    %435 = vmatpush2.msra.mxu0 0.0
    %436 = vmatprep.subr.mxu0 0.0
    %437 = vmatpush2.msra.mxu0 0.0
    %438 = vmatprep.subr.mxu0 0.0
    %439 = vmatpush2.msra.mxu0 0.0
    %440 = vmatprep.subr.mxu0 0.0
    %441 = vmatpush2.msra.mxu0 0.0
    %442 = vmatprep.mubr.f32.mxu0 0.0
    %443 = vmatmul.mubr.f32.gmra.mxu0 %v376
    %v444 = vpop.f32.mrf.mxu0
    %v445 = vadd.f32 0.0, %v444
    %v446 = vpop.f32.mrf.mxu0
    %447 = vdwg.mxu0
    %v448 = vlaneseq
    %v449 = vshrl.u32 %v448, 7
    %v450 = vsub.s32 0, %v449
    %v451 = vrot.slane %v339, %v450
    %v452 = vlaneseq
    %v453 = vshrl.u32 %v452, 7
    %v454 = vsub.s32 0, %v453
    %v455 = vrot.slane %v340, %v454
    %v456 = vlaneseq
    %v457 = vshrl.u32 %v456, 7
    %v458 = vsub.s32 0, %v457
    %v459 = vrot.slane %v341, %v458
    %v460 = vlaneseq
    %v461 = vshrl.u32 %v460, 7
    %v462 = vsub.s32 0, %v461
    %v463 = vrot.slane %v342, %v462
    %v464 = vlaneseq
    %v465 = vshrl.u32 %v464, 7
    %v466 = vsub.s32 0, %v465
    %v467 = vrot.slane %v343, %v466
    %v468 = vlaneseq
    %v469 = vshrl.u32 %v468, 7
    %v470 = vsub.s32 0, %v469
    %v471 = vrot.slane %v344, %v470
    %v472 = vlaneseq
    %v473 = vshrl.u32 %v472, 7
    %v474 = vsub.s32 0, %v473
    %v475 = vrot.slane %v345, %v474
    %v476 = vlaneseq
    %v477 = vshrl.u32 %v476, 7
    %v478 = vsub.s32 0, %v477
    %v479 = vrot.slane %v346, %v478
    %v480 = vmul.f32 %v451, %v61
    %v481 = vmul.f32 %v451, %v62
    %v482 = vmul.f32 %v455, %v61
    %v483 = vmul.f32 %v455, %v62
    %v484 = vmul.f32 %v459, %v61
    %v485 = vmul.f32 %v459, %v62
    %v486 = vmul.f32 %v463, %v61
    %v487 = vmul.f32 %v463, %v62
    %v488 = vmul.f32 %v467, %v61
    %v489 = vmul.f32 %v467, %v62
    %v490 = vmul.f32 %v471, %v61
    %v491 = vmul.f32 %v471, %v62
    %v492 = vmul.f32 %v475, %v61
    %v493 = vmul.f32 %v475, %v62
    %v494 = vmul.f32 %v479, %v61
    %v495 = vmul.f32 %v479, %v62
    %v496 = vsel %vm219, %v480, 0.0
    %497 = vadd.xlane.f32.xlu0 %v496
    %v498 = vpop.xlane.xlu0 %497
    %vm499 = vcmask 253952
    %v500 = vsel %vm499, %v481, 0.0
    %501 = vadd.xlane.f32.xlu0 %v500
    %v502 = vpop.xlane.xlu0 %501
    %v503 = vsel %vm219, %v482, 0.0
    %504 = vadd.xlane.f32.xlu0 %v503
    %v505 = vpop.xlane.xlu0 %504
    %v506 = vsel %vm499, %v483, 0.0
    %507 = vadd.xlane.f32.xlu0 %v506
    %v508 = vpop.xlane.xlu0 %507
    %v509 = vsel %vm219, %v484, 0.0
    %510 = vadd.xlane.f32.xlu0 %v509
    %v511 = vpop.xlane.xlu0 %510
    %v512 = vsel %vm499, %v485, 0.0
    %513 = vadd.xlane.f32.xlu0 %v512
    %v514 = vpop.xlane.xlu0 %513
    %v515 = vsel %vm219, %v486, 0.0
    %516 = vadd.xlane.f32.xlu0 %v515
    %v517 = vpop.xlane.xlu0 %516
    %v518 = vsel %vm499, %v487, 0.0
    %519 = vadd.xlane.f32.xlu0 %v518
    %v520 = vpop.xlane.xlu0 %519
    %v521 = vsel %vm219, %v488, 0.0
    %522 = vadd.xlane.f32.xlu0 %v521
    %v523 = vpop.xlane.xlu0 %522
    %v524 = vsel %vm499, %v489, 0.0
    %525 = vadd.xlane.f32.xlu0 %v524
    %v526 = vpop.xlane.xlu0 %525
    %v527 = vsel %vm219, %v490, 0.0
    %528 = vadd.xlane.f32.xlu0 %v527
    %v529 = vpop.xlane.xlu0 %528
    %v530 = vsel %vm499, %v491, 0.0
    %531 = vadd.xlane.f32.xlu0 %v530
    %v532 = vpop.xlane.xlu0 %531
    %v533 = vsel %vm219, %v492, 0.0
    %534 = vadd.xlane.f32.xlu0 %v533
    %v535 = vpop.xlane.xlu0 %534
    %v536 = vsel %vm499, %v493, 0.0
    %537 = vadd.xlane.f32.xlu0 %v536
    %v538 = vpop.xlane.xlu0 %537
    %v539 = vsel %vm219, %v494, 0.0
    %540 = vadd.xlane.f32.xlu0 %v539
    %v541 = vpop.xlane.xlu0 %540
    %v542 = vsel %vm499, %v495, 0.0
    %543 = vadd.xlane.f32.xlu0 %v542
    %v544 = vpop.xlane.xlu0 %543
    %546 = vbcast.lane.b32.xlu0 %v68, 256
    %v547 = vpop.permute.xlu0 %546
    %s549 = sor.u32 256, 8
    %550 = vbcast.lane.b32.xlu0 %v68, %s549
    %v551 = vpop.permute.xlu0 %550
    %v554 = vadd.f32 %v498, %v547
    %v555 = vadd.f32 %v502, %v551
    %v556 = vadd.f32 %v505, %v547
    %v557 = vadd.f32 %v508, %v551
    %v558 = vadd.f32 %v511, %v547
    %v559 = vadd.f32 %v514, %v551
    %v560 = vadd.f32 %v517, %v547
    %v561 = vadd.f32 %v520, %v551
    %v562 = vadd.f32 %v523, %v547
    %v563 = vadd.f32 %v526, %v551
    %v564 = vadd.f32 %v529, %v547
    %v565 = vadd.f32 %v532, %v551
    %v566 = vadd.f32 %v535, %v547
    %v567 = vadd.f32 %v538, %v551
    %v568 = vadd.f32 %v541, %v547
    %v569 = vadd.f32 %v544, %v551
    %586 = vset.pattern.permute.xlu0 0
    %587 = vperm.xlu0 %586, %v554
    %v588 = vpop.permute.xlu0 %587
    %589 = vset.pattern.permute.xlu0 0
    %590 = vperm.xlu0 %589, %v555
    %v591 = vpop.permute.xlu0 %590
    %592 = vset.pattern.permute.xlu0 0
    %593 = vperm.xlu0 %592, %v556
    %v594 = vpop.permute.xlu0 %593
    %595 = vset.pattern.permute.xlu0 0
    %596 = vperm.xlu0 %595, %v557
    %v597 = vpop.permute.xlu0 %596
    %598 = vset.pattern.permute.xlu0 0
    %599 = vperm.xlu0 %598, %v558
    %v600 = vpop.permute.xlu0 %599
    %601 = vset.pattern.permute.xlu0 0
    %602 = vperm.xlu0 %601, %v559
    %v603 = vpop.permute.xlu0 %602
    %604 = vset.pattern.permute.xlu0 0
    %605 = vperm.xlu0 %604, %v560
    %v606 = vpop.permute.xlu0 %605
    %607 = vset.pattern.permute.xlu0 0
    %608 = vperm.xlu0 %607, %v561
    %v609 = vpop.permute.xlu0 %608
    %610 = vset.pattern.permute.xlu0 0
    %611 = vperm.xlu0 %610, %v562
    %v612 = vpop.permute.xlu0 %611
    %613 = vset.pattern.permute.xlu0 0
    %614 = vperm.xlu0 %613, %v563
    %v615 = vpop.permute.xlu0 %614
    %616 = vset.pattern.permute.xlu0 0
    %617 = vperm.xlu0 %616, %v564
    %v618 = vpop.permute.xlu0 %617
    %619 = vset.pattern.permute.xlu0 0
    %620 = vperm.xlu0 %619, %v565
    %v621 = vpop.permute.xlu0 %620
    %622 = vset.pattern.permute.xlu0 0
    %623 = vperm.xlu0 %622, %v566
    %v624 = vpop.permute.xlu0 %623
    %625 = vset.pattern.permute.xlu0 0
    %626 = vperm.xlu0 %625, %v567
    %v627 = vpop.permute.xlu0 %626
    %628 = vset.pattern.permute.xlu0 0
    %629 = vperm.xlu0 %628, %v568
    %v630 = vpop.permute.xlu0 %629
    %631 = vset.pattern.permute.xlu0 0
    %632 = vperm.xlu0 %631, %v569
    %v633 = vpop.permute.xlu0 %632
    %v634 = vlaneseq
    %v635 = vshrl.u32 %v634, 7
    %v636 = vsub.s32 %v298, %v635
    %v637 = vrot.slane %v588, %v636
    %v638 = vadd.s32 %v298, 4294967288
    %v639 = vlaneseq
    %v640 = vshrl.u32 %v639, 7
    %v641 = vsub.s32 %v638, %v640
    %v642 = vrot.slane %v591, %v641
    %vm643 = vcmask 130112
    %v644 = vsel %vm643, %v642, %v637
    %v645 = vlaneseq
    %v646 = vshrl.u32 %v645, 7
    %v647 = vsub.s32 %v298, %v646
    %v648 = vrot.slane %v594, %v647
    %v649 = vlaneseq
    %v650 = vshrl.u32 %v649, 7
    %v651 = vsub.s32 %v638, %v650
    %v652 = vrot.slane %v597, %v651
    %v653 = vsel %vm643, %v652, %v648
    %v654 = vlaneseq
    %v655 = vshrl.u32 %v654, 7
    %v656 = vsub.s32 %v298, %v655
    %v657 = vrot.slane %v600, %v656
    %v658 = vlaneseq
    %v659 = vshrl.u32 %v658, 7
    %v660 = vsub.s32 %v638, %v659
    %v661 = vrot.slane %v603, %v660
    %v662 = vsel %vm643, %v661, %v657
    %v663 = vlaneseq
    %v664 = vshrl.u32 %v663, 7
    %v665 = vsub.s32 %v298, %v664
    %v666 = vrot.slane %v606, %v665
    %v667 = vlaneseq
    %v668 = vshrl.u32 %v667, 7
    %v669 = vsub.s32 %v638, %v668
    %v670 = vrot.slane %v609, %v669
    %v671 = vsel %vm643, %v670, %v666
    %v672 = vlaneseq
    %v673 = vshrl.u32 %v672, 7
    %v674 = vsub.s32 %v298, %v673
    %v675 = vrot.slane %v612, %v674
    %v676 = vlaneseq
    %v677 = vshrl.u32 %v676, 7
    %v678 = vsub.s32 %v638, %v677
    %v679 = vrot.slane %v615, %v678
    %v680 = vsel %vm643, %v679, %v675
    %v681 = vlaneseq
    %v682 = vshrl.u32 %v681, 7
    %v683 = vsub.s32 %v298, %v682
    %v684 = vrot.slane %v618, %v683
    %v685 = vlaneseq
    %v686 = vshrl.u32 %v685, 7
    %v687 = vsub.s32 %v638, %v686
    %v688 = vrot.slane %v621, %v687
    %v689 = vsel %vm643, %v688, %v684
    %v690 = vlaneseq
    %v691 = vshrl.u32 %v690, 7
    %v692 = vsub.s32 %v298, %v691
    %v693 = vrot.slane %v624, %v692
    %v694 = vlaneseq
    %v695 = vshrl.u32 %v694, 7
    %v696 = vsub.s32 %v638, %v695
    %v697 = vrot.slane %v627, %v696
    %v698 = vsel %vm643, %v697, %v693
    %v699 = vlaneseq
    %v700 = vshrl.u32 %v699, 7
    %v701 = vsub.s32 %v298, %v700
    %v702 = vrot.slane %v630, %v701
    %v703 = vlaneseq
    %v704 = vshrl.u32 %v703, 7
    %v705 = vsub.s32 %v638, %v704
    %v706 = vrot.slane %v633, %v705
    %v707 = vsel %vm643, %v706, %v702
    %v708 = vsel %vm356, %v653, %v644
    %v709 = vsel %vm359, %v662, %v708
    %v710 = vsel %vm362, %v671, %v709
    %v711 = vsel %vm365, %v680, %v710
    %v712 = vsel %vm368, %v689, %v711
    %v713 = vsel %vm371, %v698, %v712
    %v714 = vsel %vm374, %v707, %v713
    %vm716 = vcmask 72704
    %v717 = vsel %vm716, %v714, -inf
    %718 = vmax.xlane.f32.xlu0 %v717
    %v719 = vpop.xlane.xlu0 %718
    %v721 = vlaneseq
    %v722 = vshrl.u32 %v721, 7
    %v723 = vsub.s32 0, %v722
    %v724 = vrot.slane %v719, %v723
    %v725 = vlaneseq
    %v726 = vshrl.u32 %v725, 7
    %v727 = vsub.s32 1, %v726
    %v728 = vrot.slane %v719, %v727
    %v729 = vlaneseq
    %v730 = vshrl.u32 %v729, 7
    %v731 = vsub.s32 2, %v730
    %v732 = vrot.slane %v719, %v731
    %v733 = vlaneseq
    %v734 = vshrl.u32 %v733, 7
    %v735 = vsub.s32 3, %v734
    %v736 = vrot.slane %v719, %v735
    %v737 = vlaneseq
    %v738 = vshrl.u32 %v737, 7
    %v739 = vsub.s32 4, %v738
    %v740 = vrot.slane %v719, %v739
    %v741 = vlaneseq
    %v742 = vshrl.u32 %v741, 7
    %v743 = vsub.s32 5, %v742
    %v744 = vrot.slane %v719, %v743
    %v745 = vlaneseq
    %v746 = vshrl.u32 %v745, 7
    %v747 = vsub.s32 6, %v746
    %v748 = vrot.slane %v719, %v747
    %v749 = vlaneseq
    %v750 = vshrl.u32 %v749, 7
    %v751 = vsub.s32 7, %v750
    %v752 = vrot.slane %v719, %v751
    %vm761 = vcmp.eq.f32.partialorder %v554, %v724
    %vm762 = vcmp.eq.f32.partialorder %v555, %v724
    %vm763 = vcmp.eq.f32.partialorder %v556, %v728
    %vm764 = vcmp.eq.f32.partialorder %v557, %v728
    %vm765 = vcmp.eq.f32.partialorder %v558, %v732
    %vm766 = vcmp.eq.f32.partialorder %v559, %v732
    %vm767 = vcmp.eq.f32.partialorder %v560, %v736
    %vm768 = vcmp.eq.f32.partialorder %v561, %v736
    %vm769 = vcmp.eq.f32.partialorder %v562, %v740
    %vm770 = vcmp.eq.f32.partialorder %v563, %v740
    %vm771 = vcmp.eq.f32.partialorder %v564, %v744
    %vm772 = vcmp.eq.f32.partialorder %v565, %v744
    %vm773 = vcmp.eq.f32.partialorder %v566, %v748
    %vm774 = vcmp.eq.f32.partialorder %v567, %v748
    %vm775 = vcmp.eq.f32.partialorder %v568, %v752
    %vm776 = vcmp.eq.f32.partialorder %v569, %v752
    %778 = vbcast.lane.b32.xlu0 %v298, 256
    %v779 = vpop.permute.xlu0 %778
    %s781 = sor.u32 256, 8
    %782 = vbcast.lane.b32.xlu0 %v298, %s781
    %v783 = vpop.permute.xlu0 %782
    %v784 = vsel %vm761, %v779, 9
    %v785 = vsel %vm762, %v783, 9
    %v786 = vsel %vm763, %v779, 9
    %v787 = vsel %vm764, %v783, 9
    %v788 = vsel %vm765, %v779, 9
    %v789 = vsel %vm766, %v783, 9
    %v790 = vsel %vm767, %v779, 9
    %v791 = vsel %vm768, %v783, 9
    %v792 = vsel %vm769, %v779, 9
    %v793 = vsel %vm770, %v783, 9
    %v794 = vsel %vm771, %v779, 9
    %v795 = vsel %vm772, %v783, 9
    %v796 = vsel %vm773, %v779, 9
    %v797 = vsel %vm774, %v783, 9
    %v798 = vsel %vm775, %v779, 9
    %v799 = vsel %vm776, %v783, 9
    %800 = vset.pattern.permute.xlu0 0
    %801 = vperm.xlu0 %800, %v784
    %v802 = vpop.permute.xlu0 %801
    %803 = vset.pattern.permute.xlu0 0
    %804 = vperm.xlu0 %803, %v785
    %v805 = vpop.permute.xlu0 %804
    %806 = vset.pattern.permute.xlu0 0
    %807 = vperm.xlu0 %806, %v786
    %v808 = vpop.permute.xlu0 %807
    %809 = vset.pattern.permute.xlu0 0
    %810 = vperm.xlu0 %809, %v787
    %v811 = vpop.permute.xlu0 %810
    %812 = vset.pattern.permute.xlu0 0
    %813 = vperm.xlu0 %812, %v788
    %v814 = vpop.permute.xlu0 %813
    %815 = vset.pattern.permute.xlu0 0
    %816 = vperm.xlu0 %815, %v789
    %v817 = vpop.permute.xlu0 %816
    %818 = vset.pattern.permute.xlu0 0
    %819 = vperm.xlu0 %818, %v790
    %v820 = vpop.permute.xlu0 %819
    %821 = vset.pattern.permute.xlu0 0
    %822 = vperm.xlu0 %821, %v791
    %v823 = vpop.permute.xlu0 %822
    %824 = vset.pattern.permute.xlu0 0
    %825 = vperm.xlu0 %824, %v792
    %v826 = vpop.permute.xlu0 %825
    %827 = vset.pattern.permute.xlu0 0
    %828 = vperm.xlu0 %827, %v793
    %v829 = vpop.permute.xlu0 %828
    %830 = vset.pattern.permute.xlu0 0
    %831 = vperm.xlu0 %830, %v794
    %v832 = vpop.permute.xlu0 %831
    %833 = vset.pattern.permute.xlu0 0
    %834 = vperm.xlu0 %833, %v795
    %v835 = vpop.permute.xlu0 %834
    %836 = vset.pattern.permute.xlu0 0
    %837 = vperm.xlu0 %836, %v796
    %v838 = vpop.permute.xlu0 %837
    %839 = vset.pattern.permute.xlu0 0
    %840 = vperm.xlu0 %839, %v797
    %v841 = vpop.permute.xlu0 %840
    %842 = vset.pattern.permute.xlu0 0
    %843 = vperm.xlu0 %842, %v798
    %v844 = vpop.permute.xlu0 %843
    %845 = vset.pattern.permute.xlu0 0
    %846 = vperm.xlu0 %845, %v799
    %v847 = vpop.permute.xlu0 %846
    %v848 = vlaneseq
    %v849 = vshrl.u32 %v848, 7
    %v850 = vsub.s32 %v298, %v849
    %v851 = vrot.slane %v802, %v850
    %v852 = vlaneseq
    %v853 = vshrl.u32 %v852, 7
    %v854 = vsub.s32 %v638, %v853
    %v855 = vrot.slane %v805, %v854
    %v856 = vsel %vm643, %v855, %v851
    %v857 = vlaneseq
    %v858 = vshrl.u32 %v857, 7
    %v859 = vsub.s32 %v298, %v858
    %v860 = vrot.slane %v808, %v859
    %v861 = vlaneseq
    %v862 = vshrl.u32 %v861, 7
    %v863 = vsub.s32 %v638, %v862
    %v864 = vrot.slane %v811, %v863
    %v865 = vsel %vm643, %v864, %v860
    %v866 = vlaneseq
    %v867 = vshrl.u32 %v866, 7
    %v868 = vsub.s32 %v298, %v867
    %v869 = vrot.slane %v814, %v868
    %v870 = vlaneseq
    %v871 = vshrl.u32 %v870, 7
    %v872 = vsub.s32 %v638, %v871
    %v873 = vrot.slane %v817, %v872
    %v874 = vsel %vm643, %v873, %v869
    %v875 = vlaneseq
    %v876 = vshrl.u32 %v875, 7
    %v877 = vsub.s32 %v298, %v876
    %v878 = vrot.slane %v820, %v877
    %v879 = vlaneseq
    %v880 = vshrl.u32 %v879, 7
    %v881 = vsub.s32 %v638, %v880
    %v882 = vrot.slane %v823, %v881
    %v883 = vsel %vm643, %v882, %v878
    %v884 = vlaneseq
    %v885 = vshrl.u32 %v884, 7
    %v886 = vsub.s32 %v298, %v885
    %v887 = vrot.slane %v826, %v886
    %v888 = vlaneseq
    %v889 = vshrl.u32 %v888, 7
    %v890 = vsub.s32 %v638, %v889
    %v891 = vrot.slane %v829, %v890
    %v892 = vsel %vm643, %v891, %v887
    %v893 = vlaneseq
    %v894 = vshrl.u32 %v893, 7
    %v895 = vsub.s32 %v298, %v894
    %v896 = vrot.slane %v832, %v895
    %v897 = vlaneseq
    %v898 = vshrl.u32 %v897, 7
    %v899 = vsub.s32 %v638, %v898
    %v900 = vrot.slane %v835, %v899
    %v901 = vsel %vm643, %v900, %v896
    %v902 = vlaneseq
    %v903 = vshrl.u32 %v902, 7
    %v904 = vsub.s32 %v298, %v903
    %v905 = vrot.slane %v838, %v904
    %v906 = vlaneseq
    %v907 = vshrl.u32 %v906, 7
    %v908 = vsub.s32 %v638, %v907
    %v909 = vrot.slane %v841, %v908
    %v910 = vsel %vm643, %v909, %v905
    %v911 = vlaneseq
    %v912 = vshrl.u32 %v911, 7
    %v913 = vsub.s32 %v298, %v912
    %v914 = vrot.slane %v844, %v913
    %v915 = vlaneseq
    %v916 = vshrl.u32 %v915, 7
    %v917 = vsub.s32 %v638, %v916
    %v918 = vrot.slane %v847, %v917
    %v919 = vsel %vm643, %v918, %v914
    %v920 = vsel %vm356, %v865, %v856
    %v921 = vsel %vm359, %v874, %v920
    %v922 = vsel %vm362, %v883, %v921
    %v923 = vsel %vm365, %v892, %v922
    %v924 = vsel %vm368, %v901, %v923
    %v925 = vsel %vm371, %v910, %v924
    %v926 = vsel %vm374, %v919, %v925
    %v927 = vsel %vm716, %v926, 2147483647
    %v928 = vand.u32 %v927, 65535
    %v929 = vshra.s32 %v927, 16
    %v930 = vcvt.s32.f32 %v928
    %v931 = vcvt.s32.f32 %v929
    %932 = vmin.xlane.f32.xlu0 %v931
    %v933 = vpop.xlane.xlu0 %932
    %vm934 = vcmp.eq.f32.partialorder %v931, %v933
    %v935 = vsel %vm934, %v930, inf
    %936 = vmin.xlane.f32.xlu0 %v935
    %v937 = vpop.xlane.xlu0 %936
    %v938 = vcvt.f32.s32 %v937
    %v939 = vcvt.f32.s32 %v933
    %v940 = vshll.u32 %v939, 16
    %v941 = vadd.s32 %v940, %v938
    %vm942 = vcmp.eq.s32.totalorder %v298, %v941
    %v943 = vsel %vm942, 1, 0
    %v944 = vcvt.s32.f32 %v943
    %v945 = vlaneseq
    %v946 = vshrl.u32 %v945, 7
    %v947 = vsub.s32 0, %v946
    %v948 = vrot.slane %v944, %v947
    %950 = vbcast.lane.b32.xlu0 %v948, 256
    %v951 = vpop.permute.xlu0 %950
    %s953 = sor.u32 256, 8
    %954 = vbcast.lane.b32.xlu0 %v948, %s953
    %v955 = vpop.permute.xlu0 %954
    %v956 = vlaneseq
    %v957 = vshrl.u32 %v956, 7
    %v958 = vsub.s32 1, %v957
    %v959 = vrot.slane %v944, %v958
    %961 = vbcast.lane.b32.xlu0 %v959, 256
    %v962 = vpop.permute.xlu0 %961
    %s964 = sor.u32 256, 8
    %965 = vbcast.lane.b32.xlu0 %v959, %s964
    %v966 = vpop.permute.xlu0 %965
    %v967 = vlaneseq
    %v968 = vshrl.u32 %v967, 7
    %v969 = vsub.s32 2, %v968
    %v970 = vrot.slane %v944, %v969
    %972 = vbcast.lane.b32.xlu0 %v970, 256
    %v973 = vpop.permute.xlu0 %972
    %s975 = sor.u32 256, 8
    %976 = vbcast.lane.b32.xlu0 %v970, %s975
    %v977 = vpop.permute.xlu0 %976
    %v978 = vlaneseq
    %v979 = vshrl.u32 %v978, 7
    %v980 = vsub.s32 3, %v979
    %v981 = vrot.slane %v944, %v980
    %983 = vbcast.lane.b32.xlu0 %v981, 256
    %v984 = vpop.permute.xlu0 %983
    %s986 = sor.u32 256, 8
    %987 = vbcast.lane.b32.xlu0 %v981, %s986
    %v988 = vpop.permute.xlu0 %987
    %v989 = vlaneseq
    %v990 = vshrl.u32 %v989, 7
    %v991 = vsub.s32 4, %v990
    %v992 = vrot.slane %v944, %v991
    %994 = vbcast.lane.b32.xlu0 %v992, 256
    %v995 = vpop.permute.xlu0 %994
    %s997 = sor.u32 256, 8
    %998 = vbcast.lane.b32.xlu0 %v992, %s997
    %v999 = vpop.permute.xlu0 %998
    %v1000 = vlaneseq
    %v1001 = vshrl.u32 %v1000, 7
    %v1002 = vsub.s32 5, %v1001
    %v1003 = vrot.slane %v944, %v1002
    %1005 = vbcast.lane.b32.xlu0 %v1003, 256
    %v1006 = vpop.permute.xlu0 %1005
    %s1008 = sor.u32 256, 8
    %1009 = vbcast.lane.b32.xlu0 %v1003, %s1008
    %v1010 = vpop.permute.xlu0 %1009
    %v1011 = vlaneseq
    %v1012 = vshrl.u32 %v1011, 7
    %v1013 = vsub.s32 6, %v1012
    %v1014 = vrot.slane %v944, %v1013
    %1016 = vbcast.lane.b32.xlu0 %v1014, 256
    %v1017 = vpop.permute.xlu0 %1016
    %s1019 = sor.u32 256, 8
    %1020 = vbcast.lane.b32.xlu0 %v1014, %s1019
    %v1021 = vpop.permute.xlu0 %1020
    %v1022 = vlaneseq
    %v1023 = vshrl.u32 %v1022, 7
    %v1024 = vsub.s32 7, %v1023
    %v1025 = vrot.slane %v944, %v1024
    %1027 = vbcast.lane.b32.xlu0 %v1025, 256
    %v1028 = vpop.permute.xlu0 %1027
    %s1030 = sor.u32 256, 8
    %1031 = vbcast.lane.b32.xlu0 %v1025, %s1030
    %v1032 = vpop.permute.xlu0 %1031
    %v1033 = vmul.f32 %v951, 0.0
    %v1034 = vmul.f32 %v955, 0.0
    %v1035 = vmul.f32 %v962, 0.0
    %v1036 = vmul.f32 %v966, 0.0
    %v1037 = vmul.f32 %v973, 0.0
    %v1038 = vmul.f32 %v977, 0.0
    %v1039 = vmul.f32 %v984, 0.0
    %v1040 = vmul.f32 %v988, 0.0
    %v1041 = vmul.f32 %v995, 0.0
    %v1042 = vmul.f32 %v999, 0.0
    %v1043 = vmul.f32 %v1006, 0.0
    %v1044 = vmul.f32 %v1010, 0.0
    %v1045 = vmul.f32 %v1017, 0.0
    %v1046 = vmul.f32 %v1021, 0.0
    %v1047 = vmul.f32 %v1028, 0.0
    %v1048 = vmul.f32 %v1032, 0.0
    %vm1049 = vcmask 1040384
    %v1050 = vsel %vm1049, %v1034, 0.0
    %v1051 = vadd.f32 %v1033, %v1050
    %v1052 = vrot.slane %v1051, 4
    %v1053 = vadd.f32 %v1051, %v1052
    %v1054 = vrot.slane %v1053, 2
    %v1055 = vadd.f32 %v1053, %v1054
    %v1056 = vrot.slane %v1055, 1
    %v1057 = vadd.f32 %v1055, %v1056
    %v1058 = vsel %vm1049, %v1036, 0.0
    %v1059 = vadd.f32 %v1035, %v1058
    %v1060 = vrot.slane %v1059, 4
    %v1061 = vadd.f32 %v1059, %v1060
    %v1062 = vrot.slane %v1061, 2
    %v1063 = vadd.f32 %v1061, %v1062
    %v1064 = vrot.slane %v1063, 1
    %v1065 = vadd.f32 %v1063, %v1064
    %v1066 = vsel %vm1049, %v1038, 0.0
    %v1067 = vadd.f32 %v1037, %v1066
    %v1068 = vrot.slane %v1067, 4
    %v1069 = vadd.f32 %v1067, %v1068
    %v1070 = vrot.slane %v1069, 2
    %v1071 = vadd.f32 %v1069, %v1070
    %v1072 = vrot.slane %v1071, 1
    %v1073 = vadd.f32 %v1071, %v1072
    %v1074 = vsel %vm1049, %v1040, 0.0
    %v1075 = vadd.f32 %v1039, %v1074
    %v1076 = vrot.slane %v1075, 4
    %v1077 = vadd.f32 %v1075, %v1076
    %v1078 = vrot.slane %v1077, 2
    %v1079 = vadd.f32 %v1077, %v1078
    %v1080 = vrot.slane %v1079, 1
    %v1081 = vadd.f32 %v1079, %v1080
    %v1082 = vsel %vm1049, %v1042, 0.0
    %v1083 = vadd.f32 %v1041, %v1082
    %v1084 = vrot.slane %v1083, 4
    %v1085 = vadd.f32 %v1083, %v1084
    %v1086 = vrot.slane %v1085, 2
    %v1087 = vadd.f32 %v1085, %v1086
    %v1088 = vrot.slane %v1087, 1
    %v1089 = vadd.f32 %v1087, %v1088
    %v1090 = vsel %vm1049, %v1044, 0.0
    %v1091 = vadd.f32 %v1043, %v1090
    %v1092 = vrot.slane %v1091, 4
    %v1093 = vadd.f32 %v1091, %v1092
    %v1094 = vrot.slane %v1093, 2
    %v1095 = vadd.f32 %v1093, %v1094
    %v1096 = vrot.slane %v1095, 1
    %v1097 = vadd.f32 %v1095, %v1096
    %v1098 = vsel %vm1049, %v1046, 0.0
    %v1099 = vadd.f32 %v1045, %v1098
    %v1100 = vrot.slane %v1099, 4
    %v1101 = vadd.f32 %v1099, %v1100
    %v1102 = vrot.slane %v1101, 2
    %v1103 = vadd.f32 %v1101, %v1102
    %v1104 = vrot.slane %v1103, 1
    %v1105 = vadd.f32 %v1103, %v1104
    %v1106 = vsel %vm1049, %v1048, 0.0
    %v1107 = vadd.f32 %v1047, %v1106
    %v1108 = vrot.slane %v1107, 4
    %v1109 = vadd.f32 %v1107, %v1108
    %v1110 = vrot.slane %v1109, 2
    %v1111 = vadd.f32 %v1109, %v1110
    %v1112 = vrot.slane %v1111, 1
    %v1113 = vadd.f32 %v1111, %v1112
    %v1114 = vmul.f32 %v944, 0.0
    %v1115 = vsel %vm716, %v1114, 0.0
    %1116 = vadd.xlane.f32.xlu0 %v1115
    %v1117 = vpop.xlane.xlu0 %1116
    %vm1118 = vcmp.gt.f32.partialorder %v1117, 0.5
    %vm1119 = vcmp.gt.s32.totalorder %v941, 0
    %vm1120 = vmand %vm1119, %vm1118
    %1123 = vrot.lane.b32.xlu0 %v445, 32
    %v1124 = vpop.permute.xlu0 %1123
    %v1126 = vsel %vm219, %v375, %v1124
    %v1127 = vsel %vm1120, 1, 0
    %vm1128 = vcmp.eq.s32.totalorder %v1127, 1
    %v1137 = vsel %vm356, %v1065, %v1057
    %v1138 = vsel %vm359, %v1073, %v1137
    %v1139 = vsel %vm362, %v1081, %v1138
    %v1140 = vsel %vm365, %v1089, %v1139
    %v1141 = vsel %vm368, %v1097, %v1140
    %v1142 = vsel %vm371, %v1105, %v1141
    %v1143 = vsel %vm374, %v1113, %v1142
    %v1145 = vsel %vm1128, %v1143, %v1126
    %vm1146 = vmxor %vm1118, 1
    %vm1147 = vmand %vm1119, %vm1146
    %v1148 = vsel %vm1147, 1.0, 0.0
    %v1149 = vmul.f32 %v944, %v1148
    %v1150 = vlaneseq
    %v1151 = vshrl.u32 %v1150, 7
    %v1152 = vsub.s32 0, %v1151
    %v1153 = vrot.slane %v1149, %v1152
    %1155 = vbcast.lane.b32.xlu0 %v1153, 256
    %v1156 = vpop.permute.xlu0 %1155
    %s1158 = sor.u32 256, 8
    %1159 = vbcast.lane.b32.xlu0 %v1153, %s1158
    %v1160 = vpop.permute.xlu0 %1159
    %v1161 = vlaneseq
    %v1162 = vshrl.u32 %v1161, 7
    %v1163 = vsub.s32 1, %v1162
    %v1164 = vrot.slane %v1149, %v1163
    %1166 = vbcast.lane.b32.xlu0 %v1164, 256
    %v1167 = vpop.permute.xlu0 %1166
    %s1169 = sor.u32 256, 8
    %1170 = vbcast.lane.b32.xlu0 %v1164, %s1169
    %v1171 = vpop.permute.xlu0 %1170
    %v1172 = vlaneseq
    %v1173 = vshrl.u32 %v1172, 7
    %v1174 = vsub.s32 2, %v1173
    %v1175 = vrot.slane %v1149, %v1174
    %1177 = vbcast.lane.b32.xlu0 %v1175, 256
    %v1178 = vpop.permute.xlu0 %1177
    %s1180 = sor.u32 256, 8
    %1181 = vbcast.lane.b32.xlu0 %v1175, %s1180
    %v1182 = vpop.permute.xlu0 %1181
    %v1183 = vlaneseq
    %v1184 = vshrl.u32 %v1183, 7
    %v1185 = vsub.s32 3, %v1184
    %v1186 = vrot.slane %v1149, %v1185
    %1188 = vbcast.lane.b32.xlu0 %v1186, 256
    %v1189 = vpop.permute.xlu0 %1188
    %s1191 = sor.u32 256, 8
    %1192 = vbcast.lane.b32.xlu0 %v1186, %s1191
    %v1193 = vpop.permute.xlu0 %1192
    %v1194 = vlaneseq
    %v1195 = vshrl.u32 %v1194, 7
    %v1196 = vsub.s32 4, %v1195
    %v1197 = vrot.slane %v1149, %v1196
    %1199 = vbcast.lane.b32.xlu0 %v1197, 256
    %v1200 = vpop.permute.xlu0 %1199
    %s1202 = sor.u32 256, 8
    %1203 = vbcast.lane.b32.xlu0 %v1197, %s1202
    %v1204 = vpop.permute.xlu0 %1203
    %v1205 = vlaneseq
    %v1206 = vshrl.u32 %v1205, 7
    %v1207 = vsub.s32 5, %v1206
    %v1208 = vrot.slane %v1149, %v1207
    %1210 = vbcast.lane.b32.xlu0 %v1208, 256
    %v1211 = vpop.permute.xlu0 %1210
    %s1213 = sor.u32 256, 8
    %1214 = vbcast.lane.b32.xlu0 %v1208, %s1213
    %v1215 = vpop.permute.xlu0 %1214
    %v1216 = vlaneseq
    %v1217 = vshrl.u32 %v1216, 7
    %v1218 = vsub.s32 6, %v1217
    %v1219 = vrot.slane %v1149, %v1218
    %1221 = vbcast.lane.b32.xlu0 %v1219, 256
    %v1222 = vpop.permute.xlu0 %1221
    %s1224 = sor.u32 256, 8
    %1225 = vbcast.lane.b32.xlu0 %v1219, %s1224
    %v1226 = vpop.permute.xlu0 %1225
    %v1227 = vlaneseq
    %v1228 = vshrl.u32 %v1227, 7
    %v1229 = vsub.s32 7, %v1228
    %v1230 = vrot.slane %v1149, %v1229
    %1232 = vbcast.lane.b32.xlu0 %v1230, 256
    %v1233 = vpop.permute.xlu0 %1232
    %s1235 = sor.u32 256, 8
    %1236 = vbcast.lane.b32.xlu0 %v1230, %s1235
    %v1237 = vpop.permute.xlu0 %1236
    %v1239 = vcombine.high %v1126, %v1126
    %v1241 = vunpack.c.l.s4 1966171168
    %v1242 = vunpack.c.0.s8 %v1241
    %v1243 = vlaneseq
    %v1244 = vshrl.u32 %v1243, 7
    %v1245 = vsub.s32 %v1242, %v1244
    %v1246 = vrot.slane %v1126, %v1245
    %v1248 = vunpack.c.l.s4 1966171168
    %v1249 = vunpack.c.0.s8 %v1248
    %v1250 = vlaneseq
    %v1251 = vshrl.u32 %v1250, 7
    %v1252 = vsub.s32 %v1249, %v1251
    %v1253 = vrot.slane %v1239, %v1252
    %v1254 = vcombine.high %v1246, %v1246
    %v1255 = vcombine.high %v1253, %v1253
    %v1257 = vunpack.c.l.s4 1966171168
    %v1258 = vunpack.c.0.s8 %v1257
    %v1259 = vlaneseq
    %v1260 = vshrl.u32 %v1259, 7
    %v1261 = vsub.s32 %v1258, %v1260
    %v1262 = vrot.slane %v1246, %v1261
    %v1264 = vunpack.c.l.s4 1966171168
    %v1265 = vunpack.c.0.s8 %v1264
    %v1266 = vlaneseq
    %v1267 = vshrl.u32 %v1266, 7
    %v1268 = vsub.s32 %v1265, %v1267
    %v1269 = vrot.slane %v1253, %v1268
    %v1271 = vunpack.c.l.s4 1966171168
    %v1272 = vunpack.c.0.s8 %v1271
    %v1273 = vlaneseq
    %v1274 = vshrl.u32 %v1273, 7
    %v1275 = vsub.s32 %v1272, %v1274
    %v1276 = vrot.slane %v1254, %v1275
    %v1278 = vunpack.c.l.s4 1966171168
    %v1279 = vunpack.c.0.s8 %v1278
    %v1280 = vlaneseq
    %v1281 = vshrl.u32 %v1280, 7
    %v1282 = vsub.s32 %v1279, %v1281
    %v1283 = vrot.slane %v1255, %v1282
    %v1284 = vcombine.high %v1262, %v1262
    %v1285 = vcombine.high %v1269, %v1269
    %v1286 = vcombine.high %v1276, %v1276
    %v1287 = vcombine.high %v1283, %v1283
    %v1288 = vlaneseq
    %v1289 = vshrl.u32 %v1288, 7
    %v1290 = vsub.s32 0, %v1289
    %v1291 = vrot.slane %v1262, %v1290
    %v1292 = vlaneseq
    %v1293 = vshrl.u32 %v1292, 7
    %v1294 = vsub.s32 0, %v1293
    %v1295 = vrot.slane %v1276, %v1294
    %v1296 = vlaneseq
    %v1297 = vshrl.u32 %v1296, 7
    %v1298 = vsub.s32 0, %v1297
    %v1299 = vrot.slane %v1284, %v1298
    %v1300 = vlaneseq
    %v1301 = vshrl.u32 %v1300, 7
    %v1302 = vsub.s32 0, %v1301
    %v1303 = vrot.slane %v1286, %v1302
    %v1304 = vlaneseq
    %v1305 = vshrl.u32 %v1304, 7
    %v1306 = vsub.s32 0, %v1305
    %v1307 = vrot.slane %v1269, %v1306
    %v1308 = vlaneseq
    %v1309 = vshrl.u32 %v1308, 7
    %v1310 = vsub.s32 0, %v1309
    %v1311 = vrot.slane %v1283, %v1310
    %v1312 = vlaneseq
    %v1313 = vshrl.u32 %v1312, 7
    %v1314 = vsub.s32 0, %v1313
    %v1315 = vrot.slane %v1285, %v1314
    %v1316 = vlaneseq
    %v1317 = vshrl.u32 %v1316, 7
    %v1318 = vsub.s32 0, %v1317
    %v1319 = vrot.slane %v1287, %v1318
    %v1328 = vmul.f32 %v1156, %v1291
    %v1329 = vmul.f32 %v1160, %v1291
    %v1330 = vmul.f32 %v1167, %v1295
    %v1331 = vmul.f32 %v1171, %v1295
    %v1332 = vmul.f32 %v1178, %v1299
    %v1333 = vmul.f32 %v1182, %v1299
    %v1334 = vmul.f32 %v1189, %v1303
    %v1335 = vmul.f32 %v1193, %v1303
    %v1336 = vmul.f32 %v1200, %v1307
    %v1337 = vmul.f32 %v1204, %v1307
    %v1338 = vmul.f32 %v1211, %v1311
    %v1339 = vmul.f32 %v1215, %v1311
    %v1340 = vmul.f32 %v1222, %v1315
    %v1341 = vmul.f32 %v1226, %v1315
    %v1342 = vmul.f32 %v1233, %v1319
    %v1343 = vmul.f32 %v1237, %v1319
    %v1344 = vadd.f32 %v1328, 0.0
    %v1345 = vadd.f32 %v1329, 0.0
    %v1346 = vadd.f32 %v1330, 0.0
    %v1347 = vadd.f32 %v1331, 0.0
    %v1348 = vadd.f32 %v1332, 0.0
    %v1349 = vadd.f32 %v1333, 0.0
    %v1350 = vadd.f32 %v1334, 0.0
    %v1351 = vadd.f32 %v1335, 0.0
    %v1352 = vadd.f32 %v1336, 0.0
    %v1353 = vadd.f32 %v1337, 0.0
    %v1354 = vadd.f32 %v1338, 0.0
    %v1355 = vadd.f32 %v1339, 0.0
    %v1356 = vadd.f32 %v1340, 0.0
    %v1357 = vadd.f32 %v1341, 0.0
    %v1358 = vadd.f32 %v1342, 0.0
    %v1359 = vadd.f32 %v1343, 0.0
    %v1360 = vadd.f32 %v1149, 0.0
    %1361 = vst.msk [vmem:[#allocation2] sm:$0xff] %vm219, %v1145
    %v1363 = vrot.slane %v1145, 7
    %v1364 = vrot.slane %v1145, 1
    %v1365 = vrot.slane %v1145, 2
    %v1366 = vrot.slane %v1145, 3
    %v1367 = vrot.slane %v1145, 4
    %v1368 = vrot.slane %v1145, 5
    %v1369 = vrot.slane %v1145, 6
    %1370 = vrot.lane.b32.xlu0 %v1363, 96
    %v1371 = vpop.permute.xlu0 %1370
    %1372 = vrot.lane.b32.xlu0 %v1145, 96
    %v1373 = vpop.permute.xlu0 %1372
    %1374 = vrot.lane.b32.xlu0 %v1364, 96
    %v1375 = vpop.permute.xlu0 %1374
    %1376 = vrot.lane.b32.xlu0 %v1365, 96
    %v1377 = vpop.permute.xlu0 %1376
    %1378 = vrot.lane.b32.xlu0 %v1366, 96
    %v1379 = vpop.permute.xlu0 %1378
    %1380 = vrot.lane.b32.xlu0 %v1367, 96
    %v1381 = vpop.permute.xlu0 %1380
    %1382 = vrot.lane.b32.xlu0 %v1368, 96
    %v1383 = vpop.permute.xlu0 %1382
    %1384 = vrot.lane.b32.xlu0 %v1369, 96
    %v1385 = vpop.permute.xlu0 %1384
    %v1394 = vadd.f32 %v174, %v1371
    %v1395 = vadd.f32 %v179, %v1373
    %v1396 = vadd.f32 %v184, %v1375
    %v1397 = vadd.f32 %v189, %v1377
    %v1398 = vadd.f32 %v194, %v1379
    %v1399 = vadd.f32 %v199, %v1381
    %v1400 = vadd.f32 %v204, %v1383
    %v1401 = vadd.f32 %v209, %v1385
    %v1402 = vtanh.pop %v1394
    %v1403 = vtanh.pop %v1395
    %v1404 = vtanh.pop %v1396
    %v1405 = vtanh.pop %v1397
    %v1406 = vtanh.pop %v1398
    %v1407 = vtanh.pop %v1399
    %v1408 = vtanh.pop %v1400
    %v1409 = vtanh.pop %v1401
    %v1418 = vrot.slane %v1402, 1
    %v1419 = vsel %vm356, %v1403, %v1418
    %v1420 = vrot.slane %v1404, 7
    %v1421 = vsel %vm359, %v1420, %v1419
    %v1422 = vrot.slane %v1405, 6
    %v1423 = vsel %vm362, %v1422, %v1421
    %v1424 = vrot.slane %v1406, 5
    %v1425 = vsel %vm365, %v1424, %v1423
    %v1426 = vrot.slane %v1407, 4
    %v1427 = vsel %vm368, %v1426, %v1425
    %v1428 = vrot.slane %v1408, 3
    %v1429 = vsel %vm371, %v1428, %v1427
    %v1430 = vrot.slane %v1409, 2
    %v1431 = vsel %vm374, %v1430, %v1429
    %v1432 = vsel %vm219, %v1431, 0
    %1434 = vmatprep.subr.mxu0 0.0
    %1435 = vmatpush1.msra.mxu0 0.0
    %1436 = vmatprep.subr.mxu0 0.0
    %1437 = vmatpush1.msra.mxu0 0.0
    %1438 = vmatprep.subr.mxu0 0.0
    %1439 = vmatpush1.msra.mxu0 0.0
    %1440 = vmatprep.subr.mxu0 0.0
    %1441 = vmatpush1.msra.mxu0 0.0
    %1442 = vmatprep.subr.mxu0 0.0
    %1443 = vmatpush1.msra.mxu0 0.0
    %1444 = vmatprep.subr.mxu0 0.0
    %1445 = vmatpush1.msra.mxu0 0.0
    %1446 = vmatprep.subr.mxu0 0.0
    %1447 = vmatpush1.msra.mxu0 0.0
    %1448 = vmatprep.subr.mxu0 0.0
    %1449 = vmatpush1.msra.mxu0 0.0
    %1450 = vmatprep.subr.mxu0 0.0
    %1451 = vmatpush1.msra.mxu0 0.0
    %1452 = vmatprep.subr.mxu0 0.0
    %1453 = vmatpush1.msra.mxu0 0.0
    %1454 = vmatprep.subr.mxu0 0.0
    %1455 = vmatpush1.msra.mxu0 0.0
    %1456 = vmatprep.subr.mxu0 0.0
    %1457 = vmatpush1.msra.mxu0 0.0
    %1458 = vmatprep.subr.mxu0 0.0
    %1459 = vmatpush1.msra.mxu0 %v60
    %1460 = vmatprep.subr.mxu0 0.0
    %1461 = vmatpush1.msra.mxu0 %v59
    %1462 = vmatprep.subr.mxu0 0.0
    %1463 = vmatpush1.msra.mxu0 %v58
    %1464 = vmatprep.subr.mxu0 0.0
    %1465 = vmatpush1.msra.mxu0 %v57
    %1466 = vmatprep.subr.mxu0 0.0
    %1467 = vmatpush2.msra.mxu0 0.0
    %1468 = vmatprep.subr.mxu0 0.0
    %1469 = vmatpush2.msra.mxu0 0.0
    %1470 = vmatprep.subr.mxu0 0.0
    %1471 = vmatpush2.msra.mxu0 0.0
    %1472 = vmatprep.subr.mxu0 0.0
    %1473 = vmatpush2.msra.mxu0 0.0
    %1474 = vmatprep.subr.mxu0 0.0
    %1475 = vmatpush2.msra.mxu0 0.0
    %1476 = vmatprep.subr.mxu0 0.0
    %1477 = vmatpush2.msra.mxu0 0.0
    %1478 = vmatprep.subr.mxu0 0.0
    %1479 = vmatpush2.msra.mxu0 0.0
    %1480 = vmatprep.subr.mxu0 0.0
    %1481 = vmatpush2.msra.mxu0 0.0
    %1482 = vmatprep.subr.mxu0 0.0
    %1483 = vmatpush2.msra.mxu0 0.0
    %1484 = vmatprep.subr.mxu0 0.0
    %1485 = vmatpush2.msra.mxu0 0.0
    %1486 = vmatprep.subr.mxu0 0.0
    %1487 = vmatpush2.msra.mxu0 0.0
    %1488 = vmatprep.subr.mxu0 0.0
    %1489 = vmatpush2.msra.mxu0 0.0
    %1490 = vmatprep.subr.mxu0 0.0
    %1491 = vmatpush2.msra.mxu0 0.0
    %1492 = vmatprep.subr.mxu0 0.0
    %1493 = vmatpush2.msra.mxu0 0.0
    %1494 = vmatprep.subr.mxu0 0.0
    %1495 = vmatpush2.msra.mxu0 0.0
    %1496 = vmatprep.subr.mxu0 0.0
    %1497 = vmatpush2.msra.mxu0 0.0
    %1498 = vmatprep.mubr.f32.mxu0 0.0
    %1499 = vmatmul.mubr.f32.gmra.mxu0 %v1432
    %v1500 = vpop.f32.mrf.mxu0
    %v1501 = vadd.f32 0.0, %v1500
    %v1502 = vpop.f32.mrf.mxu0
    %1503 = vdwg.mxu0
    %v1504 = vlaneseq
    %v1505 = vshrl.u32 %v1504, 7
    %v1506 = vsub.s32 1, %v1505
    %v1507 = vrot.slane %v1402, %v1506
    %v1508 = vlaneseq
    %v1509 = vshrl.u32 %v1508, 7
    %v1510 = vsub.s32 1, %v1509
    %v1511 = vrot.slane %v1403, %v1510
    %v1512 = vlaneseq
    %v1513 = vshrl.u32 %v1512, 7
    %v1514 = vsub.s32 1, %v1513
    %v1515 = vrot.slane %v1404, %v1514
    %v1516 = vlaneseq
    %v1517 = vshrl.u32 %v1516, 7
    %v1518 = vsub.s32 1, %v1517
    %v1519 = vrot.slane %v1405, %v1518
    %v1520 = vlaneseq
    %v1521 = vshrl.u32 %v1520, 7
    %v1522 = vsub.s32 1, %v1521
    %v1523 = vrot.slane %v1406, %v1522
    %v1524 = vlaneseq
    %v1525 = vshrl.u32 %v1524, 7
    %v1526 = vsub.s32 1, %v1525
    %v1527 = vrot.slane %v1407, %v1526
    %v1528 = vlaneseq
    %v1529 = vshrl.u32 %v1528, 7
    %v1530 = vsub.s32 1, %v1529
    %v1531 = vrot.slane %v1408, %v1530
    %v1532 = vlaneseq
    %v1533 = vshrl.u32 %v1532, 7
    %v1534 = vsub.s32 1, %v1533
    %v1535 = vrot.slane %v1409, %v1534
    %v1536 = vmul.f32 %v1507, %v61
    %v1537 = vmul.f32 %v1507, %v62
    %v1538 = vmul.f32 %v1511, %v61
    %v1539 = vmul.f32 %v1511, %v62
    %v1540 = vmul.f32 %v1515, %v61
    %v1541 = vmul.f32 %v1515, %v62
    %v1542 = vmul.f32 %v1519, %v61
    %v1543 = vmul.f32 %v1519, %v62
    %v1544 = vmul.f32 %v1523, %v61
    %v1545 = vmul.f32 %v1523, %v62
    %v1546 = vmul.f32 %v1527, %v61
    %v1547 = vmul.f32 %v1527, %v62
    %v1548 = vmul.f32 %v1531, %v61
    %v1549 = vmul.f32 %v1531, %v62
    %v1550 = vmul.f32 %v1535, %v61
    %v1551 = vmul.f32 %v1535, %v62
    %v1552 = vsel %vm219, %v1536, 0.0
    %1553 = vadd.xlane.f32.xlu0 %v1552
    %v1554 = vpop.xlane.xlu0 %1553
    %v1555 = vsel %vm499, %v1537, 0.0
    %1556 = vadd.xlane.f32.xlu0 %v1555
    %v1557 = vpop.xlane.xlu0 %1556
    %v1558 = vsel %vm219, %v1538, 0.0
    %1559 = vadd.xlane.f32.xlu0 %v1558
    %v1560 = vpop.xlane.xlu0 %1559
    %v1561 = vsel %vm499, %v1539, 0.0
    %1562 = vadd.xlane.f32.xlu0 %v1561
    %v1563 = vpop.xlane.xlu0 %1562
    %v1564 = vsel %vm219, %v1540, 0.0
    %1565 = vadd.xlane.f32.xlu0 %v1564
    %v1566 = vpop.xlane.xlu0 %1565
    %v1567 = vsel %vm499, %v1541, 0.0
    %1568 = vadd.xlane.f32.xlu0 %v1567
    %v1569 = vpop.xlane.xlu0 %1568
    %v1570 = vsel %vm219, %v1542, 0.0
    %1571 = vadd.xlane.f32.xlu0 %v1570
    %v1572 = vpop.xlane.xlu0 %1571
    %v1573 = vsel %vm499, %v1543, 0.0
    %1574 = vadd.xlane.f32.xlu0 %v1573
    %v1575 = vpop.xlane.xlu0 %1574
    %v1576 = vsel %vm219, %v1544, 0.0
    %1577 = vadd.xlane.f32.xlu0 %v1576
    %v1578 = vpop.xlane.xlu0 %1577
    %v1579 = vsel %vm499, %v1545, 0.0
    %1580 = vadd.xlane.f32.xlu0 %v1579
    %v1581 = vpop.xlane.xlu0 %1580
    %v1582 = vsel %vm219, %v1546, 0.0
    %1583 = vadd.xlane.f32.xlu0 %v1582
    %v1584 = vpop.xlane.xlu0 %1583
    %v1585 = vsel %vm499, %v1547, 0.0
    %1586 = vadd.xlane.f32.xlu0 %v1585
    %v1587 = vpop.xlane.xlu0 %1586
    %v1588 = vsel %vm219, %v1548, 0.0
    %1589 = vadd.xlane.f32.xlu0 %v1588
    %v1590 = vpop.xlane.xlu0 %1589
    %v1591 = vsel %vm499, %v1549, 0.0
    %1592 = vadd.xlane.f32.xlu0 %v1591
    %v1593 = vpop.xlane.xlu0 %1592
    %v1594 = vsel %vm219, %v1550, 0.0
    %1595 = vadd.xlane.f32.xlu0 %v1594
    %v1596 = vpop.xlane.xlu0 %1595
    %v1597 = vsel %vm499, %v1551, 0.0
    %1598 = vadd.xlane.f32.xlu0 %v1597
    %v1599 = vpop.xlane.xlu0 %1598
    %v1600 = vadd.f32 %v1554, %v547
    %v1601 = vadd.f32 %v1557, %v551
    %v1602 = vadd.f32 %v1560, %v547
    %v1603 = vadd.f32 %v1563, %v551
    %v1604 = vadd.f32 %v1566, %v547
    %v1605 = vadd.f32 %v1569, %v551
    %v1606 = vadd.f32 %v1572, %v547
    %v1607 = vadd.f32 %v1575, %v551
    %v1608 = vadd.f32 %v1578, %v547
    %v1609 = vadd.f32 %v1581, %v551
    %v1610 = vadd.f32 %v1584, %v547
    %v1611 = vadd.f32 %v1587, %v551
    %v1612 = vadd.f32 %v1590, %v547
    %v1613 = vadd.f32 %v1593, %v551
    %v1614 = vadd.f32 %v1596, %v547
    %v1615 = vadd.f32 %v1599, %v551
    %1632 = vset.pattern.permute.xlu0 0
    %1633 = vperm.xlu0 %1632, %v1600
    %v1634 = vpop.permute.xlu0 %1633
    %1635 = vset.pattern.permute.xlu0 0
    %1636 = vperm.xlu0 %1635, %v1601
    %v1637 = vpop.permute.xlu0 %1636
    %1638 = vset.pattern.permute.xlu0 0
    %1639 = vperm.xlu0 %1638, %v1602
    %v1640 = vpop.permute.xlu0 %1639
    %1641 = vset.pattern.permute.xlu0 0
    %1642 = vperm.xlu0 %1641, %v1603
    %v1643 = vpop.permute.xlu0 %1642
    %1644 = vset.pattern.permute.xlu0 0
    %1645 = vperm.xlu0 %1644, %v1604
    %v1646 = vpop.permute.xlu0 %1645
    %1647 = vset.pattern.permute.xlu0 0
    %1648 = vperm.xlu0 %1647, %v1605
    %v1649 = vpop.permute.xlu0 %1648
    %1650 = vset.pattern.permute.xlu0 0
    %1651 = vperm.xlu0 %1650, %v1606
    %v1652 = vpop.permute.xlu0 %1651
    %1653 = vset.pattern.permute.xlu0 0
    %1654 = vperm.xlu0 %1653, %v1607
    %v1655 = vpop.permute.xlu0 %1654
    %1656 = vset.pattern.permute.xlu0 0
    %1657 = vperm.xlu0 %1656, %v1608
    %v1658 = vpop.permute.xlu0 %1657
    %1659 = vset.pattern.permute.xlu0 0
    %1660 = vperm.xlu0 %1659, %v1609
    %v1661 = vpop.permute.xlu0 %1660
    %1662 = vset.pattern.permute.xlu0 0
    %1663 = vperm.xlu0 %1662, %v1610
    %v1664 = vpop.permute.xlu0 %1663
    %1665 = vset.pattern.permute.xlu0 0
    %1666 = vperm.xlu0 %1665, %v1611
    %v1667 = vpop.permute.xlu0 %1666
    %1668 = vset.pattern.permute.xlu0 0
    %1669 = vperm.xlu0 %1668, %v1612
    %v1670 = vpop.permute.xlu0 %1669
    %1671 = vset.pattern.permute.xlu0 0
    %1672 = vperm.xlu0 %1671, %v1613
    %v1673 = vpop.permute.xlu0 %1672
    %1674 = vset.pattern.permute.xlu0 0
    %1675 = vperm.xlu0 %1674, %v1614
    %v1676 = vpop.permute.xlu0 %1675
    %1677 = vset.pattern.permute.xlu0 0
    %1678 = vperm.xlu0 %1677, %v1615
    %v1679 = vpop.permute.xlu0 %1678
    %v1680 = vlaneseq
    %v1681 = vshrl.u32 %v1680, 7
    %v1682 = vsub.s32 %v298, %v1681
    %v1683 = vrot.slane %v1634, %v1682
    %v1684 = vlaneseq
    %v1685 = vshrl.u32 %v1684, 7
    %v1686 = vsub.s32 %v638, %v1685
    %v1687 = vrot.slane %v1637, %v1686
    %v1688 = vsel %vm643, %v1687, %v1683
    %v1689 = vlaneseq
    %v1690 = vshrl.u32 %v1689, 7
    %v1691 = vsub.s32 %v298, %v1690
    %v1692 = vrot.slane %v1640, %v1691
    %v1693 = vlaneseq
    %v1694 = vshrl.u32 %v1693, 7
    %v1695 = vsub.s32 %v638, %v1694
    %v1696 = vrot.slane %v1643, %v1695
    %v1697 = vsel %vm643, %v1696, %v1692
    %v1698 = vlaneseq
    %v1699 = vshrl.u32 %v1698, 7
    %v1700 = vsub.s32 %v298, %v1699
    %v1701 = vrot.slane %v1646, %v1700
    %v1702 = vlaneseq
    %v1703 = vshrl.u32 %v1702, 7
    %v1704 = vsub.s32 %v638, %v1703
    %v1705 = vrot.slane %v1649, %v1704
    %v1706 = vsel %vm643, %v1705, %v1701
    %v1707 = vlaneseq
    %v1708 = vshrl.u32 %v1707, 7
    %v1709 = vsub.s32 %v298, %v1708
    %v1710 = vrot.slane %v1652, %v1709
    %v1711 = vlaneseq
    %v1712 = vshrl.u32 %v1711, 7
    %v1713 = vsub.s32 %v638, %v1712
    %v1714 = vrot.slane %v1655, %v1713
    %v1715 = vsel %vm643, %v1714, %v1710
    %v1716 = vlaneseq
    %v1717 = vshrl.u32 %v1716, 7
    %v1718 = vsub.s32 %v298, %v1717
    %v1719 = vrot.slane %v1658, %v1718
    %v1720 = vlaneseq
    %v1721 = vshrl.u32 %v1720, 7
    %v1722 = vsub.s32 %v638, %v1721
    %v1723 = vrot.slane %v1661, %v1722
    %v1724 = vsel %vm643, %v1723, %v1719
    %v1725 = vlaneseq
    %v1726 = vshrl.u32 %v1725, 7
    %v1727 = vsub.s32 %v298, %v1726
    %v1728 = vrot.slane %v1664, %v1727
    %v1729 = vlaneseq
    %v1730 = vshrl.u32 %v1729, 7
    %v1731 = vsub.s32 %v638, %v1730
    %v1732 = vrot.slane %v1667, %v1731
    %v1733 = vsel %vm643, %v1732, %v1728
    %v1734 = vlaneseq
    %v1735 = vshrl.u32 %v1734, 7
    %v1736 = vsub.s32 %v298, %v1735
    %v1737 = vrot.slane %v1670, %v1736
    %v1738 = vlaneseq
    %v1739 = vshrl.u32 %v1738, 7
    %v1740 = vsub.s32 %v638, %v1739
    %v1741 = vrot.slane %v1673, %v1740
    %v1742 = vsel %vm643, %v1741, %v1737
    %v1743 = vlaneseq
    %v1744 = vshrl.u32 %v1743, 7
    %v1745 = vsub.s32 %v298, %v1744
    %v1746 = vrot.slane %v1676, %v1745
    %v1747 = vlaneseq
    %v1748 = vshrl.u32 %v1747, 7
    %v1749 = vsub.s32 %v638, %v1748
    %v1750 = vrot.slane %v1679, %v1749
    %v1751 = vsel %vm643, %v1750, %v1746
    %v1752 = vsel %vm356, %v1697, %v1688
    %v1753 = vsel %vm359, %v1706, %v1752
    %v1754 = vsel %vm362, %v1715, %v1753
    %v1755 = vsel %vm365, %v1724, %v1754
    %v1756 = vsel %vm368, %v1733, %v1755
    %v1757 = vsel %vm371, %v1742, %v1756
    %v1758 = vsel %vm374, %v1751, %v1757
    %v1760 = vsel %vm716, %v1758, -inf
    %1761 = vmax.xlane.f32.xlu0 %v1760
    %v1762 = vpop.xlane.xlu0 %1761
    %v1764 = vlaneseq
    %v1765 = vshrl.u32 %v1764, 7
    %v1766 = vsub.s32 0, %v1765
    %v1767 = vrot.slane %v1762, %v1766
    %v1768 = vlaneseq
    %v1769 = vshrl.u32 %v1768, 7
    %v1770 = vsub.s32 1, %v1769
    %v1771 = vrot.slane %v1762, %v1770
    %v1772 = vlaneseq
    %v1773 = vshrl.u32 %v1772, 7
    %v1774 = vsub.s32 2, %v1773
    %v1775 = vrot.slane %v1762, %v1774
    %v1776 = vlaneseq
    %v1777 = vshrl.u32 %v1776, 7
    %v1778 = vsub.s32 3, %v1777
    %v1779 = vrot.slane %v1762, %v1778
    %v1780 = vlaneseq
    %v1781 = vshrl.u32 %v1780, 7
    %v1782 = vsub.s32 4, %v1781
    %v1783 = vrot.slane %v1762, %v1782
    %v1784 = vlaneseq
    %v1785 = vshrl.u32 %v1784, 7
    %v1786 = vsub.s32 5, %v1785
    %v1787 = vrot.slane %v1762, %v1786
    %v1788 = vlaneseq
    %v1789 = vshrl.u32 %v1788, 7
    %v1790 = vsub.s32 6, %v1789
    %v1791 = vrot.slane %v1762, %v1790
    %v1792 = vlaneseq
    %v1793 = vshrl.u32 %v1792, 7
    %v1794 = vsub.s32 7, %v1793
    %v1795 = vrot.slane %v1762, %v1794
    %vm1804 = vcmp.eq.f32.partialorder %v1600, %v1767
    %vm1805 = vcmp.eq.f32.partialorder %v1601, %v1767
    %vm1806 = vcmp.eq.f32.partialorder %v1602, %v1771
    %vm1807 = vcmp.eq.f32.partialorder %v1603, %v1771
    %vm1808 = vcmp.eq.f32.partialorder %v1604, %v1775
    %vm1809 = vcmp.eq.f32.partialorder %v1605, %v1775
    %vm1810 = vcmp.eq.f32.partialorder %v1606, %v1779
    %vm1811 = vcmp.eq.f32.partialorder %v1607, %v1779
    %vm1812 = vcmp.eq.f32.partialorder %v1608, %v1783
    %vm1813 = vcmp.eq.f32.partialorder %v1609, %v1783
    %vm1814 = vcmp.eq.f32.partialorder %v1610, %v1787
    %vm1815 = vcmp.eq.f32.partialorder %v1611, %v1787
    %vm1816 = vcmp.eq.f32.partialorder %v1612, %v1791
    %vm1817 = vcmp.eq.f32.partialorder %v1613, %v1791
    %vm1818 = vcmp.eq.f32.partialorder %v1614, %v1795
    %vm1819 = vcmp.eq.f32.partialorder %v1615, %v1795
    %v1820 = vsel %vm1804, %v779, 9
    %v1821 = vsel %vm1805, %v783, 9
    %v1822 = vsel %vm1806, %v779, 9
    %v1823 = vsel %vm1807, %v783, 9
    %v1824 = vsel %vm1808, %v779, 9
    %v1825 = vsel %vm1809, %v783, 9
    %v1826 = vsel %vm1810, %v779, 9
    %v1827 = vsel %vm1811, %v783, 9
    %v1828 = vsel %vm1812, %v779, 9
    %v1829 = vsel %vm1813, %v783, 9
    %v1830 = vsel %vm1814, %v779, 9
    %v1831 = vsel %vm1815, %v783, 9
    %v1832 = vsel %vm1816, %v779, 9
    %v1833 = vsel %vm1817, %v783, 9
    %v1834 = vsel %vm1818, %v779, 9
    %v1835 = vsel %vm1819, %v783, 9
    %1836 = vset.pattern.permute.xlu0 0
    %1837 = vperm.xlu0 %1836, %v1820
    %v1838 = vpop.permute.xlu0 %1837
    %1839 = vset.pattern.permute.xlu0 0
    %1840 = vperm.xlu0 %1839, %v1821
    %v1841 = vpop.permute.xlu0 %1840
    %1842 = vset.pattern.permute.xlu0 0
    %1843 = vperm.xlu0 %1842, %v1822
    %v1844 = vpop.permute.xlu0 %1843
    %1845 = vset.pattern.permute.xlu0 0
    %1846 = vperm.xlu0 %1845, %v1823
    %v1847 = vpop.permute.xlu0 %1846
    %1848 = vset.pattern.permute.xlu0 0
    %1849 = vperm.xlu0 %1848, %v1824
    %v1850 = vpop.permute.xlu0 %1849
    %1851 = vset.pattern.permute.xlu0 0
    %1852 = vperm.xlu0 %1851, %v1825
    %v1853 = vpop.permute.xlu0 %1852
    %1854 = vset.pattern.permute.xlu0 0
    %1855 = vperm.xlu0 %1854, %v1826
    %v1856 = vpop.permute.xlu0 %1855
    %1857 = vset.pattern.permute.xlu0 0
    %1858 = vperm.xlu0 %1857, %v1827
    %v1859 = vpop.permute.xlu0 %1858
    %1860 = vset.pattern.permute.xlu0 0
    %1861 = vperm.xlu0 %1860, %v1828
    %v1862 = vpop.permute.xlu0 %1861
    %1863 = vset.pattern.permute.xlu0 0
    %1864 = vperm.xlu0 %1863, %v1829
    %v1865 = vpop.permute.xlu0 %1864
    %1866 = vset.pattern.permute.xlu0 0
    %1867 = vperm.xlu0 %1866, %v1830
    %v1868 = vpop.permute.xlu0 %1867
    %1869 = vset.pattern.permute.xlu0 0
    %1870 = vperm.xlu0 %1869, %v1831
    %v1871 = vpop.permute.xlu0 %1870
    %1872 = vset.pattern.permute.xlu0 0
    %1873 = vperm.xlu0 %1872, %v1832
    %v1874 = vpop.permute.xlu0 %1873
    %1875 = vset.pattern.permute.xlu0 0
    %1876 = vperm.xlu0 %1875, %v1833
    %v1877 = vpop.permute.xlu0 %1876
    %1878 = vset.pattern.permute.xlu0 0
    %1879 = vperm.xlu0 %1878, %v1834
    %v1880 = vpop.permute.xlu0 %1879
    %1881 = vset.pattern.permute.xlu0 0
    %1882 = vperm.xlu0 %1881, %v1835
    %v1883 = vpop.permute.xlu0 %1882
    %v1884 = vlaneseq
    %v1885 = vshrl.u32 %v1884, 7
    %v1886 = vsub.s32 %v298, %v1885
    %v1887 = vrot.slane %v1838, %v1886
    %v1888 = vlaneseq
    %v1889 = vshrl.u32 %v1888, 7
    %v1890 = vsub.s32 %v638, %v1889
    %v1891 = vrot.slane %v1841, %v1890
    %v1892 = vsel %vm643, %v1891, %v1887
    %v1893 = vlaneseq
    %v1894 = vshrl.u32 %v1893, 7
    %v1895 = vsub.s32 %v298, %v1894
    %v1896 = vrot.slane %v1844, %v1895
    %v1897 = vlaneseq
    %v1898 = vshrl.u32 %v1897, 7
    %v1899 = vsub.s32 %v638, %v1898
    %v1900 = vrot.slane %v1847, %v1899
    %v1901 = vsel %vm643, %v1900, %v1896
    %v1902 = vlaneseq
    %v1903 = vshrl.u32 %v1902, 7
    %v1904 = vsub.s32 %v298, %v1903
    %v1905 = vrot.slane %v1850, %v1904
    %v1906 = vlaneseq
    %v1907 = vshrl.u32 %v1906, 7
    %v1908 = vsub.s32 %v638, %v1907
    %v1909 = vrot.slane %v1853, %v1908
    %v1910 = vsel %vm643, %v1909, %v1905
    %v1911 = vlaneseq
    %v1912 = vshrl.u32 %v1911, 7
    %v1913 = vsub.s32 %v298, %v1912
    %v1914 = vrot.slane %v1856, %v1913
    %v1915 = vlaneseq
    %v1916 = vshrl.u32 %v1915, 7
    %v1917 = vsub.s32 %v638, %v1916
    %v1918 = vrot.slane %v1859, %v1917
    %v1919 = vsel %vm643, %v1918, %v1914
    %v1920 = vlaneseq
    %v1921 = vshrl.u32 %v1920, 7
    %v1922 = vsub.s32 %v298, %v1921
    %v1923 = vrot.slane %v1862, %v1922
    %v1924 = vlaneseq
    %v1925 = vshrl.u32 %v1924, 7
    %v1926 = vsub.s32 %v638, %v1925
    %v1927 = vrot.slane %v1865, %v1926
    %v1928 = vsel %vm643, %v1927, %v1923
    %v1929 = vlaneseq
    %v1930 = vshrl.u32 %v1929, 7
    %v1931 = vsub.s32 %v298, %v1930
    %v1932 = vrot.slane %v1868, %v1931
    %v1933 = vlaneseq
    %v1934 = vshrl.u32 %v1933, 7
    %v1935 = vsub.s32 %v638, %v1934
    %v1936 = vrot.slane %v1871, %v1935
    %v1937 = vsel %vm643, %v1936, %v1932
    %v1938 = vlaneseq
    %v1939 = vshrl.u32 %v1938, 7
    %v1940 = vsub.s32 %v298, %v1939
    %v1941 = vrot.slane %v1874, %v1940
    %v1942 = vlaneseq
    %v1943 = vshrl.u32 %v1942, 7
    %v1944 = vsub.s32 %v638, %v1943
    %v1945 = vrot.slane %v1877, %v1944
    %v1946 = vsel %vm643, %v1945, %v1941
    %v1947 = vlaneseq
    %v1948 = vshrl.u32 %v1947, 7
    %v1949 = vsub.s32 %v298, %v1948
    %v1950 = vrot.slane %v1880, %v1949
    %v1951 = vlaneseq
    %v1952 = vshrl.u32 %v1951, 7
    %v1953 = vsub.s32 %v638, %v1952
    %v1954 = vrot.slane %v1883, %v1953
    %v1955 = vsel %vm643, %v1954, %v1950
    %v1956 = vsel %vm356, %v1901, %v1892
    %v1957 = vsel %vm359, %v1910, %v1956
    %v1958 = vsel %vm362, %v1919, %v1957
    %v1959 = vsel %vm365, %v1928, %v1958
    %v1960 = vsel %vm368, %v1937, %v1959
    %v1961 = vsel %vm371, %v1946, %v1960
    %v1962 = vsel %vm374, %v1955, %v1961
    %v1963 = vsel %vm716, %v1962, 2147483647
    %v1964 = vand.u32 %v1963, 65535
    %v1965 = vshra.s32 %v1963, 16
    %v1966 = vcvt.s32.f32 %v1964
    %v1967 = vcvt.s32.f32 %v1965
    %1968 = vmin.xlane.f32.xlu0 %v1967
    %v1969 = vpop.xlane.xlu0 %1968
    %vm1970 = vcmp.eq.f32.partialorder %v1967, %v1969
    %v1971 = vsel %vm1970, %v1966, inf
    %1972 = vmin.xlane.f32.xlu0 %v1971
    %v1973 = vpop.xlane.xlu0 %1972
    %v1974 = vcvt.f32.s32 %v1973
    %v1975 = vcvt.f32.s32 %v1969
    %v1976 = vshll.u32 %v1975, 16
    %v1977 = vadd.s32 %v1976, %v1974
    %vm1978 = vcmp.eq.s32.totalorder %v298, %v1977
    %v1979 = vsel %vm1978, 1, 0
    %v1980 = vcvt.s32.f32 %v1979
    %v1981 = vlaneseq
    %v1982 = vshrl.u32 %v1981, 7
    %v1983 = vsub.s32 0, %v1982
    %v1984 = vrot.slane %v1980, %v1983
    %1986 = vbcast.lane.b32.xlu0 %v1984, 256
    %v1987 = vpop.permute.xlu0 %1986
    %s1989 = sor.u32 256, 8
    %1990 = vbcast.lane.b32.xlu0 %v1984, %s1989
    %v1991 = vpop.permute.xlu0 %1990
    %v1992 = vlaneseq
    %v1993 = vshrl.u32 %v1992, 7
    %v1994 = vsub.s32 1, %v1993
    %v1995 = vrot.slane %v1980, %v1994
    %1997 = vbcast.lane.b32.xlu0 %v1995, 256
    %v1998 = vpop.permute.xlu0 %1997
    %s2000 = sor.u32 256, 8
    %2001 = vbcast.lane.b32.xlu0 %v1995, %s2000
    %v2002 = vpop.permute.xlu0 %2001
    %v2003 = vlaneseq
    %v2004 = vshrl.u32 %v2003, 7
    %v2005 = vsub.s32 2, %v2004
    %v2006 = vrot.slane %v1980, %v2005
    %2008 = vbcast.lane.b32.xlu0 %v2006, 256
    %v2009 = vpop.permute.xlu0 %2008
    %s2011 = sor.u32 256, 8
    %2012 = vbcast.lane.b32.xlu0 %v2006, %s2011
    %v2013 = vpop.permute.xlu0 %2012
    %v2014 = vlaneseq
    %v2015 = vshrl.u32 %v2014, 7
    %v2016 = vsub.s32 3, %v2015
    %v2017 = vrot.slane %v1980, %v2016
    %2019 = vbcast.lane.b32.xlu0 %v2017, 256
    %v2020 = vpop.permute.xlu0 %2019
    %s2022 = sor.u32 256, 8
    %2023 = vbcast.lane.b32.xlu0 %v2017, %s2022
    %v2024 = vpop.permute.xlu0 %2023
    %v2025 = vlaneseq
    %v2026 = vshrl.u32 %v2025, 7
    %v2027 = vsub.s32 4, %v2026
    %v2028 = vrot.slane %v1980, %v2027
    %2030 = vbcast.lane.b32.xlu0 %v2028, 256
    %v2031 = vpop.permute.xlu0 %2030
    %s2033 = sor.u32 256, 8
    %2034 = vbcast.lane.b32.xlu0 %v2028, %s2033
    %v2035 = vpop.permute.xlu0 %2034
    %v2036 = vlaneseq
    %v2037 = vshrl.u32 %v2036, 7
    %v2038 = vsub.s32 5, %v2037
    %v2039 = vrot.slane %v1980, %v2038
    %2041 = vbcast.lane.b32.xlu0 %v2039, 256
    %v2042 = vpop.permute.xlu0 %2041
    %s2044 = sor.u32 256, 8
    %2045 = vbcast.lane.b32.xlu0 %v2039, %s2044
    %v2046 = vpop.permute.xlu0 %2045
    %v2047 = vlaneseq
    %v2048 = vshrl.u32 %v2047, 7
    %v2049 = vsub.s32 6, %v2048
    %v2050 = vrot.slane %v1980, %v2049
    %2052 = vbcast.lane.b32.xlu0 %v2050, 256
    %v2053 = vpop.permute.xlu0 %2052
    %s2055 = sor.u32 256, 8
    %2056 = vbcast.lane.b32.xlu0 %v2050, %s2055
    %v2057 = vpop.permute.xlu0 %2056
    %v2058 = vlaneseq
    %v2059 = vshrl.u32 %v2058, 7
    %v2060 = vsub.s32 7, %v2059
    %v2061 = vrot.slane %v1980, %v2060
    %2063 = vbcast.lane.b32.xlu0 %v2061, 256
    %v2064 = vpop.permute.xlu0 %2063
    %s2066 = sor.u32 256, 8
    %2067 = vbcast.lane.b32.xlu0 %v2061, %s2066
    %v2068 = vpop.permute.xlu0 %2067
    %v2069 = vmul.f32 %v1344, %v1987
    %v2070 = vmul.f32 %v1345, %v1991
    %v2071 = vmul.f32 %v1346, %v1998
    %v2072 = vmul.f32 %v1347, %v2002
    %v2073 = vmul.f32 %v1348, %v2009
    %v2074 = vmul.f32 %v1349, %v2013
    %v2075 = vmul.f32 %v1350, %v2020
    %v2076 = vmul.f32 %v1351, %v2024
    %v2077 = vmul.f32 %v1352, %v2031
    %v2078 = vmul.f32 %v1353, %v2035
    %v2079 = vmul.f32 %v1354, %v2042
    %v2080 = vmul.f32 %v1355, %v2046
    %v2081 = vmul.f32 %v1356, %v2053
    %v2082 = vmul.f32 %v1357, %v2057
    %v2083 = vmul.f32 %v1358, %v2064
    %v2084 = vmul.f32 %v1359, %v2068
    %vm2085 = vcmask 523264
    %v2086 = vsel %vm2085, %v2069, 0.0
    %vm2087 = vcmask 516096
    %v2088 = vsel %vm2087, %v2070, 0.0
    %v2089 = vadd.f32 %v2086, %v2088
    %v2090 = vrot.slane %v2089, 4
    %v2091 = vadd.f32 %v2089, %v2090
    %v2092 = vrot.slane %v2091, 2
    %v2093 = vadd.f32 %v2091, %v2092
    %v2094 = vrot.slane %v2093, 1
    %v2095 = vadd.f32 %v2093, %v2094
    %v2096 = vsel %vm2085, %v2071, 0.0
    %v2097 = vsel %vm2087, %v2072, 0.0
    %v2098 = vadd.f32 %v2096, %v2097
    %v2099 = vrot.slane %v2098, 4
    %v2100 = vadd.f32 %v2098, %v2099
    %v2101 = vrot.slane %v2100, 2
    %v2102 = vadd.f32 %v2100, %v2101
    %v2103 = vrot.slane %v2102, 1
    %v2104 = vadd.f32 %v2102, %v2103
    %v2105 = vsel %vm2085, %v2073, 0.0
    %v2106 = vsel %vm2087, %v2074, 0.0
    %v2107 = vadd.f32 %v2105, %v2106
    %v2108 = vrot.slane %v2107, 4
    %v2109 = vadd.f32 %v2107, %v2108
    %v2110 = vrot.slane %v2109, 2
    %v2111 = vadd.f32 %v2109, %v2110
    %v2112 = vrot.slane %v2111, 1
    %v2113 = vadd.f32 %v2111, %v2112
    %v2114 = vsel %vm2085, %v2075, 0.0
    %v2115 = vsel %vm2087, %v2076, 0.0
    %v2116 = vadd.f32 %v2114, %v2115
    %v2117 = vrot.slane %v2116, 4
    %v2118 = vadd.f32 %v2116, %v2117
    %v2119 = vrot.slane %v2118, 2
    %v2120 = vadd.f32 %v2118, %v2119
    %v2121 = vrot.slane %v2120, 1
    %v2122 = vadd.f32 %v2120, %v2121
    %v2123 = vsel %vm2085, %v2077, 0.0
    %v2124 = vsel %vm2087, %v2078, 0.0
    %v2125 = vadd.f32 %v2123, %v2124
    %v2126 = vrot.slane %v2125, 4
    %v2127 = vadd.f32 %v2125, %v2126
    %v2128 = vrot.slane %v2127, 2
    %v2129 = vadd.f32 %v2127, %v2128
    %v2130 = vrot.slane %v2129, 1
    %v2131 = vadd.f32 %v2129, %v2130
    %v2132 = vsel %vm2085, %v2079, 0.0
    %v2133 = vsel %vm2087, %v2080, 0.0
    %v2134 = vadd.f32 %v2132, %v2133
    %v2135 = vrot.slane %v2134, 4
    %v2136 = vadd.f32 %v2134, %v2135
    %v2137 = vrot.slane %v2136, 2
    %v2138 = vadd.f32 %v2136, %v2137
    %v2139 = vrot.slane %v2138, 1
    %v2140 = vadd.f32 %v2138, %v2139
    %v2141 = vsel %vm2085, %v2081, 0.0
    %v2142 = vsel %vm2087, %v2082, 0.0
    %v2143 = vadd.f32 %v2141, %v2142
    %v2144 = vrot.slane %v2143, 4
    %v2145 = vadd.f32 %v2143, %v2144
    %v2146 = vrot.slane %v2145, 2
    %v2147 = vadd.f32 %v2145, %v2146
    %v2148 = vrot.slane %v2147, 1
    %v2149 = vadd.f32 %v2147, %v2148
    %v2150 = vsel %vm2085, %v2083, 0.0
    %v2151 = vsel %vm2087, %v2084, 0.0
    %v2152 = vadd.f32 %v2150, %v2151
    %v2153 = vrot.slane %v2152, 4
    %v2154 = vadd.f32 %v2152, %v2153
    %v2155 = vrot.slane %v2154, 2
    %v2156 = vadd.f32 %v2154, %v2155
    %v2157 = vrot.slane %v2156, 1
    %v2158 = vadd.f32 %v2156, %v2157
    %v2159 = vmul.f32 %v1360, %v1980
    %v2160 = vsel %vm716, %v2159, 0.0
    %2161 = vadd.xlane.f32.xlu0 %v2160
    %v2162 = vpop.xlane.xlu0 %2161
    %vm2163 = vcmp.gt.f32.partialorder %v2162, 0.5
    %vm2164 = vcmp.gt.s32.totalorder %v1977, 0
    %vm2165 = vmand %vm2164, %vm2163
    %v2166 = vrot.slane %v1403, 7
    %v2167 = vsel %vm359, %v2166, %v1402
    %v2168 = vrot.slane %v1404, 6
    %v2169 = vsel %vm362, %v2168, %v2167
    %v2170 = vrot.slane %v1405, 5
    %v2171 = vsel %vm365, %v2170, %v2169
    %v2172 = vrot.slane %v1406, 4
    %v2173 = vsel %vm368, %v2172, %v2171
    %v2174 = vrot.slane %v1407, 3
    %v2175 = vsel %vm371, %v2174, %v2173
    %v2176 = vrot.slane %v1408, 2
    %v2177 = vsel %vm374, %v2176, %v2175
    %v2178 = vrot.slane %v1409, 1
    %v2182 = vrot.slane %v1501, 7
    %2183 = vrot.lane.b32.xlu0 %v2182, 32
    %v2184 = vpop.permute.xlu0 %2183
    %v2186 = vsel %vm219, %v2177, %v2184
    %v2187 = vsel %vm219, %v2178, %v2184
    %v2188 = vsel %vm2165, 1, 0
    %vm2189 = vcmp.eq.s32.totalorder %v2188, 1
    %v2198 = vsel %vm356, %v2104, %v2095
    %v2199 = vsel %vm359, %v2113, %v2198
    %v2200 = vsel %vm362, %v2122, %v2199
    %v2201 = vsel %vm365, %v2131, %v2200
    %v2202 = vsel %vm368, %v2140, %v2201
    %v2203 = vsel %vm371, %v2149, %v2202
    %v2204 = vsel %vm374, %v2158, %v2203
    %vm2208 = vcmask 1046528
    %v2209 = vrot.slane %v2186, 1
    %v2210 = vrot.slane %v2187, 1
    %v2211 = vsel %vm2208, %v2209, %v2210
    %v2213 = vsel %vm2189, %v2204, %v2211
    %vm2214 = vmxor %vm2163, 1
    %vm2215 = vmand %vm2164, %vm2214
    %v2216 = vsel %vm2215, 1.0, 0.0
    %v2217 = vmul.f32 %v1980, %v2216
    %v2218 = vlaneseq
    %v2219 = vshrl.u32 %v2218, 7
    %v2220 = vsub.s32 0, %v2219
    %v2221 = vrot.slane %v2217, %v2220
    %2223 = vbcast.lane.b32.xlu0 %v2221, 256
    %v2224 = vpop.permute.xlu0 %2223
    %s2226 = sor.u32 256, 8
    %2227 = vbcast.lane.b32.xlu0 %v2221, %s2226
    %v2228 = vpop.permute.xlu0 %2227
    %v2229 = vlaneseq
    %v2230 = vshrl.u32 %v2229, 7
    %v2231 = vsub.s32 1, %v2230
    %v2232 = vrot.slane %v2217, %v2231
    %2234 = vbcast.lane.b32.xlu0 %v2232, 256
    %v2235 = vpop.permute.xlu0 %2234
    %s2237 = sor.u32 256, 8
    %2238 = vbcast.lane.b32.xlu0 %v2232, %s2237
    %v2239 = vpop.permute.xlu0 %2238
    %v2240 = vlaneseq
    %v2241 = vshrl.u32 %v2240, 7
    %v2242 = vsub.s32 2, %v2241
    %v2243 = vrot.slane %v2217, %v2242
    %2245 = vbcast.lane.b32.xlu0 %v2243, 256
    %v2246 = vpop.permute.xlu0 %2245
    %s2248 = sor.u32 256, 8
    %2249 = vbcast.lane.b32.xlu0 %v2243, %s2248
    %v2250 = vpop.permute.xlu0 %2249
    %v2251 = vlaneseq
    %v2252 = vshrl.u32 %v2251, 7
    %v2253 = vsub.s32 3, %v2252
    %v2254 = vrot.slane %v2217, %v2253
    %2256 = vbcast.lane.b32.xlu0 %v2254, 256
    %v2257 = vpop.permute.xlu0 %2256
    %s2259 = sor.u32 256, 8
    %2260 = vbcast.lane.b32.xlu0 %v2254, %s2259
    %v2261 = vpop.permute.xlu0 %2260
    %v2262 = vlaneseq
    %v2263 = vshrl.u32 %v2262, 7
    %v2264 = vsub.s32 4, %v2263
    %v2265 = vrot.slane %v2217, %v2264
    %2267 = vbcast.lane.b32.xlu0 %v2265, 256
    %v2268 = vpop.permute.xlu0 %2267
    %s2270 = sor.u32 256, 8
    %2271 = vbcast.lane.b32.xlu0 %v2265, %s2270
    %v2272 = vpop.permute.xlu0 %2271
    %v2273 = vlaneseq
    %v2274 = vshrl.u32 %v2273, 7
    %v2275 = vsub.s32 5, %v2274
    %v2276 = vrot.slane %v2217, %v2275
    %2278 = vbcast.lane.b32.xlu0 %v2276, 256
    %v2279 = vpop.permute.xlu0 %2278
    %s2281 = sor.u32 256, 8
    %2282 = vbcast.lane.b32.xlu0 %v2276, %s2281
    %v2283 = vpop.permute.xlu0 %2282
    %v2284 = vlaneseq
    %v2285 = vshrl.u32 %v2284, 7
    %v2286 = vsub.s32 6, %v2285
    %v2287 = vrot.slane %v2217, %v2286
    %2289 = vbcast.lane.b32.xlu0 %v2287, 256
    %v2290 = vpop.permute.xlu0 %2289
    %s2292 = sor.u32 256, 8
    %2293 = vbcast.lane.b32.xlu0 %v2287, %s2292
    %v2294 = vpop.permute.xlu0 %2293
    %v2295 = vlaneseq
    %v2296 = vshrl.u32 %v2295, 7
    %v2297 = vsub.s32 7, %v2296
    %v2298 = vrot.slane %v2217, %v2297
    %2300 = vbcast.lane.b32.xlu0 %v2298, 256
    %v2301 = vpop.permute.xlu0 %2300
    %s2303 = sor.u32 256, 8
    %2304 = vbcast.lane.b32.xlu0 %v2298, %s2303
    %v2305 = vpop.permute.xlu0 %2304
    %v2306 = vcombine.high %v2186, %v2186
    %v2308 = vunpack.c.l.s4 1966171168
    %v2309 = vunpack.c.0.s8 %v2308
    %v2310 = vlaneseq
    %v2311 = vshrl.u32 %v2310, 7
    %v2312 = vsub.s32 %v2309, %v2311
    %v2313 = vrot.slane %v2186, %v2312
    %v2315 = vunpack.c.l.s4 1966171168
    %v2316 = vunpack.c.0.s8 %v2315
    %v2317 = vlaneseq
    %v2318 = vshrl.u32 %v2317, 7
    %v2319 = vsub.s32 %v2316, %v2318
    %v2320 = vrot.slane %v2306, %v2319
    %v2321 = vcombine.high %v2313, %v2313
    %v2322 = vcombine.high %v2320, %v2320
    %v2324 = vunpack.c.l.s4 1966171168
    %v2325 = vunpack.c.0.s8 %v2324
    %v2326 = vlaneseq
    %v2327 = vshrl.u32 %v2326, 7
    %v2328 = vsub.s32 %v2325, %v2327
    %v2329 = vrot.slane %v2313, %v2328
    %v2331 = vunpack.c.l.s4 1966171168
    %v2332 = vunpack.c.0.s8 %v2331
    %v2333 = vlaneseq
    %v2334 = vshrl.u32 %v2333, 7
    %v2335 = vsub.s32 %v2332, %v2334
    %v2336 = vrot.slane %v2320, %v2335
    %v2338 = vunpack.c.l.s4 1966171168
    %v2339 = vunpack.c.0.s8 %v2338
    %v2340 = vlaneseq
    %v2341 = vshrl.u32 %v2340, 7
    %v2342 = vsub.s32 %v2339, %v2341
    %v2343 = vrot.slane %v2321, %v2342
    %v2345 = vunpack.c.l.s4 1966171168
    %v2346 = vunpack.c.0.s8 %v2345
    %v2347 = vlaneseq
    %v2348 = vshrl.u32 %v2347, 7
    %v2349 = vsub.s32 %v2346, %v2348
    %v2350 = vrot.slane %v2322, %v2349
    %v2351 = vcombine.high %v2329, %v2329
    %v2352 = vcombine.high %v2336, %v2336
    %v2353 = vcombine.high %v2343, %v2343
    %v2354 = vcombine.high %v2350, %v2350
    %v2356 = vunpack.c.l.s4 1966171168
    %v2357 = vunpack.c.0.s8 %v2356
    %v2358 = vlaneseq
    %v2359 = vshrl.u32 %v2358, 7
    %v2360 = vsub.s32 %v2357, %v2359
    %v2361 = vrot.slane %v2187, %v2360
    %v2363 = vunpack.c.l.s4 1966171168
    %v2364 = vunpack.c.0.s8 %v2363
    %v2365 = vlaneseq
    %v2366 = vshrl.u32 %v2365, 7
    %v2367 = vsub.s32 %v2364, %v2366
    %v2368 = vrot.slane %v2361, %v2367
    %v2369 = vlaneseq
    %v2370 = vshrl.u32 %v2369, 7
    %v2371 = vsub.s32 0, %v2370
    %v2372 = vrot.slane %v2343, %v2371
    %v2373 = vlaneseq
    %v2374 = vshrl.u32 %v2373, 7
    %v2375 = vsub.s32 0, %v2374
    %v2376 = vrot.slane %v2351, %v2375
    %v2377 = vlaneseq
    %v2378 = vshrl.u32 %v2377, 7
    %v2379 = vsub.s32 0, %v2378
    %v2380 = vrot.slane %v2353, %v2379
    %v2381 = vlaneseq
    %v2382 = vshrl.u32 %v2381, 7
    %v2383 = vsub.s32 0, %v2382
    %v2384 = vrot.slane %v2336, %v2383
    %v2385 = vlaneseq
    %v2386 = vshrl.u32 %v2385, 7
    %v2387 = vsub.s32 0, %v2386
    %v2388 = vrot.slane %v2350, %v2387
    %v2389 = vlaneseq
    %v2390 = vshrl.u32 %v2389, 7
    %v2391 = vsub.s32 0, %v2390
    %v2392 = vrot.slane %v2352, %v2391
    %v2393 = vlaneseq
    %v2394 = vshrl.u32 %v2393, 7
    %v2395 = vsub.s32 0, %v2394
    %v2396 = vrot.slane %v2354, %v2395
    %v2397 = vlaneseq
    %v2398 = vshrl.u32 %v2397, 7
    %v2399 = vsub.s32 0, %v2398
    %v2400 = vrot.slane %v2368, %v2399
    %v2409 = vmul.f32 %v2224, %v2372
    %v2410 = vmul.f32 %v2228, %v2372
    %v2411 = vmul.f32 %v2235, %v2376
    %v2412 = vmul.f32 %v2239, %v2376
    %v2413 = vmul.f32 %v2246, %v2380
    %v2414 = vmul.f32 %v2250, %v2380
    %v2415 = vmul.f32 %v2257, %v2384
    %v2416 = vmul.f32 %v2261, %v2384
    %v2417 = vmul.f32 %v2268, %v2388
    %v2418 = vmul.f32 %v2272, %v2388
    %v2419 = vmul.f32 %v2279, %v2392
    %v2420 = vmul.f32 %v2283, %v2392
    %v2421 = vmul.f32 %v2290, %v2396
    %v2422 = vmul.f32 %v2294, %v2396
    %v2423 = vmul.f32 %v2301, %v2400
    %v2424 = vmul.f32 %v2305, %v2400
    %v2425 = vadd.f32 %v1344, %v2409
    %v2426 = vadd.f32 %v1345, %v2410
    %v2427 = vadd.f32 %v1346, %v2411
    %v2428 = vadd.f32 %v1347, %v2412
    %v2429 = vadd.f32 %v1348, %v2413
    %v2430 = vadd.f32 %v1349, %v2414
    %v2431 = vadd.f32 %v1350, %v2415
    %v2432 = vadd.f32 %v1351, %v2416
    %v2433 = vadd.f32 %v1352, %v2417
    %v2434 = vadd.f32 %v1353, %v2418
    %v2435 = vadd.f32 %v1354, %v2419
    %v2436 = vadd.f32 %v1355, %v2420
    %v2437 = vadd.f32 %v1356, %v2421
    %v2438 = vadd.f32 %v1357, %v2422
    %v2439 = vadd.f32 %v1358, %v2423
    %v2440 = vadd.f32 %v1359, %v2424
    %v2441 = vadd.f32 %v1360, %v2217
    %2442 = vst.msk [vmem:[#allocation2 + $0x8] sm:$0xff] %vm219, %v2213
    %v2444 = vrot.slane %v2213, 6
    %v2445 = vrot.slane %v2213, 7
    %v2446 = vrot.slane %v2213, 1
    %v2447 = vrot.slane %v2213, 2
    %v2448 = vrot.slane %v2213, 3
    %v2449 = vrot.slane %v2213, 4
    %v2450 = vrot.slane %v2213, 5
    %2451 = vrot.lane.b32.xlu0 %v2444, 96
    %v2452 = vpop.permute.xlu0 %2451
    %2453 = vrot.lane.b32.xlu0 %v2445, 96
    %v2454 = vpop.permute.xlu0 %2453
    %2455 = vrot.lane.b32.xlu0 %v2213, 96
    %v2456 = vpop.permute.xlu0 %2455
    %2457 = vrot.lane.b32.xlu0 %v2446, 96
    %v2458 = vpop.permute.xlu0 %2457
    %2459 = vrot.lane.b32.xlu0 %v2447, 96
    %v2460 = vpop.permute.xlu0 %2459
    %2461 = vrot.lane.b32.xlu0 %v2448, 96
    %v2462 = vpop.permute.xlu0 %2461
    %2463 = vrot.lane.b32.xlu0 %v2449, 96
    %v2464 = vpop.permute.xlu0 %2463
    %2465 = vrot.lane.b32.xlu0 %v2450, 96
    %v2466 = vpop.permute.xlu0 %2465
    %v2475 = vadd.f32 %v174, %v2452
    %v2476 = vadd.f32 %v179, %v2454
    %v2477 = vadd.f32 %v184, %v2456
    %v2478 = vadd.f32 %v189, %v2458
    %v2479 = vadd.f32 %v194, %v2460
    %v2480 = vadd.f32 %v199, %v2462
    %v2481 = vadd.f32 %v204, %v2464
    %v2482 = vadd.f32 %v209, %v2466
    %v2483 = vtanh.pop %v2475
    %v2484 = vtanh.pop %v2476
    %v2485 = vtanh.pop %v2477
    %v2486 = vtanh.pop %v2478
    %v2487 = vtanh.pop %v2479
    %v2488 = vtanh.pop %v2480
    %v2489 = vtanh.pop %v2481
    %v2490 = vtanh.pop %v2482
    %v2499 = vrot.slane %v2483, 2
    %v2500 = vrot.slane %v2484, 1
    %v2501 = vsel %vm356, %v2500, %v2499
    %v2502 = vsel %vm359, %v2485, %v2501
    %v2503 = vrot.slane %v2486, 7
    %v2504 = vsel %vm362, %v2503, %v2502
    %v2505 = vrot.slane %v2487, 6
    %v2506 = vsel %vm365, %v2505, %v2504
    %v2507 = vrot.slane %v2488, 5
    %v2508 = vsel %vm368, %v2507, %v2506
    %v2509 = vrot.slane %v2489, 4
    %v2510 = vsel %vm371, %v2509, %v2508
    %v2511 = vrot.slane %v2490, 3
    %v2512 = vsel %vm374, %v2511, %v2510
    %v2513 = vsel %vm219, %v2512, 0
    %2515 = vmatprep.subr.mxu0 0.0
    %2516 = vmatpush1.msra.mxu0 0.0
    %2517 = vmatprep.subr.mxu0 0.0
    %2518 = vmatpush1.msra.mxu0 0.0
    %2519 = vmatprep.subr.mxu0 0.0
    %2520 = vmatpush1.msra.mxu0 0.0
    %2521 = vmatprep.subr.mxu0 0.0
    %2522 = vmatpush1.msra.mxu0 0.0
    %2523 = vmatprep.subr.mxu0 0.0
    %2524 = vmatpush1.msra.mxu0 0.0
    %2525 = vmatprep.subr.mxu0 0.0
    %2526 = vmatpush1.msra.mxu0 0.0
    %2527 = vmatprep.subr.mxu0 0.0
    %2528 = vmatpush1.msra.mxu0 0.0
    %2529 = vmatprep.subr.mxu0 0.0
    %2530 = vmatpush1.msra.mxu0 0.0
    %2531 = vmatprep.subr.mxu0 0.0
    %2532 = vmatpush1.msra.mxu0 0.0
    %2533 = vmatprep.subr.mxu0 0.0
    %2534 = vmatpush1.msra.mxu0 0.0
    %2535 = vmatprep.subr.mxu0 0.0
    %2536 = vmatpush1.msra.mxu0 0.0
    %2537 = vmatprep.subr.mxu0 0.0
    %2538 = vmatpush1.msra.mxu0 0.0
    %2539 = vmatprep.subr.mxu0 0.0
    %2540 = vmatpush1.msra.mxu0 %v60
    %2541 = vmatprep.subr.mxu0 0.0
    %2542 = vmatpush1.msra.mxu0 %v59
    %2543 = vmatprep.subr.mxu0 0.0
    %2544 = vmatpush1.msra.mxu0 %v58
    %2545 = vmatprep.subr.mxu0 0.0
    %2546 = vmatpush1.msra.mxu0 %v57
    %2547 = vmatprep.subr.mxu0 0.0
    %2548 = vmatpush2.msra.mxu0 0.0
    %2549 = vmatprep.subr.mxu0 0.0
    %2550 = vmatpush2.msra.mxu0 0.0
    %2551 = vmatprep.subr.mxu0 0.0
    %2552 = vmatpush2.msra.mxu0 0.0
    %2553 = vmatprep.subr.mxu0 0.0
    %2554 = vmatpush2.msra.mxu0 0.0
    %2555 = vmatprep.subr.mxu0 0.0
    %2556 = vmatpush2.msra.mxu0 0.0
    %2557 = vmatprep.subr.mxu0 0.0
    %2558 = vmatpush2.msra.mxu0 0.0
    %2559 = vmatprep.subr.mxu0 0.0
    %2560 = vmatpush2.msra.mxu0 0.0
    %2561 = vmatprep.subr.mxu0 0.0
    %2562 = vmatpush2.msra.mxu0 0.0
    %2563 = vmatprep.subr.mxu0 0.0
    %2564 = vmatpush2.msra.mxu0 0.0
    %2565 = vmatprep.subr.mxu0 0.0
    %2566 = vmatpush2.msra.mxu0 0.0
    %2567 = vmatprep.subr.mxu0 0.0
    %2568 = vmatpush2.msra.mxu0 0.0
    %2569 = vmatprep.subr.mxu0 0.0
    %2570 = vmatpush2.msra.mxu0 0.0
    %2571 = vmatprep.subr.mxu0 0.0
    %2572 = vmatpush2.msra.mxu0 0.0
    %2573 = vmatprep.subr.mxu0 0.0
    %2574 = vmatpush2.msra.mxu0 0.0
    %2575 = vmatprep.subr.mxu0 0.0
    %2576 = vmatpush2.msra.mxu0 0.0
    %2577 = vmatprep.subr.mxu0 0.0
    %2578 = vmatpush2.msra.mxu0 0.0
    %2579 = vmatprep.mubr.f32.mxu0 0.0
    %2580 = vmatmul.mubr.f32.gmra.mxu0 %v2513
    %v2581 = vpop.f32.mrf.mxu0
    %v2582 = vadd.f32 0.0, %v2581
    %v2583 = vpop.f32.mrf.mxu0
    %2584 = vdwg.mxu0
    %v2585 = vlaneseq
    %v2586 = vshrl.u32 %v2585, 7
    %v2587 = vsub.s32 2, %v2586
    %v2588 = vrot.slane %v2483, %v2587
    %v2589 = vlaneseq
    %v2590 = vshrl.u32 %v2589, 7
    %v2591 = vsub.s32 2, %v2590
    %v2592 = vrot.slane %v2484, %v2591
    %v2593 = vlaneseq
    %v2594 = vshrl.u32 %v2593, 7
    %v2595 = vsub.s32 2, %v2594
    %v2596 = vrot.slane %v2485, %v2595
    %v2597 = vlaneseq
    %v2598 = vshrl.u32 %v2597, 7
    %v2599 = vsub.s32 2, %v2598
    %v2600 = vrot.slane %v2486, %v2599
    %v2601 = vlaneseq
    %v2602 = vshrl.u32 %v2601, 7
    %v2603 = vsub.s32 2, %v2602
    %v2604 = vrot.slane %v2487, %v2603
    %v2605 = vlaneseq
    %v2606 = vshrl.u32 %v2605, 7
    %v2607 = vsub.s32 2, %v2606
    %v2608 = vrot.slane %v2488, %v2607
    %v2609 = vlaneseq
    %v2610 = vshrl.u32 %v2609, 7
    %v2611 = vsub.s32 2, %v2610
    %v2612 = vrot.slane %v2489, %v2611
    %v2613 = vlaneseq
    %v2614 = vshrl.u32 %v2613, 7
    %v2615 = vsub.s32 2, %v2614
    %v2616 = vrot.slane %v2490, %v2615
    %v2617 = vmul.f32 %v2588, %v61
    %v2618 = vmul.f32 %v2588, %v62
    %v2619 = vmul.f32 %v2592, %v61
    %v2620 = vmul.f32 %v2592, %v62
    %v2621 = vmul.f32 %v2596, %v61
    %v2622 = vmul.f32 %v2596, %v62
    %v2623 = vmul.f32 %v2600, %v61
    %v2624 = vmul.f32 %v2600, %v62
    %v2625 = vmul.f32 %v2604, %v61
    %v2626 = vmul.f32 %v2604, %v62
    %v2627 = vmul.f32 %v2608, %v61
    %v2628 = vmul.f32 %v2608, %v62
    %v2629 = vmul.f32 %v2612, %v61
    %v2630 = vmul.f32 %v2612, %v62
    %v2631 = vmul.f32 %v2616, %v61
    %v2632 = vmul.f32 %v2616, %v62
    %v2633 = vsel %vm219, %v2617, 0.0
    %2634 = vadd.xlane.f32.xlu0 %v2633
    %v2635 = vpop.xlane.xlu0 %2634
    %v2636 = vsel %vm499, %v2618, 0.0
    %2637 = vadd.xlane.f32.xlu0 %v2636
    %v2638 = vpop.xlane.xlu0 %2637
    %v2639 = vsel %vm219, %v2619, 0.0
    %2640 = vadd.xlane.f32.xlu0 %v2639
    %v2641 = vpop.xlane.xlu0 %2640
    %v2642 = vsel %vm499, %v2620, 0.0
    %2643 = vadd.xlane.f32.xlu0 %v2642
    %v2644 = vpop.xlane.xlu0 %2643
    %v2645 = vsel %vm219, %v2621, 0.0
    %2646 = vadd.xlane.f32.xlu0 %v2645
    %v2647 = vpop.xlane.xlu0 %2646
    %v2648 = vsel %vm499, %v2622, 0.0
    %2649 = vadd.xlane.f32.xlu0 %v2648
    %v2650 = vpop.xlane.xlu0 %2649
    %v2651 = vsel %vm219, %v2623, 0.0
    %2652 = vadd.xlane.f32.xlu0 %v2651
    %v2653 = vpop.xlane.xlu0 %2652
    %v2654 = vsel %vm499, %v2624, 0.0
    %2655 = vadd.xlane.f32.xlu0 %v2654
    %v2656 = vpop.xlane.xlu0 %2655
    %v2657 = vsel %vm219, %v2625, 0.0
    %2658 = vadd.xlane.f32.xlu0 %v2657
    %v2659 = vpop.xlane.xlu0 %2658
    %v2660 = vsel %vm499, %v2626, 0.0
    %2661 = vadd.xlane.f32.xlu0 %v2660
    %v2662 = vpop.xlane.xlu0 %2661
    %v2663 = vsel %vm219, %v2627, 0.0
    %2664 = vadd.xlane.f32.xlu0 %v2663
    %v2665 = vpop.xlane.xlu0 %2664
    %v2666 = vsel %vm499, %v2628, 0.0
    %2667 = vadd.xlane.f32.xlu0 %v2666
    %v2668 = vpop.xlane.xlu0 %2667
    %v2669 = vsel %vm219, %v2629, 0.0
    %2670 = vadd.xlane.f32.xlu0 %v2669
    %v2671 = vpop.xlane.xlu0 %2670
    %v2672 = vsel %vm499, %v2630, 0.0
    %2673 = vadd.xlane.f32.xlu0 %v2672
    %v2674 = vpop.xlane.xlu0 %2673
    %v2675 = vsel %vm219, %v2631, 0.0
    %2676 = vadd.xlane.f32.xlu0 %v2675
    %v2677 = vpop.xlane.xlu0 %2676
    %v2678 = vsel %vm499, %v2632, 0.0
    %2679 = vadd.xlane.f32.xlu0 %v2678
    %v2680 = vpop.xlane.xlu0 %2679
    %v2681 = vadd.f32 %v2635, %v547
    %v2682 = vadd.f32 %v2638, %v551
    %v2683 = vadd.f32 %v2641, %v547
    %v2684 = vadd.f32 %v2644, %v551
    %v2685 = vadd.f32 %v2647, %v547
    %v2686 = vadd.f32 %v2650, %v551
    %v2687 = vadd.f32 %v2653, %v547
    %v2688 = vadd.f32 %v2656, %v551
    %v2689 = vadd.f32 %v2659, %v547
    %v2690 = vadd.f32 %v2662, %v551
    %v2691 = vadd.f32 %v2665, %v547
    %v2692 = vadd.f32 %v2668, %v551
    %v2693 = vadd.f32 %v2671, %v547
    %v2694 = vadd.f32 %v2674, %v551
    %v2695 = vadd.f32 %v2677, %v547
    %v2696 = vadd.f32 %v2680, %v551
    %2713 = vset.pattern.permute.xlu0 0
    %2714 = vperm.xlu0 %2713, %v2681
    %v2715 = vpop.permute.xlu0 %2714
    %2716 = vset.pattern.permute.xlu0 0
    %2717 = vperm.xlu0 %2716, %v2682
    %v2718 = vpop.permute.xlu0 %2717
    %2719 = vset.pattern.permute.xlu0 0
    %2720 = vperm.xlu0 %2719, %v2683
    %v2721 = vpop.permute.xlu0 %2720
    %2722 = vset.pattern.permute.xlu0 0
    %2723 = vperm.xlu0 %2722, %v2684
    %v2724 = vpop.permute.xlu0 %2723
    %2725 = vset.pattern.permute.xlu0 0
    %2726 = vperm.xlu0 %2725, %v2685
    %v2727 = vpop.permute.xlu0 %2726
    %2728 = vset.pattern.permute.xlu0 0
    %2729 = vperm.xlu0 %2728, %v2686
    %v2730 = vpop.permute.xlu0 %2729
    %2731 = vset.pattern.permute.xlu0 0
    %2732 = vperm.xlu0 %2731, %v2687
    %v2733 = vpop.permute.xlu0 %2732
    %2734 = vset.pattern.permute.xlu0 0
    %2735 = vperm.xlu0 %2734, %v2688
    %v2736 = vpop.permute.xlu0 %2735
    %2737 = vset.pattern.permute.xlu0 0
    %2738 = vperm.xlu0 %2737, %v2689
    %v2739 = vpop.permute.xlu0 %2738
    %2740 = vset.pattern.permute.xlu0 0
    %2741 = vperm.xlu0 %2740, %v2690
    %v2742 = vpop.permute.xlu0 %2741
    %2743 = vset.pattern.permute.xlu0 0
    %2744 = vperm.xlu0 %2743, %v2691
    %v2745 = vpop.permute.xlu0 %2744
    %2746 = vset.pattern.permute.xlu0 0
    %2747 = vperm.xlu0 %2746, %v2692
    %v2748 = vpop.permute.xlu0 %2747
    %2749 = vset.pattern.permute.xlu0 0
    %2750 = vperm.xlu0 %2749, %v2693
    %v2751 = vpop.permute.xlu0 %2750
    %2752 = vset.pattern.permute.xlu0 0
    %2753 = vperm.xlu0 %2752, %v2694
    %v2754 = vpop.permute.xlu0 %2753
    %2755 = vset.pattern.permute.xlu0 0
    %2756 = vperm.xlu0 %2755, %v2695
    %v2757 = vpop.permute.xlu0 %2756
    %2758 = vset.pattern.permute.xlu0 0
    %2759 = vperm.xlu0 %2758, %v2696
    %v2760 = vpop.permute.xlu0 %2759
    %v2761 = vlaneseq
    %v2762 = vshrl.u32 %v2761, 7
    %v2763 = vsub.s32 %v298, %v2762
    %v2764 = vrot.slane %v2715, %v2763
    %v2765 = vlaneseq
    %v2766 = vshrl.u32 %v2765, 7
    %v2767 = vsub.s32 %v638, %v2766
    %v2768 = vrot.slane %v2718, %v2767
    %v2769 = vsel %vm643, %v2768, %v2764
    %v2770 = vlaneseq
    %v2771 = vshrl.u32 %v2770, 7
    %v2772 = vsub.s32 %v298, %v2771
    %v2773 = vrot.slane %v2721, %v2772
    %v2774 = vlaneseq
    %v2775 = vshrl.u32 %v2774, 7
    %v2776 = vsub.s32 %v638, %v2775
    %v2777 = vrot.slane %v2724, %v2776
    %v2778 = vsel %vm643, %v2777, %v2773
    %v2779 = vlaneseq
    %v2780 = vshrl.u32 %v2779, 7
    %v2781 = vsub.s32 %v298, %v2780
    %v2782 = vrot.slane %v2727, %v2781
    %v2783 = vlaneseq
    %v2784 = vshrl.u32 %v2783, 7
    %v2785 = vsub.s32 %v638, %v2784
    %v2786 = vrot.slane %v2730, %v2785
    %v2787 = vsel %vm643, %v2786, %v2782
    %v2788 = vlaneseq
    %v2789 = vshrl.u32 %v2788, 7
    %v2790 = vsub.s32 %v298, %v2789
    %v2791 = vrot.slane %v2733, %v2790
    %v2792 = vlaneseq
    %v2793 = vshrl.u32 %v2792, 7
    %v2794 = vsub.s32 %v638, %v2793
    %v2795 = vrot.slane %v2736, %v2794
    %v2796 = vsel %vm643, %v2795, %v2791
    %v2797 = vlaneseq
    %v2798 = vshrl.u32 %v2797, 7
    %v2799 = vsub.s32 %v298, %v2798
    %v2800 = vrot.slane %v2739, %v2799
    %v2801 = vlaneseq
    %v2802 = vshrl.u32 %v2801, 7
    %v2803 = vsub.s32 %v638, %v2802
    %v2804 = vrot.slane %v2742, %v2803
    %v2805 = vsel %vm643, %v2804, %v2800
    %v2806 = vlaneseq
    %v2807 = vshrl.u32 %v2806, 7
    %v2808 = vsub.s32 %v298, %v2807
    %v2809 = vrot.slane %v2745, %v2808
    %v2810 = vlaneseq
    %v2811 = vshrl.u32 %v2810, 7
    %v2812 = vsub.s32 %v638, %v2811
    %v2813 = vrot.slane %v2748, %v2812
    %v2814 = vsel %vm643, %v2813, %v2809
    %v2815 = vlaneseq
    %v2816 = vshrl.u32 %v2815, 7
    %v2817 = vsub.s32 %v298, %v2816
    %v2818 = vrot.slane %v2751, %v2817
    %v2819 = vlaneseq
    %v2820 = vshrl.u32 %v2819, 7
    %v2821 = vsub.s32 %v638, %v2820
    %v2822 = vrot.slane %v2754, %v2821
    %v2823 = vsel %vm643, %v2822, %v2818
    %v2824 = vlaneseq
    %v2825 = vshrl.u32 %v2824, 7
    %v2826 = vsub.s32 %v298, %v2825
    %v2827 = vrot.slane %v2757, %v2826
    %v2828 = vlaneseq
    %v2829 = vshrl.u32 %v2828, 7
    %v2830 = vsub.s32 %v638, %v2829
    %v2831 = vrot.slane %v2760, %v2830
    %v2832 = vsel %vm643, %v2831, %v2827
    %v2833 = vsel %vm356, %v2778, %v2769
    %v2834 = vsel %vm359, %v2787, %v2833
    %v2835 = vsel %vm362, %v2796, %v2834
    %v2836 = vsel %vm365, %v2805, %v2835
    %v2837 = vsel %vm368, %v2814, %v2836
    %v2838 = vsel %vm371, %v2823, %v2837
    %v2839 = vsel %vm374, %v2832, %v2838
    %v2841 = vsel %vm716, %v2839, -inf
    %2842 = vmax.xlane.f32.xlu0 %v2841
    %v2843 = vpop.xlane.xlu0 %2842
    %v2845 = vlaneseq
    %v2846 = vshrl.u32 %v2845, 7
    %v2847 = vsub.s32 0, %v2846
    %v2848 = vrot.slane %v2843, %v2847
    %v2849 = vlaneseq
    %v2850 = vshrl.u32 %v2849, 7
    %v2851 = vsub.s32 1, %v2850
    %v2852 = vrot.slane %v2843, %v2851
    %v2853 = vlaneseq
    %v2854 = vshrl.u32 %v2853, 7
    %v2855 = vsub.s32 2, %v2854
    %v2856 = vrot.slane %v2843, %v2855
    %v2857 = vlaneseq
    %v2858 = vshrl.u32 %v2857, 7
    %v2859 = vsub.s32 3, %v2858
    %v2860 = vrot.slane %v2843, %v2859
    %v2861 = vlaneseq
    %v2862 = vshrl.u32 %v2861, 7
    %v2863 = vsub.s32 4, %v2862
    %v2864 = vrot.slane %v2843, %v2863
    %v2865 = vlaneseq
    %v2866 = vshrl.u32 %v2865, 7
    %v2867 = vsub.s32 5, %v2866
    %v2868 = vrot.slane %v2843, %v2867
    %v2869 = vlaneseq
    %v2870 = vshrl.u32 %v2869, 7
    %v2871 = vsub.s32 6, %v2870
    %v2872 = vrot.slane %v2843, %v2871
    %v2873 = vlaneseq
    %v2874 = vshrl.u32 %v2873, 7
    %v2875 = vsub.s32 7, %v2874
    %v2876 = vrot.slane %v2843, %v2875
    %vm2885 = vcmp.eq.f32.partialorder %v2681, %v2848
    %vm2886 = vcmp.eq.f32.partialorder %v2682, %v2848
    %vm2887 = vcmp.eq.f32.partialorder %v2683, %v2852
    %vm2888 = vcmp.eq.f32.partialorder %v2684, %v2852
    %vm2889 = vcmp.eq.f32.partialorder %v2685, %v2856
    %vm2890 = vcmp.eq.f32.partialorder %v2686, %v2856
    %vm2891 = vcmp.eq.f32.partialorder %v2687, %v2860
    %vm2892 = vcmp.eq.f32.partialorder %v2688, %v2860
    %vm2893 = vcmp.eq.f32.partialorder %v2689, %v2864
    %vm2894 = vcmp.eq.f32.partialorder %v2690, %v2864
    %vm2895 = vcmp.eq.f32.partialorder %v2691, %v2868
    %vm2896 = vcmp.eq.f32.partialorder %v2692, %v2868
    %vm2897 = vcmp.eq.f32.partialorder %v2693, %v2872
    %vm2898 = vcmp.eq.f32.partialorder %v2694, %v2872
    %vm2899 = vcmp.eq.f32.partialorder %v2695, %v2876
    %vm2900 = vcmp.eq.f32.partialorder %v2696, %v2876
    %v2901 = vsel %vm2885, %v779, 9
    %v2902 = vsel %vm2886, %v783, 9
    %v2903 = vsel %vm2887, %v779, 9
    %v2904 = vsel %vm2888, %v783, 9
    %v2905 = vsel %vm2889, %v779, 9
    %v2906 = vsel %vm2890, %v783, 9
    %v2907 = vsel %vm2891, %v779, 9
    %v2908 = vsel %vm2892, %v783, 9
    %v2909 = vsel %vm2893, %v779, 9
    %v2910 = vsel %vm2894, %v783, 9
    %v2911 = vsel %vm2895, %v779, 9
    %v2912 = vsel %vm2896, %v783, 9
    %v2913 = vsel %vm2897, %v779, 9
    %v2914 = vsel %vm2898, %v783, 9
    %v2915 = vsel %vm2899, %v779, 9
    %v2916 = vsel %vm2900, %v783, 9
    %2917 = vset.pattern.permute.xlu0 0
    %2918 = vperm.xlu0 %2917, %v2901
    %v2919 = vpop.permute.xlu0 %2918
    %2920 = vset.pattern.permute.xlu0 0
    %2921 = vperm.xlu0 %2920, %v2902
    %v2922 = vpop.permute.xlu0 %2921
    %2923 = vset.pattern.permute.xlu0 0
    %2924 = vperm.xlu0 %2923, %v2903
    %v2925 = vpop.permute.xlu0 %2924
    %2926 = vset.pattern.permute.xlu0 0
    %2927 = vperm.xlu0 %2926, %v2904
    %v2928 = vpop.permute.xlu0 %2927
    %2929 = vset.pattern.permute.xlu0 0
    %2930 = vperm.xlu0 %2929, %v2905
    %v2931 = vpop.permute.xlu0 %2930
    %2932 = vset.pattern.permute.xlu0 0
    %2933 = vperm.xlu0 %2932, %v2906
    %v2934 = vpop.permute.xlu0 %2933
    %2935 = vset.pattern.permute.xlu0 0
    %2936 = vperm.xlu0 %2935, %v2907
    %v2937 = vpop.permute.xlu0 %2936
    %2938 = vset.pattern.permute.xlu0 0
    %2939 = vperm.xlu0 %2938, %v2908
    %v2940 = vpop.permute.xlu0 %2939
    %2941 = vset.pattern.permute.xlu0 0
    %2942 = vperm.xlu0 %2941, %v2909
    %v2943 = vpop.permute.xlu0 %2942
    %2944 = vset.pattern.permute.xlu0 0
    %2945 = vperm.xlu0 %2944, %v2910
    %v2946 = vpop.permute.xlu0 %2945
    %2947 = vset.pattern.permute.xlu0 0
    %2948 = vperm.xlu0 %2947, %v2911
    %v2949 = vpop.permute.xlu0 %2948
    %2950 = vset.pattern.permute.xlu0 0
    %2951 = vperm.xlu0 %2950, %v2912
    %v2952 = vpop.permute.xlu0 %2951
    %2953 = vset.pattern.permute.xlu0 0
    %2954 = vperm.xlu0 %2953, %v2913
    %v2955 = vpop.permute.xlu0 %2954
    %2956 = vset.pattern.permute.xlu0 0
    %2957 = vperm.xlu0 %2956, %v2914
    %v2958 = vpop.permute.xlu0 %2957
    %2959 = vset.pattern.permute.xlu0 0
    %2960 = vperm.xlu0 %2959, %v2915
    %v2961 = vpop.permute.xlu0 %2960
    %2962 = vset.pattern.permute.xlu0 0
    %2963 = vperm.xlu0 %2962, %v2916
    %v2964 = vpop.permute.xlu0 %2963
    %v2965 = vlaneseq
    %v2966 = vshrl.u32 %v2965, 7
    %v2967 = vsub.s32 %v298, %v2966
    %v2968 = vrot.slane %v2919, %v2967
    %v2969 = vlaneseq
    %v2970 = vshrl.u32 %v2969, 7
    %v2971 = vsub.s32 %v638, %v2970
    %v2972 = vrot.slane %v2922, %v2971
    %v2973 = vsel %vm643, %v2972, %v2968
    %v2974 = vlaneseq
    %v2975 = vshrl.u32 %v2974, 7
    %v2976 = vsub.s32 %v298, %v2975
    %v2977 = vrot.slane %v2925, %v2976
    %v2978 = vlaneseq
    %v2979 = vshrl.u32 %v2978, 7
    %v2980 = vsub.s32 %v638, %v2979
    %v2981 = vrot.slane %v2928, %v2980
    %v2982 = vsel %vm643, %v2981, %v2977
    %v2983 = vlaneseq
    %v2984 = vshrl.u32 %v2983, 7
    %v2985 = vsub.s32 %v298, %v2984
    %v2986 = vrot.slane %v2931, %v2985
    %v2987 = vlaneseq
    %v2988 = vshrl.u32 %v2987, 7
    %v2989 = vsub.s32 %v638, %v2988
    %v2990 = vrot.slane %v2934, %v2989
    %v2991 = vsel %vm643, %v2990, %v2986
    %v2992 = vlaneseq
    %v2993 = vshrl.u32 %v2992, 7
    %v2994 = vsub.s32 %v298, %v2993
    %v2995 = vrot.slane %v2937, %v2994
    %v2996 = vlaneseq
    %v2997 = vshrl.u32 %v2996, 7
    %v2998 = vsub.s32 %v638, %v2997
    %v2999 = vrot.slane %v2940, %v2998
    %v3000 = vsel %vm643, %v2999, %v2995
    %v3001 = vlaneseq
    %v3002 = vshrl.u32 %v3001, 7
    %v3003 = vsub.s32 %v298, %v3002
    %v3004 = vrot.slane %v2943, %v3003
    %v3005 = vlaneseq
    %v3006 = vshrl.u32 %v3005, 7
    %v3007 = vsub.s32 %v638, %v3006
    %v3008 = vrot.slane %v2946, %v3007
    %v3009 = vsel %vm643, %v3008, %v3004
    %v3010 = vlaneseq
    %v3011 = vshrl.u32 %v3010, 7
    %v3012 = vsub.s32 %v298, %v3011
    %v3013 = vrot.slane %v2949, %v3012
    %v3014 = vlaneseq
    %v3015 = vshrl.u32 %v3014, 7
    %v3016 = vsub.s32 %v638, %v3015
    %v3017 = vrot.slane %v2952, %v3016
    %v3018 = vsel %vm643, %v3017, %v3013
    %v3019 = vlaneseq
    %v3020 = vshrl.u32 %v3019, 7
    %v3021 = vsub.s32 %v298, %v3020
    %v3022 = vrot.slane %v2955, %v3021
    %v3023 = vlaneseq
    %v3024 = vshrl.u32 %v3023, 7
    %v3025 = vsub.s32 %v638, %v3024
    %v3026 = vrot.slane %v2958, %v3025
    %v3027 = vsel %vm643, %v3026, %v3022
    %v3028 = vlaneseq
    %v3029 = vshrl.u32 %v3028, 7
    %v3030 = vsub.s32 %v298, %v3029
    %v3031 = vrot.slane %v2961, %v3030
    %v3032 = vlaneseq
    %v3033 = vshrl.u32 %v3032, 7
    %v3034 = vsub.s32 %v638, %v3033
    %v3035 = vrot.slane %v2964, %v3034
    %v3036 = vsel %vm643, %v3035, %v3031
    %v3037 = vsel %vm356, %v2982, %v2973
    %v3038 = vsel %vm359, %v2991, %v3037
    %v3039 = vsel %vm362, %v3000, %v3038
    %v3040 = vsel %vm365, %v3009, %v3039
    %v3041 = vsel %vm368, %v3018, %v3040
    %v3042 = vsel %vm371, %v3027, %v3041
    %v3043 = vsel %vm374, %v3036, %v3042
    %v3044 = vsel %vm716, %v3043, 2147483647
    %v3045 = vand.u32 %v3044, 65535
    %v3046 = vshra.s32 %v3044, 16
    %v3047 = vcvt.s32.f32 %v3045
    %v3048 = vcvt.s32.f32 %v3046
    %3049 = vmin.xlane.f32.xlu0 %v3048
    %v3050 = vpop.xlane.xlu0 %3049
    %vm3051 = vcmp.eq.f32.partialorder %v3048, %v3050
    %v3052 = vsel %vm3051, %v3047, inf
    %3053 = vmin.xlane.f32.xlu0 %v3052
    %v3054 = vpop.xlane.xlu0 %3053
    %v3055 = vcvt.f32.s32 %v3054
    %v3056 = vcvt.f32.s32 %v3050
    %v3057 = vshll.u32 %v3056, 16
    %v3058 = vadd.s32 %v3057, %v3055
    %vm3059 = vcmp.eq.s32.totalorder %v298, %v3058
    %v3060 = vsel %vm3059, 1, 0
    %v3061 = vcvt.s32.f32 %v3060
    %v3062 = vlaneseq
    %v3063 = vshrl.u32 %v3062, 7
    %v3064 = vsub.s32 0, %v3063
    %v3065 = vrot.slane %v3061, %v3064
    %3067 = vbcast.lane.b32.xlu0 %v3065, 256
    %v3068 = vpop.permute.xlu0 %3067
    %s3070 = sor.u32 256, 8
    %3071 = vbcast.lane.b32.xlu0 %v3065, %s3070
    %v3072 = vpop.permute.xlu0 %3071
    %v3073 = vlaneseq
    %v3074 = vshrl.u32 %v3073, 7
    %v3075 = vsub.s32 1, %v3074
    %v3076 = vrot.slane %v3061, %v3075
    %3078 = vbcast.lane.b32.xlu0 %v3076, 256
    %v3079 = vpop.permute.xlu0 %3078
    %s3081 = sor.u32 256, 8
    %3082 = vbcast.lane.b32.xlu0 %v3076, %s3081
    %v3083 = vpop.permute.xlu0 %3082
    %v3084 = vlaneseq
    %v3085 = vshrl.u32 %v3084, 7
    %v3086 = vsub.s32 2, %v3085
    %v3087 = vrot.slane %v3061, %v3086
    %3089 = vbcast.lane.b32.xlu0 %v3087, 256
    %v3090 = vpop.permute.xlu0 %3089
    %s3092 = sor.u32 256, 8
    %3093 = vbcast.lane.b32.xlu0 %v3087, %s3092
    %v3094 = vpop.permute.xlu0 %3093
    %v3095 = vlaneseq
    %v3096 = vshrl.u32 %v3095, 7
    %v3097 = vsub.s32 3, %v3096
    %v3098 = vrot.slane %v3061, %v3097
    %3100 = vbcast.lane.b32.xlu0 %v3098, 256
    %v3101 = vpop.permute.xlu0 %3100
    %s3103 = sor.u32 256, 8
    %3104 = vbcast.lane.b32.xlu0 %v3098, %s3103
    %v3105 = vpop.permute.xlu0 %3104
    %v3106 = vlaneseq
    %v3107 = vshrl.u32 %v3106, 7
    %v3108 = vsub.s32 4, %v3107
    %v3109 = vrot.slane %v3061, %v3108
    %3111 = vbcast.lane.b32.xlu0 %v3109, 256
    %v3112 = vpop.permute.xlu0 %3111
    %s3114 = sor.u32 256, 8
    %3115 = vbcast.lane.b32.xlu0 %v3109, %s3114
    %v3116 = vpop.permute.xlu0 %3115
    %v3117 = vlaneseq
    %v3118 = vshrl.u32 %v3117, 7
    %v3119 = vsub.s32 5, %v3118
    %v3120 = vrot.slane %v3061, %v3119
    %3122 = vbcast.lane.b32.xlu0 %v3120, 256
    %v3123 = vpop.permute.xlu0 %3122
    %s3125 = sor.u32 256, 8
    %3126 = vbcast.lane.b32.xlu0 %v3120, %s3125
    %v3127 = vpop.permute.xlu0 %3126
    %v3128 = vlaneseq
    %v3129 = vshrl.u32 %v3128, 7
    %v3130 = vsub.s32 6, %v3129
    %v3131 = vrot.slane %v3061, %v3130
    %3133 = vbcast.lane.b32.xlu0 %v3131, 256
    %v3134 = vpop.permute.xlu0 %3133
    %s3136 = sor.u32 256, 8
    %3137 = vbcast.lane.b32.xlu0 %v3131, %s3136
    %v3138 = vpop.permute.xlu0 %3137
    %v3139 = vlaneseq
    %v3140 = vshrl.u32 %v3139, 7
    %v3141 = vsub.s32 7, %v3140
    %v3142 = vrot.slane %v3061, %v3141
    %3144 = vbcast.lane.b32.xlu0 %v3142, 256
    %v3145 = vpop.permute.xlu0 %3144
    %s3147 = sor.u32 256, 8
    %3148 = vbcast.lane.b32.xlu0 %v3142, %s3147
    %v3149 = vpop.permute.xlu0 %3148
    %v3150 = vmul.f32 %v2425, %v3068
    %v3151 = vmul.f32 %v2426, %v3072
    %v3152 = vmul.f32 %v2427, %v3079
    %v3153 = vmul.f32 %v2428, %v3083
    %v3154 = vmul.f32 %v2429, %v3090
    %v3155 = vmul.f32 %v2430, %v3094
    %v3156 = vmul.f32 %v2431, %v3101
    %v3157 = vmul.f32 %v2432, %v3105
    %v3158 = vmul.f32 %v2433, %v3112
    %v3159 = vmul.f32 %v2434, %v3116
    %v3160 = vmul.f32 %v2435, %v3123
    %v3161 = vmul.f32 %v2436, %v3127
    %v3162 = vmul.f32 %v2437, %v3134
    %v3163 = vmul.f32 %v2438, %v3138
    %v3164 = vmul.f32 %v2439, %v3145
    %v3165 = vmul.f32 %v2440, %v3149
    %v3166 = vsel %vm2085, %v3150, 0.0
    %v3167 = vsel %vm2087, %v3151, 0.0
    %v3168 = vadd.f32 %v3166, %v3167
    %v3169 = vrot.slane %v3168, 4
    %v3170 = vadd.f32 %v3168, %v3169
    %v3171 = vrot.slane %v3170, 2
    %v3172 = vadd.f32 %v3170, %v3171
    %v3173 = vrot.slane %v3172, 1
    %v3174 = vadd.f32 %v3172, %v3173
    %v3175 = vsel %vm2085, %v3152, 0.0
    %v3176 = vsel %vm2087, %v3153, 0.0
    %v3177 = vadd.f32 %v3175, %v3176
    %v3178 = vrot.slane %v3177, 4
    %v3179 = vadd.f32 %v3177, %v3178
    %v3180 = vrot.slane %v3179, 2
    %v3181 = vadd.f32 %v3179, %v3180
    %v3182 = vrot.slane %v3181, 1
    %v3183 = vadd.f32 %v3181, %v3182
    %v3184 = vsel %vm2085, %v3154, 0.0
    %v3185 = vsel %vm2087, %v3155, 0.0
    %v3186 = vadd.f32 %v3184, %v3185
    %v3187 = vrot.slane %v3186, 4
    %v3188 = vadd.f32 %v3186, %v3187
    %v3189 = vrot.slane %v3188, 2
    %v3190 = vadd.f32 %v3188, %v3189
    %v3191 = vrot.slane %v3190, 1
    %v3192 = vadd.f32 %v3190, %v3191
    %v3193 = vsel %vm2085, %v3156, 0.0
    %v3194 = vsel %vm2087, %v3157, 0.0
    %v3195 = vadd.f32 %v3193, %v3194
    %v3196 = vrot.slane %v3195, 4
    %v3197 = vadd.f32 %v3195, %v3196
    %v3198 = vrot.slane %v3197, 2
    %v3199 = vadd.f32 %v3197, %v3198
    %v3200 = vrot.slane %v3199, 1
    %v3201 = vadd.f32 %v3199, %v3200
    %v3202 = vsel %vm2085, %v3158, 0.0
    %v3203 = vsel %vm2087, %v3159, 0.0
    %v3204 = vadd.f32 %v3202, %v3203
    %v3205 = vrot.slane %v3204, 4
    %v3206 = vadd.f32 %v3204, %v3205
    %v3207 = vrot.slane %v3206, 2
    %v3208 = vadd.f32 %v3206, %v3207
    %v3209 = vrot.slane %v3208, 1
    %v3210 = vadd.f32 %v3208, %v3209
    %v3211 = vsel %vm2085, %v3160, 0.0
    %v3212 = vsel %vm2087, %v3161, 0.0
    %v3213 = vadd.f32 %v3211, %v3212
    %v3214 = vrot.slane %v3213, 4
    %v3215 = vadd.f32 %v3213, %v3214
    %v3216 = vrot.slane %v3215, 2
    %v3217 = vadd.f32 %v3215, %v3216
    %v3218 = vrot.slane %v3217, 1
    %v3219 = vadd.f32 %v3217, %v3218
    %v3220 = vsel %vm2085, %v3162, 0.0
    %v3221 = vsel %vm2087, %v3163, 0.0
    %v3222 = vadd.f32 %v3220, %v3221
    %v3223 = vrot.slane %v3222, 4
    %v3224 = vadd.f32 %v3222, %v3223
    %v3225 = vrot.slane %v3224, 2
    %v3226 = vadd.f32 %v3224, %v3225
    %v3227 = vrot.slane %v3226, 1
    %v3228 = vadd.f32 %v3226, %v3227
    %v3229 = vsel %vm2085, %v3164, 0.0
    %v3230 = vsel %vm2087, %v3165, 0.0
    %v3231 = vadd.f32 %v3229, %v3230
    %v3232 = vrot.slane %v3231, 4
    %v3233 = vadd.f32 %v3231, %v3232
    %v3234 = vrot.slane %v3233, 2
    %v3235 = vadd.f32 %v3233, %v3234
    %v3236 = vrot.slane %v3235, 1
    %v3237 = vadd.f32 %v3235, %v3236
    %v3238 = vmul.f32 %v2441, %v3061
    %v3239 = vsel %vm716, %v3238, 0.0
    %3240 = vadd.xlane.f32.xlu0 %v3239
    %v3241 = vpop.xlane.xlu0 %3240
    %vm3242 = vcmp.gt.f32.partialorder %v3241, 0.5
    %vm3243 = vcmp.gt.s32.totalorder %v3058, 0
    %vm3244 = vmand %vm3243, %vm3242
    %v3245 = vrot.slane %v2484, 7
    %v3246 = vsel %vm362, %v3245, %v2483
    %v3247 = vrot.slane %v2485, 6
    %v3248 = vsel %vm365, %v3247, %v3246
    %v3249 = vrot.slane %v2486, 5
    %v3250 = vsel %vm368, %v3249, %v3248
    %v3251 = vrot.slane %v2487, 4
    %v3252 = vsel %vm371, %v3251, %v3250
    %v3253 = vrot.slane %v2488, 3
    %v3254 = vsel %vm374, %v3253, %v3252
    %v3255 = vrot.slane %v2489, 2
    %v3256 = vrot.slane %v2490, 1
    %v3257 = vsel %vm356, %v3256, %v3255
    %v3261 = vrot.slane %v2582, 6
    %3262 = vrot.lane.b32.xlu0 %v3261, 32
    %v3263 = vpop.permute.xlu0 %3262
    %v3265 = vsel %vm219, %v3254, %v3263
    %v3266 = vsel %vm219, %v3257, %v3263
    %v3267 = vsel %vm3244, 1, 0
    %vm3268 = vcmp.eq.s32.totalorder %v3267, 1
    %v3277 = vsel %vm356, %v3183, %v3174
    %v3278 = vsel %vm359, %v3192, %v3277
    %v3279 = vsel %vm362, %v3201, %v3278
    %v3280 = vsel %vm365, %v3210, %v3279
    %v3281 = vsel %vm368, %v3219, %v3280
    %v3282 = vsel %vm371, %v3228, %v3281
    %v3283 = vsel %vm374, %v3237, %v3282
    %vm3287 = vcmask 1045504
    %v3288 = vrot.slane %v3265, 2
    %v3289 = vrot.slane %v3266, 2
    %v3290 = vsel %vm3287, %v3288, %v3289
    %v3292 = vsel %vm3268, %v3283, %v3290
    %vm3293 = vmxor %vm3242, 1
    %vm3294 = vmand %vm3243, %vm3293
    %v3295 = vsel %vm3294, 1.0, 0.0
    %v3296 = vmul.f32 %v3061, %v3295
    %v3297 = vlaneseq
    %v3298 = vshrl.u32 %v3297, 7
    %v3299 = vsub.s32 0, %v3298
    %v3300 = vrot.slane %v3296, %v3299
    %3302 = vbcast.lane.b32.xlu0 %v3300, 256
    %v3303 = vpop.permute.xlu0 %3302
    %s3305 = sor.u32 256, 8
    %3306 = vbcast.lane.b32.xlu0 %v3300, %s3305
    %v3307 = vpop.permute.xlu0 %3306
    %v3308 = vlaneseq
    %v3309 = vshrl.u32 %v3308, 7
    %v3310 = vsub.s32 1, %v3309
    %v3311 = vrot.slane %v3296, %v3310
    %3313 = vbcast.lane.b32.xlu0 %v3311, 256
    %v3314 = vpop.permute.xlu0 %3313
    %s3316 = sor.u32 256, 8
    %3317 = vbcast.lane.b32.xlu0 %v3311, %s3316
    %v3318 = vpop.permute.xlu0 %3317
    %v3319 = vlaneseq
    %v3320 = vshrl.u32 %v3319, 7
    %v3321 = vsub.s32 2, %v3320
    %v3322 = vrot.slane %v3296, %v3321
    %3324 = vbcast.lane.b32.xlu0 %v3322, 256
    %v3325 = vpop.permute.xlu0 %3324
    %s3327 = sor.u32 256, 8
    %3328 = vbcast.lane.b32.xlu0 %v3322, %s3327
    %v3329 = vpop.permute.xlu0 %3328
    %v3330 = vlaneseq
    %v3331 = vshrl.u32 %v3330, 7
    %v3332 = vsub.s32 3, %v3331
    %v3333 = vrot.slane %v3296, %v3332
    %3335 = vbcast.lane.b32.xlu0 %v3333, 256
    %v3336 = vpop.permute.xlu0 %3335
    %s3338 = sor.u32 256, 8
    %3339 = vbcast.lane.b32.xlu0 %v3333, %s3338
    %v3340 = vpop.permute.xlu0 %3339
    %v3341 = vlaneseq
    %v3342 = vshrl.u32 %v3341, 7
    %v3343 = vsub.s32 4, %v3342
    %v3344 = vrot.slane %v3296, %v3343
    %3346 = vbcast.lane.b32.xlu0 %v3344, 256
    %v3347 = vpop.permute.xlu0 %3346
    %s3349 = sor.u32 256, 8
    %3350 = vbcast.lane.b32.xlu0 %v3344, %s3349
    %v3351 = vpop.permute.xlu0 %3350
    %v3352 = vlaneseq
    %v3353 = vshrl.u32 %v3352, 7
    %v3354 = vsub.s32 5, %v3353
    %v3355 = vrot.slane %v3296, %v3354
    %3357 = vbcast.lane.b32.xlu0 %v3355, 256
    %v3358 = vpop.permute.xlu0 %3357
    %s3360 = sor.u32 256, 8
    %3361 = vbcast.lane.b32.xlu0 %v3355, %s3360
    %v3362 = vpop.permute.xlu0 %3361
    %v3363 = vlaneseq
    %v3364 = vshrl.u32 %v3363, 7
    %v3365 = vsub.s32 6, %v3364
    %v3366 = vrot.slane %v3296, %v3365
    %3368 = vbcast.lane.b32.xlu0 %v3366, 256
    %v3369 = vpop.permute.xlu0 %3368
    %s3371 = sor.u32 256, 8
    %3372 = vbcast.lane.b32.xlu0 %v3366, %s3371
    %v3373 = vpop.permute.xlu0 %3372
    %v3374 = vlaneseq
    %v3375 = vshrl.u32 %v3374, 7
    %v3376 = vsub.s32 7, %v3375
    %v3377 = vrot.slane %v3296, %v3376
    %3379 = vbcast.lane.b32.xlu0 %v3377, 256
    %v3380 = vpop.permute.xlu0 %3379
    %s3382 = sor.u32 256, 8
    %3383 = vbcast.lane.b32.xlu0 %v3377, %s3382
    %v3384 = vpop.permute.xlu0 %3383
    %v3385 = vcombine.high %v3265, %v3265
    %v3387 = vunpack.c.l.s4 1966171168
    %v3388 = vunpack.c.0.s8 %v3387
    %v3389 = vlaneseq
    %v3390 = vshrl.u32 %v3389, 7
    %v3391 = vsub.s32 %v3388, %v3390
    %v3392 = vrot.slane %v3265, %v3391
    %v3394 = vunpack.c.l.s4 1966171168
    %v3395 = vunpack.c.0.s8 %v3394
    %v3396 = vlaneseq
    %v3397 = vshrl.u32 %v3396, 7
    %v3398 = vsub.s32 %v3395, %v3397
    %v3399 = vrot.slane %v3385, %v3398
    %v3400 = vcombine.high %v3392, %v3392
    %v3401 = vcombine.high %v3399, %v3399
    %v3403 = vunpack.c.l.s4 1966171168
    %v3404 = vunpack.c.0.s8 %v3403
    %v3405 = vlaneseq
    %v3406 = vshrl.u32 %v3405, 7
    %v3407 = vsub.s32 %v3404, %v3406
    %v3408 = vrot.slane %v3392, %v3407
    %v3410 = vunpack.c.l.s4 1966171168
    %v3411 = vunpack.c.0.s8 %v3410
    %v3412 = vlaneseq
    %v3413 = vshrl.u32 %v3412, 7
    %v3414 = vsub.s32 %v3411, %v3413
    %v3415 = vrot.slane %v3399, %v3414
    %v3417 = vunpack.c.l.s4 1966171168
    %v3418 = vunpack.c.0.s8 %v3417
    %v3419 = vlaneseq
    %v3420 = vshrl.u32 %v3419, 7
    %v3421 = vsub.s32 %v3418, %v3420
    %v3422 = vrot.slane %v3400, %v3421
    %v3424 = vunpack.c.l.s4 1966171168
    %v3425 = vunpack.c.0.s8 %v3424
    %v3426 = vlaneseq
    %v3427 = vshrl.u32 %v3426, 7
    %v3428 = vsub.s32 %v3425, %v3427
    %v3429 = vrot.slane %v3401, %v3428
    %v3430 = vcombine.high %v3408, %v3408
    %v3431 = vcombine.high %v3415, %v3415
    %v3432 = vcombine.high %v3422, %v3422
    %v3433 = vcombine.high %v3429, %v3429
    %v3435 = vunpack.c.l.s4 1966171168
    %v3436 = vunpack.c.0.s8 %v3435
    %v3437 = vlaneseq
    %v3438 = vshrl.u32 %v3437, 7
    %v3439 = vsub.s32 %v3436, %v3438
    %v3440 = vrot.slane %v3266, %v3439
    %v3441 = vcombine.high %v3440, %v3440
    %v3443 = vunpack.c.l.s4 1966171168
    %v3444 = vunpack.c.0.s8 %v3443
    %v3445 = vlaneseq
    %v3446 = vshrl.u32 %v3445, 7
    %v3447 = vsub.s32 %v3444, %v3446
    %v3448 = vrot.slane %v3440, %v3447
    %v3450 = vunpack.c.l.s4 1966171168
    %v3451 = vunpack.c.0.s8 %v3450
    %v3452 = vlaneseq
    %v3453 = vshrl.u32 %v3452, 7
    %v3454 = vsub.s32 %v3451, %v3453
    %v3455 = vrot.slane %v3441, %v3454
    %v3456 = vlaneseq
    %v3457 = vshrl.u32 %v3456, 7
    %v3458 = vsub.s32 0, %v3457
    %v3459 = vrot.slane %v3430, %v3458
    %v3460 = vlaneseq
    %v3461 = vshrl.u32 %v3460, 7
    %v3462 = vsub.s32 0, %v3461
    %v3463 = vrot.slane %v3432, %v3462
    %v3464 = vlaneseq
    %v3465 = vshrl.u32 %v3464, 7
    %v3466 = vsub.s32 0, %v3465
    %v3467 = vrot.slane %v3415, %v3466
    %v3468 = vlaneseq
    %v3469 = vshrl.u32 %v3468, 7
    %v3470 = vsub.s32 0, %v3469
    %v3471 = vrot.slane %v3429, %v3470
    %v3472 = vlaneseq
    %v3473 = vshrl.u32 %v3472, 7
    %v3474 = vsub.s32 0, %v3473
    %v3475 = vrot.slane %v3431, %v3474
    %v3476 = vlaneseq
    %v3477 = vshrl.u32 %v3476, 7
    %v3478 = vsub.s32 0, %v3477
    %v3479 = vrot.slane %v3433, %v3478
    %v3480 = vlaneseq
    %v3481 = vshrl.u32 %v3480, 7
    %v3482 = vsub.s32 0, %v3481
    %v3483 = vrot.slane %v3448, %v3482
    %v3484 = vlaneseq
    %v3485 = vshrl.u32 %v3484, 7
    %v3486 = vsub.s32 0, %v3485
    %v3487 = vrot.slane %v3455, %v3486
    %v3496 = vmul.f32 %v3303, %v3459
    %v3497 = vmul.f32 %v3307, %v3459
    %v3498 = vmul.f32 %v3314, %v3463
    %v3499 = vmul.f32 %v3318, %v3463
    %v3500 = vmul.f32 %v3325, %v3467
    %v3501 = vmul.f32 %v3329, %v3467
    %v3502 = vmul.f32 %v3336, %v3471
    %v3503 = vmul.f32 %v3340, %v3471
    %v3504 = vmul.f32 %v3347, %v3475
    %v3505 = vmul.f32 %v3351, %v3475
    %v3506 = vmul.f32 %v3358, %v3479
    %v3507 = vmul.f32 %v3362, %v3479
    %v3508 = vmul.f32 %v3369, %v3483
    %v3509 = vmul.f32 %v3373, %v3483
    %v3510 = vmul.f32 %v3380, %v3487
    %v3511 = vmul.f32 %v3384, %v3487
    %v3512 = vadd.f32 %v2425, %v3496
    %v3513 = vadd.f32 %v2426, %v3497
    %v3514 = vadd.f32 %v2427, %v3498
    %v3515 = vadd.f32 %v2428, %v3499
    %v3516 = vadd.f32 %v2429, %v3500
    %v3517 = vadd.f32 %v2430, %v3501
    %v3518 = vadd.f32 %v2431, %v3502
    %v3519 = vadd.f32 %v2432, %v3503
    %v3520 = vadd.f32 %v2433, %v3504
    %v3521 = vadd.f32 %v2434, %v3505
    %v3522 = vadd.f32 %v2435, %v3506
    %v3523 = vadd.f32 %v2436, %v3507
    %v3524 = vadd.f32 %v2437, %v3508
    %v3525 = vadd.f32 %v2438, %v3509
    %v3526 = vadd.f32 %v2439, %v3510
    %v3527 = vadd.f32 %v2440, %v3511
    %v3528 = vadd.f32 %v2441, %v3296
    %3529 = vst.msk [vmem:[#allocation2 + $0x10] sm:$0xff] %vm219, %v3292
    %v3531 = vrot.slane %v3292, 5
    %v3532 = vrot.slane %v3292, 6
    %v3533 = vrot.slane %v3292, 7
    %v3534 = vrot.slane %v3292, 1
    %v3535 = vrot.slane %v3292, 2
    %v3536 = vrot.slane %v3292, 3
    %v3537 = vrot.slane %v3292, 4
    %3538 = vrot.lane.b32.xlu0 %v3531, 96
    %v3539 = vpop.permute.xlu0 %3538
    %3540 = vrot.lane.b32.xlu0 %v3532, 96
    %v3541 = vpop.permute.xlu0 %3540
    %3542 = vrot.lane.b32.xlu0 %v3533, 96
    %v3543 = vpop.permute.xlu0 %3542
    %3544 = vrot.lane.b32.xlu0 %v3292, 96
    %v3545 = vpop.permute.xlu0 %3544
    %3546 = vrot.lane.b32.xlu0 %v3534, 96
    %v3547 = vpop.permute.xlu0 %3546
    %3548 = vrot.lane.b32.xlu0 %v3535, 96
    %v3549 = vpop.permute.xlu0 %3548
    %3550 = vrot.lane.b32.xlu0 %v3536, 96
    %v3551 = vpop.permute.xlu0 %3550
    %3552 = vrot.lane.b32.xlu0 %v3537, 96
    %v3553 = vpop.permute.xlu0 %3552
    %v3562 = vadd.f32 %v174, %v3539
    %v3563 = vadd.f32 %v179, %v3541
    %v3564 = vadd.f32 %v184, %v3543
    %v3565 = vadd.f32 %v189, %v3545
    %v3566 = vadd.f32 %v194, %v3547
    %v3567 = vadd.f32 %v199, %v3549
    %v3568 = vadd.f32 %v204, %v3551
    %v3569 = vadd.f32 %v209, %v3553
    %v3570 = vtanh.pop %v3562
    %v3571 = vtanh.pop %v3563
    %v3572 = vtanh.pop %v3564
    %v3573 = vtanh.pop %v3565
    %v3574 = vtanh.pop %v3566
    %v3575 = vtanh.pop %v3567
    %v3576 = vtanh.pop %v3568
    %v3577 = vtanh.pop %v3569
    %v3586 = vrot.slane %v3570, 3
    %v3587 = vrot.slane %v3571, 2
    %v3588 = vsel %vm356, %v3587, %v3586
    %v3589 = vrot.slane %v3572, 1
    %v3590 = vsel %vm359, %v3589, %v3588
    %v3591 = vsel %vm362, %v3573, %v3590
    %v3592 = vrot.slane %v3574, 7
    %v3593 = vsel %vm365, %v3592, %v3591
    %v3594 = vrot.slane %v3575, 6
    %v3595 = vsel %vm368, %v3594, %v3593
    %v3596 = vrot.slane %v3576, 5
    %v3597 = vsel %vm371, %v3596, %v3595
    %v3598 = vrot.slane %v3577, 4
    %v3599 = vsel %vm374, %v3598, %v3597
    %v3600 = vsel %vm219, %v3599, 0
    %3602 = vmatprep.subr.mxu0 0.0
    %3603 = vmatpush1.msra.mxu0 0.0
    %3604 = vmatprep.subr.mxu0 0.0
    %3605 = vmatpush1.msra.mxu0 0.0
    %3606 = vmatprep.subr.mxu0 0.0
    %3607 = vmatpush1.msra.mxu0 0.0
    %3608 = vmatprep.subr.mxu0 0.0
    %3609 = vmatpush1.msra.mxu0 0.0
    %3610 = vmatprep.subr.mxu0 0.0
    %3611 = vmatpush1.msra.mxu0 0.0
    %3612 = vmatprep.subr.mxu0 0.0
    %3613 = vmatpush1.msra.mxu0 0.0
    %3614 = vmatprep.subr.mxu0 0.0
    %3615 = vmatpush1.msra.mxu0 0.0
    %3616 = vmatprep.subr.mxu0 0.0
    %3617 = vmatpush1.msra.mxu0 0.0
    %3618 = vmatprep.subr.mxu0 0.0
    %3619 = vmatpush1.msra.mxu0 0.0
    %3620 = vmatprep.subr.mxu0 0.0
    %3621 = vmatpush1.msra.mxu0 0.0
    %3622 = vmatprep.subr.mxu0 0.0
    %3623 = vmatpush1.msra.mxu0 0.0
    %3624 = vmatprep.subr.mxu0 0.0
    %3625 = vmatpush1.msra.mxu0 0.0
    %3626 = vmatprep.subr.mxu0 0.0
    %3627 = vmatpush1.msra.mxu0 %v60
    %3628 = vmatprep.subr.mxu0 0.0
    %3629 = vmatpush1.msra.mxu0 %v59
    %3630 = vmatprep.subr.mxu0 0.0
    %3631 = vmatpush1.msra.mxu0 %v58
    %3632 = vmatprep.subr.mxu0 0.0
    %3633 = vmatpush1.msra.mxu0 %v57
    %3634 = vmatprep.subr.mxu0 0.0
    %3635 = vmatpush2.msra.mxu0 0.0
    %3636 = vmatprep.subr.mxu0 0.0
    %3637 = vmatpush2.msra.mxu0 0.0
    %3638 = vmatprep.subr.mxu0 0.0
    %3639 = vmatpush2.msra.mxu0 0.0
    %3640 = vmatprep.subr.mxu0 0.0
    %3641 = vmatpush2.msra.mxu0 0.0
    %3642 = vmatprep.subr.mxu0 0.0
    %3643 = vmatpush2.msra.mxu0 0.0
    %3644 = vmatprep.subr.mxu0 0.0
    %3645 = vmatpush2.msra.mxu0 0.0
    %3646 = vmatprep.subr.mxu0 0.0
    %3647 = vmatpush2.msra.mxu0 0.0
    %3648 = vmatprep.subr.mxu0 0.0
    %3649 = vmatpush2.msra.mxu0 0.0
    %3650 = vmatprep.subr.mxu0 0.0
    %3651 = vmatpush2.msra.mxu0 0.0
    %3652 = vmatprep.subr.mxu0 0.0
    %3653 = vmatpush2.msra.mxu0 0.0
    %3654 = vmatprep.subr.mxu0 0.0
    %3655 = vmatpush2.msra.mxu0 0.0
    %3656 = vmatprep.subr.mxu0 0.0
    %3657 = vmatpush2.msra.mxu0 0.0
    %3658 = vmatprep.subr.mxu0 0.0
    %3659 = vmatpush2.msra.mxu0 0.0
    %3660 = vmatprep.subr.mxu0 0.0
    %3661 = vmatpush2.msra.mxu0 0.0
    %3662 = vmatprep.subr.mxu0 0.0
    %3663 = vmatpush2.msra.mxu0 0.0
    %3664 = vmatprep.subr.mxu0 0.0
    %3665 = vmatpush2.msra.mxu0 0.0
    %3666 = vmatprep.mubr.f32.mxu0 0.0
    %3667 = vmatmul.mubr.f32.gmra.mxu0 %v3600
    %v3668 = vpop.f32.mrf.mxu0
    %v3669 = vadd.f32 0.0, %v3668
    %v3670 = vpop.f32.mrf.mxu0
    %3671 = vdwg.mxu0
    %v3672 = vlaneseq
    %v3673 = vshrl.u32 %v3672, 7
    %v3674 = vsub.s32 3, %v3673
    %v3675 = vrot.slane %v3570, %v3674
    %v3676 = vlaneseq
    %v3677 = vshrl.u32 %v3676, 7
    %v3678 = vsub.s32 3, %v3677
    %v3679 = vrot.slane %v3571, %v3678
    %v3680 = vlaneseq
    %v3681 = vshrl.u32 %v3680, 7
    %v3682 = vsub.s32 3, %v3681
    %v3683 = vrot.slane %v3572, %v3682
    %v3684 = vlaneseq
    %v3685 = vshrl.u32 %v3684, 7
    %v3686 = vsub.s32 3, %v3685
    %v3687 = vrot.slane %v3573, %v3686
    %v3688 = vlaneseq
    %v3689 = vshrl.u32 %v3688, 7
    %v3690 = vsub.s32 3, %v3689
    %v3691 = vrot.slane %v3574, %v3690
    %v3692 = vlaneseq
    %v3693 = vshrl.u32 %v3692, 7
    %v3694 = vsub.s32 3, %v3693
    %v3695 = vrot.slane %v3575, %v3694
    %v3696 = vlaneseq
    %v3697 = vshrl.u32 %v3696, 7
    %v3698 = vsub.s32 3, %v3697
    %v3699 = vrot.slane %v3576, %v3698
    %v3700 = vlaneseq
    %v3701 = vshrl.u32 %v3700, 7
    %v3702 = vsub.s32 3, %v3701
    %v3703 = vrot.slane %v3577, %v3702
    %v3704 = vmul.f32 %v3675, %v61
    %v3705 = vmul.f32 %v3675, %v62
    %v3706 = vmul.f32 %v3679, %v61
    %v3707 = vmul.f32 %v3679, %v62
    %v3708 = vmul.f32 %v3683, %v61
    %v3709 = vmul.f32 %v3683, %v62
    %v3710 = vmul.f32 %v3687, %v61
    %v3711 = vmul.f32 %v3687, %v62
    %v3712 = vmul.f32 %v3691, %v61
    %v3713 = vmul.f32 %v3691, %v62
    %v3714 = vmul.f32 %v3695, %v61
    %v3715 = vmul.f32 %v3695, %v62
    %v3716 = vmul.f32 %v3699, %v61
    %v3717 = vmul.f32 %v3699, %v62
    %v3718 = vmul.f32 %v3703, %v61
    %v3719 = vmul.f32 %v3703, %v62
    %v3720 = vsel %vm219, %v3704, 0.0
    %3721 = vadd.xlane.f32.xlu0 %v3720
    %v3722 = vpop.xlane.xlu0 %3721
    %v3723 = vsel %vm499, %v3705, 0.0
    %3724 = vadd.xlane.f32.xlu0 %v3723
    %v3725 = vpop.xlane.xlu0 %3724
    %v3726 = vsel %vm219, %v3706, 0.0
    %3727 = vadd.xlane.f32.xlu0 %v3726
    %v3728 = vpop.xlane.xlu0 %3727
    %v3729 = vsel %vm499, %v3707, 0.0
    %3730 = vadd.xlane.f32.xlu0 %v3729
    %v3731 = vpop.xlane.xlu0 %3730
    %v3732 = vsel %vm219, %v3708, 0.0
    %3733 = vadd.xlane.f32.xlu0 %v3732
    %v3734 = vpop.xlane.xlu0 %3733
    %v3735 = vsel %vm499, %v3709, 0.0
    %3736 = vadd.xlane.f32.xlu0 %v3735
    %v3737 = vpop.xlane.xlu0 %3736
    %v3738 = vsel %vm219, %v3710, 0.0
    %3739 = vadd.xlane.f32.xlu0 %v3738
    %v3740 = vpop.xlane.xlu0 %3739
    %v3741 = vsel %vm499, %v3711, 0.0
    %3742 = vadd.xlane.f32.xlu0 %v3741
    %v3743 = vpop.xlane.xlu0 %3742
    %v3744 = vsel %vm219, %v3712, 0.0
    %3745 = vadd.xlane.f32.xlu0 %v3744
    %v3746 = vpop.xlane.xlu0 %3745
    %v3747 = vsel %vm499, %v3713, 0.0
    %3748 = vadd.xlane.f32.xlu0 %v3747
    %v3749 = vpop.xlane.xlu0 %3748
    %v3750 = vsel %vm219, %v3714, 0.0
    %3751 = vadd.xlane.f32.xlu0 %v3750
    %v3752 = vpop.xlane.xlu0 %3751
    %v3753 = vsel %vm499, %v3715, 0.0
    %3754 = vadd.xlane.f32.xlu0 %v3753
    %v3755 = vpop.xlane.xlu0 %3754
    %v3756 = vsel %vm219, %v3716, 0.0
    %3757 = vadd.xlane.f32.xlu0 %v3756
    %v3758 = vpop.xlane.xlu0 %3757
    %v3759 = vsel %vm499, %v3717, 0.0
    %3760 = vadd.xlane.f32.xlu0 %v3759
    %v3761 = vpop.xlane.xlu0 %3760
    %v3762 = vsel %vm219, %v3718, 0.0
    %3763 = vadd.xlane.f32.xlu0 %v3762
    %v3764 = vpop.xlane.xlu0 %3763
    %v3765 = vsel %vm499, %v3719, 0.0
    %3766 = vadd.xlane.f32.xlu0 %v3765
    %v3767 = vpop.xlane.xlu0 %3766
    %v3768 = vadd.f32 %v3722, %v547
    %v3769 = vadd.f32 %v3725, %v551
    %v3770 = vadd.f32 %v3728, %v547
    %v3771 = vadd.f32 %v3731, %v551
    %v3772 = vadd.f32 %v3734, %v547
    %v3773 = vadd.f32 %v3737, %v551
    %v3774 = vadd.f32 %v3740, %v547
    %v3775 = vadd.f32 %v3743, %v551
    %v3776 = vadd.f32 %v3746, %v547
    %v3777 = vadd.f32 %v3749, %v551
    %v3778 = vadd.f32 %v3752, %v547
    %v3779 = vadd.f32 %v3755, %v551
    %v3780 = vadd.f32 %v3758, %v547
    %v3781 = vadd.f32 %v3761, %v551
    %v3782 = vadd.f32 %v3764, %v547
    %v3783 = vadd.f32 %v3767, %v551
    %3800 = vset.pattern.permute.xlu0 0
    %3801 = vperm.xlu0 %3800, %v3768
    %v3802 = vpop.permute.xlu0 %3801
    %3803 = vset.pattern.permute.xlu0 0
    %3804 = vperm.xlu0 %3803, %v3769
    %v3805 = vpop.permute.xlu0 %3804
    %3806 = vset.pattern.permute.xlu0 0
    %3807 = vperm.xlu0 %3806, %v3770
    %v3808 = vpop.permute.xlu0 %3807
    %3809 = vset.pattern.permute.xlu0 0
    %3810 = vperm.xlu0 %3809, %v3771
    %v3811 = vpop.permute.xlu0 %3810
    %3812 = vset.pattern.permute.xlu0 0
    %3813 = vperm.xlu0 %3812, %v3772
    %v3814 = vpop.permute.xlu0 %3813
    %3815 = vset.pattern.permute.xlu0 0
    %3816 = vperm.xlu0 %3815, %v3773
    %v3817 = vpop.permute.xlu0 %3816
    %3818 = vset.pattern.permute.xlu0 0
    %3819 = vperm.xlu0 %3818, %v3774
    %v3820 = vpop.permute.xlu0 %3819
    %3821 = vset.pattern.permute.xlu0 0
    %3822 = vperm.xlu0 %3821, %v3775
    %v3823 = vpop.permute.xlu0 %3822
    %3824 = vset.pattern.permute.xlu0 0
    %3825 = vperm.xlu0 %3824, %v3776
    %v3826 = vpop.permute.xlu0 %3825
    %3827 = vset.pattern.permute.xlu0 0
    %3828 = vperm.xlu0 %3827, %v3777
    %v3829 = vpop.permute.xlu0 %3828
    %3830 = vset.pattern.permute.xlu0 0
    %3831 = vperm.xlu0 %3830, %v3778
    %v3832 = vpop.permute.xlu0 %3831
    %3833 = vset.pattern.permute.xlu0 0
    %3834 = vperm.xlu0 %3833, %v3779
    %v3835 = vpop.permute.xlu0 %3834
    %3836 = vset.pattern.permute.xlu0 0
    %3837 = vperm.xlu0 %3836, %v3780
    %v3838 = vpop.permute.xlu0 %3837
    %3839 = vset.pattern.permute.xlu0 0
    %3840 = vperm.xlu0 %3839, %v3781
    %v3841 = vpop.permute.xlu0 %3840
    %3842 = vset.pattern.permute.xlu0 0
    %3843 = vperm.xlu0 %3842, %v3782
    %v3844 = vpop.permute.xlu0 %3843
    %3845 = vset.pattern.permute.xlu0 0
    %3846 = vperm.xlu0 %3845, %v3783
    %v3847 = vpop.permute.xlu0 %3846
    %v3848 = vlaneseq
    %v3849 = vshrl.u32 %v3848, 7
    %v3850 = vsub.s32 %v298, %v3849
    %v3851 = vrot.slane %v3802, %v3850
    %v3852 = vlaneseq
    %v3853 = vshrl.u32 %v3852, 7
    %v3854 = vsub.s32 %v638, %v3853
    %v3855 = vrot.slane %v3805, %v3854
    %v3856 = vsel %vm643, %v3855, %v3851
    %v3857 = vlaneseq
    %v3858 = vshrl.u32 %v3857, 7
    %v3859 = vsub.s32 %v298, %v3858
    %v3860 = vrot.slane %v3808, %v3859
    %v3861 = vlaneseq
    %v3862 = vshrl.u32 %v3861, 7
    %v3863 = vsub.s32 %v638, %v3862
    %v3864 = vrot.slane %v3811, %v3863
    %v3865 = vsel %vm643, %v3864, %v3860
    %v3866 = vlaneseq
    %v3867 = vshrl.u32 %v3866, 7
    %v3868 = vsub.s32 %v298, %v3867
    %v3869 = vrot.slane %v3814, %v3868
    %v3870 = vlaneseq
    %v3871 = vshrl.u32 %v3870, 7
    %v3872 = vsub.s32 %v638, %v3871
    %v3873 = vrot.slane %v3817, %v3872
    %v3874 = vsel %vm643, %v3873, %v3869
    %v3875 = vlaneseq
    %v3876 = vshrl.u32 %v3875, 7
    %v3877 = vsub.s32 %v298, %v3876
    %v3878 = vrot.slane %v3820, %v3877
    %v3879 = vlaneseq
    %v3880 = vshrl.u32 %v3879, 7
    %v3881 = vsub.s32 %v638, %v3880
    %v3882 = vrot.slane %v3823, %v3881
    %v3883 = vsel %vm643, %v3882, %v3878
    %v3884 = vlaneseq
    %v3885 = vshrl.u32 %v3884, 7
    %v3886 = vsub.s32 %v298, %v3885
    %v3887 = vrot.slane %v3826, %v3886
    %v3888 = vlaneseq
    %v3889 = vshrl.u32 %v3888, 7
    %v3890 = vsub.s32 %v638, %v3889
    %v3891 = vrot.slane %v3829, %v3890
    %v3892 = vsel %vm643, %v3891, %v3887
    %v3893 = vlaneseq
    %v3894 = vshrl.u32 %v3893, 7
    %v3895 = vsub.s32 %v298, %v3894
    %v3896 = vrot.slane %v3832, %v3895
    %v3897 = vlaneseq
    %v3898 = vshrl.u32 %v3897, 7
    %v3899 = vsub.s32 %v638, %v3898
    %v3900 = vrot.slane %v3835, %v3899
    %v3901 = vsel %vm643, %v3900, %v3896
    %v3902 = vlaneseq
    %v3903 = vshrl.u32 %v3902, 7
    %v3904 = vsub.s32 %v298, %v3903
    %v3905 = vrot.slane %v3838, %v3904
    %v3906 = vlaneseq
    %v3907 = vshrl.u32 %v3906, 7
    %v3908 = vsub.s32 %v638, %v3907
    %v3909 = vrot.slane %v3841, %v3908
    %v3910 = vsel %vm643, %v3909, %v3905
    %v3911 = vlaneseq
    %v3912 = vshrl.u32 %v3911, 7
    %v3913 = vsub.s32 %v298, %v3912
    %v3914 = vrot.slane %v3844, %v3913
    %v3915 = vlaneseq
    %v3916 = vshrl.u32 %v3915, 7
    %v3917 = vsub.s32 %v638, %v3916
    %v3918 = vrot.slane %v3847, %v3917
    %v3919 = vsel %vm643, %v3918, %v3914
    %v3920 = vsel %vm356, %v3865, %v3856
    %v3921 = vsel %vm359, %v3874, %v3920
    %v3922 = vsel %vm362, %v3883, %v3921
    %v3923 = vsel %vm365, %v3892, %v3922
    %v3924 = vsel %vm368, %v3901, %v3923
    %v3925 = vsel %vm371, %v3910, %v3924
    %v3926 = vsel %vm374, %v3919, %v3925
    %v3928 = vsel %vm716, %v3926, -inf
    %3929 = vmax.xlane.f32.xlu0 %v3928
    %v3930 = vpop.xlane.xlu0 %3929
    %v3932 = vlaneseq
    %v3933 = vshrl.u32 %v3932, 7
    %v3934 = vsub.s32 0, %v3933
    %v3935 = vrot.slane %v3930, %v3934
    %v3936 = vlaneseq
    %v3937 = vshrl.u32 %v3936, 7
    %v3938 = vsub.s32 1, %v3937
    %v3939 = vrot.slane %v3930, %v3938
    %v3940 = vlaneseq
    %v3941 = vshrl.u32 %v3940, 7
    %v3942 = vsub.s32 2, %v3941
    %v3943 = vrot.slane %v3930, %v3942
    %v3944 = vlaneseq
    %v3945 = vshrl.u32 %v3944, 7
    %v3946 = vsub.s32 3, %v3945
    %v3947 = vrot.slane %v3930, %v3946
    %v3948 = vlaneseq
    %v3949 = vshrl.u32 %v3948, 7
    %v3950 = vsub.s32 4, %v3949
    %v3951 = vrot.slane %v3930, %v3950
    %v3952 = vlaneseq
    %v3953 = vshrl.u32 %v3952, 7
    %v3954 = vsub.s32 5, %v3953
    %v3955 = vrot.slane %v3930, %v3954
    %v3956 = vlaneseq
    %v3957 = vshrl.u32 %v3956, 7
    %v3958 = vsub.s32 6, %v3957
    %v3959 = vrot.slane %v3930, %v3958
    %v3960 = vlaneseq
    %v3961 = vshrl.u32 %v3960, 7
    %v3962 = vsub.s32 7, %v3961
    %v3963 = vrot.slane %v3930, %v3962
    %vm3972 = vcmp.eq.f32.partialorder %v3768, %v3935
    %vm3973 = vcmp.eq.f32.partialorder %v3769, %v3935
    %vm3974 = vcmp.eq.f32.partialorder %v3770, %v3939
    %vm3975 = vcmp.eq.f32.partialorder %v3771, %v3939
    %vm3976 = vcmp.eq.f32.partialorder %v3772, %v3943
    %vm3977 = vcmp.eq.f32.partialorder %v3773, %v3943
    %vm3978 = vcmp.eq.f32.partialorder %v3774, %v3947
    %vm3979 = vcmp.eq.f32.partialorder %v3775, %v3947
    %vm3980 = vcmp.eq.f32.partialorder %v3776, %v3951
    %vm3981 = vcmp.eq.f32.partialorder %v3777, %v3951
    %vm3982 = vcmp.eq.f32.partialorder %v3778, %v3955
    %vm3983 = vcmp.eq.f32.partialorder %v3779, %v3955
    %vm3984 = vcmp.eq.f32.partialorder %v3780, %v3959
    %vm3985 = vcmp.eq.f32.partialorder %v3781, %v3959
    %vm3986 = vcmp.eq.f32.partialorder %v3782, %v3963
    %vm3987 = vcmp.eq.f32.partialorder %v3783, %v3963
    %v3988 = vsel %vm3972, %v779, 9
    %v3989 = vsel %vm3973, %v783, 9
    %v3990 = vsel %vm3974, %v779, 9
    %v3991 = vsel %vm3975, %v783, 9
    %v3992 = vsel %vm3976, %v779, 9
    %v3993 = vsel %vm3977, %v783, 9
    %v3994 = vsel %vm3978, %v779, 9
    %v3995 = vsel %vm3979, %v783, 9
    %v3996 = vsel %vm3980, %v779, 9
    %v3997 = vsel %vm3981, %v783, 9
    %v3998 = vsel %vm3982, %v779, 9
    %v3999 = vsel %vm3983, %v783, 9
    %v4000 = vsel %vm3984, %v779, 9
    %v4001 = vsel %vm3985, %v783, 9
    %v4002 = vsel %vm3986, %v779, 9
    %v4003 = vsel %vm3987, %v783, 9
    %4004 = vset.pattern.permute.xlu0 0
    %4005 = vperm.xlu0 %4004, %v3988
    %v4006 = vpop.permute.xlu0 %4005
    %4007 = vset.pattern.permute.xlu0 0
    %4008 = vperm.xlu0 %4007, %v3989
    %v4009 = vpop.permute.xlu0 %4008
    %4010 = vset.pattern.permute.xlu0 0
    %4011 = vperm.xlu0 %4010, %v3990
    %v4012 = vpop.permute.xlu0 %4011
    %4013 = vset.pattern.permute.xlu0 0
    %4014 = vperm.xlu0 %4013, %v3991
    %v4015 = vpop.permute.xlu0 %4014
    %4016 = vset.pattern.permute.xlu0 0
    %4017 = vperm.xlu0 %4016, %v3992
    %v4018 = vpop.permute.xlu0 %4017
    %4019 = vset.pattern.permute.xlu0 0
    %4020 = vperm.xlu0 %4019, %v3993
    %v4021 = vpop.permute.xlu0 %4020
    %4022 = vset.pattern.permute.xlu0 0
    %4023 = vperm.xlu0 %4022, %v3994
    %v4024 = vpop.permute.xlu0 %4023
    %4025 = vset.pattern.permute.xlu0 0
    %4026 = vperm.xlu0 %4025, %v3995
    %v4027 = vpop.permute.xlu0 %4026
    %4028 = vset.pattern.permute.xlu0 0
    %4029 = vperm.xlu0 %4028, %v3996
    %v4030 = vpop.permute.xlu0 %4029
    %4031 = vset.pattern.permute.xlu0 0
    %4032 = vperm.xlu0 %4031, %v3997
    %v4033 = vpop.permute.xlu0 %4032
    %4034 = vset.pattern.permute.xlu0 0
    %4035 = vperm.xlu0 %4034, %v3998
    %v4036 = vpop.permute.xlu0 %4035
    %4037 = vset.pattern.permute.xlu0 0
    %4038 = vperm.xlu0 %4037, %v3999
    %v4039 = vpop.permute.xlu0 %4038
    %4040 = vset.pattern.permute.xlu0 0
    %4041 = vperm.xlu0 %4040, %v4000
    %v4042 = vpop.permute.xlu0 %4041
    %4043 = vset.pattern.permute.xlu0 0
    %4044 = vperm.xlu0 %4043, %v4001
    %v4045 = vpop.permute.xlu0 %4044
    %4046 = vset.pattern.permute.xlu0 0
    %4047 = vperm.xlu0 %4046, %v4002
    %v4048 = vpop.permute.xlu0 %4047
    %4049 = vset.pattern.permute.xlu0 0
    %4050 = vperm.xlu0 %4049, %v4003
    %v4051 = vpop.permute.xlu0 %4050
    %v4052 = vlaneseq
    %v4053 = vshrl.u32 %v4052, 7
    %v4054 = vsub.s32 %v298, %v4053
    %v4055 = vrot.slane %v4006, %v4054
    %v4056 = vlaneseq
    %v4057 = vshrl.u32 %v4056, 7
    %v4058 = vsub.s32 %v638, %v4057
    %v4059 = vrot.slane %v4009, %v4058
    %v4060 = vsel %vm643, %v4059, %v4055
    %v4061 = vlaneseq
    %v4062 = vshrl.u32 %v4061, 7
    %v4063 = vsub.s32 %v298, %v4062
    %v4064 = vrot.slane %v4012, %v4063
    %v4065 = vlaneseq
    %v4066 = vshrl.u32 %v4065, 7
    %v4067 = vsub.s32 %v638, %v4066
    %v4068 = vrot.slane %v4015, %v4067
    %v4069 = vsel %vm643, %v4068, %v4064
    %v4070 = vlaneseq
    %v4071 = vshrl.u32 %v4070, 7
    %v4072 = vsub.s32 %v298, %v4071
    %v4073 = vrot.slane %v4018, %v4072
    %v4074 = vlaneseq
    %v4075 = vshrl.u32 %v4074, 7
    %v4076 = vsub.s32 %v638, %v4075
    %v4077 = vrot.slane %v4021, %v4076
    %v4078 = vsel %vm643, %v4077, %v4073
    %v4079 = vlaneseq
    %v4080 = vshrl.u32 %v4079, 7
    %v4081 = vsub.s32 %v298, %v4080
    %v4082 = vrot.slane %v4024, %v4081
    %v4083 = vlaneseq
    %v4084 = vshrl.u32 %v4083, 7
    %v4085 = vsub.s32 %v638, %v4084
    %v4086 = vrot.slane %v4027, %v4085
    %v4087 = vsel %vm643, %v4086, %v4082
    %v4088 = vlaneseq
    %v4089 = vshrl.u32 %v4088, 7
    %v4090 = vsub.s32 %v298, %v4089
    %v4091 = vrot.slane %v4030, %v4090
    %v4092 = vlaneseq
    %v4093 = vshrl.u32 %v4092, 7
    %v4094 = vsub.s32 %v638, %v4093
    %v4095 = vrot.slane %v4033, %v4094
    %v4096 = vsel %vm643, %v4095, %v4091
    %v4097 = vlaneseq
    %v4098 = vshrl.u32 %v4097, 7
    %v4099 = vsub.s32 %v298, %v4098
    %v4100 = vrot.slane %v4036, %v4099
    %v4101 = vlaneseq
    %v4102 = vshrl.u32 %v4101, 7
    %v4103 = vsub.s32 %v638, %v4102
    %v4104 = vrot.slane %v4039, %v4103
    %v4105 = vsel %vm643, %v4104, %v4100
    %v4106 = vlaneseq
    %v4107 = vshrl.u32 %v4106, 7
    %v4108 = vsub.s32 %v298, %v4107
    %v4109 = vrot.slane %v4042, %v4108
    %v4110 = vlaneseq
    %v4111 = vshrl.u32 %v4110, 7
    %v4112 = vsub.s32 %v638, %v4111
    %v4113 = vrot.slane %v4045, %v4112
    %v4114 = vsel %vm643, %v4113, %v4109
    %v4115 = vlaneseq
    %v4116 = vshrl.u32 %v4115, 7
    %v4117 = vsub.s32 %v298, %v4116
    %v4118 = vrot.slane %v4048, %v4117
    %v4119 = vlaneseq
    %v4120 = vshrl.u32 %v4119, 7
    %v4121 = vsub.s32 %v638, %v4120
    %v4122 = vrot.slane %v4051, %v4121
    %v4123 = vsel %vm643, %v4122, %v4118
    %v4124 = vsel %vm356, %v4069, %v4060
    %v4125 = vsel %vm359, %v4078, %v4124
    %v4126 = vsel %vm362, %v4087, %v4125
    %v4127 = vsel %vm365, %v4096, %v4126
    %v4128 = vsel %vm368, %v4105, %v4127
    %v4129 = vsel %vm371, %v4114, %v4128
    %v4130 = vsel %vm374, %v4123, %v4129
    %v4131 = vsel %vm716, %v4130, 2147483647
    %v4132 = vand.u32 %v4131, 65535
    %v4133 = vshra.s32 %v4131, 16
    %v4134 = vcvt.s32.f32 %v4132
    %v4135 = vcvt.s32.f32 %v4133
    %4136 = vmin.xlane.f32.xlu0 %v4135
    %v4137 = vpop.xlane.xlu0 %4136
    %vm4138 = vcmp.eq.f32.partialorder %v4135, %v4137
    %v4139 = vsel %vm4138, %v4134, inf
    %4140 = vmin.xlane.f32.xlu0 %v4139
    %v4141 = vpop.xlane.xlu0 %4140
    %v4142 = vcvt.f32.s32 %v4141
    %v4143 = vcvt.f32.s32 %v4137
    %v4144 = vshll.u32 %v4143, 16
    %v4145 = vadd.s32 %v4144, %v4142
    %vm4146 = vcmp.eq.s32.totalorder %v298, %v4145
    %v4147 = vsel %vm4146, 1, 0
    %v4148 = vcvt.s32.f32 %v4147
    %v4149 = vlaneseq
    %v4150 = vshrl.u32 %v4149, 7
    %v4151 = vsub.s32 0, %v4150
    %v4152 = vrot.slane %v4148, %v4151
    %4154 = vbcast.lane.b32.xlu0 %v4152, 256
    %v4155 = vpop.permute.xlu0 %4154
    %s4157 = sor.u32 256, 8
    %4158 = vbcast.lane.b32.xlu0 %v4152, %s4157
    %v4159 = vpop.permute.xlu0 %4158
    %v4160 = vlaneseq
    %v4161 = vshrl.u32 %v4160, 7
    %v4162 = vsub.s32 1, %v4161
    %v4163 = vrot.slane %v4148, %v4162
    %4165 = vbcast.lane.b32.xlu0 %v4163, 256
    %v4166 = vpop.permute.xlu0 %4165
    %s4168 = sor.u32 256, 8
    %4169 = vbcast.lane.b32.xlu0 %v4163, %s4168
    %v4170 = vpop.permute.xlu0 %4169
    %v4171 = vlaneseq
    %v4172 = vshrl.u32 %v4171, 7
    %v4173 = vsub.s32 2, %v4172
    %v4174 = vrot.slane %v4148, %v4173
    %4176 = vbcast.lane.b32.xlu0 %v4174, 256
    %v4177 = vpop.permute.xlu0 %4176
    %s4179 = sor.u32 256, 8
    %4180 = vbcast.lane.b32.xlu0 %v4174, %s4179
    %v4181 = vpop.permute.xlu0 %4180
    %v4182 = vlaneseq
    %v4183 = vshrl.u32 %v4182, 7
    %v4184 = vsub.s32 3, %v4183
    %v4185 = vrot.slane %v4148, %v4184
    %4187 = vbcast.lane.b32.xlu0 %v4185, 256
    %v4188 = vpop.permute.xlu0 %4187
    %s4190 = sor.u32 256, 8
    %4191 = vbcast.lane.b32.xlu0 %v4185, %s4190
    %v4192 = vpop.permute.xlu0 %4191
    %v4193 = vlaneseq
    %v4194 = vshrl.u32 %v4193, 7
    %v4195 = vsub.s32 4, %v4194
    %v4196 = vrot.slane %v4148, %v4195
    %4198 = vbcast.lane.b32.xlu0 %v4196, 256
    %v4199 = vpop.permute.xlu0 %4198
    %s4201 = sor.u32 256, 8
    %4202 = vbcast.lane.b32.xlu0 %v4196, %s4201
    %v4203 = vpop.permute.xlu0 %4202
    %v4204 = vlaneseq
    %v4205 = vshrl.u32 %v4204, 7
    %v4206 = vsub.s32 5, %v4205
    %v4207 = vrot.slane %v4148, %v4206
    %4209 = vbcast.lane.b32.xlu0 %v4207, 256
    %v4210 = vpop.permute.xlu0 %4209
    %s4212 = sor.u32 256, 8
    %4213 = vbcast.lane.b32.xlu0 %v4207, %s4212
    %v4214 = vpop.permute.xlu0 %4213
    %v4215 = vlaneseq
    %v4216 = vshrl.u32 %v4215, 7
    %v4217 = vsub.s32 6, %v4216
    %v4218 = vrot.slane %v4148, %v4217
    %4220 = vbcast.lane.b32.xlu0 %v4218, 256
    %v4221 = vpop.permute.xlu0 %4220
    %s4223 = sor.u32 256, 8
    %4224 = vbcast.lane.b32.xlu0 %v4218, %s4223
    %v4225 = vpop.permute.xlu0 %4224
    %v4226 = vlaneseq
    %v4227 = vshrl.u32 %v4226, 7
    %v4228 = vsub.s32 7, %v4227
    %v4229 = vrot.slane %v4148, %v4228
    %4231 = vbcast.lane.b32.xlu0 %v4229, 256
    %v4232 = vpop.permute.xlu0 %4231
    %s4234 = sor.u32 256, 8
    %4235 = vbcast.lane.b32.xlu0 %v4229, %s4234
    %v4236 = vpop.permute.xlu0 %4235
    %v4237 = vmul.f32 %v3512, %v4155
    %v4238 = vmul.f32 %v3513, %v4159
    %v4239 = vmul.f32 %v3514, %v4166
    %v4240 = vmul.f32 %v3515, %v4170
    %v4241 = vmul.f32 %v3516, %v4177
    %v4242 = vmul.f32 %v3517, %v4181
    %v4243 = vmul.f32 %v3518, %v4188
    %v4244 = vmul.f32 %v3519, %v4192
    %v4245 = vmul.f32 %v3520, %v4199
    %v4246 = vmul.f32 %v3521, %v4203
    %v4247 = vmul.f32 %v3522, %v4210
    %v4248 = vmul.f32 %v3523, %v4214
    %v4249 = vmul.f32 %v3524, %v4221
    %v4250 = vmul.f32 %v3525, %v4225
    %v4251 = vmul.f32 %v3526, %v4232
    %v4252 = vmul.f32 %v3527, %v4236
    %v4253 = vsel %vm2085, %v4237, 0.0
    %v4254 = vsel %vm2087, %v4238, 0.0
    %v4255 = vadd.f32 %v4253, %v4254
    %v4256 = vrot.slane %v4255, 4
    %v4257 = vadd.f32 %v4255, %v4256
    %v4258 = vrot.slane %v4257, 2
    %v4259 = vadd.f32 %v4257, %v4258
    %v4260 = vrot.slane %v4259, 1
    %v4261 = vadd.f32 %v4259, %v4260
    %v4262 = vsel %vm2085, %v4239, 0.0
    %v4263 = vsel %vm2087, %v4240, 0.0
    %v4264 = vadd.f32 %v4262, %v4263
    %v4265 = vrot.slane %v4264, 4
    %v4266 = vadd.f32 %v4264, %v4265
    %v4267 = vrot.slane %v4266, 2
    %v4268 = vadd.f32 %v4266, %v4267
    %v4269 = vrot.slane %v4268, 1
    %v4270 = vadd.f32 %v4268, %v4269
    %v4271 = vsel %vm2085, %v4241, 0.0
    %v4272 = vsel %vm2087, %v4242, 0.0
    %v4273 = vadd.f32 %v4271, %v4272
    %v4274 = vrot.slane %v4273, 4
    %v4275 = vadd.f32 %v4273, %v4274
    %v4276 = vrot.slane %v4275, 2
    %v4277 = vadd.f32 %v4275, %v4276
    %v4278 = vrot.slane %v4277, 1
    %v4279 = vadd.f32 %v4277, %v4278
    %v4280 = vsel %vm2085, %v4243, 0.0
    %v4281 = vsel %vm2087, %v4244, 0.0
    %v4282 = vadd.f32 %v4280, %v4281
    %v4283 = vrot.slane %v4282, 4
    %v4284 = vadd.f32 %v4282, %v4283
    %v4285 = vrot.slane %v4284, 2
    %v4286 = vadd.f32 %v4284, %v4285
    %v4287 = vrot.slane %v4286, 1
    %v4288 = vadd.f32 %v4286, %v4287
    %v4289 = vsel %vm2085, %v4245, 0.0
    %v4290 = vsel %vm2087, %v4246, 0.0
    %v4291 = vadd.f32 %v4289, %v4290
    %v4292 = vrot.slane %v4291, 4
    %v4293 = vadd.f32 %v4291, %v4292
    %v4294 = vrot.slane %v4293, 2
    %v4295 = vadd.f32 %v4293, %v4294
    %v4296 = vrot.slane %v4295, 1
    %v4297 = vadd.f32 %v4295, %v4296
    %v4298 = vsel %vm2085, %v4247, 0.0
    %v4299 = vsel %vm2087, %v4248, 0.0
    %v4300 = vadd.f32 %v4298, %v4299
    %v4301 = vrot.slane %v4300, 4
    %v4302 = vadd.f32 %v4300, %v4301
    %v4303 = vrot.slane %v4302, 2
    %v4304 = vadd.f32 %v4302, %v4303
    %v4305 = vrot.slane %v4304, 1
    %v4306 = vadd.f32 %v4304, %v4305
    %v4307 = vsel %vm2085, %v4249, 0.0
    %v4308 = vsel %vm2087, %v4250, 0.0
    %v4309 = vadd.f32 %v4307, %v4308
    %v4310 = vrot.slane %v4309, 4
    %v4311 = vadd.f32 %v4309, %v4310
    %v4312 = vrot.slane %v4311, 2
    %v4313 = vadd.f32 %v4311, %v4312
    %v4314 = vrot.slane %v4313, 1
    %v4315 = vadd.f32 %v4313, %v4314
    %v4316 = vsel %vm2085, %v4251, 0.0
    %v4317 = vsel %vm2087, %v4252, 0.0
    %v4318 = vadd.f32 %v4316, %v4317
    %v4319 = vrot.slane %v4318, 4
    %v4320 = vadd.f32 %v4318, %v4319
    %v4321 = vrot.slane %v4320, 2
    %v4322 = vadd.f32 %v4320, %v4321
    %v4323 = vrot.slane %v4322, 1
    %v4324 = vadd.f32 %v4322, %v4323
    %v4325 = vmul.f32 %v3528, %v4148
    %v4326 = vsel %vm716, %v4325, 0.0
    %4327 = vadd.xlane.f32.xlu0 %v4326
    %v4328 = vpop.xlane.xlu0 %4327
    %vm4329 = vcmp.gt.f32.partialorder %v4328, 0.5
    %vm4330 = vcmp.gt.s32.totalorder %v4145, 0
    %vm4331 = vmand %vm4330, %vm4329
    %v4332 = vrot.slane %v3571, 7
    %v4333 = vsel %vm365, %v4332, %v3570
    %v4334 = vrot.slane %v3572, 6
    %v4335 = vsel %vm368, %v4334, %v4333
    %v4336 = vrot.slane %v3573, 5
    %v4337 = vsel %vm371, %v4336, %v4335
    %v4338 = vrot.slane %v3574, 4
    %v4339 = vsel %vm374, %v4338, %v4337
    %v4340 = vrot.slane %v3575, 3
    %v4341 = vrot.slane %v3576, 2
    %v4342 = vsel %vm356, %v4341, %v4340
    %v4343 = vrot.slane %v3577, 1
    %v4344 = vsel %vm359, %v4343, %v4342
    %v4348 = vrot.slane %v3669, 5
    %4349 = vrot.lane.b32.xlu0 %v4348, 32
    %v4350 = vpop.permute.xlu0 %4349
    %v4352 = vsel %vm219, %v4339, %v4350
    %v4353 = vsel %vm219, %v4344, %v4350
    %v4354 = vsel %vm4331, 1, 0
    %vm4355 = vcmp.eq.s32.totalorder %v4354, 1
    %v4364 = vsel %vm356, %v4270, %v4261
    %v4365 = vsel %vm359, %v4279, %v4364
    %v4366 = vsel %vm362, %v4288, %v4365
    %v4367 = vsel %vm365, %v4297, %v4366
    %v4368 = vsel %vm368, %v4306, %v4367
    %v4369 = vsel %vm371, %v4315, %v4368
    %v4370 = vsel %vm374, %v4324, %v4369
    %vm4374 = vcmask 1044480
    %v4375 = vrot.slane %v4352, 3
    %v4376 = vrot.slane %v4353, 3
    %v4377 = vsel %vm4374, %v4375, %v4376
    %v4379 = vsel %vm4355, %v4370, %v4377
    %vm4380 = vmxor %vm4329, 1
    %vm4381 = vmand %vm4330, %vm4380
    %v4382 = vsel %vm4381, 1.0, 0.0
    %v4383 = vmul.f32 %v4148, %v4382
    %v4384 = vlaneseq
    %v4385 = vshrl.u32 %v4384, 7
    %v4386 = vsub.s32 0, %v4385
    %v4387 = vrot.slane %v4383, %v4386
    %4389 = vbcast.lane.b32.xlu0 %v4387, 256
    %v4390 = vpop.permute.xlu0 %4389
    %s4392 = sor.u32 256, 8
    %4393 = vbcast.lane.b32.xlu0 %v4387, %s4392
    %v4394 = vpop.permute.xlu0 %4393
    %v4395 = vlaneseq
    %v4396 = vshrl.u32 %v4395, 7
    %v4397 = vsub.s32 1, %v4396
    %v4398 = vrot.slane %v4383, %v4397
    %4400 = vbcast.lane.b32.xlu0 %v4398, 256
    %v4401 = vpop.permute.xlu0 %4400
    %s4403 = sor.u32 256, 8
    %4404 = vbcast.lane.b32.xlu0 %v4398, %s4403
    %v4405 = vpop.permute.xlu0 %4404
    %v4406 = vlaneseq
    %v4407 = vshrl.u32 %v4406, 7
    %v4408 = vsub.s32 2, %v4407
    %v4409 = vrot.slane %v4383, %v4408
    %4411 = vbcast.lane.b32.xlu0 %v4409, 256
    %v4412 = vpop.permute.xlu0 %4411
    %s4414 = sor.u32 256, 8
    %4415 = vbcast.lane.b32.xlu0 %v4409, %s4414
    %v4416 = vpop.permute.xlu0 %4415
    %v4417 = vlaneseq
    %v4418 = vshrl.u32 %v4417, 7
    %v4419 = vsub.s32 3, %v4418
    %v4420 = vrot.slane %v4383, %v4419
    %4422 = vbcast.lane.b32.xlu0 %v4420, 256
    %v4423 = vpop.permute.xlu0 %4422
    %s4425 = sor.u32 256, 8
    %4426 = vbcast.lane.b32.xlu0 %v4420, %s4425
    %v4427 = vpop.permute.xlu0 %4426
    %v4428 = vlaneseq
    %v4429 = vshrl.u32 %v4428, 7
    %v4430 = vsub.s32 4, %v4429
    %v4431 = vrot.slane %v4383, %v4430
    %4433 = vbcast.lane.b32.xlu0 %v4431, 256
    %v4434 = vpop.permute.xlu0 %4433
    %s4436 = sor.u32 256, 8
    %4437 = vbcast.lane.b32.xlu0 %v4431, %s4436
    %v4438 = vpop.permute.xlu0 %4437
    %v4439 = vlaneseq
    %v4440 = vshrl.u32 %v4439, 7
    %v4441 = vsub.s32 5, %v4440
    %v4442 = vrot.slane %v4383, %v4441
    %4444 = vbcast.lane.b32.xlu0 %v4442, 256
    %v4445 = vpop.permute.xlu0 %4444
    %s4447 = sor.u32 256, 8
    %4448 = vbcast.lane.b32.xlu0 %v4442, %s4447
    %v4449 = vpop.permute.xlu0 %4448
    %v4450 = vlaneseq
    %v4451 = vshrl.u32 %v4450, 7
    %v4452 = vsub.s32 6, %v4451
    %v4453 = vrot.slane %v4383, %v4452
    %4455 = vbcast.lane.b32.xlu0 %v4453, 256
    %v4456 = vpop.permute.xlu0 %4455
    %s4458 = sor.u32 256, 8
    %4459 = vbcast.lane.b32.xlu0 %v4453, %s4458
    %v4460 = vpop.permute.xlu0 %4459
    %v4461 = vlaneseq
    %v4462 = vshrl.u32 %v4461, 7
    %v4463 = vsub.s32 7, %v4462
    %v4464 = vrot.slane %v4383, %v4463
    %4466 = vbcast.lane.b32.xlu0 %v4464, 256
    %v4467 = vpop.permute.xlu0 %4466
    %s4469 = sor.u32 256, 8
    %4470 = vbcast.lane.b32.xlu0 %v4464, %s4469
    %v4471 = vpop.permute.xlu0 %4470
    %v4472 = vcombine.high %v4352, %v4352
    %v4474 = vunpack.c.l.s4 1966171168
    %v4475 = vunpack.c.0.s8 %v4474
    %v4476 = vlaneseq
    %v4477 = vshrl.u32 %v4476, 7
    %v4478 = vsub.s32 %v4475, %v4477
    %v4479 = vrot.slane %v4352, %v4478
    %v4481 = vunpack.c.l.s4 1966171168
    %v4482 = vunpack.c.0.s8 %v4481
    %v4483 = vlaneseq
    %v4484 = vshrl.u32 %v4483, 7
    %v4485 = vsub.s32 %v4482, %v4484
    %v4486 = vrot.slane %v4472, %v4485
    %v4487 = vcombine.high %v4479, %v4479
    %v4488 = vcombine.high %v4486, %v4486
    %v4490 = vunpack.c.l.s4 1966171168
    %v4491 = vunpack.c.0.s8 %v4490
    %v4492 = vlaneseq
    %v4493 = vshrl.u32 %v4492, 7
    %v4494 = vsub.s32 %v4491, %v4493
    %v4495 = vrot.slane %v4486, %v4494
    %v4497 = vunpack.c.l.s4 1966171168
    %v4498 = vunpack.c.0.s8 %v4497
    %v4499 = vlaneseq
    %v4500 = vshrl.u32 %v4499, 7
    %v4501 = vsub.s32 %v4498, %v4500
    %v4502 = vrot.slane %v4487, %v4501
    %v4504 = vunpack.c.l.s4 1966171168
    %v4505 = vunpack.c.0.s8 %v4504
    %v4506 = vlaneseq
    %v4507 = vshrl.u32 %v4506, 7
    %v4508 = vsub.s32 %v4505, %v4507
    %v4509 = vrot.slane %v4488, %v4508
    %v4510 = vcombine.high %v4495, %v4495
    %v4511 = vcombine.high %v4502, %v4502
    %v4512 = vcombine.high %v4509, %v4509
    %v4514 = vunpack.c.l.s4 1966171168
    %v4515 = vunpack.c.0.s8 %v4514
    %v4516 = vlaneseq
    %v4517 = vshrl.u32 %v4516, 7
    %v4518 = vsub.s32 %v4515, %v4517
    %v4519 = vrot.slane %v4353, %v4518
    %v4520 = vcombine.high %v4519, %v4519
    %v4522 = vunpack.c.l.s4 1966171168
    %v4523 = vunpack.c.0.s8 %v4522
    %v4524 = vlaneseq
    %v4525 = vshrl.u32 %v4524, 7
    %v4526 = vsub.s32 %v4523, %v4525
    %v4527 = vrot.slane %v4519, %v4526
    %v4529 = vunpack.c.l.s4 1966171168
    %v4530 = vunpack.c.0.s8 %v4529
    %v4531 = vlaneseq
    %v4532 = vshrl.u32 %v4531, 7
    %v4533 = vsub.s32 %v4530, %v4532
    %v4534 = vrot.slane %v4520, %v4533
    %v4535 = vcombine.high %v4527, %v4527
    %v4536 = vlaneseq
    %v4537 = vshrl.u32 %v4536, 7
    %v4538 = vsub.s32 0, %v4537
    %v4539 = vrot.slane %v4511, %v4538
    %v4540 = vlaneseq
    %v4541 = vshrl.u32 %v4540, 7
    %v4542 = vsub.s32 0, %v4541
    %v4543 = vrot.slane %v4495, %v4542
    %v4544 = vlaneseq
    %v4545 = vshrl.u32 %v4544, 7
    %v4546 = vsub.s32 0, %v4545
    %v4547 = vrot.slane %v4509, %v4546
    %v4548 = vlaneseq
    %v4549 = vshrl.u32 %v4548, 7
    %v4550 = vsub.s32 0, %v4549
    %v4551 = vrot.slane %v4510, %v4550
    %v4552 = vlaneseq
    %v4553 = vshrl.u32 %v4552, 7
    %v4554 = vsub.s32 0, %v4553
    %v4555 = vrot.slane %v4512, %v4554
    %v4556 = vlaneseq
    %v4557 = vshrl.u32 %v4556, 7
    %v4558 = vsub.s32 0, %v4557
    %v4559 = vrot.slane %v4527, %v4558
    %v4560 = vlaneseq
    %v4561 = vshrl.u32 %v4560, 7
    %v4562 = vsub.s32 0, %v4561
    %v4563 = vrot.slane %v4534, %v4562
    %v4564 = vlaneseq
    %v4565 = vshrl.u32 %v4564, 7
    %v4566 = vsub.s32 0, %v4565
    %v4567 = vrot.slane %v4535, %v4566
    %v4576 = vmul.f32 %v4390, %v4539
    %v4577 = vmul.f32 %v4394, %v4539
    %v4578 = vmul.f32 %v4401, %v4543
    %v4579 = vmul.f32 %v4405, %v4543
    %v4580 = vmul.f32 %v4412, %v4547
    %v4581 = vmul.f32 %v4416, %v4547
    %v4582 = vmul.f32 %v4423, %v4551
    %v4583 = vmul.f32 %v4427, %v4551
    %v4584 = vmul.f32 %v4434, %v4555
    %v4585 = vmul.f32 %v4438, %v4555
    %v4586 = vmul.f32 %v4445, %v4559
    %v4587 = vmul.f32 %v4449, %v4559
    %v4588 = vmul.f32 %v4456, %v4563
    %v4589 = vmul.f32 %v4460, %v4563
    %v4590 = vmul.f32 %v4467, %v4567
    %v4591 = vmul.f32 %v4471, %v4567
    %v4592 = vadd.f32 %v3512, %v4576
    %v4593 = vadd.f32 %v3513, %v4577
    %v4594 = vadd.f32 %v3514, %v4578
    %v4595 = vadd.f32 %v3515, %v4579
    %v4596 = vadd.f32 %v3516, %v4580
    %v4597 = vadd.f32 %v3517, %v4581
    %v4598 = vadd.f32 %v3518, %v4582
    %v4599 = vadd.f32 %v3519, %v4583
    %v4600 = vadd.f32 %v3520, %v4584
    %v4601 = vadd.f32 %v3521, %v4585
    %v4602 = vadd.f32 %v3522, %v4586
    %v4603 = vadd.f32 %v3523, %v4587
    %v4604 = vadd.f32 %v3524, %v4588
    %v4605 = vadd.f32 %v3525, %v4589
    %v4606 = vadd.f32 %v3526, %v4590
    %v4607 = vadd.f32 %v3527, %v4591
    %v4608 = vadd.f32 %v3528, %v4383
    %4609 = vst.msk [vmem:[#allocation2 + $0x18] sm:$0xff] %vm219, %v4379
    %v4611 = vrot.slane %v4379, 4
    %v4612 = vrot.slane %v4379, 5
    %v4613 = vrot.slane %v4379, 6
    %v4614 = vrot.slane %v4379, 7
    %v4615 = vrot.slane %v4379, 1
    %v4616 = vrot.slane %v4379, 2
    %v4617 = vrot.slane %v4379, 3
    %4618 = vrot.lane.b32.xlu0 %v4611, 96
    %v4619 = vpop.permute.xlu0 %4618
    %4620 = vrot.lane.b32.xlu0 %v4612, 96
    %v4621 = vpop.permute.xlu0 %4620
    %4622 = vrot.lane.b32.xlu0 %v4613, 96
    %v4623 = vpop.permute.xlu0 %4622
    %4624 = vrot.lane.b32.xlu0 %v4614, 96
    %v4625 = vpop.permute.xlu0 %4624
    %4626 = vrot.lane.b32.xlu0 %v4379, 96
    %v4627 = vpop.permute.xlu0 %4626
    %4628 = vrot.lane.b32.xlu0 %v4615, 96
    %v4629 = vpop.permute.xlu0 %4628
    %4630 = vrot.lane.b32.xlu0 %v4616, 96
    %v4631 = vpop.permute.xlu0 %4630
    %4632 = vrot.lane.b32.xlu0 %v4617, 96
    %v4633 = vpop.permute.xlu0 %4632
    %v4642 = vadd.f32 %v174, %v4619
    %v4643 = vadd.f32 %v179, %v4621
    %v4644 = vadd.f32 %v184, %v4623
    %v4645 = vadd.f32 %v189, %v4625
    %v4646 = vadd.f32 %v194, %v4627
    %v4647 = vadd.f32 %v199, %v4629
    %v4648 = vadd.f32 %v204, %v4631
    %v4649 = vadd.f32 %v209, %v4633
    %v4650 = vtanh.pop %v4642
    %v4651 = vtanh.pop %v4643
    %v4652 = vtanh.pop %v4644
    %v4653 = vtanh.pop %v4645
    %v4654 = vtanh.pop %v4646
    %v4655 = vtanh.pop %v4647
    %v4656 = vtanh.pop %v4648
    %v4657 = vtanh.pop %v4649
    %v4666 = vrot.slane %v4650, 4
    %v4667 = vrot.slane %v4651, 3
    %v4668 = vsel %vm356, %v4667, %v4666
    %v4669 = vrot.slane %v4652, 2
    %v4670 = vsel %vm359, %v4669, %v4668
    %v4671 = vrot.slane %v4653, 1
    %v4672 = vsel %vm362, %v4671, %v4670
    %v4673 = vsel %vm365, %v4654, %v4672
    %v4674 = vrot.slane %v4655, 7
    %v4675 = vsel %vm368, %v4674, %v4673
    %v4676 = vrot.slane %v4656, 6
    %v4677 = vsel %vm371, %v4676, %v4675
    %v4678 = vrot.slane %v4657, 5
    %v4679 = vsel %vm374, %v4678, %v4677
    %v4680 = vsel %vm219, %v4679, 0
    %4682 = vmatprep.subr.mxu0 0.0
    %4683 = vmatpush1.msra.mxu0 0.0
    %4684 = vmatprep.subr.mxu0 0.0
    %4685 = vmatpush1.msra.mxu0 0.0
    %4686 = vmatprep.subr.mxu0 0.0
    %4687 = vmatpush1.msra.mxu0 0.0
    %4688 = vmatprep.subr.mxu0 0.0
    %4689 = vmatpush1.msra.mxu0 0.0
    %4690 = vmatprep.subr.mxu0 0.0
    %4691 = vmatpush1.msra.mxu0 0.0
    %4692 = vmatprep.subr.mxu0 0.0
    %4693 = vmatpush1.msra.mxu0 0.0
    %4694 = vmatprep.subr.mxu0 0.0
    %4695 = vmatpush1.msra.mxu0 0.0
    %4696 = vmatprep.subr.mxu0 0.0
    %4697 = vmatpush1.msra.mxu0 0.0
    %4698 = vmatprep.subr.mxu0 0.0
    %4699 = vmatpush1.msra.mxu0 0.0
    %4700 = vmatprep.subr.mxu0 0.0
    %4701 = vmatpush1.msra.mxu0 0.0
    %4702 = vmatprep.subr.mxu0 0.0
    %4703 = vmatpush1.msra.mxu0 0.0
    %4704 = vmatprep.subr.mxu0 0.0
    %4705 = vmatpush1.msra.mxu0 0.0
    %4706 = vmatprep.subr.mxu0 0.0
    %4707 = vmatpush1.msra.mxu0 %v60
    %4708 = vmatprep.subr.mxu0 0.0
    %4709 = vmatpush1.msra.mxu0 %v59
    %4710 = vmatprep.subr.mxu0 0.0
    %4711 = vmatpush1.msra.mxu0 %v58
    %4712 = vmatprep.subr.mxu0 0.0
    %4713 = vmatpush1.msra.mxu0 %v57
    %4714 = vmatprep.subr.mxu0 0.0
    %4715 = vmatpush2.msra.mxu0 0.0
    %4716 = vmatprep.subr.mxu0 0.0
    %4717 = vmatpush2.msra.mxu0 0.0
    %4718 = vmatprep.subr.mxu0 0.0
    %4719 = vmatpush2.msra.mxu0 0.0
    %4720 = vmatprep.subr.mxu0 0.0
    %4721 = vmatpush2.msra.mxu0 0.0
    %4722 = vmatprep.subr.mxu0 0.0
    %4723 = vmatpush2.msra.mxu0 0.0
    %4724 = vmatprep.subr.mxu0 0.0
    %4725 = vmatpush2.msra.mxu0 0.0
    %4726 = vmatprep.subr.mxu0 0.0
    %4727 = vmatpush2.msra.mxu0 0.0
    %4728 = vmatprep.subr.mxu0 0.0
    %4729 = vmatpush2.msra.mxu0 0.0
    %4730 = vmatprep.subr.mxu0 0.0
    %4731 = vmatpush2.msra.mxu0 0.0
    %4732 = vmatprep.subr.mxu0 0.0
    %4733 = vmatpush2.msra.mxu0 0.0
    %4734 = vmatprep.subr.mxu0 0.0
    %4735 = vmatpush2.msra.mxu0 0.0
    %4736 = vmatprep.subr.mxu0 0.0
    %4737 = vmatpush2.msra.mxu0 0.0
    %4738 = vmatprep.subr.mxu0 0.0
    %4739 = vmatpush2.msra.mxu0 0.0
    %4740 = vmatprep.subr.mxu0 0.0
    %4741 = vmatpush2.msra.mxu0 0.0
    %4742 = vmatprep.subr.mxu0 0.0
    %4743 = vmatpush2.msra.mxu0 0.0
    %4744 = vmatprep.subr.mxu0 0.0
    %4745 = vmatpush2.msra.mxu0 0.0
    %4746 = vmatprep.mubr.f32.mxu0 0.0
    %4747 = vmatmul.mubr.f32.gmra.mxu0 %v4680
    %v4748 = vpop.f32.mrf.mxu0
    %v4749 = vadd.f32 0.0, %v4748
    %v4750 = vpop.f32.mrf.mxu0
    %4751 = vdwg.mxu0
    %v4752 = vlaneseq
    %v4753 = vshrl.u32 %v4752, 7
    %v4754 = vsub.s32 4, %v4753
    %v4755 = vrot.slane %v4650, %v4754
    %v4756 = vlaneseq
    %v4757 = vshrl.u32 %v4756, 7
    %v4758 = vsub.s32 4, %v4757
    %v4759 = vrot.slane %v4651, %v4758
    %v4760 = vlaneseq
    %v4761 = vshrl.u32 %v4760, 7
    %v4762 = vsub.s32 4, %v4761
    %v4763 = vrot.slane %v4652, %v4762
    %v4764 = vlaneseq
    %v4765 = vshrl.u32 %v4764, 7
    %v4766 = vsub.s32 4, %v4765
    %v4767 = vrot.slane %v4653, %v4766
    %v4768 = vlaneseq
    %v4769 = vshrl.u32 %v4768, 7
    %v4770 = vsub.s32 4, %v4769
    %v4771 = vrot.slane %v4654, %v4770
    %v4772 = vlaneseq
    %v4773 = vshrl.u32 %v4772, 7
    %v4774 = vsub.s32 4, %v4773
    %v4775 = vrot.slane %v4655, %v4774
    %v4776 = vlaneseq
    %v4777 = vshrl.u32 %v4776, 7
    %v4778 = vsub.s32 4, %v4777
    %v4779 = vrot.slane %v4656, %v4778
    %v4780 = vlaneseq
    %v4781 = vshrl.u32 %v4780, 7
    %v4782 = vsub.s32 4, %v4781
    %v4783 = vrot.slane %v4657, %v4782
    %v4784 = vmul.f32 %v4755, %v61
    %v4785 = vmul.f32 %v4755, %v62
    %v4786 = vmul.f32 %v4759, %v61
    %v4787 = vmul.f32 %v4759, %v62
    %v4788 = vmul.f32 %v4763, %v61
    %v4789 = vmul.f32 %v4763, %v62
    %v4790 = vmul.f32 %v4767, %v61
    %v4791 = vmul.f32 %v4767, %v62
    %v4792 = vmul.f32 %v4771, %v61
    %v4793 = vmul.f32 %v4771, %v62
    %v4794 = vmul.f32 %v4775, %v61
    %v4795 = vmul.f32 %v4775, %v62
    %v4796 = vmul.f32 %v4779, %v61
    %v4797 = vmul.f32 %v4779, %v62
    %v4798 = vmul.f32 %v4783, %v61
    %v4799 = vmul.f32 %v4783, %v62
    %v4800 = vsel %vm219, %v4784, 0.0
    %4801 = vadd.xlane.f32.xlu0 %v4800
    %v4802 = vpop.xlane.xlu0 %4801
    %v4803 = vsel %vm499, %v4785, 0.0
    %4804 = vadd.xlane.f32.xlu0 %v4803
    %v4805 = vpop.xlane.xlu0 %4804
    %v4806 = vsel %vm219, %v4786, 0.0
    %4807 = vadd.xlane.f32.xlu0 %v4806
    %v4808 = vpop.xlane.xlu0 %4807
    %v4809 = vsel %vm499, %v4787, 0.0
    %4810 = vadd.xlane.f32.xlu0 %v4809
    %v4811 = vpop.xlane.xlu0 %4810
    %v4812 = vsel %vm219, %v4788, 0.0
    %4813 = vadd.xlane.f32.xlu0 %v4812
    %v4814 = vpop.xlane.xlu0 %4813
    %v4815 = vsel %vm499, %v4789, 0.0
    %4816 = vadd.xlane.f32.xlu0 %v4815
    %v4817 = vpop.xlane.xlu0 %4816
    %v4818 = vsel %vm219, %v4790, 0.0
    %4819 = vadd.xlane.f32.xlu0 %v4818
    %v4820 = vpop.xlane.xlu0 %4819
    %v4821 = vsel %vm499, %v4791, 0.0
    %4822 = vadd.xlane.f32.xlu0 %v4821
    %v4823 = vpop.xlane.xlu0 %4822
    %v4824 = vsel %vm219, %v4792, 0.0
    %4825 = vadd.xlane.f32.xlu0 %v4824
    %v4826 = vpop.xlane.xlu0 %4825
    %v4827 = vsel %vm499, %v4793, 0.0
    %4828 = vadd.xlane.f32.xlu0 %v4827
    %v4829 = vpop.xlane.xlu0 %4828
    %v4830 = vsel %vm219, %v4794, 0.0
    %4831 = vadd.xlane.f32.xlu0 %v4830
    %v4832 = vpop.xlane.xlu0 %4831
    %v4833 = vsel %vm499, %v4795, 0.0
    %4834 = vadd.xlane.f32.xlu0 %v4833
    %v4835 = vpop.xlane.xlu0 %4834
    %v4836 = vsel %vm219, %v4796, 0.0
    %4837 = vadd.xlane.f32.xlu0 %v4836
    %v4838 = vpop.xlane.xlu0 %4837
    %v4839 = vsel %vm499, %v4797, 0.0
    %4840 = vadd.xlane.f32.xlu0 %v4839
    %v4841 = vpop.xlane.xlu0 %4840
    %v4842 = vsel %vm219, %v4798, 0.0
    %4843 = vadd.xlane.f32.xlu0 %v4842
    %v4844 = vpop.xlane.xlu0 %4843
    %v4845 = vsel %vm499, %v4799, 0.0
    %4846 = vadd.xlane.f32.xlu0 %v4845
    %v4847 = vpop.xlane.xlu0 %4846
    %v4848 = vadd.f32 %v4802, %v547
    %v4849 = vadd.f32 %v4805, %v551
    %v4850 = vadd.f32 %v4808, %v547
    %v4851 = vadd.f32 %v4811, %v551
    %v4852 = vadd.f32 %v4814, %v547
    %v4853 = vadd.f32 %v4817, %v551
    %v4854 = vadd.f32 %v4820, %v547
    %v4855 = vadd.f32 %v4823, %v551
    %v4856 = vadd.f32 %v4826, %v547
    %v4857 = vadd.f32 %v4829, %v551
    %v4858 = vadd.f32 %v4832, %v547
    %v4859 = vadd.f32 %v4835, %v551
    %v4860 = vadd.f32 %v4838, %v547
    %v4861 = vadd.f32 %v4841, %v551
    %v4862 = vadd.f32 %v4844, %v547
    %v4863 = vadd.f32 %v4847, %v551
    %4880 = vset.pattern.permute.xlu0 0
    %4881 = vperm.xlu0 %4880, %v4848
    %v4882 = vpop.permute.xlu0 %4881
    %4883 = vset.pattern.permute.xlu0 0
    %4884 = vperm.xlu0 %4883, %v4849
    %v4885 = vpop.permute.xlu0 %4884
    %4886 = vset.pattern.permute.xlu0 0
    %4887 = vperm.xlu0 %4886, %v4850
    %v4888 = vpop.permute.xlu0 %4887
    %4889 = vset.pattern.permute.xlu0 0
    %4890 = vperm.xlu0 %4889, %v4851
    %v4891 = vpop.permute.xlu0 %4890
    %4892 = vset.pattern.permute.xlu0 0
    %4893 = vperm.xlu0 %4892, %v4852
    %v4894 = vpop.permute.xlu0 %4893
    %4895 = vset.pattern.permute.xlu0 0
    %4896 = vperm.xlu0 %4895, %v4853
    %v4897 = vpop.permute.xlu0 %4896
    %4898 = vset.pattern.permute.xlu0 0
    %4899 = vperm.xlu0 %4898, %v4854
    %v4900 = vpop.permute.xlu0 %4899
    %4901 = vset.pattern.permute.xlu0 0
    %4902 = vperm.xlu0 %4901, %v4855
    %v4903 = vpop.permute.xlu0 %4902
    %4904 = vset.pattern.permute.xlu0 0
    %4905 = vperm.xlu0 %4904, %v4856
    %v4906 = vpop.permute.xlu0 %4905
    %4907 = vset.pattern.permute.xlu0 0
    %4908 = vperm.xlu0 %4907, %v4857
    %v4909 = vpop.permute.xlu0 %4908
    %4910 = vset.pattern.permute.xlu0 0
    %4911 = vperm.xlu0 %4910, %v4858
    %v4912 = vpop.permute.xlu0 %4911
    %4913 = vset.pattern.permute.xlu0 0
    %4914 = vperm.xlu0 %4913, %v4859
    %v4915 = vpop.permute.xlu0 %4914
    %4916 = vset.pattern.permute.xlu0 0
    %4917 = vperm.xlu0 %4916, %v4860
    %v4918 = vpop.permute.xlu0 %4917
    %4919 = vset.pattern.permute.xlu0 0
    %4920 = vperm.xlu0 %4919, %v4861
    %v4921 = vpop.permute.xlu0 %4920
    %4922 = vset.pattern.permute.xlu0 0
    %4923 = vperm.xlu0 %4922, %v4862
    %v4924 = vpop.permute.xlu0 %4923
    %4925 = vset.pattern.permute.xlu0 0
    %4926 = vperm.xlu0 %4925, %v4863
    %v4927 = vpop.permute.xlu0 %4926
    %v4928 = vlaneseq
    %v4929 = vshrl.u32 %v4928, 7
    %v4930 = vsub.s32 %v298, %v4929
    %v4931 = vrot.slane %v4882, %v4930
    %v4932 = vlaneseq
    %v4933 = vshrl.u32 %v4932, 7
    %v4934 = vsub.s32 %v638, %v4933
    %v4935 = vrot.slane %v4885, %v4934
    %v4936 = vsel %vm643, %v4935, %v4931
    %v4937 = vlaneseq
    %v4938 = vshrl.u32 %v4937, 7
    %v4939 = vsub.s32 %v298, %v4938
    %v4940 = vrot.slane %v4888, %v4939
    %v4941 = vlaneseq
    %v4942 = vshrl.u32 %v4941, 7
    %v4943 = vsub.s32 %v638, %v4942
    %v4944 = vrot.slane %v4891, %v4943
    %v4945 = vsel %vm643, %v4944, %v4940
    %v4946 = vlaneseq
    %v4947 = vshrl.u32 %v4946, 7
    %v4948 = vsub.s32 %v298, %v4947
    %v4949 = vrot.slane %v4894, %v4948
    %v4950 = vlaneseq
    %v4951 = vshrl.u32 %v4950, 7
    %v4952 = vsub.s32 %v638, %v4951
    %v4953 = vrot.slane %v4897, %v4952
    %v4954 = vsel %vm643, %v4953, %v4949
    %v4955 = vlaneseq
    %v4956 = vshrl.u32 %v4955, 7
    %v4957 = vsub.s32 %v298, %v4956
    %v4958 = vrot.slane %v4900, %v4957
    %v4959 = vlaneseq
    %v4960 = vshrl.u32 %v4959, 7
    %v4961 = vsub.s32 %v638, %v4960
    %v4962 = vrot.slane %v4903, %v4961
    %v4963 = vsel %vm643, %v4962, %v4958
    %v4964 = vlaneseq
    %v4965 = vshrl.u32 %v4964, 7
    %v4966 = vsub.s32 %v298, %v4965
    %v4967 = vrot.slane %v4906, %v4966
    %v4968 = vlaneseq
    %v4969 = vshrl.u32 %v4968, 7
    %v4970 = vsub.s32 %v638, %v4969
    %v4971 = vrot.slane %v4909, %v4970
    %v4972 = vsel %vm643, %v4971, %v4967
    %v4973 = vlaneseq
    %v4974 = vshrl.u32 %v4973, 7
    %v4975 = vsub.s32 %v298, %v4974
    %v4976 = vrot.slane %v4912, %v4975
    %v4977 = vlaneseq
    %v4978 = vshrl.u32 %v4977, 7
    %v4979 = vsub.s32 %v638, %v4978
    %v4980 = vrot.slane %v4915, %v4979
    %v4981 = vsel %vm643, %v4980, %v4976
    %v4982 = vlaneseq
    %v4983 = vshrl.u32 %v4982, 7
    %v4984 = vsub.s32 %v298, %v4983
    %v4985 = vrot.slane %v4918, %v4984
    %v4986 = vlaneseq
    %v4987 = vshrl.u32 %v4986, 7
    %v4988 = vsub.s32 %v638, %v4987
    %v4989 = vrot.slane %v4921, %v4988
    %v4990 = vsel %vm643, %v4989, %v4985
    %v4991 = vlaneseq
    %v4992 = vshrl.u32 %v4991, 7
    %v4993 = vsub.s32 %v298, %v4992
    %v4994 = vrot.slane %v4924, %v4993
    %v4995 = vlaneseq
    %v4996 = vshrl.u32 %v4995, 7
    %v4997 = vsub.s32 %v638, %v4996
    %v4998 = vrot.slane %v4927, %v4997
    %v4999 = vsel %vm643, %v4998, %v4994
    %v5000 = vsel %vm356, %v4945, %v4936
    %v5001 = vsel %vm359, %v4954, %v5000
    %v5002 = vsel %vm362, %v4963, %v5001
    %v5003 = vsel %vm365, %v4972, %v5002
    %v5004 = vsel %vm368, %v4981, %v5003
    %v5005 = vsel %vm371, %v4990, %v5004
    %v5006 = vsel %vm374, %v4999, %v5005
    %v5008 = vsel %vm716, %v5006, -inf
    %5009 = vmax.xlane.f32.xlu0 %v5008
    %v5010 = vpop.xlane.xlu0 %5009
    %v5012 = vlaneseq
    %v5013 = vshrl.u32 %v5012, 7
    %v5014 = vsub.s32 0, %v5013
    %v5015 = vrot.slane %v5010, %v5014
    %v5016 = vlaneseq
    %v5017 = vshrl.u32 %v5016, 7
    %v5018 = vsub.s32 1, %v5017
    %v5019 = vrot.slane %v5010, %v5018
    %v5020 = vlaneseq
    %v5021 = vshrl.u32 %v5020, 7
    %v5022 = vsub.s32 2, %v5021
    %v5023 = vrot.slane %v5010, %v5022
    %v5024 = vlaneseq
    %v5025 = vshrl.u32 %v5024, 7
    %v5026 = vsub.s32 3, %v5025
    %v5027 = vrot.slane %v5010, %v5026
    %v5028 = vlaneseq
    %v5029 = vshrl.u32 %v5028, 7
    %v5030 = vsub.s32 4, %v5029
    %v5031 = vrot.slane %v5010, %v5030
    %v5032 = vlaneseq
    %v5033 = vshrl.u32 %v5032, 7
    %v5034 = vsub.s32 5, %v5033
    %v5035 = vrot.slane %v5010, %v5034
    %v5036 = vlaneseq
    %v5037 = vshrl.u32 %v5036, 7
    %v5038 = vsub.s32 6, %v5037
    %v5039 = vrot.slane %v5010, %v5038
    %v5040 = vlaneseq
    %v5041 = vshrl.u32 %v5040, 7
    %v5042 = vsub.s32 7, %v5041
    %v5043 = vrot.slane %v5010, %v5042
    %vm5052 = vcmp.eq.f32.partialorder %v4848, %v5015
    %vm5053 = vcmp.eq.f32.partialorder %v4849, %v5015
    %vm5054 = vcmp.eq.f32.partialorder %v4850, %v5019
    %vm5055 = vcmp.eq.f32.partialorder %v4851, %v5019
    %vm5056 = vcmp.eq.f32.partialorder %v4852, %v5023
    %vm5057 = vcmp.eq.f32.partialorder %v4853, %v5023
    %vm5058 = vcmp.eq.f32.partialorder %v4854, %v5027
    %vm5059 = vcmp.eq.f32.partialorder %v4855, %v5027
    %vm5060 = vcmp.eq.f32.partialorder %v4856, %v5031
    %vm5061 = vcmp.eq.f32.partialorder %v4857, %v5031
    %vm5062 = vcmp.eq.f32.partialorder %v4858, %v5035
    %vm5063 = vcmp.eq.f32.partialorder %v4859, %v5035
    %vm5064 = vcmp.eq.f32.partialorder %v4860, %v5039
    %vm5065 = vcmp.eq.f32.partialorder %v4861, %v5039
    %vm5066 = vcmp.eq.f32.partialorder %v4862, %v5043
    %vm5067 = vcmp.eq.f32.partialorder %v4863, %v5043
    %v5068 = vsel %vm5052, %v779, 9
    %v5069 = vsel %vm5053, %v783, 9
    %v5070 = vsel %vm5054, %v779, 9
    %v5071 = vsel %vm5055, %v783, 9
    %v5072 = vsel %vm5056, %v779, 9
    %v5073 = vsel %vm5057, %v783, 9
    %v5074 = vsel %vm5058, %v779, 9
    %v5075 = vsel %vm5059, %v783, 9
    %v5076 = vsel %vm5060, %v779, 9
    %v5077 = vsel %vm5061, %v783, 9
    %v5078 = vsel %vm5062, %v779, 9
    %v5079 = vsel %vm5063, %v783, 9
    %v5080 = vsel %vm5064, %v779, 9
    %v5081 = vsel %vm5065, %v783, 9
    %v5082 = vsel %vm5066, %v779, 9
    %v5083 = vsel %vm5067, %v783, 9
    %5084 = vset.pattern.permute.xlu0 0
    %5085 = vperm.xlu0 %5084, %v5068
    %v5086 = vpop.permute.xlu0 %5085
    %5087 = vset.pattern.permute.xlu0 0
    %5088 = vperm.xlu0 %5087, %v5069
    %v5089 = vpop.permute.xlu0 %5088
    %5090 = vset.pattern.permute.xlu0 0
    %5091 = vperm.xlu0 %5090, %v5070
    %v5092 = vpop.permute.xlu0 %5091
    %5093 = vset.pattern.permute.xlu0 0
    %5094 = vperm.xlu0 %5093, %v5071
    %v5095 = vpop.permute.xlu0 %5094
    %5096 = vset.pattern.permute.xlu0 0
    %5097 = vperm.xlu0 %5096, %v5072
    %v5098 = vpop.permute.xlu0 %5097
    %5099 = vset.pattern.permute.xlu0 0
    %5100 = vperm.xlu0 %5099, %v5073
    %v5101 = vpop.permute.xlu0 %5100
    %5102 = vset.pattern.permute.xlu0 0
    %5103 = vperm.xlu0 %5102, %v5074
    %v5104 = vpop.permute.xlu0 %5103
    %5105 = vset.pattern.permute.xlu0 0
    %5106 = vperm.xlu0 %5105, %v5075
    %v5107 = vpop.permute.xlu0 %5106
    %5108 = vset.pattern.permute.xlu0 0
    %5109 = vperm.xlu0 %5108, %v5076
    %v5110 = vpop.permute.xlu0 %5109
    %5111 = vset.pattern.permute.xlu0 0
    %5112 = vperm.xlu0 %5111, %v5077
    %v5113 = vpop.permute.xlu0 %5112
    %5114 = vset.pattern.permute.xlu0 0
    %5115 = vperm.xlu0 %5114, %v5078
    %v5116 = vpop.permute.xlu0 %5115
    %5117 = vset.pattern.permute.xlu0 0
    %5118 = vperm.xlu0 %5117, %v5079
    %v5119 = vpop.permute.xlu0 %5118
    %5120 = vset.pattern.permute.xlu0 0
    %5121 = vperm.xlu0 %5120, %v5080
    %v5122 = vpop.permute.xlu0 %5121
    %5123 = vset.pattern.permute.xlu0 0
    %5124 = vperm.xlu0 %5123, %v5081
    %v5125 = vpop.permute.xlu0 %5124
    %5126 = vset.pattern.permute.xlu0 0
    %5127 = vperm.xlu0 %5126, %v5082
    %v5128 = vpop.permute.xlu0 %5127
    %5129 = vset.pattern.permute.xlu0 0
    %5130 = vperm.xlu0 %5129, %v5083
    %v5131 = vpop.permute.xlu0 %5130
    %v5132 = vlaneseq
    %v5133 = vshrl.u32 %v5132, 7
    %v5134 = vsub.s32 %v298, %v5133
    %v5135 = vrot.slane %v5086, %v5134
    %v5136 = vlaneseq
    %v5137 = vshrl.u32 %v5136, 7
    %v5138 = vsub.s32 %v638, %v5137
    %v5139 = vrot.slane %v5089, %v5138
    %v5140 = vsel %vm643, %v5139, %v5135
    %v5141 = vlaneseq
    %v5142 = vshrl.u32 %v5141, 7
    %v5143 = vsub.s32 %v298, %v5142
    %v5144 = vrot.slane %v5092, %v5143
    %v5145 = vlaneseq
    %v5146 = vshrl.u32 %v5145, 7
    %v5147 = vsub.s32 %v638, %v5146
    %v5148 = vrot.slane %v5095, %v5147
    %v5149 = vsel %vm643, %v5148, %v5144
    %v5150 = vlaneseq
    %v5151 = vshrl.u32 %v5150, 7
    %v5152 = vsub.s32 %v298, %v5151
    %v5153 = vrot.slane %v5098, %v5152
    %v5154 = vlaneseq
    %v5155 = vshrl.u32 %v5154, 7
    %v5156 = vsub.s32 %v638, %v5155
    %v5157 = vrot.slane %v5101, %v5156
    %v5158 = vsel %vm643, %v5157, %v5153
    %v5159 = vlaneseq
    %v5160 = vshrl.u32 %v5159, 7
    %v5161 = vsub.s32 %v298, %v5160
    %v5162 = vrot.slane %v5104, %v5161
    %v5163 = vlaneseq
    %v5164 = vshrl.u32 %v5163, 7
    %v5165 = vsub.s32 %v638, %v5164
    %v5166 = vrot.slane %v5107, %v5165
    %v5167 = vsel %vm643, %v5166, %v5162
    %v5168 = vlaneseq
    %v5169 = vshrl.u32 %v5168, 7
    %v5170 = vsub.s32 %v298, %v5169
    %v5171 = vrot.slane %v5110, %v5170
    %v5172 = vlaneseq
    %v5173 = vshrl.u32 %v5172, 7
    %v5174 = vsub.s32 %v638, %v5173
    %v5175 = vrot.slane %v5113, %v5174
    %v5176 = vsel %vm643, %v5175, %v5171
    %v5177 = vlaneseq
    %v5178 = vshrl.u32 %v5177, 7
    %v5179 = vsub.s32 %v298, %v5178
    %v5180 = vrot.slane %v5116, %v5179
    %v5181 = vlaneseq
    %v5182 = vshrl.u32 %v5181, 7
    %v5183 = vsub.s32 %v638, %v5182
    %v5184 = vrot.slane %v5119, %v5183
    %v5185 = vsel %vm643, %v5184, %v5180
    %v5186 = vlaneseq
    %v5187 = vshrl.u32 %v5186, 7
    %v5188 = vsub.s32 %v298, %v5187
    %v5189 = vrot.slane %v5122, %v5188
    %v5190 = vlaneseq
    %v5191 = vshrl.u32 %v5190, 7
    %v5192 = vsub.s32 %v638, %v5191
    %v5193 = vrot.slane %v5125, %v5192
    %v5194 = vsel %vm643, %v5193, %v5189
    %v5195 = vlaneseq
    %v5196 = vshrl.u32 %v5195, 7
    %v5197 = vsub.s32 %v298, %v5196
    %v5198 = vrot.slane %v5128, %v5197
    %v5199 = vlaneseq
    %v5200 = vshrl.u32 %v5199, 7
    %v5201 = vsub.s32 %v638, %v5200
    %v5202 = vrot.slane %v5131, %v5201
    %v5203 = vsel %vm643, %v5202, %v5198
    %v5204 = vsel %vm356, %v5149, %v5140
    %v5205 = vsel %vm359, %v5158, %v5204
    %v5206 = vsel %vm362, %v5167, %v5205
    %v5207 = vsel %vm365, %v5176, %v5206
    %v5208 = vsel %vm368, %v5185, %v5207
    %v5209 = vsel %vm371, %v5194, %v5208
    %v5210 = vsel %vm374, %v5203, %v5209
    %v5211 = vsel %vm716, %v5210, 2147483647
    %v5212 = vand.u32 %v5211, 65535
    %v5213 = vshra.s32 %v5211, 16
    %v5214 = vcvt.s32.f32 %v5212
    %v5215 = vcvt.s32.f32 %v5213
    %5216 = vmin.xlane.f32.xlu0 %v5215
    %v5217 = vpop.xlane.xlu0 %5216
    %vm5218 = vcmp.eq.f32.partialorder %v5215, %v5217
    %v5219 = vsel %vm5218, %v5214, inf
    %5220 = vmin.xlane.f32.xlu0 %v5219
    %v5221 = vpop.xlane.xlu0 %5220
    %v5222 = vcvt.f32.s32 %v5221
    %v5223 = vcvt.f32.s32 %v5217
    %v5224 = vshll.u32 %v5223, 16
    %v5225 = vadd.s32 %v5224, %v5222
    %vm5226 = vcmp.eq.s32.totalorder %v298, %v5225
    %v5227 = vsel %vm5226, 1, 0
    %v5228 = vcvt.s32.f32 %v5227
    %v5229 = vlaneseq
    %v5230 = vshrl.u32 %v5229, 7
    %v5231 = vsub.s32 0, %v5230
    %v5232 = vrot.slane %v5228, %v5231
    %5234 = vbcast.lane.b32.xlu0 %v5232, 256
    %v5235 = vpop.permute.xlu0 %5234
    %s5237 = sor.u32 256, 8
    %5238 = vbcast.lane.b32.xlu0 %v5232, %s5237
    %v5239 = vpop.permute.xlu0 %5238
    %v5240 = vlaneseq
    %v5241 = vshrl.u32 %v5240, 7
    %v5242 = vsub.s32 1, %v5241
    %v5243 = vrot.slane %v5228, %v5242
    %5245 = vbcast.lane.b32.xlu0 %v5243, 256
    %v5246 = vpop.permute.xlu0 %5245
    %s5248 = sor.u32 256, 8
    %5249 = vbcast.lane.b32.xlu0 %v5243, %s5248
    %v5250 = vpop.permute.xlu0 %5249
    %v5251 = vlaneseq
    %v5252 = vshrl.u32 %v5251, 7
    %v5253 = vsub.s32 2, %v5252
    %v5254 = vrot.slane %v5228, %v5253
    %5256 = vbcast.lane.b32.xlu0 %v5254, 256
    %v5257 = vpop.permute.xlu0 %5256
    %s5259 = sor.u32 256, 8
    %5260 = vbcast.lane.b32.xlu0 %v5254, %s5259
    %v5261 = vpop.permute.xlu0 %5260
    %v5262 = vlaneseq
    %v5263 = vshrl.u32 %v5262, 7
    %v5264 = vsub.s32 3, %v5263
    %v5265 = vrot.slane %v5228, %v5264
    %5267 = vbcast.lane.b32.xlu0 %v5265, 256
    %v5268 = vpop.permute.xlu0 %5267
    %s5270 = sor.u32 256, 8
    %5271 = vbcast.lane.b32.xlu0 %v5265, %s5270
    %v5272 = vpop.permute.xlu0 %5271
    %v5273 = vlaneseq
    %v5274 = vshrl.u32 %v5273, 7
    %v5275 = vsub.s32 4, %v5274
    %v5276 = vrot.slane %v5228, %v5275
    %5278 = vbcast.lane.b32.xlu0 %v5276, 256
    %v5279 = vpop.permute.xlu0 %5278
    %s5281 = sor.u32 256, 8
    %5282 = vbcast.lane.b32.xlu0 %v5276, %s5281
    %v5283 = vpop.permute.xlu0 %5282
    %v5284 = vlaneseq
    %v5285 = vshrl.u32 %v5284, 7
    %v5286 = vsub.s32 5, %v5285
    %v5287 = vrot.slane %v5228, %v5286
    %5289 = vbcast.lane.b32.xlu0 %v5287, 256
    %v5290 = vpop.permute.xlu0 %5289
    %s5292 = sor.u32 256, 8
    %5293 = vbcast.lane.b32.xlu0 %v5287, %s5292
    %v5294 = vpop.permute.xlu0 %5293
    %v5295 = vlaneseq
    %v5296 = vshrl.u32 %v5295, 7
    %v5297 = vsub.s32 6, %v5296
    %v5298 = vrot.slane %v5228, %v5297
    %5300 = vbcast.lane.b32.xlu0 %v5298, 256
    %v5301 = vpop.permute.xlu0 %5300
    %s5303 = sor.u32 256, 8
    %5304 = vbcast.lane.b32.xlu0 %v5298, %s5303
    %v5305 = vpop.permute.xlu0 %5304
    %v5306 = vlaneseq
    %v5307 = vshrl.u32 %v5306, 7
    %v5308 = vsub.s32 7, %v5307
    %v5309 = vrot.slane %v5228, %v5308
    %5311 = vbcast.lane.b32.xlu0 %v5309, 256
    %v5312 = vpop.permute.xlu0 %5311
    %s5314 = sor.u32 256, 8
    %5315 = vbcast.lane.b32.xlu0 %v5309, %s5314
    %v5316 = vpop.permute.xlu0 %5315
    %v5317 = vmul.f32 %v4592, %v5235
    %v5318 = vmul.f32 %v4593, %v5239
    %v5319 = vmul.f32 %v4594, %v5246
    %v5320 = vmul.f32 %v4595, %v5250
    %v5321 = vmul.f32 %v4596, %v5257
    %v5322 = vmul.f32 %v4597, %v5261
    %v5323 = vmul.f32 %v4598, %v5268
    %v5324 = vmul.f32 %v4599, %v5272
    %v5325 = vmul.f32 %v4600, %v5279
    %v5326 = vmul.f32 %v4601, %v5283
    %v5327 = vmul.f32 %v4602, %v5290
    %v5328 = vmul.f32 %v4603, %v5294
    %v5329 = vmul.f32 %v4604, %v5301
    %v5330 = vmul.f32 %v4605, %v5305
    %v5331 = vmul.f32 %v4606, %v5312
    %v5332 = vmul.f32 %v4607, %v5316
    %v5333 = vsel %vm2085, %v5317, 0.0
    %v5334 = vsel %vm2087, %v5318, 0.0
    %v5335 = vadd.f32 %v5333, %v5334
    %v5336 = vrot.slane %v5335, 4
    %v5337 = vadd.f32 %v5335, %v5336
    %v5338 = vrot.slane %v5337, 2
    %v5339 = vadd.f32 %v5337, %v5338
    %v5340 = vrot.slane %v5339, 1
    %v5341 = vadd.f32 %v5339, %v5340
    %v5342 = vsel %vm2085, %v5319, 0.0
    %v5343 = vsel %vm2087, %v5320, 0.0
    %v5344 = vadd.f32 %v5342, %v5343
    %v5345 = vrot.slane %v5344, 4
    %v5346 = vadd.f32 %v5344, %v5345
    %v5347 = vrot.slane %v5346, 2
    %v5348 = vadd.f32 %v5346, %v5347
    %v5349 = vrot.slane %v5348, 1
    %v5350 = vadd.f32 %v5348, %v5349
    %v5351 = vsel %vm2085, %v5321, 0.0
    %v5352 = vsel %vm2087, %v5322, 0.0
    %v5353 = vadd.f32 %v5351, %v5352
    %v5354 = vrot.slane %v5353, 4
    %v5355 = vadd.f32 %v5353, %v5354
    %v5356 = vrot.slane %v5355, 2
    %v5357 = vadd.f32 %v5355, %v5356
    %v5358 = vrot.slane %v5357, 1
    %v5359 = vadd.f32 %v5357, %v5358
    %v5360 = vsel %vm2085, %v5323, 0.0
    %v5361 = vsel %vm2087, %v5324, 0.0
    %v5362 = vadd.f32 %v5360, %v5361
    %v5363 = vrot.slane %v5362, 4
    %v5364 = vadd.f32 %v5362, %v5363
    %v5365 = vrot.slane %v5364, 2
    %v5366 = vadd.f32 %v5364, %v5365
    %v5367 = vrot.slane %v5366, 1
    %v5368 = vadd.f32 %v5366, %v5367
    %v5369 = vsel %vm2085, %v5325, 0.0
    %v5370 = vsel %vm2087, %v5326, 0.0
    %v5371 = vadd.f32 %v5369, %v5370
    %v5372 = vrot.slane %v5371, 4
    %v5373 = vadd.f32 %v5371, %v5372
    %v5374 = vrot.slane %v5373, 2
    %v5375 = vadd.f32 %v5373, %v5374
    %v5376 = vrot.slane %v5375, 1
    %v5377 = vadd.f32 %v5375, %v5376
    %v5378 = vsel %vm2085, %v5327, 0.0
    %v5379 = vsel %vm2087, %v5328, 0.0
    %v5380 = vadd.f32 %v5378, %v5379
    %v5381 = vrot.slane %v5380, 4
    %v5382 = vadd.f32 %v5380, %v5381
    %v5383 = vrot.slane %v5382, 2
    %v5384 = vadd.f32 %v5382, %v5383
    %v5385 = vrot.slane %v5384, 1
    %v5386 = vadd.f32 %v5384, %v5385
    %v5387 = vsel %vm2085, %v5329, 0.0
    %v5388 = vsel %vm2087, %v5330, 0.0
    %v5389 = vadd.f32 %v5387, %v5388
    %v5390 = vrot.slane %v5389, 4
    %v5391 = vadd.f32 %v5389, %v5390
    %v5392 = vrot.slane %v5391, 2
    %v5393 = vadd.f32 %v5391, %v5392
    %v5394 = vrot.slane %v5393, 1
    %v5395 = vadd.f32 %v5393, %v5394
    %v5396 = vsel %vm2085, %v5331, 0.0
    %v5397 = vsel %vm2087, %v5332, 0.0
    %v5398 = vadd.f32 %v5396, %v5397
    %v5399 = vrot.slane %v5398, 4
    %v5400 = vadd.f32 %v5398, %v5399
    %v5401 = vrot.slane %v5400, 2
    %v5402 = vadd.f32 %v5400, %v5401
    %v5403 = vrot.slane %v5402, 1
    %v5404 = vadd.f32 %v5402, %v5403
    %v5405 = vmul.f32 %v4608, %v5228
    %v5406 = vsel %vm716, %v5405, 0.0
    %5407 = vadd.xlane.f32.xlu0 %v5406
    %v5408 = vpop.xlane.xlu0 %5407
    %vm5409 = vcmp.gt.f32.partialorder %v5408, 0.5
    %vm5410 = vcmp.gt.s32.totalorder %v5225, 0
    %vm5411 = vmand %vm5410, %vm5409
    %v5412 = vrot.slane %v4651, 7
    %v5413 = vsel %vm368, %v5412, %v4650
    %v5414 = vrot.slane %v4652, 6
    %v5415 = vsel %vm371, %v5414, %v5413
    %v5416 = vrot.slane %v4653, 5
    %v5417 = vsel %vm374, %v5416, %v5415
    %v5418 = vrot.slane %v4654, 4
    %v5419 = vrot.slane %v4655, 3
    %v5420 = vsel %vm356, %v5419, %v5418
    %v5421 = vrot.slane %v4656, 2
    %v5422 = vsel %vm359, %v5421, %v5420
    %v5423 = vrot.slane %v4657, 1
    %v5424 = vsel %vm362, %v5423, %v5422
    %v5428 = vrot.slane %v4749, 4
    %5429 = vrot.lane.b32.xlu0 %v5428, 32
    %v5430 = vpop.permute.xlu0 %5429
    %v5432 = vsel %vm219, %v5417, %v5430
    %v5433 = vsel %vm219, %v5424, %v5430
    %v5434 = vsel %vm5411, 1, 0
    %vm5435 = vcmp.eq.s32.totalorder %v5434, 1
    %v5444 = vsel %vm356, %v5350, %v5341
    %v5445 = vsel %vm359, %v5359, %v5444
    %v5446 = vsel %vm362, %v5368, %v5445
    %v5447 = vsel %vm365, %v5377, %v5446
    %v5448 = vsel %vm368, %v5386, %v5447
    %v5449 = vsel %vm371, %v5395, %v5448
    %v5450 = vsel %vm374, %v5404, %v5449
    %vm5454 = vcmask 1043456
    %v5455 = vrot.slane %v5432, 4
    %v5456 = vrot.slane %v5433, 4
    %v5457 = vsel %vm5454, %v5455, %v5456
    %v5459 = vsel %vm5435, %v5450, %v5457
    %vm5460 = vmxor %vm5409, 1
    %vm5461 = vmand %vm5410, %vm5460
    %v5462 = vsel %vm5461, 1.0, 0.0
    %v5463 = vmul.f32 %v5228, %v5462
    %v5464 = vlaneseq
    %v5465 = vshrl.u32 %v5464, 7
    %v5466 = vsub.s32 0, %v5465
    %v5467 = vrot.slane %v5463, %v5466
    %5469 = vbcast.lane.b32.xlu0 %v5467, 256
    %v5470 = vpop.permute.xlu0 %5469
    %s5472 = sor.u32 256, 8
    %5473 = vbcast.lane.b32.xlu0 %v5467, %s5472
    %v5474 = vpop.permute.xlu0 %5473
    %v5475 = vlaneseq
    %v5476 = vshrl.u32 %v5475, 7
    %v5477 = vsub.s32 1, %v5476
    %v5478 = vrot.slane %v5463, %v5477
    %5480 = vbcast.lane.b32.xlu0 %v5478, 256
    %v5481 = vpop.permute.xlu0 %5480
    %s5483 = sor.u32 256, 8
    %5484 = vbcast.lane.b32.xlu0 %v5478, %s5483
    %v5485 = vpop.permute.xlu0 %5484
    %v5486 = vlaneseq
    %v5487 = vshrl.u32 %v5486, 7
    %v5488 = vsub.s32 2, %v5487
    %v5489 = vrot.slane %v5463, %v5488
    %5491 = vbcast.lane.b32.xlu0 %v5489, 256
    %v5492 = vpop.permute.xlu0 %5491
    %s5494 = sor.u32 256, 8
    %5495 = vbcast.lane.b32.xlu0 %v5489, %s5494
    %v5496 = vpop.permute.xlu0 %5495
    %v5497 = vlaneseq
    %v5498 = vshrl.u32 %v5497, 7
    %v5499 = vsub.s32 3, %v5498
    %v5500 = vrot.slane %v5463, %v5499
    %5502 = vbcast.lane.b32.xlu0 %v5500, 256
    %v5503 = vpop.permute.xlu0 %5502
    %s5505 = sor.u32 256, 8
    %5506 = vbcast.lane.b32.xlu0 %v5500, %s5505
    %v5507 = vpop.permute.xlu0 %5506
    %v5508 = vlaneseq
    %v5509 = vshrl.u32 %v5508, 7
    %v5510 = vsub.s32 4, %v5509
    %v5511 = vrot.slane %v5463, %v5510
    %5513 = vbcast.lane.b32.xlu0 %v5511, 256
    %v5514 = vpop.permute.xlu0 %5513
    %s5516 = sor.u32 256, 8
    %5517 = vbcast.lane.b32.xlu0 %v5511, %s5516
    %v5518 = vpop.permute.xlu0 %5517
    %v5519 = vlaneseq
    %v5520 = vshrl.u32 %v5519, 7
    %v5521 = vsub.s32 5, %v5520
    %v5522 = vrot.slane %v5463, %v5521
    %5524 = vbcast.lane.b32.xlu0 %v5522, 256
    %v5525 = vpop.permute.xlu0 %5524
    %s5527 = sor.u32 256, 8
    %5528 = vbcast.lane.b32.xlu0 %v5522, %s5527
    %v5529 = vpop.permute.xlu0 %5528
    %v5530 = vlaneseq
    %v5531 = vshrl.u32 %v5530, 7
    %v5532 = vsub.s32 6, %v5531
    %v5533 = vrot.slane %v5463, %v5532
    %5535 = vbcast.lane.b32.xlu0 %v5533, 256
    %v5536 = vpop.permute.xlu0 %5535
    %s5538 = sor.u32 256, 8
    %5539 = vbcast.lane.b32.xlu0 %v5533, %s5538
    %v5540 = vpop.permute.xlu0 %5539
    %v5541 = vlaneseq
    %v5542 = vshrl.u32 %v5541, 7
    %v5543 = vsub.s32 7, %v5542
    %v5544 = vrot.slane %v5463, %v5543
    %5546 = vbcast.lane.b32.xlu0 %v5544, 256
    %v5547 = vpop.permute.xlu0 %5546
    %s5549 = sor.u32 256, 8
    %5550 = vbcast.lane.b32.xlu0 %v5544, %s5549
    %v5551 = vpop.permute.xlu0 %5550
    %v5552 = vcombine.high %v5432, %v5432
    %v5554 = vunpack.c.l.s4 1966171168
    %v5555 = vunpack.c.0.s8 %v5554
    %v5556 = vlaneseq
    %v5557 = vshrl.u32 %v5556, 7
    %v5558 = vsub.s32 %v5555, %v5557
    %v5559 = vrot.slane %v5552, %v5558
    %v5560 = vcombine.high %v5559, %v5559
    %v5562 = vunpack.c.l.s4 1966171168
    %v5563 = vunpack.c.0.s8 %v5562
    %v5564 = vlaneseq
    %v5565 = vshrl.u32 %v5564, 7
    %v5566 = vsub.s32 %v5563, %v5565
    %v5567 = vrot.slane %v5559, %v5566
    %v5569 = vunpack.c.l.s4 1966171168
    %v5570 = vunpack.c.0.s8 %v5569
    %v5571 = vlaneseq
    %v5572 = vshrl.u32 %v5571, 7
    %v5573 = vsub.s32 %v5570, %v5572
    %v5574 = vrot.slane %v5560, %v5573
    %v5575 = vcombine.high %v5567, %v5567
    %v5576 = vcombine.high %v5574, %v5574
    %v5578 = vunpack.c.l.s4 1966171168
    %v5579 = vunpack.c.0.s8 %v5578
    %v5580 = vlaneseq
    %v5581 = vshrl.u32 %v5580, 7
    %v5582 = vsub.s32 %v5579, %v5581
    %v5583 = vrot.slane %v5433, %v5582
    %v5584 = vcombine.high %v5583, %v5583
    %v5586 = vunpack.c.l.s4 1966171168
    %v5587 = vunpack.c.0.s8 %v5586
    %v5588 = vlaneseq
    %v5589 = vshrl.u32 %v5588, 7
    %v5590 = vsub.s32 %v5587, %v5589
    %v5591 = vrot.slane %v5583, %v5590
    %v5593 = vunpack.c.l.s4 1966171168
    %v5594 = vunpack.c.0.s8 %v5593
    %v5595 = vlaneseq
    %v5596 = vshrl.u32 %v5595, 7
    %v5597 = vsub.s32 %v5594, %v5596
    %v5598 = vrot.slane %v5584, %v5597
    %v5599 = vcombine.high %v5591, %v5591
    %v5600 = vcombine.high %v5598, %v5598
    %v5601 = vlaneseq
    %v5602 = vshrl.u32 %v5601, 7
    %v5603 = vsub.s32 0, %v5602
    %v5604 = vrot.slane %v5567, %v5603
    %v5605 = vlaneseq
    %v5606 = vshrl.u32 %v5605, 7
    %v5607 = vsub.s32 0, %v5606
    %v5608 = vrot.slane %v5574, %v5607
    %v5609 = vlaneseq
    %v5610 = vshrl.u32 %v5609, 7
    %v5611 = vsub.s32 0, %v5610
    %v5612 = vrot.slane %v5575, %v5611
    %v5613 = vlaneseq
    %v5614 = vshrl.u32 %v5613, 7
    %v5615 = vsub.s32 0, %v5614
    %v5616 = vrot.slane %v5576, %v5615
    %v5617 = vlaneseq
    %v5618 = vshrl.u32 %v5617, 7
    %v5619 = vsub.s32 0, %v5618
    %v5620 = vrot.slane %v5591, %v5619
    %v5621 = vlaneseq
    %v5622 = vshrl.u32 %v5621, 7
    %v5623 = vsub.s32 0, %v5622
    %v5624 = vrot.slane %v5598, %v5623
    %v5625 = vlaneseq
    %v5626 = vshrl.u32 %v5625, 7
    %v5627 = vsub.s32 0, %v5626
    %v5628 = vrot.slane %v5599, %v5627
    %v5629 = vlaneseq
    %v5630 = vshrl.u32 %v5629, 7
    %v5631 = vsub.s32 0, %v5630
    %v5632 = vrot.slane %v5600, %v5631
    %v5641 = vmul.f32 %v5470, %v5604
    %v5642 = vmul.f32 %v5474, %v5604
    %v5643 = vmul.f32 %v5481, %v5608
    %v5644 = vmul.f32 %v5485, %v5608
    %v5645 = vmul.f32 %v5492, %v5612
    %v5646 = vmul.f32 %v5496, %v5612
    %v5647 = vmul.f32 %v5503, %v5616
    %v5648 = vmul.f32 %v5507, %v5616
    %v5649 = vmul.f32 %v5514, %v5620
    %v5650 = vmul.f32 %v5518, %v5620
    %v5651 = vmul.f32 %v5525, %v5624
    %v5652 = vmul.f32 %v5529, %v5624
    %v5653 = vmul.f32 %v5536, %v5628
    %v5654 = vmul.f32 %v5540, %v5628
    %v5655 = vmul.f32 %v5547, %v5632
    %v5656 = vmul.f32 %v5551, %v5632
    %v5657 = vadd.f32 %v4592, %v5641
    %v5658 = vadd.f32 %v4593, %v5642
    %v5659 = vadd.f32 %v4594, %v5643
    %v5660 = vadd.f32 %v4595, %v5644
    %v5661 = vadd.f32 %v4596, %v5645
    %v5662 = vadd.f32 %v4597, %v5646
    %v5663 = vadd.f32 %v4598, %v5647
    %v5664 = vadd.f32 %v4599, %v5648
    %v5665 = vadd.f32 %v4600, %v5649
    %v5666 = vadd.f32 %v4601, %v5650
    %v5667 = vadd.f32 %v4602, %v5651
    %v5668 = vadd.f32 %v4603, %v5652
    %v5669 = vadd.f32 %v4604, %v5653
    %v5670 = vadd.f32 %v4605, %v5654
    %v5671 = vadd.f32 %v4606, %v5655
    %v5672 = vadd.f32 %v4607, %v5656
    %v5673 = vadd.f32 %v4608, %v5463
    %5674 = vst.msk [vmem:[#allocation2 + $0x20] sm:$0xff] %vm219, %v5459
    %v5676 = vrot.slane %v5459, 3
    %v5677 = vrot.slane %v5459, 4
    %v5678 = vrot.slane %v5459, 5
    %v5679 = vrot.slane %v5459, 6
    %v5680 = vrot.slane %v5459, 7
    %v5681 = vrot.slane %v5459, 1
    %v5682 = vrot.slane %v5459, 2
    %5683 = vrot.lane.b32.xlu0 %v5676, 96
    %v5684 = vpop.permute.xlu0 %5683
    %5685 = vrot.lane.b32.xlu0 %v5677, 96
    %v5686 = vpop.permute.xlu0 %5685
    %5687 = vrot.lane.b32.xlu0 %v5678, 96
    %v5688 = vpop.permute.xlu0 %5687
    %5689 = vrot.lane.b32.xlu0 %v5679, 96
    %v5690 = vpop.permute.xlu0 %5689
    %5691 = vrot.lane.b32.xlu0 %v5680, 96
    %v5692 = vpop.permute.xlu0 %5691
    %5693 = vrot.lane.b32.xlu0 %v5459, 96
    %v5694 = vpop.permute.xlu0 %5693
    %5695 = vrot.lane.b32.xlu0 %v5681, 96
    %v5696 = vpop.permute.xlu0 %5695
    %5697 = vrot.lane.b32.xlu0 %v5682, 96
    %v5698 = vpop.permute.xlu0 %5697
    %v5707 = vadd.f32 %v174, %v5684
    %v5708 = vadd.f32 %v179, %v5686
    %v5709 = vadd.f32 %v184, %v5688
    %v5710 = vadd.f32 %v189, %v5690
    %v5711 = vadd.f32 %v194, %v5692
    %v5712 = vadd.f32 %v199, %v5694
    %v5713 = vadd.f32 %v204, %v5696
    %v5714 = vadd.f32 %v209, %v5698
    %v5715 = vtanh.pop %v5707
    %v5716 = vtanh.pop %v5708
    %v5717 = vtanh.pop %v5709
    %v5718 = vtanh.pop %v5710
    %v5719 = vtanh.pop %v5711
    %v5720 = vtanh.pop %v5712
    %v5721 = vtanh.pop %v5713
    %v5722 = vtanh.pop %v5714
    %v5731 = vrot.slane %v5715, 5
    %v5732 = vrot.slane %v5716, 4
    %v5733 = vsel %vm356, %v5732, %v5731
    %v5734 = vrot.slane %v5717, 3
    %v5735 = vsel %vm359, %v5734, %v5733
    %v5736 = vrot.slane %v5718, 2
    %v5737 = vsel %vm362, %v5736, %v5735
    %v5738 = vrot.slane %v5719, 1
    %v5739 = vsel %vm365, %v5738, %v5737
    %v5740 = vsel %vm368, %v5720, %v5739
    %v5741 = vrot.slane %v5721, 7
    %v5742 = vsel %vm371, %v5741, %v5740
    %v5743 = vrot.slane %v5722, 6
    %v5744 = vsel %vm374, %v5743, %v5742
    %v5745 = vsel %vm219, %v5744, 0
    %5747 = vmatprep.subr.mxu0 0.0
    %5748 = vmatpush1.msra.mxu0 0.0
    %5749 = vmatprep.subr.mxu0 0.0
    %5750 = vmatpush1.msra.mxu0 0.0
    %5751 = vmatprep.subr.mxu0 0.0
    %5752 = vmatpush1.msra.mxu0 0.0
    %5753 = vmatprep.subr.mxu0 0.0
    %5754 = vmatpush1.msra.mxu0 0.0
    %5755 = vmatprep.subr.mxu0 0.0
    %5756 = vmatpush1.msra.mxu0 0.0
    %5757 = vmatprep.subr.mxu0 0.0
    %5758 = vmatpush1.msra.mxu0 0.0
    %5759 = vmatprep.subr.mxu0 0.0
    %5760 = vmatpush1.msra.mxu0 0.0
    %5761 = vmatprep.subr.mxu0 0.0
    %5762 = vmatpush1.msra.mxu0 0.0
    %5763 = vmatprep.subr.mxu0 0.0
    %5764 = vmatpush1.msra.mxu0 0.0
    %5765 = vmatprep.subr.mxu0 0.0
    %5766 = vmatpush1.msra.mxu0 0.0
    %5767 = vmatprep.subr.mxu0 0.0
    %5768 = vmatpush1.msra.mxu0 0.0
    %5769 = vmatprep.subr.mxu0 0.0
    %5770 = vmatpush1.msra.mxu0 0.0
    %5771 = vmatprep.subr.mxu0 0.0
    %5772 = vmatpush1.msra.mxu0 %v60
    %5773 = vmatprep.subr.mxu0 0.0
    %5774 = vmatpush1.msra.mxu0 %v59
    %5775 = vmatprep.subr.mxu0 0.0
    %5776 = vmatpush1.msra.mxu0 %v58
    %5777 = vmatprep.subr.mxu0 0.0
    %5778 = vmatpush1.msra.mxu0 %v57
    %5779 = vmatprep.subr.mxu0 0.0
    %5780 = vmatpush2.msra.mxu0 0.0
    %5781 = vmatprep.subr.mxu0 0.0
    %5782 = vmatpush2.msra.mxu0 0.0
    %5783 = vmatprep.subr.mxu0 0.0
    %5784 = vmatpush2.msra.mxu0 0.0
    %5785 = vmatprep.subr.mxu0 0.0
    %5786 = vmatpush2.msra.mxu0 0.0
    %5787 = vmatprep.subr.mxu0 0.0
    %5788 = vmatpush2.msra.mxu0 0.0
    %5789 = vmatprep.subr.mxu0 0.0
    %5790 = vmatpush2.msra.mxu0 0.0
    %5791 = vmatprep.subr.mxu0 0.0
    %5792 = vmatpush2.msra.mxu0 0.0
    %5793 = vmatprep.subr.mxu0 0.0
    %5794 = vmatpush2.msra.mxu0 0.0
    %5795 = vmatprep.subr.mxu0 0.0
    %5796 = vmatpush2.msra.mxu0 0.0
    %5797 = vmatprep.subr.mxu0 0.0
    %5798 = vmatpush2.msra.mxu0 0.0
    %5799 = vmatprep.subr.mxu0 0.0
    %5800 = vmatpush2.msra.mxu0 0.0
    %5801 = vmatprep.subr.mxu0 0.0
    %5802 = vmatpush2.msra.mxu0 0.0
    %5803 = vmatprep.subr.mxu0 0.0
    %5804 = vmatpush2.msra.mxu0 0.0
    %5805 = vmatprep.subr.mxu0 0.0
    %5806 = vmatpush2.msra.mxu0 0.0
    %5807 = vmatprep.subr.mxu0 0.0
    %5808 = vmatpush2.msra.mxu0 0.0
    %5809 = vmatprep.subr.mxu0 0.0
    %5810 = vmatpush2.msra.mxu0 0.0
    %5811 = vmatprep.mubr.f32.mxu0 0.0
    %5812 = vmatmul.mubr.f32.gmra.mxu0 %v5745
    %v5813 = vpop.f32.mrf.mxu0
    %v5814 = vadd.f32 0.0, %v5813
    %v5815 = vpop.f32.mrf.mxu0
    %5816 = vdwg.mxu0
    %v5817 = vlaneseq
    %v5818 = vshrl.u32 %v5817, 7
    %v5819 = vsub.s32 5, %v5818
    %v5820 = vrot.slane %v5715, %v5819
    %v5821 = vlaneseq
    %v5822 = vshrl.u32 %v5821, 7
    %v5823 = vsub.s32 5, %v5822
    %v5824 = vrot.slane %v5716, %v5823
    %v5825 = vlaneseq
    %v5826 = vshrl.u32 %v5825, 7
    %v5827 = vsub.s32 5, %v5826
    %v5828 = vrot.slane %v5717, %v5827
    %v5829 = vlaneseq
    %v5830 = vshrl.u32 %v5829, 7
    %v5831 = vsub.s32 5, %v5830
    %v5832 = vrot.slane %v5718, %v5831
    %v5833 = vlaneseq
    %v5834 = vshrl.u32 %v5833, 7
    %v5835 = vsub.s32 5, %v5834
    %v5836 = vrot.slane %v5719, %v5835
    %v5837 = vlaneseq
    %v5838 = vshrl.u32 %v5837, 7
    %v5839 = vsub.s32 5, %v5838
    %v5840 = vrot.slane %v5720, %v5839
    %v5841 = vlaneseq
    %v5842 = vshrl.u32 %v5841, 7
    %v5843 = vsub.s32 5, %v5842
    %v5844 = vrot.slane %v5721, %v5843
    %v5845 = vlaneseq
    %v5846 = vshrl.u32 %v5845, 7
    %v5847 = vsub.s32 5, %v5846
    %v5848 = vrot.slane %v5722, %v5847
    %v5849 = vmul.f32 %v5820, %v61
    %v5850 = vmul.f32 %v5820, %v62
    %v5851 = vmul.f32 %v5824, %v61
    %v5852 = vmul.f32 %v5824, %v62
    %v5853 = vmul.f32 %v5828, %v61
    %v5854 = vmul.f32 %v5828, %v62
    %v5855 = vmul.f32 %v5832, %v61
    %v5856 = vmul.f32 %v5832, %v62
    %v5857 = vmul.f32 %v5836, %v61
    %v5858 = vmul.f32 %v5836, %v62
    %v5859 = vmul.f32 %v5840, %v61
    %v5860 = vmul.f32 %v5840, %v62
    %v5861 = vmul.f32 %v5844, %v61
    %v5862 = vmul.f32 %v5844, %v62
    %v5863 = vmul.f32 %v5848, %v61
    %v5864 = vmul.f32 %v5848, %v62
    %v5865 = vsel %vm219, %v5849, 0.0
    %5866 = vadd.xlane.f32.xlu0 %v5865
    %v5867 = vpop.xlane.xlu0 %5866
    %v5868 = vsel %vm499, %v5850, 0.0
    %5869 = vadd.xlane.f32.xlu0 %v5868
    %v5870 = vpop.xlane.xlu0 %5869
    %v5871 = vsel %vm219, %v5851, 0.0
    %5872 = vadd.xlane.f32.xlu0 %v5871
    %v5873 = vpop.xlane.xlu0 %5872
    %v5874 = vsel %vm499, %v5852, 0.0
    %5875 = vadd.xlane.f32.xlu0 %v5874
    %v5876 = vpop.xlane.xlu0 %5875
    %v5877 = vsel %vm219, %v5853, 0.0
    %5878 = vadd.xlane.f32.xlu0 %v5877
    %v5879 = vpop.xlane.xlu0 %5878
    %v5880 = vsel %vm499, %v5854, 0.0
    %5881 = vadd.xlane.f32.xlu0 %v5880
    %v5882 = vpop.xlane.xlu0 %5881
    %v5883 = vsel %vm219, %v5855, 0.0
    %5884 = vadd.xlane.f32.xlu0 %v5883
    %v5885 = vpop.xlane.xlu0 %5884
    %v5886 = vsel %vm499, %v5856, 0.0
    %5887 = vadd.xlane.f32.xlu0 %v5886
    %v5888 = vpop.xlane.xlu0 %5887
    %v5889 = vsel %vm219, %v5857, 0.0
    %5890 = vadd.xlane.f32.xlu0 %v5889
    %v5891 = vpop.xlane.xlu0 %5890
    %v5892 = vsel %vm499, %v5858, 0.0
    %5893 = vadd.xlane.f32.xlu0 %v5892
    %v5894 = vpop.xlane.xlu0 %5893
    %v5895 = vsel %vm219, %v5859, 0.0
    %5896 = vadd.xlane.f32.xlu0 %v5895
    %v5897 = vpop.xlane.xlu0 %5896
    %v5898 = vsel %vm499, %v5860, 0.0
    %5899 = vadd.xlane.f32.xlu0 %v5898
    %v5900 = vpop.xlane.xlu0 %5899
    %v5901 = vsel %vm219, %v5861, 0.0
    %5902 = vadd.xlane.f32.xlu0 %v5901
    %v5903 = vpop.xlane.xlu0 %5902
    %v5904 = vsel %vm499, %v5862, 0.0
    %5905 = vadd.xlane.f32.xlu0 %v5904
    %v5906 = vpop.xlane.xlu0 %5905
    %v5907 = vsel %vm219, %v5863, 0.0
    %5908 = vadd.xlane.f32.xlu0 %v5907
    %v5909 = vpop.xlane.xlu0 %5908
    %v5910 = vsel %vm499, %v5864, 0.0
    %5911 = vadd.xlane.f32.xlu0 %v5910
    %v5912 = vpop.xlane.xlu0 %5911
    %v5913 = vadd.f32 %v5867, %v547
    %v5914 = vadd.f32 %v5870, %v551
    %v5915 = vadd.f32 %v5873, %v547
    %v5916 = vadd.f32 %v5876, %v551
    %v5917 = vadd.f32 %v5879, %v547
    %v5918 = vadd.f32 %v5882, %v551
    %v5919 = vadd.f32 %v5885, %v547
    %v5920 = vadd.f32 %v5888, %v551
    %v5921 = vadd.f32 %v5891, %v547
    %v5922 = vadd.f32 %v5894, %v551
    %v5923 = vadd.f32 %v5897, %v547
    %v5924 = vadd.f32 %v5900, %v551
    %v5925 = vadd.f32 %v5903, %v547
    %v5926 = vadd.f32 %v5906, %v551
    %v5927 = vadd.f32 %v5909, %v547
    %v5928 = vadd.f32 %v5912, %v551
    %5945 = vset.pattern.permute.xlu0 0
    %5946 = vperm.xlu0 %5945, %v5913
    %v5947 = vpop.permute.xlu0 %5946
    %5948 = vset.pattern.permute.xlu0 0
    %5949 = vperm.xlu0 %5948, %v5914
    %v5950 = vpop.permute.xlu0 %5949
    %5951 = vset.pattern.permute.xlu0 0
    %5952 = vperm.xlu0 %5951, %v5915
    %v5953 = vpop.permute.xlu0 %5952
    %5954 = vset.pattern.permute.xlu0 0
    %5955 = vperm.xlu0 %5954, %v5916
    %v5956 = vpop.permute.xlu0 %5955
    %5957 = vset.pattern.permute.xlu0 0
    %5958 = vperm.xlu0 %5957, %v5917
    %v5959 = vpop.permute.xlu0 %5958
    %5960 = vset.pattern.permute.xlu0 0
    %5961 = vperm.xlu0 %5960, %v5918
    %v5962 = vpop.permute.xlu0 %5961
    %5963 = vset.pattern.permute.xlu0 0
    %5964 = vperm.xlu0 %5963, %v5919
    %v5965 = vpop.permute.xlu0 %5964
    %5966 = vset.pattern.permute.xlu0 0
    %5967 = vperm.xlu0 %5966, %v5920
    %v5968 = vpop.permute.xlu0 %5967
    %5969 = vset.pattern.permute.xlu0 0
    %5970 = vperm.xlu0 %5969, %v5921
    %v5971 = vpop.permute.xlu0 %5970
    %5972 = vset.pattern.permute.xlu0 0
    %5973 = vperm.xlu0 %5972, %v5922
    %v5974 = vpop.permute.xlu0 %5973
    %5975 = vset.pattern.permute.xlu0 0
    %5976 = vperm.xlu0 %5975, %v5923
    %v5977 = vpop.permute.xlu0 %5976
    %5978 = vset.pattern.permute.xlu0 0
    %5979 = vperm.xlu0 %5978, %v5924
    %v5980 = vpop.permute.xlu0 %5979
    %5981 = vset.pattern.permute.xlu0 0
    %5982 = vperm.xlu0 %5981, %v5925
    %v5983 = vpop.permute.xlu0 %5982
    %5984 = vset.pattern.permute.xlu0 0
    %5985 = vperm.xlu0 %5984, %v5926
    %v5986 = vpop.permute.xlu0 %5985
    %5987 = vset.pattern.permute.xlu0 0
    %5988 = vperm.xlu0 %5987, %v5927
    %v5989 = vpop.permute.xlu0 %5988
    %5990 = vset.pattern.permute.xlu0 0
    %5991 = vperm.xlu0 %5990, %v5928
    %v5992 = vpop.permute.xlu0 %5991
    %v5993 = vlaneseq
    %v5994 = vshrl.u32 %v5993, 7
    %v5995 = vsub.s32 %v298, %v5994
    %v5996 = vrot.slane %v5947, %v5995
    %v5997 = vlaneseq
    %v5998 = vshrl.u32 %v5997, 7
    %v5999 = vsub.s32 %v638, %v5998
    %v6000 = vrot.slane %v5950, %v5999
    %v6001 = vsel %vm643, %v6000, %v5996
    %v6002 = vlaneseq
    %v6003 = vshrl.u32 %v6002, 7
    %v6004 = vsub.s32 %v298, %v6003
    %v6005 = vrot.slane %v5953, %v6004
    %v6006 = vlaneseq
    %v6007 = vshrl.u32 %v6006, 7
    %v6008 = vsub.s32 %v638, %v6007
    %v6009 = vrot.slane %v5956, %v6008
    %v6010 = vsel %vm643, %v6009, %v6005
    %v6011 = vlaneseq
    %v6012 = vshrl.u32 %v6011, 7
    %v6013 = vsub.s32 %v298, %v6012
    %v6014 = vrot.slane %v5959, %v6013
    %v6015 = vlaneseq
    %v6016 = vshrl.u32 %v6015, 7
    %v6017 = vsub.s32 %v638, %v6016
    %v6018 = vrot.slane %v5962, %v6017
    %v6019 = vsel %vm643, %v6018, %v6014
    %v6020 = vlaneseq
    %v6021 = vshrl.u32 %v6020, 7
    %v6022 = vsub.s32 %v298, %v6021
    %v6023 = vrot.slane %v5965, %v6022
    %v6024 = vlaneseq
    %v6025 = vshrl.u32 %v6024, 7
    %v6026 = vsub.s32 %v638, %v6025
    %v6027 = vrot.slane %v5968, %v6026
    %v6028 = vsel %vm643, %v6027, %v6023
    %v6029 = vlaneseq
    %v6030 = vshrl.u32 %v6029, 7
    %v6031 = vsub.s32 %v298, %v6030
    %v6032 = vrot.slane %v5971, %v6031
    %v6033 = vlaneseq
    %v6034 = vshrl.u32 %v6033, 7
    %v6035 = vsub.s32 %v638, %v6034
    %v6036 = vrot.slane %v5974, %v6035
    %v6037 = vsel %vm643, %v6036, %v6032
    %v6038 = vlaneseq
    %v6039 = vshrl.u32 %v6038, 7
    %v6040 = vsub.s32 %v298, %v6039
    %v6041 = vrot.slane %v5977, %v6040
    %v6042 = vlaneseq
    %v6043 = vshrl.u32 %v6042, 7
    %v6044 = vsub.s32 %v638, %v6043
    %v6045 = vrot.slane %v5980, %v6044
    %v6046 = vsel %vm643, %v6045, %v6041
    %v6047 = vlaneseq
    %v6048 = vshrl.u32 %v6047, 7
    %v6049 = vsub.s32 %v298, %v6048
    %v6050 = vrot.slane %v5983, %v6049
    %v6051 = vlaneseq
    %v6052 = vshrl.u32 %v6051, 7
    %v6053 = vsub.s32 %v638, %v6052
    %v6054 = vrot.slane %v5986, %v6053
    %v6055 = vsel %vm643, %v6054, %v6050
    %v6056 = vlaneseq
    %v6057 = vshrl.u32 %v6056, 7
    %v6058 = vsub.s32 %v298, %v6057
    %v6059 = vrot.slane %v5989, %v6058
    %v6060 = vlaneseq
    %v6061 = vshrl.u32 %v6060, 7
    %v6062 = vsub.s32 %v638, %v6061
    %v6063 = vrot.slane %v5992, %v6062
    %v6064 = vsel %vm643, %v6063, %v6059
    %v6065 = vsel %vm356, %v6010, %v6001
    %v6066 = vsel %vm359, %v6019, %v6065
    %v6067 = vsel %vm362, %v6028, %v6066
    %v6068 = vsel %vm365, %v6037, %v6067
    %v6069 = vsel %vm368, %v6046, %v6068
    %v6070 = vsel %vm371, %v6055, %v6069
    %v6071 = vsel %vm374, %v6064, %v6070
    %v6073 = vsel %vm716, %v6071, -inf
    %6074 = vmax.xlane.f32.xlu0 %v6073
    %v6075 = vpop.xlane.xlu0 %6074
    %v6077 = vlaneseq
    %v6078 = vshrl.u32 %v6077, 7
    %v6079 = vsub.s32 0, %v6078
    %v6080 = vrot.slane %v6075, %v6079
    %v6081 = vlaneseq
    %v6082 = vshrl.u32 %v6081, 7
    %v6083 = vsub.s32 1, %v6082
    %v6084 = vrot.slane %v6075, %v6083
    %v6085 = vlaneseq
    %v6086 = vshrl.u32 %v6085, 7
    %v6087 = vsub.s32 2, %v6086
    %v6088 = vrot.slane %v6075, %v6087
    %v6089 = vlaneseq
    %v6090 = vshrl.u32 %v6089, 7
    %v6091 = vsub.s32 3, %v6090
    %v6092 = vrot.slane %v6075, %v6091
    %v6093 = vlaneseq
    %v6094 = vshrl.u32 %v6093, 7
    %v6095 = vsub.s32 4, %v6094
    %v6096 = vrot.slane %v6075, %v6095
    %v6097 = vlaneseq
    %v6098 = vshrl.u32 %v6097, 7
    %v6099 = vsub.s32 5, %v6098
    %v6100 = vrot.slane %v6075, %v6099
    %v6101 = vlaneseq
    %v6102 = vshrl.u32 %v6101, 7
    %v6103 = vsub.s32 6, %v6102
    %v6104 = vrot.slane %v6075, %v6103
    %v6105 = vlaneseq
    %v6106 = vshrl.u32 %v6105, 7
    %v6107 = vsub.s32 7, %v6106
    %v6108 = vrot.slane %v6075, %v6107
    %vm6117 = vcmp.eq.f32.partialorder %v5913, %v6080
    %vm6118 = vcmp.eq.f32.partialorder %v5914, %v6080
    %vm6119 = vcmp.eq.f32.partialorder %v5915, %v6084
    %vm6120 = vcmp.eq.f32.partialorder %v5916, %v6084
    %vm6121 = vcmp.eq.f32.partialorder %v5917, %v6088
    %vm6122 = vcmp.eq.f32.partialorder %v5918, %v6088
    %vm6123 = vcmp.eq.f32.partialorder %v5919, %v6092
    %vm6124 = vcmp.eq.f32.partialorder %v5920, %v6092
    %vm6125 = vcmp.eq.f32.partialorder %v5921, %v6096
    %vm6126 = vcmp.eq.f32.partialorder %v5922, %v6096
    %vm6127 = vcmp.eq.f32.partialorder %v5923, %v6100
    %vm6128 = vcmp.eq.f32.partialorder %v5924, %v6100
    %vm6129 = vcmp.eq.f32.partialorder %v5925, %v6104
    %vm6130 = vcmp.eq.f32.partialorder %v5926, %v6104
    %vm6131 = vcmp.eq.f32.partialorder %v5927, %v6108
    %vm6132 = vcmp.eq.f32.partialorder %v5928, %v6108
    %v6133 = vsel %vm6117, %v779, 9
    %v6134 = vsel %vm6118, %v783, 9
    %v6135 = vsel %vm6119, %v779, 9
    %v6136 = vsel %vm6120, %v783, 9
    %v6137 = vsel %vm6121, %v779, 9
    %v6138 = vsel %vm6122, %v783, 9
    %v6139 = vsel %vm6123, %v779, 9
    %v6140 = vsel %vm6124, %v783, 9
    %v6141 = vsel %vm6125, %v779, 9
    %v6142 = vsel %vm6126, %v783, 9
    %v6143 = vsel %vm6127, %v779, 9
    %v6144 = vsel %vm6128, %v783, 9
    %v6145 = vsel %vm6129, %v779, 9
    %v6146 = vsel %vm6130, %v783, 9
    %v6147 = vsel %vm6131, %v779, 9
    %v6148 = vsel %vm6132, %v783, 9
    %6149 = vset.pattern.permute.xlu0 0
    %6150 = vperm.xlu0 %6149, %v6133
    %v6151 = vpop.permute.xlu0 %6150
    %6152 = vset.pattern.permute.xlu0 0
    %6153 = vperm.xlu0 %6152, %v6134
    %v6154 = vpop.permute.xlu0 %6153
    %6155 = vset.pattern.permute.xlu0 0
    %6156 = vperm.xlu0 %6155, %v6135
    %v6157 = vpop.permute.xlu0 %6156
    %6158 = vset.pattern.permute.xlu0 0
    %6159 = vperm.xlu0 %6158, %v6136
    %v6160 = vpop.permute.xlu0 %6159
    %6161 = vset.pattern.permute.xlu0 0
    %6162 = vperm.xlu0 %6161, %v6137
    %v6163 = vpop.permute.xlu0 %6162
    %6164 = vset.pattern.permute.xlu0 0
    %6165 = vperm.xlu0 %6164, %v6138
    %v6166 = vpop.permute.xlu0 %6165
    %6167 = vset.pattern.permute.xlu0 0
    %6168 = vperm.xlu0 %6167, %v6139
    %v6169 = vpop.permute.xlu0 %6168
    %6170 = vset.pattern.permute.xlu0 0
    %6171 = vperm.xlu0 %6170, %v6140
    %v6172 = vpop.permute.xlu0 %6171
    %6173 = vset.pattern.permute.xlu0 0
    %6174 = vperm.xlu0 %6173, %v6141
    %v6175 = vpop.permute.xlu0 %6174
    %6176 = vset.pattern.permute.xlu0 0
    %6177 = vperm.xlu0 %6176, %v6142
    %v6178 = vpop.permute.xlu0 %6177
    %6179 = vset.pattern.permute.xlu0 0
    %6180 = vperm.xlu0 %6179, %v6143
    %v6181 = vpop.permute.xlu0 %6180
    %6182 = vset.pattern.permute.xlu0 0
    %6183 = vperm.xlu0 %6182, %v6144
    %v6184 = vpop.permute.xlu0 %6183
    %6185 = vset.pattern.permute.xlu0 0
    %6186 = vperm.xlu0 %6185, %v6145
    %v6187 = vpop.permute.xlu0 %6186
    %6188 = vset.pattern.permute.xlu0 0
    %6189 = vperm.xlu0 %6188, %v6146
    %v6190 = vpop.permute.xlu0 %6189
    %6191 = vset.pattern.permute.xlu0 0
    %6192 = vperm.xlu0 %6191, %v6147
    %v6193 = vpop.permute.xlu0 %6192
    %6194 = vset.pattern.permute.xlu0 0
    %6195 = vperm.xlu0 %6194, %v6148
    %v6196 = vpop.permute.xlu0 %6195
    %v6197 = vlaneseq
    %v6198 = vshrl.u32 %v6197, 7
    %v6199 = vsub.s32 %v298, %v6198
    %v6200 = vrot.slane %v6151, %v6199
    %v6201 = vlaneseq
    %v6202 = vshrl.u32 %v6201, 7
    %v6203 = vsub.s32 %v638, %v6202
    %v6204 = vrot.slane %v6154, %v6203
    %v6205 = vsel %vm643, %v6204, %v6200
    %v6206 = vlaneseq
    %v6207 = vshrl.u32 %v6206, 7
    %v6208 = vsub.s32 %v298, %v6207
    %v6209 = vrot.slane %v6157, %v6208
    %v6210 = vlaneseq
    %v6211 = vshrl.u32 %v6210, 7
    %v6212 = vsub.s32 %v638, %v6211
    %v6213 = vrot.slane %v6160, %v6212
    %v6214 = vsel %vm643, %v6213, %v6209
    %v6215 = vlaneseq
    %v6216 = vshrl.u32 %v6215, 7
    %v6217 = vsub.s32 %v298, %v6216
    %v6218 = vrot.slane %v6163, %v6217
    %v6219 = vlaneseq
    %v6220 = vshrl.u32 %v6219, 7
    %v6221 = vsub.s32 %v638, %v6220
    %v6222 = vrot.slane %v6166, %v6221
    %v6223 = vsel %vm643, %v6222, %v6218
    %v6224 = vlaneseq
    %v6225 = vshrl.u32 %v6224, 7
    %v6226 = vsub.s32 %v298, %v6225
    %v6227 = vrot.slane %v6169, %v6226
    %v6228 = vlaneseq
    %v6229 = vshrl.u32 %v6228, 7
    %v6230 = vsub.s32 %v638, %v6229
    %v6231 = vrot.slane %v6172, %v6230
    %v6232 = vsel %vm643, %v6231, %v6227
    %v6233 = vlaneseq
    %v6234 = vshrl.u32 %v6233, 7
    %v6235 = vsub.s32 %v298, %v6234
    %v6236 = vrot.slane %v6175, %v6235
    %v6237 = vlaneseq
    %v6238 = vshrl.u32 %v6237, 7
    %v6239 = vsub.s32 %v638, %v6238
    %v6240 = vrot.slane %v6178, %v6239
    %v6241 = vsel %vm643, %v6240, %v6236
    %v6242 = vlaneseq
    %v6243 = vshrl.u32 %v6242, 7
    %v6244 = vsub.s32 %v298, %v6243
    %v6245 = vrot.slane %v6181, %v6244
    %v6246 = vlaneseq
    %v6247 = vshrl.u32 %v6246, 7
    %v6248 = vsub.s32 %v638, %v6247
    %v6249 = vrot.slane %v6184, %v6248
    %v6250 = vsel %vm643, %v6249, %v6245
    %v6251 = vlaneseq
    %v6252 = vshrl.u32 %v6251, 7
    %v6253 = vsub.s32 %v298, %v6252
    %v6254 = vrot.slane %v6187, %v6253
    %v6255 = vlaneseq
    %v6256 = vshrl.u32 %v6255, 7
    %v6257 = vsub.s32 %v638, %v6256
    %v6258 = vrot.slane %v6190, %v6257
    %v6259 = vsel %vm643, %v6258, %v6254
    %v6260 = vlaneseq
    %v6261 = vshrl.u32 %v6260, 7
    %v6262 = vsub.s32 %v298, %v6261
    %v6263 = vrot.slane %v6193, %v6262
    %v6264 = vlaneseq
    %v6265 = vshrl.u32 %v6264, 7
    %v6266 = vsub.s32 %v638, %v6265
    %v6267 = vrot.slane %v6196, %v6266
    %v6268 = vsel %vm643, %v6267, %v6263
    %v6269 = vsel %vm356, %v6214, %v6205
    %v6270 = vsel %vm359, %v6223, %v6269
    %v6271 = vsel %vm362, %v6232, %v6270
    %v6272 = vsel %vm365, %v6241, %v6271
    %v6273 = vsel %vm368, %v6250, %v6272
    %v6274 = vsel %vm371, %v6259, %v6273
    %v6275 = vsel %vm374, %v6268, %v6274
    %v6276 = vsel %vm716, %v6275, 2147483647
    %v6277 = vand.u32 %v6276, 65535
    %v6278 = vshra.s32 %v6276, 16
    %v6279 = vcvt.s32.f32 %v6277
    %v6280 = vcvt.s32.f32 %v6278
    %6281 = vmin.xlane.f32.xlu0 %v6280
    %v6282 = vpop.xlane.xlu0 %6281
    %vm6283 = vcmp.eq.f32.partialorder %v6280, %v6282
    %v6284 = vsel %vm6283, %v6279, inf
    %6285 = vmin.xlane.f32.xlu0 %v6284
    %v6286 = vpop.xlane.xlu0 %6285
    %v6287 = vcvt.f32.s32 %v6286
    %v6288 = vcvt.f32.s32 %v6282
    %v6289 = vshll.u32 %v6288, 16
    %v6290 = vadd.s32 %v6289, %v6287
    %vm6291 = vcmp.eq.s32.totalorder %v298, %v6290
    %v6292 = vsel %vm6291, 1, 0
    %v6293 = vcvt.s32.f32 %v6292
    %v6294 = vlaneseq
    %v6295 = vshrl.u32 %v6294, 7
    %v6296 = vsub.s32 0, %v6295
    %v6297 = vrot.slane %v6293, %v6296
    %6299 = vbcast.lane.b32.xlu0 %v6297, 256
    %v6300 = vpop.permute.xlu0 %6299
    %s6302 = sor.u32 256, 8
    %6303 = vbcast.lane.b32.xlu0 %v6297, %s6302
    %v6304 = vpop.permute.xlu0 %6303
    %v6305 = vlaneseq
    %v6306 = vshrl.u32 %v6305, 7
    %v6307 = vsub.s32 1, %v6306
    %v6308 = vrot.slane %v6293, %v6307
    %6310 = vbcast.lane.b32.xlu0 %v6308, 256
    %v6311 = vpop.permute.xlu0 %6310
    %s6313 = sor.u32 256, 8
    %6314 = vbcast.lane.b32.xlu0 %v6308, %s6313
    %v6315 = vpop.permute.xlu0 %6314
    %v6316 = vlaneseq
    %v6317 = vshrl.u32 %v6316, 7
    %v6318 = vsub.s32 2, %v6317
    %v6319 = vrot.slane %v6293, %v6318
    %6321 = vbcast.lane.b32.xlu0 %v6319, 256
    %v6322 = vpop.permute.xlu0 %6321
    %s6324 = sor.u32 256, 8
    %6325 = vbcast.lane.b32.xlu0 %v6319, %s6324
    %v6326 = vpop.permute.xlu0 %6325
    %v6327 = vlaneseq
    %v6328 = vshrl.u32 %v6327, 7
    %v6329 = vsub.s32 3, %v6328
    %v6330 = vrot.slane %v6293, %v6329
    %6332 = vbcast.lane.b32.xlu0 %v6330, 256
    %v6333 = vpop.permute.xlu0 %6332
    %s6335 = sor.u32 256, 8
    %6336 = vbcast.lane.b32.xlu0 %v6330, %s6335
    %v6337 = vpop.permute.xlu0 %6336
    %v6338 = vlaneseq
    %v6339 = vshrl.u32 %v6338, 7
    %v6340 = vsub.s32 4, %v6339
    %v6341 = vrot.slane %v6293, %v6340
    %6343 = vbcast.lane.b32.xlu0 %v6341, 256
    %v6344 = vpop.permute.xlu0 %6343
    %s6346 = sor.u32 256, 8
    %6347 = vbcast.lane.b32.xlu0 %v6341, %s6346
    %v6348 = vpop.permute.xlu0 %6347
    %v6349 = vlaneseq
    %v6350 = vshrl.u32 %v6349, 7
    %v6351 = vsub.s32 5, %v6350
    %v6352 = vrot.slane %v6293, %v6351
    %6354 = vbcast.lane.b32.xlu0 %v6352, 256
    %v6355 = vpop.permute.xlu0 %6354
    %s6357 = sor.u32 256, 8
    %6358 = vbcast.lane.b32.xlu0 %v6352, %s6357
    %v6359 = vpop.permute.xlu0 %6358
    %v6360 = vlaneseq
    %v6361 = vshrl.u32 %v6360, 7
    %v6362 = vsub.s32 6, %v6361
    %v6363 = vrot.slane %v6293, %v6362
    %6365 = vbcast.lane.b32.xlu0 %v6363, 256
    %v6366 = vpop.permute.xlu0 %6365
    %s6368 = sor.u32 256, 8
    %6369 = vbcast.lane.b32.xlu0 %v6363, %s6368
    %v6370 = vpop.permute.xlu0 %6369
    %v6371 = vlaneseq
    %v6372 = vshrl.u32 %v6371, 7
    %v6373 = vsub.s32 7, %v6372
    %v6374 = vrot.slane %v6293, %v6373
    %6376 = vbcast.lane.b32.xlu0 %v6374, 256
    %v6377 = vpop.permute.xlu0 %6376
    %s6379 = sor.u32 256, 8
    %6380 = vbcast.lane.b32.xlu0 %v6374, %s6379
    %v6381 = vpop.permute.xlu0 %6380
    %v6382 = vmul.f32 %v5657, %v6300
    %v6383 = vmul.f32 %v5658, %v6304
    %v6384 = vmul.f32 %v5659, %v6311
    %v6385 = vmul.f32 %v5660, %v6315
    %v6386 = vmul.f32 %v5661, %v6322
    %v6387 = vmul.f32 %v5662, %v6326
    %v6388 = vmul.f32 %v5663, %v6333
    %v6389 = vmul.f32 %v5664, %v6337
    %v6390 = vmul.f32 %v5665, %v6344
    %v6391 = vmul.f32 %v5666, %v6348
    %v6392 = vmul.f32 %v5667, %v6355
    %v6393 = vmul.f32 %v5668, %v6359
    %v6394 = vmul.f32 %v5669, %v6366
    %v6395 = vmul.f32 %v5670, %v6370
    %v6396 = vmul.f32 %v5671, %v6377
    %v6397 = vmul.f32 %v5672, %v6381
    %v6398 = vsel %vm2085, %v6382, 0.0
    %v6399 = vsel %vm2087, %v6383, 0.0
    %v6400 = vadd.f32 %v6398, %v6399
    %v6401 = vrot.slane %v6400, 4
    %v6402 = vadd.f32 %v6400, %v6401
    %v6403 = vrot.slane %v6402, 2
    %v6404 = vadd.f32 %v6402, %v6403
    %v6405 = vrot.slane %v6404, 1
    %v6406 = vadd.f32 %v6404, %v6405
    %v6407 = vsel %vm2085, %v6384, 0.0
    %v6408 = vsel %vm2087, %v6385, 0.0
    %v6409 = vadd.f32 %v6407, %v6408
    %v6410 = vrot.slane %v6409, 4
    %v6411 = vadd.f32 %v6409, %v6410
    %v6412 = vrot.slane %v6411, 2
    %v6413 = vadd.f32 %v6411, %v6412
    %v6414 = vrot.slane %v6413, 1
    %v6415 = vadd.f32 %v6413, %v6414
    %v6416 = vsel %vm2085, %v6386, 0.0
    %v6417 = vsel %vm2087, %v6387, 0.0
    %v6418 = vadd.f32 %v6416, %v6417
    %v6419 = vrot.slane %v6418, 4
    %v6420 = vadd.f32 %v6418, %v6419
    %v6421 = vrot.slane %v6420, 2
    %v6422 = vadd.f32 %v6420, %v6421
    %v6423 = vrot.slane %v6422, 1
    %v6424 = vadd.f32 %v6422, %v6423
    %v6425 = vsel %vm2085, %v6388, 0.0
    %v6426 = vsel %vm2087, %v6389, 0.0
    %v6427 = vadd.f32 %v6425, %v6426
    %v6428 = vrot.slane %v6427, 4
    %v6429 = vadd.f32 %v6427, %v6428
    %v6430 = vrot.slane %v6429, 2
    %v6431 = vadd.f32 %v6429, %v6430
    %v6432 = vrot.slane %v6431, 1
    %v6433 = vadd.f32 %v6431, %v6432
    %v6434 = vsel %vm2085, %v6390, 0.0
    %v6435 = vsel %vm2087, %v6391, 0.0
    %v6436 = vadd.f32 %v6434, %v6435
    %v6437 = vrot.slane %v6436, 4
    %v6438 = vadd.f32 %v6436, %v6437
    %v6439 = vrot.slane %v6438, 2
    %v6440 = vadd.f32 %v6438, %v6439
    %v6441 = vrot.slane %v6440, 1
    %v6442 = vadd.f32 %v6440, %v6441
    %v6443 = vsel %vm2085, %v6392, 0.0
    %v6444 = vsel %vm2087, %v6393, 0.0
    %v6445 = vadd.f32 %v6443, %v6444
    %v6446 = vrot.slane %v6445, 4
    %v6447 = vadd.f32 %v6445, %v6446
    %v6448 = vrot.slane %v6447, 2
    %v6449 = vadd.f32 %v6447, %v6448
    %v6450 = vrot.slane %v6449, 1
    %v6451 = vadd.f32 %v6449, %v6450
    %v6452 = vsel %vm2085, %v6394, 0.0
    %v6453 = vsel %vm2087, %v6395, 0.0
    %v6454 = vadd.f32 %v6452, %v6453
    %v6455 = vrot.slane %v6454, 4
    %v6456 = vadd.f32 %v6454, %v6455
    %v6457 = vrot.slane %v6456, 2
    %v6458 = vadd.f32 %v6456, %v6457
    %v6459 = vrot.slane %v6458, 1
    %v6460 = vadd.f32 %v6458, %v6459
    %v6461 = vsel %vm2085, %v6396, 0.0
    %v6462 = vsel %vm2087, %v6397, 0.0
    %v6463 = vadd.f32 %v6461, %v6462
    %v6464 = vrot.slane %v6463, 4
    %v6465 = vadd.f32 %v6463, %v6464
    %v6466 = vrot.slane %v6465, 2
    %v6467 = vadd.f32 %v6465, %v6466
    %v6468 = vrot.slane %v6467, 1
    %v6469 = vadd.f32 %v6467, %v6468
    %v6470 = vmul.f32 %v5673, %v6293
    %v6471 = vsel %vm716, %v6470, 0.0
    %6472 = vadd.xlane.f32.xlu0 %v6471
    %v6473 = vpop.xlane.xlu0 %6472
    %vm6474 = vcmp.gt.f32.partialorder %v6473, 0.5
    %vm6475 = vcmp.gt.s32.totalorder %v6290, 0
    %vm6476 = vmand %vm6475, %vm6474
    %v6477 = vrot.slane %v5716, 7
    %v6478 = vsel %vm371, %v6477, %v5715
    %v6479 = vrot.slane %v5717, 6
    %v6480 = vsel %vm374, %v6479, %v6478
    %v6481 = vrot.slane %v5718, 5
    %v6482 = vrot.slane %v5719, 4
    %v6483 = vsel %vm356, %v6482, %v6481
    %v6484 = vrot.slane %v5720, 3
    %v6485 = vsel %vm359, %v6484, %v6483
    %v6486 = vrot.slane %v5721, 2
    %v6487 = vsel %vm362, %v6486, %v6485
    %v6488 = vrot.slane %v5722, 1
    %v6489 = vsel %vm365, %v6488, %v6487
    %v6493 = vrot.slane %v5814, 3
    %6494 = vrot.lane.b32.xlu0 %v6493, 32
    %v6495 = vpop.permute.xlu0 %6494
    %v6497 = vsel %vm219, %v6480, %v6495
    %v6498 = vsel %vm219, %v6489, %v6495
    %v6499 = vsel %vm6476, 1, 0
    %vm6500 = vcmp.eq.s32.totalorder %v6499, 1
    %v6509 = vsel %vm356, %v6415, %v6406
    %v6510 = vsel %vm359, %v6424, %v6509
    %v6511 = vsel %vm362, %v6433, %v6510
    %v6512 = vsel %vm365, %v6442, %v6511
    %v6513 = vsel %vm368, %v6451, %v6512
    %v6514 = vsel %vm371, %v6460, %v6513
    %v6515 = vsel %vm374, %v6469, %v6514
    %vm6519 = vcmask 1042432
    %v6520 = vrot.slane %v6497, 5
    %v6521 = vrot.slane %v6498, 5
    %v6522 = vsel %vm6519, %v6520, %v6521
    %v6524 = vsel %vm6500, %v6515, %v6522
    %vm6525 = vmxor %vm6474, 1
    %vm6526 = vmand %vm6475, %vm6525
    %v6527 = vsel %vm6526, 1.0, 0.0
    %v6528 = vmul.f32 %v6293, %v6527
    %v6529 = vlaneseq
    %v6530 = vshrl.u32 %v6529, 7
    %v6531 = vsub.s32 0, %v6530
    %v6532 = vrot.slane %v6528, %v6531
    %6534 = vbcast.lane.b32.xlu0 %v6532, 256
    %v6535 = vpop.permute.xlu0 %6534
    %s6537 = sor.u32 256, 8
    %6538 = vbcast.lane.b32.xlu0 %v6532, %s6537
    %v6539 = vpop.permute.xlu0 %6538
    %v6540 = vlaneseq
    %v6541 = vshrl.u32 %v6540, 7
    %v6542 = vsub.s32 1, %v6541
    %v6543 = vrot.slane %v6528, %v6542
    %6545 = vbcast.lane.b32.xlu0 %v6543, 256
    %v6546 = vpop.permute.xlu0 %6545
    %s6548 = sor.u32 256, 8
    %6549 = vbcast.lane.b32.xlu0 %v6543, %s6548
    %v6550 = vpop.permute.xlu0 %6549
    %v6551 = vlaneseq
    %v6552 = vshrl.u32 %v6551, 7
    %v6553 = vsub.s32 2, %v6552
    %v6554 = vrot.slane %v6528, %v6553
    %6556 = vbcast.lane.b32.xlu0 %v6554, 256
    %v6557 = vpop.permute.xlu0 %6556
    %s6559 = sor.u32 256, 8
    %6560 = vbcast.lane.b32.xlu0 %v6554, %s6559
    %v6561 = vpop.permute.xlu0 %6560
    %v6562 = vlaneseq
    %v6563 = vshrl.u32 %v6562, 7
    %v6564 = vsub.s32 3, %v6563
    %v6565 = vrot.slane %v6528, %v6564
    %6567 = vbcast.lane.b32.xlu0 %v6565, 256
    %v6568 = vpop.permute.xlu0 %6567
    %s6570 = sor.u32 256, 8
    %6571 = vbcast.lane.b32.xlu0 %v6565, %s6570
    %v6572 = vpop.permute.xlu0 %6571
    %v6573 = vlaneseq
    %v6574 = vshrl.u32 %v6573, 7
    %v6575 = vsub.s32 4, %v6574
    %v6576 = vrot.slane %v6528, %v6575
    %6578 = vbcast.lane.b32.xlu0 %v6576, 256
    %v6579 = vpop.permute.xlu0 %6578
    %s6581 = sor.u32 256, 8
    %6582 = vbcast.lane.b32.xlu0 %v6576, %s6581
    %v6583 = vpop.permute.xlu0 %6582
    %v6584 = vlaneseq
    %v6585 = vshrl.u32 %v6584, 7
    %v6586 = vsub.s32 5, %v6585
    %v6587 = vrot.slane %v6528, %v6586
    %6589 = vbcast.lane.b32.xlu0 %v6587, 256
    %v6590 = vpop.permute.xlu0 %6589
    %s6592 = sor.u32 256, 8
    %6593 = vbcast.lane.b32.xlu0 %v6587, %s6592
    %v6594 = vpop.permute.xlu0 %6593
    %v6595 = vlaneseq
    %v6596 = vshrl.u32 %v6595, 7
    %v6597 = vsub.s32 6, %v6596
    %v6598 = vrot.slane %v6528, %v6597
    %6600 = vbcast.lane.b32.xlu0 %v6598, 256
    %v6601 = vpop.permute.xlu0 %6600
    %s6603 = sor.u32 256, 8
    %6604 = vbcast.lane.b32.xlu0 %v6598, %s6603
    %v6605 = vpop.permute.xlu0 %6604
    %v6606 = vlaneseq
    %v6607 = vshrl.u32 %v6606, 7
    %v6608 = vsub.s32 7, %v6607
    %v6609 = vrot.slane %v6528, %v6608
    %6611 = vbcast.lane.b32.xlu0 %v6609, 256
    %v6612 = vpop.permute.xlu0 %6611
    %s6614 = sor.u32 256, 8
    %6615 = vbcast.lane.b32.xlu0 %v6609, %s6614
    %v6616 = vpop.permute.xlu0 %6615
    %v6617 = vcombine.high %v6497, %v6497
    %v6619 = vunpack.c.l.s4 1966171168
    %v6620 = vunpack.c.0.s8 %v6619
    %v6621 = vlaneseq
    %v6622 = vshrl.u32 %v6621, 7
    %v6623 = vsub.s32 %v6620, %v6622
    %v6624 = vrot.slane %v6617, %v6623
    %v6625 = vcombine.high %v6624, %v6624
    %v6627 = vunpack.c.l.s4 1966171168
    %v6628 = vunpack.c.0.s8 %v6627
    %v6629 = vlaneseq
    %v6630 = vshrl.u32 %v6629, 7
    %v6631 = vsub.s32 %v6628, %v6630
    %v6632 = vrot.slane %v6624, %v6631
    %v6634 = vunpack.c.l.s4 1966171168
    %v6635 = vunpack.c.0.s8 %v6634
    %v6636 = vlaneseq
    %v6637 = vshrl.u32 %v6636, 7
    %v6638 = vsub.s32 %v6635, %v6637
    %v6639 = vrot.slane %v6625, %v6638
    %v6640 = vcombine.high %v6632, %v6632
    %v6641 = vcombine.high %v6639, %v6639
    %v6642 = vcombine.high %v6498, %v6498
    %v6644 = vunpack.c.l.s4 1966171168
    %v6645 = vunpack.c.0.s8 %v6644
    %v6646 = vlaneseq
    %v6647 = vshrl.u32 %v6646, 7
    %v6648 = vsub.s32 %v6645, %v6647
    %v6649 = vrot.slane %v6498, %v6648
    %v6651 = vunpack.c.l.s4 1966171168
    %v6652 = vunpack.c.0.s8 %v6651
    %v6653 = vlaneseq
    %v6654 = vshrl.u32 %v6653, 7
    %v6655 = vsub.s32 %v6652, %v6654
    %v6656 = vrot.slane %v6642, %v6655
    %v6657 = vcombine.high %v6649, %v6649
    %v6659 = vunpack.c.l.s4 1966171168
    %v6660 = vunpack.c.0.s8 %v6659
    %v6661 = vlaneseq
    %v6662 = vshrl.u32 %v6661, 7
    %v6663 = vsub.s32 %v6660, %v6662
    %v6664 = vrot.slane %v6649, %v6663
    %v6666 = vunpack.c.l.s4 1966171168
    %v6667 = vunpack.c.0.s8 %v6666
    %v6668 = vlaneseq
    %v6669 = vshrl.u32 %v6668, 7
    %v6670 = vsub.s32 %v6667, %v6669
    %v6671 = vrot.slane %v6656, %v6670
    %v6673 = vunpack.c.l.s4 1966171168
    %v6674 = vunpack.c.0.s8 %v6673
    %v6675 = vlaneseq
    %v6676 = vshrl.u32 %v6675, 7
    %v6677 = vsub.s32 %v6674, %v6676
    %v6678 = vrot.slane %v6657, %v6677
    %v6679 = vcombine.high %v6664, %v6664
    %v6680 = vcombine.high %v6678, %v6678
    %v6681 = vlaneseq
    %v6682 = vshrl.u32 %v6681, 7
    %v6683 = vsub.s32 0, %v6682
    %v6684 = vrot.slane %v6639, %v6683
    %v6685 = vlaneseq
    %v6686 = vshrl.u32 %v6685, 7
    %v6687 = vsub.s32 0, %v6686
    %v6688 = vrot.slane %v6640, %v6687
    %v6689 = vlaneseq
    %v6690 = vshrl.u32 %v6689, 7
    %v6691 = vsub.s32 0, %v6690
    %v6692 = vrot.slane %v6641, %v6691
    %v6693 = vlaneseq
    %v6694 = vshrl.u32 %v6693, 7
    %v6695 = vsub.s32 0, %v6694
    %v6696 = vrot.slane %v6664, %v6695
    %v6697 = vlaneseq
    %v6698 = vshrl.u32 %v6697, 7
    %v6699 = vsub.s32 0, %v6698
    %v6700 = vrot.slane %v6678, %v6699
    %v6701 = vlaneseq
    %v6702 = vshrl.u32 %v6701, 7
    %v6703 = vsub.s32 0, %v6702
    %v6704 = vrot.slane %v6679, %v6703
    %v6705 = vlaneseq
    %v6706 = vshrl.u32 %v6705, 7
    %v6707 = vsub.s32 0, %v6706
    %v6708 = vrot.slane %v6680, %v6707
    %v6709 = vlaneseq
    %v6710 = vshrl.u32 %v6709, 7
    %v6711 = vsub.s32 0, %v6710
    %v6712 = vrot.slane %v6671, %v6711
    %v6721 = vmul.f32 %v6535, %v6684
    %v6722 = vmul.f32 %v6539, %v6684
    %v6723 = vmul.f32 %v6546, %v6688
    %v6724 = vmul.f32 %v6550, %v6688
    %v6725 = vmul.f32 %v6557, %v6692
    %v6726 = vmul.f32 %v6561, %v6692
    %v6727 = vmul.f32 %v6568, %v6696
    %v6728 = vmul.f32 %v6572, %v6696
    %v6729 = vmul.f32 %v6579, %v6700
    %v6730 = vmul.f32 %v6583, %v6700
    %v6731 = vmul.f32 %v6590, %v6704
    %v6732 = vmul.f32 %v6594, %v6704
    %v6733 = vmul.f32 %v6601, %v6708
    %v6734 = vmul.f32 %v6605, %v6708
    %v6735 = vmul.f32 %v6612, %v6712
    %v6736 = vmul.f32 %v6616, %v6712
    %v6737 = vadd.f32 %v5657, %v6721
    %v6738 = vadd.f32 %v5658, %v6722
    %v6739 = vadd.f32 %v5659, %v6723
    %v6740 = vadd.f32 %v5660, %v6724
    %v6741 = vadd.f32 %v5661, %v6725
    %v6742 = vadd.f32 %v5662, %v6726
    %v6743 = vadd.f32 %v5663, %v6727
    %v6744 = vadd.f32 %v5664, %v6728
    %v6745 = vadd.f32 %v5665, %v6729
    %v6746 = vadd.f32 %v5666, %v6730
    %v6747 = vadd.f32 %v5667, %v6731
    %v6748 = vadd.f32 %v5668, %v6732
    %v6749 = vadd.f32 %v5669, %v6733
    %v6750 = vadd.f32 %v5670, %v6734
    %v6751 = vadd.f32 %v5671, %v6735
    %v6752 = vadd.f32 %v5672, %v6736
    %v6753 = vadd.f32 %v5673, %v6528
    %6754 = vst.msk [vmem:[#allocation2 + $0x28] sm:$0xff] %vm219, %v6524
    %v6756 = vrot.slane %v6524, 2
    %v6757 = vrot.slane %v6524, 3
    %v6758 = vrot.slane %v6524, 4
    %v6759 = vrot.slane %v6524, 5
    %v6760 = vrot.slane %v6524, 6
    %v6761 = vrot.slane %v6524, 7
    %v6762 = vrot.slane %v6524, 1
    %6763 = vrot.lane.b32.xlu0 %v6756, 96
    %v6764 = vpop.permute.xlu0 %6763
    %6765 = vrot.lane.b32.xlu0 %v6757, 96
    %v6766 = vpop.permute.xlu0 %6765
    %6767 = vrot.lane.b32.xlu0 %v6758, 96
    %v6768 = vpop.permute.xlu0 %6767
    %6769 = vrot.lane.b32.xlu0 %v6759, 96
    %v6770 = vpop.permute.xlu0 %6769
    %6771 = vrot.lane.b32.xlu0 %v6760, 96
    %v6772 = vpop.permute.xlu0 %6771
    %6773 = vrot.lane.b32.xlu0 %v6761, 96
    %v6774 = vpop.permute.xlu0 %6773
    %6775 = vrot.lane.b32.xlu0 %v6524, 96
    %v6776 = vpop.permute.xlu0 %6775
    %6777 = vrot.lane.b32.xlu0 %v6762, 96
    %v6778 = vpop.permute.xlu0 %6777
    %v6787 = vadd.f32 %v174, %v6764
    %v6788 = vadd.f32 %v179, %v6766
    %v6789 = vadd.f32 %v184, %v6768
    %v6790 = vadd.f32 %v189, %v6770
    %v6791 = vadd.f32 %v194, %v6772
    %v6792 = vadd.f32 %v199, %v6774
    %v6793 = vadd.f32 %v204, %v6776
    %v6794 = vadd.f32 %v209, %v6778
    %v6795 = vtanh.pop %v6787
    %v6796 = vtanh.pop %v6788
    %v6797 = vtanh.pop %v6789
    %v6798 = vtanh.pop %v6790
    %v6799 = vtanh.pop %v6791
    %v6800 = vtanh.pop %v6792
    %v6801 = vtanh.pop %v6793
    %v6802 = vtanh.pop %v6794
    %v6811 = vrot.slane %v6795, 6
    %v6812 = vrot.slane %v6796, 5
    %v6813 = vsel %vm356, %v6812, %v6811
    %v6814 = vrot.slane %v6797, 4
    %v6815 = vsel %vm359, %v6814, %v6813
    %v6816 = vrot.slane %v6798, 3
    %v6817 = vsel %vm362, %v6816, %v6815
    %v6818 = vrot.slane %v6799, 2
    %v6819 = vsel %vm365, %v6818, %v6817
    %v6820 = vrot.slane %v6800, 1
    %v6821 = vsel %vm368, %v6820, %v6819
    %v6822 = vsel %vm371, %v6801, %v6821
    %v6823 = vrot.slane %v6802, 7
    %v6824 = vsel %vm374, %v6823, %v6822
    %v6825 = vsel %vm219, %v6824, 0
    %6827 = vmatprep.subr.mxu0 0.0
    %6828 = vmatpush1.msra.mxu0 0.0
    %6829 = vmatprep.subr.mxu0 0.0
    %6830 = vmatpush1.msra.mxu0 0.0
    %6831 = vmatprep.subr.mxu0 0.0
    %6832 = vmatpush1.msra.mxu0 0.0
    %6833 = vmatprep.subr.mxu0 0.0
    %6834 = vmatpush1.msra.mxu0 0.0
    %6835 = vmatprep.subr.mxu0 0.0
    %6836 = vmatpush1.msra.mxu0 0.0
    %6837 = vmatprep.subr.mxu0 0.0
    %6838 = vmatpush1.msra.mxu0 0.0
    %6839 = vmatprep.subr.mxu0 0.0
    %6840 = vmatpush1.msra.mxu0 0.0
    %6841 = vmatprep.subr.mxu0 0.0
    %6842 = vmatpush1.msra.mxu0 0.0
    %6843 = vmatprep.subr.mxu0 0.0
    %6844 = vmatpush1.msra.mxu0 0.0
    %6845 = vmatprep.subr.mxu0 0.0
    %6846 = vmatpush1.msra.mxu0 0.0
    %6847 = vmatprep.subr.mxu0 0.0
    %6848 = vmatpush1.msra.mxu0 0.0
    %6849 = vmatprep.subr.mxu0 0.0
    %6850 = vmatpush1.msra.mxu0 0.0
    %6851 = vmatprep.subr.mxu0 0.0
    %6852 = vmatpush1.msra.mxu0 %v60
    %6853 = vmatprep.subr.mxu0 0.0
    %6854 = vmatpush1.msra.mxu0 %v59
    %6855 = vmatprep.subr.mxu0 0.0
    %6856 = vmatpush1.msra.mxu0 %v58
    %6857 = vmatprep.subr.mxu0 0.0
    %6858 = vmatpush1.msra.mxu0 %v57
    %6859 = vmatprep.subr.mxu0 0.0
    %6860 = vmatpush2.msra.mxu0 0.0
    %6861 = vmatprep.subr.mxu0 0.0
    %6862 = vmatpush2.msra.mxu0 0.0
    %6863 = vmatprep.subr.mxu0 0.0
    %6864 = vmatpush2.msra.mxu0 0.0
    %6865 = vmatprep.subr.mxu0 0.0
    %6866 = vmatpush2.msra.mxu0 0.0
    %6867 = vmatprep.subr.mxu0 0.0
    %6868 = vmatpush2.msra.mxu0 0.0
    %6869 = vmatprep.subr.mxu0 0.0
    %6870 = vmatpush2.msra.mxu0 0.0
    %6871 = vmatprep.subr.mxu0 0.0
    %6872 = vmatpush2.msra.mxu0 0.0
    %6873 = vmatprep.subr.mxu0 0.0
    %6874 = vmatpush2.msra.mxu0 0.0
    %6875 = vmatprep.subr.mxu0 0.0
    %6876 = vmatpush2.msra.mxu0 0.0
    %6877 = vmatprep.subr.mxu0 0.0
    %6878 = vmatpush2.msra.mxu0 0.0
    %6879 = vmatprep.subr.mxu0 0.0
    %6880 = vmatpush2.msra.mxu0 0.0
    %6881 = vmatprep.subr.mxu0 0.0
    %6882 = vmatpush2.msra.mxu0 0.0
    %6883 = vmatprep.subr.mxu0 0.0
    %6884 = vmatpush2.msra.mxu0 0.0
    %6885 = vmatprep.subr.mxu0 0.0
    %6886 = vmatpush2.msra.mxu0 0.0
    %6887 = vmatprep.subr.mxu0 0.0
    %6888 = vmatpush2.msra.mxu0 0.0
    %6889 = vmatprep.subr.mxu0 0.0
    %6890 = vmatpush2.msra.mxu0 0.0
    %6891 = vmatprep.mubr.f32.mxu0 0.0
    %6892 = vmatmul.mubr.f32.gmra.mxu0 %v6825
    %v6893 = vpop.f32.mrf.mxu0
    %v6894 = vadd.f32 0.0, %v6893
    %v6895 = vpop.f32.mrf.mxu0
    %6896 = vdwg.mxu0
    %v6897 = vlaneseq
    %v6898 = vshrl.u32 %v6897, 7
    %v6899 = vsub.s32 6, %v6898
    %v6900 = vrot.slane %v6795, %v6899
    %v6901 = vlaneseq
    %v6902 = vshrl.u32 %v6901, 7
    %v6903 = vsub.s32 6, %v6902
    %v6904 = vrot.slane %v6796, %v6903
    %v6905 = vlaneseq
    %v6906 = vshrl.u32 %v6905, 7
    %v6907 = vsub.s32 6, %v6906
    %v6908 = vrot.slane %v6797, %v6907
    %v6909 = vlaneseq
    %v6910 = vshrl.u32 %v6909, 7
    %v6911 = vsub.s32 6, %v6910
    %v6912 = vrot.slane %v6798, %v6911
    %v6913 = vlaneseq
    %v6914 = vshrl.u32 %v6913, 7
    %v6915 = vsub.s32 6, %v6914
    %v6916 = vrot.slane %v6799, %v6915
    %v6917 = vlaneseq
    %v6918 = vshrl.u32 %v6917, 7
    %v6919 = vsub.s32 6, %v6918
    %v6920 = vrot.slane %v6800, %v6919
    %v6921 = vlaneseq
    %v6922 = vshrl.u32 %v6921, 7
    %v6923 = vsub.s32 6, %v6922
    %v6924 = vrot.slane %v6801, %v6923
    %v6925 = vlaneseq
    %v6926 = vshrl.u32 %v6925, 7
    %v6927 = vsub.s32 6, %v6926
    %v6928 = vrot.slane %v6802, %v6927
    %v6929 = vmul.f32 %v6900, %v61
    %v6930 = vmul.f32 %v6900, %v62
    %v6931 = vmul.f32 %v6904, %v61
    %v6932 = vmul.f32 %v6904, %v62
    %v6933 = vmul.f32 %v6908, %v61
    %v6934 = vmul.f32 %v6908, %v62
    %v6935 = vmul.f32 %v6912, %v61
    %v6936 = vmul.f32 %v6912, %v62
    %v6937 = vmul.f32 %v6916, %v61
    %v6938 = vmul.f32 %v6916, %v62
    %v6939 = vmul.f32 %v6920, %v61
    %v6940 = vmul.f32 %v6920, %v62
    %v6941 = vmul.f32 %v6924, %v61
    %v6942 = vmul.f32 %v6924, %v62
    %v6943 = vmul.f32 %v6928, %v61
    %v6944 = vmul.f32 %v6928, %v62
    %v6945 = vsel %vm219, %v6929, 0.0
    %6946 = vadd.xlane.f32.xlu0 %v6945
    %v6947 = vpop.xlane.xlu0 %6946
    %v6948 = vsel %vm499, %v6930, 0.0
    %6949 = vadd.xlane.f32.xlu0 %v6948
    %v6950 = vpop.xlane.xlu0 %6949
    %v6951 = vsel %vm219, %v6931, 0.0
    %6952 = vadd.xlane.f32.xlu0 %v6951
    %v6953 = vpop.xlane.xlu0 %6952
    %v6954 = vsel %vm499, %v6932, 0.0
    %6955 = vadd.xlane.f32.xlu0 %v6954
    %v6956 = vpop.xlane.xlu0 %6955
    %v6957 = vsel %vm219, %v6933, 0.0
    %6958 = vadd.xlane.f32.xlu0 %v6957
    %v6959 = vpop.xlane.xlu0 %6958
    %v6960 = vsel %vm499, %v6934, 0.0
    %6961 = vadd.xlane.f32.xlu0 %v6960
    %v6962 = vpop.xlane.xlu0 %6961
    %v6963 = vsel %vm219, %v6935, 0.0
    %6964 = vadd.xlane.f32.xlu0 %v6963
    %v6965 = vpop.xlane.xlu0 %6964
    %v6966 = vsel %vm499, %v6936, 0.0
    %6967 = vadd.xlane.f32.xlu0 %v6966
    %v6968 = vpop.xlane.xlu0 %6967
    %v6969 = vsel %vm219, %v6937, 0.0
    %6970 = vadd.xlane.f32.xlu0 %v6969
    %v6971 = vpop.xlane.xlu0 %6970
    %v6972 = vsel %vm499, %v6938, 0.0
    %6973 = vadd.xlane.f32.xlu0 %v6972
    %v6974 = vpop.xlane.xlu0 %6973
    %v6975 = vsel %vm219, %v6939, 0.0
    %6976 = vadd.xlane.f32.xlu0 %v6975
    %v6977 = vpop.xlane.xlu0 %6976
    %v6978 = vsel %vm499, %v6940, 0.0
    %6979 = vadd.xlane.f32.xlu0 %v6978
    %v6980 = vpop.xlane.xlu0 %6979
    %v6981 = vsel %vm219, %v6941, 0.0
    %6982 = vadd.xlane.f32.xlu0 %v6981
    %v6983 = vpop.xlane.xlu0 %6982
    %v6984 = vsel %vm499, %v6942, 0.0
    %6985 = vadd.xlane.f32.xlu0 %v6984
    %v6986 = vpop.xlane.xlu0 %6985
    %v6987 = vsel %vm219, %v6943, 0.0
    %6988 = vadd.xlane.f32.xlu0 %v6987
    %v6989 = vpop.xlane.xlu0 %6988
    %v6990 = vsel %vm499, %v6944, 0.0
    %6991 = vadd.xlane.f32.xlu0 %v6990
    %v6992 = vpop.xlane.xlu0 %6991
    %v6993 = vadd.f32 %v6947, %v547
    %v6994 = vadd.f32 %v6950, %v551
    %v6995 = vadd.f32 %v6953, %v547
    %v6996 = vadd.f32 %v6956, %v551
    %v6997 = vadd.f32 %v6959, %v547
    %v6998 = vadd.f32 %v6962, %v551
    %v6999 = vadd.f32 %v6965, %v547
    %v7000 = vadd.f32 %v6968, %v551
    %v7001 = vadd.f32 %v6971, %v547
    %v7002 = vadd.f32 %v6974, %v551
    %v7003 = vadd.f32 %v6977, %v547
    %v7004 = vadd.f32 %v6980, %v551
    %v7005 = vadd.f32 %v6983, %v547
    %v7006 = vadd.f32 %v6986, %v551
    %v7007 = vadd.f32 %v6989, %v547
    %v7008 = vadd.f32 %v6992, %v551
    %7025 = vset.pattern.permute.xlu0 0
    %7026 = vperm.xlu0 %7025, %v6993
    %v7027 = vpop.permute.xlu0 %7026
    %7028 = vset.pattern.permute.xlu0 0
    %7029 = vperm.xlu0 %7028, %v6994
    %v7030 = vpop.permute.xlu0 %7029
    %7031 = vset.pattern.permute.xlu0 0
    %7032 = vperm.xlu0 %7031, %v6995
    %v7033 = vpop.permute.xlu0 %7032
    %7034 = vset.pattern.permute.xlu0 0
    %7035 = vperm.xlu0 %7034, %v6996
    %v7036 = vpop.permute.xlu0 %7035
    %7037 = vset.pattern.permute.xlu0 0
    %7038 = vperm.xlu0 %7037, %v6997
    %v7039 = vpop.permute.xlu0 %7038
    %7040 = vset.pattern.permute.xlu0 0
    %7041 = vperm.xlu0 %7040, %v6998
    %v7042 = vpop.permute.xlu0 %7041
    %7043 = vset.pattern.permute.xlu0 0
    %7044 = vperm.xlu0 %7043, %v6999
    %v7045 = vpop.permute.xlu0 %7044
    %7046 = vset.pattern.permute.xlu0 0
    %7047 = vperm.xlu0 %7046, %v7000
    %v7048 = vpop.permute.xlu0 %7047
    %7049 = vset.pattern.permute.xlu0 0
    %7050 = vperm.xlu0 %7049, %v7001
    %v7051 = vpop.permute.xlu0 %7050
    %7052 = vset.pattern.permute.xlu0 0
    %7053 = vperm.xlu0 %7052, %v7002
    %v7054 = vpop.permute.xlu0 %7053
    %7055 = vset.pattern.permute.xlu0 0
    %7056 = vperm.xlu0 %7055, %v7003
    %v7057 = vpop.permute.xlu0 %7056
    %7058 = vset.pattern.permute.xlu0 0
    %7059 = vperm.xlu0 %7058, %v7004
    %v7060 = vpop.permute.xlu0 %7059
    %7061 = vset.pattern.permute.xlu0 0
    %7062 = vperm.xlu0 %7061, %v7005
    %v7063 = vpop.permute.xlu0 %7062
    %7064 = vset.pattern.permute.xlu0 0
    %7065 = vperm.xlu0 %7064, %v7006
    %v7066 = vpop.permute.xlu0 %7065
    %7067 = vset.pattern.permute.xlu0 0
    %7068 = vperm.xlu0 %7067, %v7007
    %v7069 = vpop.permute.xlu0 %7068
    %7070 = vset.pattern.permute.xlu0 0
    %7071 = vperm.xlu0 %7070, %v7008
    %v7072 = vpop.permute.xlu0 %7071
    %v7073 = vlaneseq
    %v7074 = vshrl.u32 %v7073, 7
    %v7075 = vsub.s32 %v298, %v7074
    %v7076 = vrot.slane %v7027, %v7075
    %v7077 = vlaneseq
    %v7078 = vshrl.u32 %v7077, 7
    %v7079 = vsub.s32 %v638, %v7078
    %v7080 = vrot.slane %v7030, %v7079
    %v7081 = vsel %vm643, %v7080, %v7076
    %v7082 = vlaneseq
    %v7083 = vshrl.u32 %v7082, 7
    %v7084 = vsub.s32 %v298, %v7083
    %v7085 = vrot.slane %v7033, %v7084
    %v7086 = vlaneseq
    %v7087 = vshrl.u32 %v7086, 7
    %v7088 = vsub.s32 %v638, %v7087
    %v7089 = vrot.slane %v7036, %v7088
    %v7090 = vsel %vm643, %v7089, %v7085
    %v7091 = vlaneseq
    %v7092 = vshrl.u32 %v7091, 7
    %v7093 = vsub.s32 %v298, %v7092
    %v7094 = vrot.slane %v7039, %v7093
    %v7095 = vlaneseq
    %v7096 = vshrl.u32 %v7095, 7
    %v7097 = vsub.s32 %v638, %v7096
    %v7098 = vrot.slane %v7042, %v7097
    %v7099 = vsel %vm643, %v7098, %v7094
    %v7100 = vlaneseq
    %v7101 = vshrl.u32 %v7100, 7
    %v7102 = vsub.s32 %v298, %v7101
    %v7103 = vrot.slane %v7045, %v7102
    %v7104 = vlaneseq
    %v7105 = vshrl.u32 %v7104, 7
    %v7106 = vsub.s32 %v638, %v7105
    %v7107 = vrot.slane %v7048, %v7106
    %v7108 = vsel %vm643, %v7107, %v7103
    %v7109 = vlaneseq
    %v7110 = vshrl.u32 %v7109, 7
    %v7111 = vsub.s32 %v298, %v7110
    %v7112 = vrot.slane %v7051, %v7111
    %v7113 = vlaneseq
    %v7114 = vshrl.u32 %v7113, 7
    %v7115 = vsub.s32 %v638, %v7114
    %v7116 = vrot.slane %v7054, %v7115
    %v7117 = vsel %vm643, %v7116, %v7112
    %v7118 = vlaneseq
    %v7119 = vshrl.u32 %v7118, 7
    %v7120 = vsub.s32 %v298, %v7119
    %v7121 = vrot.slane %v7057, %v7120
    %v7122 = vlaneseq
    %v7123 = vshrl.u32 %v7122, 7
    %v7124 = vsub.s32 %v638, %v7123
    %v7125 = vrot.slane %v7060, %v7124
    %v7126 = vsel %vm643, %v7125, %v7121
    %v7127 = vlaneseq
    %v7128 = vshrl.u32 %v7127, 7
    %v7129 = vsub.s32 %v298, %v7128
    %v7130 = vrot.slane %v7063, %v7129
    %v7131 = vlaneseq
    %v7132 = vshrl.u32 %v7131, 7
    %v7133 = vsub.s32 %v638, %v7132
    %v7134 = vrot.slane %v7066, %v7133
    %v7135 = vsel %vm643, %v7134, %v7130
    %v7136 = vlaneseq
    %v7137 = vshrl.u32 %v7136, 7
    %v7138 = vsub.s32 %v298, %v7137
    %v7139 = vrot.slane %v7069, %v7138
    %v7140 = vlaneseq
    %v7141 = vshrl.u32 %v7140, 7
    %v7142 = vsub.s32 %v638, %v7141
    %v7143 = vrot.slane %v7072, %v7142
    %v7144 = vsel %vm643, %v7143, %v7139
    %v7145 = vsel %vm356, %v7090, %v7081
    %v7146 = vsel %vm359, %v7099, %v7145
    %v7147 = vsel %vm362, %v7108, %v7146
    %v7148 = vsel %vm365, %v7117, %v7147
    %v7149 = vsel %vm368, %v7126, %v7148
    %v7150 = vsel %vm371, %v7135, %v7149
    %v7151 = vsel %vm374, %v7144, %v7150
    %v7153 = vsel %vm716, %v7151, -inf
    %7154 = vmax.xlane.f32.xlu0 %v7153
    %v7155 = vpop.xlane.xlu0 %7154
    %v7157 = vlaneseq
    %v7158 = vshrl.u32 %v7157, 7
    %v7159 = vsub.s32 0, %v7158
    %v7160 = vrot.slane %v7155, %v7159
    %v7161 = vlaneseq
    %v7162 = vshrl.u32 %v7161, 7
    %v7163 = vsub.s32 1, %v7162
    %v7164 = vrot.slane %v7155, %v7163
    %v7165 = vlaneseq
    %v7166 = vshrl.u32 %v7165, 7
    %v7167 = vsub.s32 2, %v7166
    %v7168 = vrot.slane %v7155, %v7167
    %v7169 = vlaneseq
    %v7170 = vshrl.u32 %v7169, 7
    %v7171 = vsub.s32 3, %v7170
    %v7172 = vrot.slane %v7155, %v7171
    %v7173 = vlaneseq
    %v7174 = vshrl.u32 %v7173, 7
    %v7175 = vsub.s32 4, %v7174
    %v7176 = vrot.slane %v7155, %v7175
    %v7177 = vlaneseq
    %v7178 = vshrl.u32 %v7177, 7
    %v7179 = vsub.s32 5, %v7178
    %v7180 = vrot.slane %v7155, %v7179
    %v7181 = vlaneseq
    %v7182 = vshrl.u32 %v7181, 7
    %v7183 = vsub.s32 6, %v7182
    %v7184 = vrot.slane %v7155, %v7183
    %v7185 = vlaneseq
    %v7186 = vshrl.u32 %v7185, 7
    %v7187 = vsub.s32 7, %v7186
    %v7188 = vrot.slane %v7155, %v7187
    %vm7197 = vcmp.eq.f32.partialorder %v6993, %v7160
    %vm7198 = vcmp.eq.f32.partialorder %v6994, %v7160
    %vm7199 = vcmp.eq.f32.partialorder %v6995, %v7164
    %vm7200 = vcmp.eq.f32.partialorder %v6996, %v7164
    %vm7201 = vcmp.eq.f32.partialorder %v6997, %v7168
    %vm7202 = vcmp.eq.f32.partialorder %v6998, %v7168
    %vm7203 = vcmp.eq.f32.partialorder %v6999, %v7172
    %vm7204 = vcmp.eq.f32.partialorder %v7000, %v7172
    %vm7205 = vcmp.eq.f32.partialorder %v7001, %v7176
    %vm7206 = vcmp.eq.f32.partialorder %v7002, %v7176
    %vm7207 = vcmp.eq.f32.partialorder %v7003, %v7180
    %vm7208 = vcmp.eq.f32.partialorder %v7004, %v7180
    %vm7209 = vcmp.eq.f32.partialorder %v7005, %v7184
    %vm7210 = vcmp.eq.f32.partialorder %v7006, %v7184
    %vm7211 = vcmp.eq.f32.partialorder %v7007, %v7188
    %vm7212 = vcmp.eq.f32.partialorder %v7008, %v7188
    %v7213 = vsel %vm7197, %v779, 9
    %v7214 = vsel %vm7198, %v783, 9
    %v7215 = vsel %vm7199, %v779, 9
    %v7216 = vsel %vm7200, %v783, 9
    %v7217 = vsel %vm7201, %v779, 9
    %v7218 = vsel %vm7202, %v783, 9
    %v7219 = vsel %vm7203, %v779, 9
    %v7220 = vsel %vm7204, %v783, 9
    %v7221 = vsel %vm7205, %v779, 9
    %v7222 = vsel %vm7206, %v783, 9
    %v7223 = vsel %vm7207, %v779, 9
    %v7224 = vsel %vm7208, %v783, 9
    %v7225 = vsel %vm7209, %v779, 9
    %v7226 = vsel %vm7210, %v783, 9
    %v7227 = vsel %vm7211, %v779, 9
    %v7228 = vsel %vm7212, %v783, 9
    %7229 = vset.pattern.permute.xlu0 0
    %7230 = vperm.xlu0 %7229, %v7213
    %v7231 = vpop.permute.xlu0 %7230
    %7232 = vset.pattern.permute.xlu0 0
    %7233 = vperm.xlu0 %7232, %v7214
    %v7234 = vpop.permute.xlu0 %7233
    %7235 = vset.pattern.permute.xlu0 0
    %7236 = vperm.xlu0 %7235, %v7215
    %v7237 = vpop.permute.xlu0 %7236
    %7238 = vset.pattern.permute.xlu0 0
    %7239 = vperm.xlu0 %7238, %v7216
    %v7240 = vpop.permute.xlu0 %7239
    %7241 = vset.pattern.permute.xlu0 0
    %7242 = vperm.xlu0 %7241, %v7217
    %v7243 = vpop.permute.xlu0 %7242
    %7244 = vset.pattern.permute.xlu0 0
    %7245 = vperm.xlu0 %7244, %v7218
    %v7246 = vpop.permute.xlu0 %7245
    %7247 = vset.pattern.permute.xlu0 0
    %7248 = vperm.xlu0 %7247, %v7219
    %v7249 = vpop.permute.xlu0 %7248
    %7250 = vset.pattern.permute.xlu0 0
    %7251 = vperm.xlu0 %7250, %v7220
    %v7252 = vpop.permute.xlu0 %7251
    %7253 = vset.pattern.permute.xlu0 0
    %7254 = vperm.xlu0 %7253, %v7221
    %v7255 = vpop.permute.xlu0 %7254
    %7256 = vset.pattern.permute.xlu0 0
    %7257 = vperm.xlu0 %7256, %v7222
    %v7258 = vpop.permute.xlu0 %7257
    %7259 = vset.pattern.permute.xlu0 0
    %7260 = vperm.xlu0 %7259, %v7223
    %v7261 = vpop.permute.xlu0 %7260
    %7262 = vset.pattern.permute.xlu0 0
    %7263 = vperm.xlu0 %7262, %v7224
    %v7264 = vpop.permute.xlu0 %7263
    %7265 = vset.pattern.permute.xlu0 0
    %7266 = vperm.xlu0 %7265, %v7225
    %v7267 = vpop.permute.xlu0 %7266
    %7268 = vset.pattern.permute.xlu0 0
    %7269 = vperm.xlu0 %7268, %v7226
    %v7270 = vpop.permute.xlu0 %7269
    %7271 = vset.pattern.permute.xlu0 0
    %7272 = vperm.xlu0 %7271, %v7227
    %v7273 = vpop.permute.xlu0 %7272
    %7274 = vset.pattern.permute.xlu0 0
    %7275 = vperm.xlu0 %7274, %v7228
    %v7276 = vpop.permute.xlu0 %7275
    %v7277 = vlaneseq
    %v7278 = vshrl.u32 %v7277, 7
    %v7279 = vsub.s32 %v298, %v7278
    %v7280 = vrot.slane %v7231, %v7279
    %v7281 = vlaneseq
    %v7282 = vshrl.u32 %v7281, 7
    %v7283 = vsub.s32 %v638, %v7282
    %v7284 = vrot.slane %v7234, %v7283
    %v7285 = vsel %vm643, %v7284, %v7280
    %v7286 = vlaneseq
    %v7287 = vshrl.u32 %v7286, 7
    %v7288 = vsub.s32 %v298, %v7287
    %v7289 = vrot.slane %v7237, %v7288
    %v7290 = vlaneseq
    %v7291 = vshrl.u32 %v7290, 7
    %v7292 = vsub.s32 %v638, %v7291
    %v7293 = vrot.slane %v7240, %v7292
    %v7294 = vsel %vm643, %v7293, %v7289
    %v7295 = vlaneseq
    %v7296 = vshrl.u32 %v7295, 7
    %v7297 = vsub.s32 %v298, %v7296
    %v7298 = vrot.slane %v7243, %v7297
    %v7299 = vlaneseq
    %v7300 = vshrl.u32 %v7299, 7
    %v7301 = vsub.s32 %v638, %v7300
    %v7302 = vrot.slane %v7246, %v7301
    %v7303 = vsel %vm643, %v7302, %v7298
    %v7304 = vlaneseq
    %v7305 = vshrl.u32 %v7304, 7
    %v7306 = vsub.s32 %v298, %v7305
    %v7307 = vrot.slane %v7249, %v7306
    %v7308 = vlaneseq
    %v7309 = vshrl.u32 %v7308, 7
    %v7310 = vsub.s32 %v638, %v7309
    %v7311 = vrot.slane %v7252, %v7310
    %v7312 = vsel %vm643, %v7311, %v7307
    %v7313 = vlaneseq
    %v7314 = vshrl.u32 %v7313, 7
    %v7315 = vsub.s32 %v298, %v7314
    %v7316 = vrot.slane %v7255, %v7315
    %v7317 = vlaneseq
    %v7318 = vshrl.u32 %v7317, 7
    %v7319 = vsub.s32 %v638, %v7318
    %v7320 = vrot.slane %v7258, %v7319
    %v7321 = vsel %vm643, %v7320, %v7316
    %v7322 = vlaneseq
    %v7323 = vshrl.u32 %v7322, 7
    %v7324 = vsub.s32 %v298, %v7323
    %v7325 = vrot.slane %v7261, %v7324
    %v7326 = vlaneseq
    %v7327 = vshrl.u32 %v7326, 7
    %v7328 = vsub.s32 %v638, %v7327
    %v7329 = vrot.slane %v7264, %v7328
    %v7330 = vsel %vm643, %v7329, %v7325
    %v7331 = vlaneseq
    %v7332 = vshrl.u32 %v7331, 7
    %v7333 = vsub.s32 %v298, %v7332
    %v7334 = vrot.slane %v7267, %v7333
    %v7335 = vlaneseq
    %v7336 = vshrl.u32 %v7335, 7
    %v7337 = vsub.s32 %v638, %v7336
    %v7338 = vrot.slane %v7270, %v7337
    %v7339 = vsel %vm643, %v7338, %v7334
    %v7340 = vlaneseq
    %v7341 = vshrl.u32 %v7340, 7
    %v7342 = vsub.s32 %v298, %v7341
    %v7343 = vrot.slane %v7273, %v7342
    %v7344 = vlaneseq
    %v7345 = vshrl.u32 %v7344, 7
    %v7346 = vsub.s32 %v638, %v7345
    %v7347 = vrot.slane %v7276, %v7346
    %v7348 = vsel %vm643, %v7347, %v7343
    %v7349 = vsel %vm356, %v7294, %v7285
    %v7350 = vsel %vm359, %v7303, %v7349
    %v7351 = vsel %vm362, %v7312, %v7350
    %v7352 = vsel %vm365, %v7321, %v7351
    %v7353 = vsel %vm368, %v7330, %v7352
    %v7354 = vsel %vm371, %v7339, %v7353
    %v7355 = vsel %vm374, %v7348, %v7354
    %v7356 = vsel %vm716, %v7355, 2147483647
    %v7357 = vand.u32 %v7356, 65535
    %v7358 = vshra.s32 %v7356, 16
    %v7359 = vcvt.s32.f32 %v7357
    %v7360 = vcvt.s32.f32 %v7358
    %7361 = vmin.xlane.f32.xlu0 %v7360
    %v7362 = vpop.xlane.xlu0 %7361
    %vm7363 = vcmp.eq.f32.partialorder %v7360, %v7362
    %v7364 = vsel %vm7363, %v7359, inf
    %7365 = vmin.xlane.f32.xlu0 %v7364
    %v7366 = vpop.xlane.xlu0 %7365
    %v7367 = vcvt.f32.s32 %v7366
    %v7368 = vcvt.f32.s32 %v7362
    %v7369 = vshll.u32 %v7368, 16
    %v7370 = vadd.s32 %v7369, %v7367
    %vm7371 = vcmp.eq.s32.totalorder %v298, %v7370
    %v7372 = vsel %vm7371, 1, 0
    %v7373 = vcvt.s32.f32 %v7372
    %v7374 = vlaneseq
    %v7375 = vshrl.u32 %v7374, 7
    %v7376 = vsub.s32 0, %v7375
    %v7377 = vrot.slane %v7373, %v7376
    %7379 = vbcast.lane.b32.xlu0 %v7377, 256
    %v7380 = vpop.permute.xlu0 %7379
    %s7382 = sor.u32 256, 8
    %7383 = vbcast.lane.b32.xlu0 %v7377, %s7382
    %v7384 = vpop.permute.xlu0 %7383
    %v7385 = vlaneseq
    %v7386 = vshrl.u32 %v7385, 7
    %v7387 = vsub.s32 1, %v7386
    %v7388 = vrot.slane %v7373, %v7387
    %7390 = vbcast.lane.b32.xlu0 %v7388, 256
    %v7391 = vpop.permute.xlu0 %7390
    %s7393 = sor.u32 256, 8
    %7394 = vbcast.lane.b32.xlu0 %v7388, %s7393
    %v7395 = vpop.permute.xlu0 %7394
    %v7396 = vlaneseq
    %v7397 = vshrl.u32 %v7396, 7
    %v7398 = vsub.s32 2, %v7397
    %v7399 = vrot.slane %v7373, %v7398
    %7401 = vbcast.lane.b32.xlu0 %v7399, 256
    %v7402 = vpop.permute.xlu0 %7401
    %s7404 = sor.u32 256, 8
    %7405 = vbcast.lane.b32.xlu0 %v7399, %s7404
    %v7406 = vpop.permute.xlu0 %7405
    %v7407 = vlaneseq
    %v7408 = vshrl.u32 %v7407, 7
    %v7409 = vsub.s32 3, %v7408
    %v7410 = vrot.slane %v7373, %v7409
    %7412 = vbcast.lane.b32.xlu0 %v7410, 256
    %v7413 = vpop.permute.xlu0 %7412
    %s7415 = sor.u32 256, 8
    %7416 = vbcast.lane.b32.xlu0 %v7410, %s7415
    %v7417 = vpop.permute.xlu0 %7416
    %v7418 = vlaneseq
    %v7419 = vshrl.u32 %v7418, 7
    %v7420 = vsub.s32 4, %v7419
    %v7421 = vrot.slane %v7373, %v7420
    %7423 = vbcast.lane.b32.xlu0 %v7421, 256
    %v7424 = vpop.permute.xlu0 %7423
    %s7426 = sor.u32 256, 8
    %7427 = vbcast.lane.b32.xlu0 %v7421, %s7426
    %v7428 = vpop.permute.xlu0 %7427
    %v7429 = vlaneseq
    %v7430 = vshrl.u32 %v7429, 7
    %v7431 = vsub.s32 5, %v7430
    %v7432 = vrot.slane %v7373, %v7431
    %7434 = vbcast.lane.b32.xlu0 %v7432, 256
    %v7435 = vpop.permute.xlu0 %7434
    %s7437 = sor.u32 256, 8
    %7438 = vbcast.lane.b32.xlu0 %v7432, %s7437
    %v7439 = vpop.permute.xlu0 %7438
    %v7440 = vlaneseq
    %v7441 = vshrl.u32 %v7440, 7
    %v7442 = vsub.s32 6, %v7441
    %v7443 = vrot.slane %v7373, %v7442
    %7445 = vbcast.lane.b32.xlu0 %v7443, 256
    %v7446 = vpop.permute.xlu0 %7445
    %s7448 = sor.u32 256, 8
    %7449 = vbcast.lane.b32.xlu0 %v7443, %s7448
    %v7450 = vpop.permute.xlu0 %7449
    %v7451 = vlaneseq
    %v7452 = vshrl.u32 %v7451, 7
    %v7453 = vsub.s32 7, %v7452
    %v7454 = vrot.slane %v7373, %v7453
    %7456 = vbcast.lane.b32.xlu0 %v7454, 256
    %v7457 = vpop.permute.xlu0 %7456
    %s7459 = sor.u32 256, 8
    %7460 = vbcast.lane.b32.xlu0 %v7454, %s7459
    %v7461 = vpop.permute.xlu0 %7460
    %v7462 = vmul.f32 %v6737, %v7380
    %v7463 = vmul.f32 %v6738, %v7384
    %v7464 = vmul.f32 %v6739, %v7391
    %v7465 = vmul.f32 %v6740, %v7395
    %v7466 = vmul.f32 %v6741, %v7402
    %v7467 = vmul.f32 %v6742, %v7406
    %v7468 = vmul.f32 %v6743, %v7413
    %v7469 = vmul.f32 %v6744, %v7417
    %v7470 = vmul.f32 %v6745, %v7424
    %v7471 = vmul.f32 %v6746, %v7428
    %v7472 = vmul.f32 %v6747, %v7435
    %v7473 = vmul.f32 %v6748, %v7439
    %v7474 = vmul.f32 %v6749, %v7446
    %v7475 = vmul.f32 %v6750, %v7450
    %v7476 = vmul.f32 %v6751, %v7457
    %v7477 = vmul.f32 %v6752, %v7461
    %v7478 = vsel %vm2085, %v7462, 0.0
    %v7479 = vsel %vm2087, %v7463, 0.0
    %v7480 = vadd.f32 %v7478, %v7479
    %v7481 = vrot.slane %v7480, 4
    %v7482 = vadd.f32 %v7480, %v7481
    %v7483 = vrot.slane %v7482, 2
    %v7484 = vadd.f32 %v7482, %v7483
    %v7485 = vrot.slane %v7484, 1
    %v7486 = vadd.f32 %v7484, %v7485
    %v7487 = vsel %vm2085, %v7464, 0.0
    %v7488 = vsel %vm2087, %v7465, 0.0
    %v7489 = vadd.f32 %v7487, %v7488
    %v7490 = vrot.slane %v7489, 4
    %v7491 = vadd.f32 %v7489, %v7490
    %v7492 = vrot.slane %v7491, 2
    %v7493 = vadd.f32 %v7491, %v7492
    %v7494 = vrot.slane %v7493, 1
    %v7495 = vadd.f32 %v7493, %v7494
    %v7496 = vsel %vm2085, %v7466, 0.0
    %v7497 = vsel %vm2087, %v7467, 0.0
    %v7498 = vadd.f32 %v7496, %v7497
    %v7499 = vrot.slane %v7498, 4
    %v7500 = vadd.f32 %v7498, %v7499
    %v7501 = vrot.slane %v7500, 2
    %v7502 = vadd.f32 %v7500, %v7501
    %v7503 = vrot.slane %v7502, 1
    %v7504 = vadd.f32 %v7502, %v7503
    %v7505 = vsel %vm2085, %v7468, 0.0
    %v7506 = vsel %vm2087, %v7469, 0.0
    %v7507 = vadd.f32 %v7505, %v7506
    %v7508 = vrot.slane %v7507, 4
    %v7509 = vadd.f32 %v7507, %v7508
    %v7510 = vrot.slane %v7509, 2
    %v7511 = vadd.f32 %v7509, %v7510
    %v7512 = vrot.slane %v7511, 1
    %v7513 = vadd.f32 %v7511, %v7512
    %v7514 = vsel %vm2085, %v7470, 0.0
    %v7515 = vsel %vm2087, %v7471, 0.0
    %v7516 = vadd.f32 %v7514, %v7515
    %v7517 = vrot.slane %v7516, 4
    %v7518 = vadd.f32 %v7516, %v7517
    %v7519 = vrot.slane %v7518, 2
    %v7520 = vadd.f32 %v7518, %v7519
    %v7521 = vrot.slane %v7520, 1
    %v7522 = vadd.f32 %v7520, %v7521
    %v7523 = vsel %vm2085, %v7472, 0.0
    %v7524 = vsel %vm2087, %v7473, 0.0
    %v7525 = vadd.f32 %v7523, %v7524
    %v7526 = vrot.slane %v7525, 4
    %v7527 = vadd.f32 %v7525, %v7526
    %v7528 = vrot.slane %v7527, 2
    %v7529 = vadd.f32 %v7527, %v7528
    %v7530 = vrot.slane %v7529, 1
    %v7531 = vadd.f32 %v7529, %v7530
    %v7532 = vsel %vm2085, %v7474, 0.0
    %v7533 = vsel %vm2087, %v7475, 0.0
    %v7534 = vadd.f32 %v7532, %v7533
    %v7535 = vrot.slane %v7534, 4
    %v7536 = vadd.f32 %v7534, %v7535
    %v7537 = vrot.slane %v7536, 2
    %v7538 = vadd.f32 %v7536, %v7537
    %v7539 = vrot.slane %v7538, 1
    %v7540 = vadd.f32 %v7538, %v7539
    %v7541 = vsel %vm2085, %v7476, 0.0
    %v7542 = vsel %vm2087, %v7477, 0.0
    %v7543 = vadd.f32 %v7541, %v7542
    %v7544 = vrot.slane %v7543, 4
    %v7545 = vadd.f32 %v7543, %v7544
    %v7546 = vrot.slane %v7545, 2
    %v7547 = vadd.f32 %v7545, %v7546
    %v7548 = vrot.slane %v7547, 1
    %v7549 = vadd.f32 %v7547, %v7548
    %v7550 = vmul.f32 %v6753, %v7373
    %v7551 = vsel %vm716, %v7550, 0.0
    %7552 = vadd.xlane.f32.xlu0 %v7551
    %v7553 = vpop.xlane.xlu0 %7552
    %vm7554 = vcmp.gt.f32.partialorder %v7553, 0.5
    %vm7555 = vcmp.gt.s32.totalorder %v7370, 0
    %vm7556 = vmand %vm7555, %vm7554
    %v7557 = vrot.slane %v6796, 7
    %v7558 = vsel %vm374, %v7557, %v6795
    %v7559 = vrot.slane %v6797, 6
    %v7560 = vrot.slane %v6798, 5
    %v7561 = vsel %vm356, %v7560, %v7559
    %v7562 = vrot.slane %v6799, 4
    %v7563 = vsel %vm359, %v7562, %v7561
    %v7564 = vrot.slane %v6800, 3
    %v7565 = vsel %vm362, %v7564, %v7563
    %v7566 = vrot.slane %v6801, 2
    %v7567 = vsel %vm365, %v7566, %v7565
    %v7568 = vrot.slane %v6802, 1
    %v7569 = vsel %vm368, %v7568, %v7567
    %v7573 = vrot.slane %v6894, 2
    %7574 = vrot.lane.b32.xlu0 %v7573, 32
    %v7575 = vpop.permute.xlu0 %7574
    %v7577 = vsel %vm219, %v7558, %v7575
    %v7578 = vsel %vm219, %v7569, %v7575
    %v7579 = vsel %vm7556, 1, 0
    %vm7580 = vcmp.eq.s32.totalorder %v7579, 1
    %v7589 = vsel %vm356, %v7495, %v7486
    %v7590 = vsel %vm359, %v7504, %v7589
    %v7591 = vsel %vm362, %v7513, %v7590
    %v7592 = vsel %vm365, %v7522, %v7591
    %v7593 = vsel %vm368, %v7531, %v7592
    %v7594 = vsel %vm371, %v7540, %v7593
    %v7595 = vsel %vm374, %v7549, %v7594
    %vm7599 = vcmask 1041408
    %v7600 = vrot.slane %v7577, 6
    %v7601 = vrot.slane %v7578, 6
    %v7602 = vsel %vm7599, %v7600, %v7601
    %v7604 = vsel %vm7580, %v7595, %v7602
    %vm7605 = vmxor %vm7554, 1
    %vm7606 = vmand %vm7555, %vm7605
    %v7607 = vsel %vm7606, 1.0, 0.0
    %v7608 = vmul.f32 %v7373, %v7607
    %v7609 = vlaneseq
    %v7610 = vshrl.u32 %v7609, 7
    %v7611 = vsub.s32 0, %v7610
    %v7612 = vrot.slane %v7608, %v7611
    %7614 = vbcast.lane.b32.xlu0 %v7612, 256
    %v7615 = vpop.permute.xlu0 %7614
    %s7617 = sor.u32 256, 8
    %7618 = vbcast.lane.b32.xlu0 %v7612, %s7617
    %v7619 = vpop.permute.xlu0 %7618
    %v7620 = vlaneseq
    %v7621 = vshrl.u32 %v7620, 7
    %v7622 = vsub.s32 1, %v7621
    %v7623 = vrot.slane %v7608, %v7622
    %7625 = vbcast.lane.b32.xlu0 %v7623, 256
    %v7626 = vpop.permute.xlu0 %7625
    %s7628 = sor.u32 256, 8
    %7629 = vbcast.lane.b32.xlu0 %v7623, %s7628
    %v7630 = vpop.permute.xlu0 %7629
    %v7631 = vlaneseq
    %v7632 = vshrl.u32 %v7631, 7
    %v7633 = vsub.s32 2, %v7632
    %v7634 = vrot.slane %v7608, %v7633
    %7636 = vbcast.lane.b32.xlu0 %v7634, 256
    %v7637 = vpop.permute.xlu0 %7636
    %s7639 = sor.u32 256, 8
    %7640 = vbcast.lane.b32.xlu0 %v7634, %s7639
    %v7641 = vpop.permute.xlu0 %7640
    %v7642 = vlaneseq
    %v7643 = vshrl.u32 %v7642, 7
    %v7644 = vsub.s32 3, %v7643
    %v7645 = vrot.slane %v7608, %v7644
    %7647 = vbcast.lane.b32.xlu0 %v7645, 256
    %v7648 = vpop.permute.xlu0 %7647
    %s7650 = sor.u32 256, 8
    %7651 = vbcast.lane.b32.xlu0 %v7645, %s7650
    %v7652 = vpop.permute.xlu0 %7651
    %v7653 = vlaneseq
    %v7654 = vshrl.u32 %v7653, 7
    %v7655 = vsub.s32 4, %v7654
    %v7656 = vrot.slane %v7608, %v7655
    %7658 = vbcast.lane.b32.xlu0 %v7656, 256
    %v7659 = vpop.permute.xlu0 %7658
    %s7661 = sor.u32 256, 8
    %7662 = vbcast.lane.b32.xlu0 %v7656, %s7661
    %v7663 = vpop.permute.xlu0 %7662
    %v7664 = vlaneseq
    %v7665 = vshrl.u32 %v7664, 7
    %v7666 = vsub.s32 5, %v7665
    %v7667 = vrot.slane %v7608, %v7666
    %7669 = vbcast.lane.b32.xlu0 %v7667, 256
    %v7670 = vpop.permute.xlu0 %7669
    %s7672 = sor.u32 256, 8
    %7673 = vbcast.lane.b32.xlu0 %v7667, %s7672
    %v7674 = vpop.permute.xlu0 %7673
    %v7675 = vlaneseq
    %v7676 = vshrl.u32 %v7675, 7
    %v7677 = vsub.s32 6, %v7676
    %v7678 = vrot.slane %v7608, %v7677
    %7680 = vbcast.lane.b32.xlu0 %v7678, 256
    %v7681 = vpop.permute.xlu0 %7680
    %s7683 = sor.u32 256, 8
    %7684 = vbcast.lane.b32.xlu0 %v7678, %s7683
    %v7685 = vpop.permute.xlu0 %7684
    %v7686 = vlaneseq
    %v7687 = vshrl.u32 %v7686, 7
    %v7688 = vsub.s32 7, %v7687
    %v7689 = vrot.slane %v7608, %v7688
    %7691 = vbcast.lane.b32.xlu0 %v7689, 256
    %v7692 = vpop.permute.xlu0 %7691
    %s7694 = sor.u32 256, 8
    %7695 = vbcast.lane.b32.xlu0 %v7689, %s7694
    %v7696 = vpop.permute.xlu0 %7695
    %v7697 = vcombine.high %v7577, %v7577
    %v7699 = vunpack.c.l.s4 1966171168
    %v7700 = vunpack.c.0.s8 %v7699
    %v7701 = vlaneseq
    %v7702 = vshrl.u32 %v7701, 7
    %v7703 = vsub.s32 %v7700, %v7702
    %v7704 = vrot.slane %v7697, %v7703
    %v7705 = vcombine.high %v7704, %v7704
    %v7707 = vunpack.c.l.s4 1966171168
    %v7708 = vunpack.c.0.s8 %v7707
    %v7709 = vlaneseq
    %v7710 = vshrl.u32 %v7709, 7
    %v7711 = vsub.s32 %v7708, %v7710
    %v7712 = vrot.slane %v7704, %v7711
    %v7714 = vunpack.c.l.s4 1966171168
    %v7715 = vunpack.c.0.s8 %v7714
    %v7716 = vlaneseq
    %v7717 = vshrl.u32 %v7716, 7
    %v7718 = vsub.s32 %v7715, %v7717
    %v7719 = vrot.slane %v7705, %v7718
    %v7720 = vcombine.high %v7712, %v7712
    %v7721 = vcombine.high %v7719, %v7719
    %v7722 = vcombine.high %v7578, %v7578
    %v7724 = vunpack.c.l.s4 1966171168
    %v7725 = vunpack.c.0.s8 %v7724
    %v7726 = vlaneseq
    %v7727 = vshrl.u32 %v7726, 7
    %v7728 = vsub.s32 %v7725, %v7727
    %v7729 = vrot.slane %v7578, %v7728
    %v7731 = vunpack.c.l.s4 1966171168
    %v7732 = vunpack.c.0.s8 %v7731
    %v7733 = vlaneseq
    %v7734 = vshrl.u32 %v7733, 7
    %v7735 = vsub.s32 %v7732, %v7734
    %v7736 = vrot.slane %v7722, %v7735
    %v7737 = vcombine.high %v7729, %v7729
    %v7738 = vcombine.high %v7736, %v7736
    %v7740 = vunpack.c.l.s4 1966171168
    %v7741 = vunpack.c.0.s8 %v7740
    %v7742 = vlaneseq
    %v7743 = vshrl.u32 %v7742, 7
    %v7744 = vsub.s32 %v7741, %v7743
    %v7745 = vrot.slane %v7729, %v7744
    %v7747 = vunpack.c.l.s4 1966171168
    %v7748 = vunpack.c.0.s8 %v7747
    %v7749 = vlaneseq
    %v7750 = vshrl.u32 %v7749, 7
    %v7751 = vsub.s32 %v7748, %v7750
    %v7752 = vrot.slane %v7736, %v7751
    %v7754 = vunpack.c.l.s4 1966171168
    %v7755 = vunpack.c.0.s8 %v7754
    %v7756 = vlaneseq
    %v7757 = vshrl.u32 %v7756, 7
    %v7758 = vsub.s32 %v7755, %v7757
    %v7759 = vrot.slane %v7737, %v7758
    %v7761 = vunpack.c.l.s4 1966171168
    %v7762 = vunpack.c.0.s8 %v7761
    %v7763 = vlaneseq
    %v7764 = vshrl.u32 %v7763, 7
    %v7765 = vsub.s32 %v7762, %v7764
    %v7766 = vrot.slane %v7738, %v7765
    %v7767 = vcombine.high %v7745, %v7745
    %v7768 = vcombine.high %v7759, %v7759
    %v7769 = vlaneseq
    %v7770 = vshrl.u32 %v7769, 7
    %v7771 = vsub.s32 0, %v7770
    %v7772 = vrot.slane %v7720, %v7771
    %v7773 = vlaneseq
    %v7774 = vshrl.u32 %v7773, 7
    %v7775 = vsub.s32 0, %v7774
    %v7776 = vrot.slane %v7721, %v7775
    %v7777 = vlaneseq
    %v7778 = vshrl.u32 %v7777, 7
    %v7779 = vsub.s32 0, %v7778
    %v7780 = vrot.slane %v7745, %v7779
    %v7781 = vlaneseq
    %v7782 = vshrl.u32 %v7781, 7
    %v7783 = vsub.s32 0, %v7782
    %v7784 = vrot.slane %v7759, %v7783
    %v7785 = vlaneseq
    %v7786 = vshrl.u32 %v7785, 7
    %v7787 = vsub.s32 0, %v7786
    %v7788 = vrot.slane %v7767, %v7787
    %v7789 = vlaneseq
    %v7790 = vshrl.u32 %v7789, 7
    %v7791 = vsub.s32 0, %v7790
    %v7792 = vrot.slane %v7768, %v7791
    %v7793 = vlaneseq
    %v7794 = vshrl.u32 %v7793, 7
    %v7795 = vsub.s32 0, %v7794
    %v7796 = vrot.slane %v7752, %v7795
    %v7797 = vlaneseq
    %v7798 = vshrl.u32 %v7797, 7
    %v7799 = vsub.s32 0, %v7798
    %v7800 = vrot.slane %v7766, %v7799
    %v7809 = vmul.f32 %v7615, %v7772
    %v7810 = vmul.f32 %v7619, %v7772
    %v7811 = vmul.f32 %v7626, %v7776
    %v7812 = vmul.f32 %v7630, %v7776
    %v7813 = vmul.f32 %v7637, %v7780
    %v7814 = vmul.f32 %v7641, %v7780
    %v7815 = vmul.f32 %v7648, %v7784
    %v7816 = vmul.f32 %v7652, %v7784
    %v7817 = vmul.f32 %v7659, %v7788
    %v7818 = vmul.f32 %v7663, %v7788
    %v7819 = vmul.f32 %v7670, %v7792
    %v7820 = vmul.f32 %v7674, %v7792
    %v7821 = vmul.f32 %v7681, %v7796
    %v7822 = vmul.f32 %v7685, %v7796
    %v7823 = vmul.f32 %v7692, %v7800
    %v7824 = vmul.f32 %v7696, %v7800
    %v7825 = vadd.f32 %v6737, %v7809
    %v7826 = vadd.f32 %v6738, %v7810
    %v7827 = vadd.f32 %v6739, %v7811
    %v7828 = vadd.f32 %v6740, %v7812
    %v7829 = vadd.f32 %v6741, %v7813
    %v7830 = vadd.f32 %v6742, %v7814
    %v7831 = vadd.f32 %v6743, %v7815
    %v7832 = vadd.f32 %v6744, %v7816
    %v7833 = vadd.f32 %v6745, %v7817
    %v7834 = vadd.f32 %v6746, %v7818
    %v7835 = vadd.f32 %v6747, %v7819
    %v7836 = vadd.f32 %v6748, %v7820
    %v7837 = vadd.f32 %v6749, %v7821
    %v7838 = vadd.f32 %v6750, %v7822
    %v7839 = vadd.f32 %v6751, %v7823
    %v7840 = vadd.f32 %v6752, %v7824
    %v7841 = vadd.f32 %v6753, %v7608
    %7842 = vst.msk [vmem:[#allocation2 + $0x30] sm:$0xff] %vm219, %v7604
    %v7844 = vrot.slane %v7604, 1
    %v7845 = vrot.slane %v7604, 2
    %v7846 = vrot.slane %v7604, 3
    %v7847 = vrot.slane %v7604, 4
    %v7848 = vrot.slane %v7604, 5
    %v7849 = vrot.slane %v7604, 6
    %v7850 = vrot.slane %v7604, 7
    %7851 = vrot.lane.b32.xlu0 %v7844, 96
    %v7852 = vpop.permute.xlu0 %7851
    %7853 = vrot.lane.b32.xlu0 %v7845, 96
    %v7854 = vpop.permute.xlu0 %7853
    %7855 = vrot.lane.b32.xlu0 %v7846, 96
    %v7856 = vpop.permute.xlu0 %7855
    %7857 = vrot.lane.b32.xlu0 %v7847, 96
    %v7858 = vpop.permute.xlu0 %7857
    %7859 = vrot.lane.b32.xlu0 %v7848, 96
    %v7860 = vpop.permute.xlu0 %7859
    %7861 = vrot.lane.b32.xlu0 %v7849, 96
    %v7862 = vpop.permute.xlu0 %7861
    %7863 = vrot.lane.b32.xlu0 %v7850, 96
    %v7864 = vpop.permute.xlu0 %7863
    %7865 = vrot.lane.b32.xlu0 %v7604, 96
    %v7866 = vpop.permute.xlu0 %7865
    %v7875 = vadd.f32 %v174, %v7852
    %v7876 = vadd.f32 %v179, %v7854
    %v7877 = vadd.f32 %v184, %v7856
    %v7878 = vadd.f32 %v189, %v7858
    %v7879 = vadd.f32 %v194, %v7860
    %v7880 = vadd.f32 %v199, %v7862
    %v7881 = vadd.f32 %v204, %v7864
    %v7882 = vadd.f32 %v209, %v7866
    %v7883 = vtanh.pop %v7875
    %v7884 = vtanh.pop %v7876
    %v7885 = vtanh.pop %v7877
    %v7886 = vtanh.pop %v7878
    %v7887 = vtanh.pop %v7879
    %v7888 = vtanh.pop %v7880
    %v7889 = vtanh.pop %v7881
    %v7890 = vtanh.pop %v7882
    %v7899 = vrot.slane %v7883, 7
    %v7900 = vrot.slane %v7884, 6
    %v7901 = vsel %vm356, %v7900, %v7899
    %v7902 = vrot.slane %v7885, 5
    %v7903 = vsel %vm359, %v7902, %v7901
    %v7904 = vrot.slane %v7886, 4
    %v7905 = vsel %vm362, %v7904, %v7903
    %v7906 = vrot.slane %v7887, 3
    %v7907 = vsel %vm365, %v7906, %v7905
    %v7908 = vrot.slane %v7888, 2
    %v7909 = vsel %vm368, %v7908, %v7907
    %v7910 = vrot.slane %v7889, 1
    %v7911 = vsel %vm371, %v7910, %v7909
    %v7912 = vsel %vm374, %v7890, %v7911
    %v7913 = vsel %vm219, %v7912, 0
    %7915 = vmatprep.subr.mxu0 0.0
    %7916 = vmatpush1.msra.mxu0 0.0
    %7917 = vmatprep.subr.mxu0 0.0
    %7918 = vmatpush1.msra.mxu0 0.0
    %7919 = vmatprep.subr.mxu0 0.0
    %7920 = vmatpush1.msra.mxu0 0.0
    %7921 = vmatprep.subr.mxu0 0.0
    %7922 = vmatpush1.msra.mxu0 0.0
    %7923 = vmatprep.subr.mxu0 0.0
    %7924 = vmatpush1.msra.mxu0 0.0
    %7925 = vmatprep.subr.mxu0 0.0
    %7926 = vmatpush1.msra.mxu0 0.0
    %7927 = vmatprep.subr.mxu0 0.0
    %7928 = vmatpush1.msra.mxu0 0.0
    %7929 = vmatprep.subr.mxu0 0.0
    %7930 = vmatpush1.msra.mxu0 0.0
    %7931 = vmatprep.subr.mxu0 0.0
    %7932 = vmatpush1.msra.mxu0 0.0
    %7933 = vmatprep.subr.mxu0 0.0
    %7934 = vmatpush1.msra.mxu0 0.0
    %7935 = vmatprep.subr.mxu0 0.0
    %7936 = vmatpush1.msra.mxu0 0.0
    %7937 = vmatprep.subr.mxu0 0.0
    %7938 = vmatpush1.msra.mxu0 0.0
    %7939 = vmatprep.subr.mxu0 0.0
    %7940 = vmatpush1.msra.mxu0 %v60
    %7941 = vmatprep.subr.mxu0 0.0
    %7942 = vmatpush1.msra.mxu0 %v59
    %7943 = vmatprep.subr.mxu0 0.0
    %7944 = vmatpush1.msra.mxu0 %v58
    %7945 = vmatprep.subr.mxu0 0.0
    %7946 = vmatpush1.msra.mxu0 %v57
    %7947 = vmatprep.subr.mxu0 0.0
    %7948 = vmatpush2.msra.mxu0 0.0
    %7949 = vmatprep.subr.mxu0 0.0
    %7950 = vmatpush2.msra.mxu0 0.0
    %7951 = vmatprep.subr.mxu0 0.0
    %7952 = vmatpush2.msra.mxu0 0.0
    %7953 = vmatprep.subr.mxu0 0.0
    %7954 = vmatpush2.msra.mxu0 0.0
    %7955 = vmatprep.subr.mxu0 0.0
    %7956 = vmatpush2.msra.mxu0 0.0
    %7957 = vmatprep.subr.mxu0 0.0
    %7958 = vmatpush2.msra.mxu0 0.0
    %7959 = vmatprep.subr.mxu0 0.0
    %7960 = vmatpush2.msra.mxu0 0.0
    %7961 = vmatprep.subr.mxu0 0.0
    %7962 = vmatpush2.msra.mxu0 0.0
    %7963 = vmatprep.subr.mxu0 0.0
    %7964 = vmatpush2.msra.mxu0 0.0
    %7965 = vmatprep.subr.mxu0 0.0
    %7966 = vmatpush2.msra.mxu0 0.0
    %7967 = vmatprep.subr.mxu0 0.0
    %7968 = vmatpush2.msra.mxu0 0.0
    %7969 = vmatprep.subr.mxu0 0.0
    %7970 = vmatpush2.msra.mxu0 0.0
    %7971 = vmatprep.subr.mxu0 0.0
    %7972 = vmatpush2.msra.mxu0 0.0
    %7973 = vmatprep.subr.mxu0 0.0
    %7974 = vmatpush2.msra.mxu0 0.0
    %7975 = vmatprep.subr.mxu0 0.0
    %7976 = vmatpush2.msra.mxu0 0.0
    %7977 = vmatprep.subr.mxu0 0.0
    %7978 = vmatpush2.msra.mxu0 0.0
    %7979 = vmatprep.mubr.f32.mxu0 0.0
    %7980 = vmatmul.mubr.f32.gmra.mxu0 %v7913
    %v7981 = vpop.f32.mrf.mxu0
    %v7982 = vadd.f32 0.0, %v7981
    %v7983 = vpop.f32.mrf.mxu0
    %7984 = vdwg.mxu0
    %v7985 = vlaneseq
    %v7986 = vshrl.u32 %v7985, 7
    %v7987 = vsub.s32 7, %v7986
    %v7988 = vrot.slane %v7883, %v7987
    %v7989 = vlaneseq
    %v7990 = vshrl.u32 %v7989, 7
    %v7991 = vsub.s32 7, %v7990
    %v7992 = vrot.slane %v7884, %v7991
    %v7993 = vlaneseq
    %v7994 = vshrl.u32 %v7993, 7
    %v7995 = vsub.s32 7, %v7994
    %v7996 = vrot.slane %v7885, %v7995
    %v7997 = vlaneseq
    %v7998 = vshrl.u32 %v7997, 7
    %v7999 = vsub.s32 7, %v7998
    %v8000 = vrot.slane %v7886, %v7999
    %v8001 = vlaneseq
    %v8002 = vshrl.u32 %v8001, 7
    %v8003 = vsub.s32 7, %v8002
    %v8004 = vrot.slane %v7887, %v8003
    %v8005 = vlaneseq
    %v8006 = vshrl.u32 %v8005, 7
    %v8007 = vsub.s32 7, %v8006
    %v8008 = vrot.slane %v7888, %v8007
    %v8009 = vlaneseq
    %v8010 = vshrl.u32 %v8009, 7
    %v8011 = vsub.s32 7, %v8010
    %v8012 = vrot.slane %v7889, %v8011
    %v8013 = vlaneseq
    %v8014 = vshrl.u32 %v8013, 7
    %v8015 = vsub.s32 7, %v8014
    %v8016 = vrot.slane %v7890, %v8015
    %v8017 = vmul.f32 %v7988, %v61
    %v8018 = vmul.f32 %v7988, %v62
    %v8019 = vmul.f32 %v7992, %v61
    %v8020 = vmul.f32 %v7992, %v62
    %v8021 = vmul.f32 %v7996, %v61
    %v8022 = vmul.f32 %v7996, %v62
    %v8023 = vmul.f32 %v8000, %v61
    %v8024 = vmul.f32 %v8000, %v62
    %v8025 = vmul.f32 %v8004, %v61
    %v8026 = vmul.f32 %v8004, %v62
    %v8027 = vmul.f32 %v8008, %v61
    %v8028 = vmul.f32 %v8008, %v62
    %v8029 = vmul.f32 %v8012, %v61
    %v8030 = vmul.f32 %v8012, %v62
    %v8031 = vmul.f32 %v8016, %v61
    %v8032 = vmul.f32 %v8016, %v62
    %v8033 = vsel %vm219, %v8017, 0.0
    %8034 = vadd.xlane.f32.xlu0 %v8033
    %v8035 = vpop.xlane.xlu0 %8034
    %v8036 = vsel %vm499, %v8018, 0.0
    %8037 = vadd.xlane.f32.xlu0 %v8036
    %v8038 = vpop.xlane.xlu0 %8037
    %v8039 = vsel %vm219, %v8019, 0.0
    %8040 = vadd.xlane.f32.xlu0 %v8039
    %v8041 = vpop.xlane.xlu0 %8040
    %v8042 = vsel %vm499, %v8020, 0.0
    %8043 = vadd.xlane.f32.xlu0 %v8042
    %v8044 = vpop.xlane.xlu0 %8043
    %v8045 = vsel %vm219, %v8021, 0.0
    %8046 = vadd.xlane.f32.xlu0 %v8045
    %v8047 = vpop.xlane.xlu0 %8046
    %v8048 = vsel %vm499, %v8022, 0.0
    %8049 = vadd.xlane.f32.xlu0 %v8048
    %v8050 = vpop.xlane.xlu0 %8049
    %v8051 = vsel %vm219, %v8023, 0.0
    %8052 = vadd.xlane.f32.xlu0 %v8051
    %v8053 = vpop.xlane.xlu0 %8052
    %v8054 = vsel %vm499, %v8024, 0.0
    %8055 = vadd.xlane.f32.xlu0 %v8054
    %v8056 = vpop.xlane.xlu0 %8055
    %v8057 = vsel %vm219, %v8025, 0.0
    %8058 = vadd.xlane.f32.xlu0 %v8057
    %v8059 = vpop.xlane.xlu0 %8058
    %v8060 = vsel %vm499, %v8026, 0.0
    %8061 = vadd.xlane.f32.xlu0 %v8060
    %v8062 = vpop.xlane.xlu0 %8061
    %v8063 = vsel %vm219, %v8027, 0.0
    %8064 = vadd.xlane.f32.xlu0 %v8063
    %v8065 = vpop.xlane.xlu0 %8064
    %v8066 = vsel %vm499, %v8028, 0.0
    %8067 = vadd.xlane.f32.xlu0 %v8066
    %v8068 = vpop.xlane.xlu0 %8067
    %v8069 = vsel %vm219, %v8029, 0.0
    %8070 = vadd.xlane.f32.xlu0 %v8069
    %v8071 = vpop.xlane.xlu0 %8070
    %v8072 = vsel %vm499, %v8030, 0.0
    %8073 = vadd.xlane.f32.xlu0 %v8072
    %v8074 = vpop.xlane.xlu0 %8073
    %v8075 = vsel %vm219, %v8031, 0.0
    %8076 = vadd.xlane.f32.xlu0 %v8075
    %v8077 = vpop.xlane.xlu0 %8076
    %v8078 = vsel %vm499, %v8032, 0.0
    %8079 = vadd.xlane.f32.xlu0 %v8078
    %v8080 = vpop.xlane.xlu0 %8079
    %v8081 = vadd.f32 %v8035, %v547
    %v8082 = vadd.f32 %v8038, %v551
    %v8083 = vadd.f32 %v8041, %v547
    %v8084 = vadd.f32 %v8044, %v551
    %v8085 = vadd.f32 %v8047, %v547
    %v8086 = vadd.f32 %v8050, %v551
    %v8087 = vadd.f32 %v8053, %v547
    %v8088 = vadd.f32 %v8056, %v551
    %v8089 = vadd.f32 %v8059, %v547
    %v8090 = vadd.f32 %v8062, %v551
    %v8091 = vadd.f32 %v8065, %v547
    %v8092 = vadd.f32 %v8068, %v551
    %v8093 = vadd.f32 %v8071, %v547
    %v8094 = vadd.f32 %v8074, %v551
    %v8095 = vadd.f32 %v8077, %v547
    %v8096 = vadd.f32 %v8080, %v551
    %8113 = vset.pattern.permute.xlu0 0
    %8114 = vperm.xlu0 %8113, %v8081
    %v8115 = vpop.permute.xlu0 %8114
    %8116 = vset.pattern.permute.xlu0 0
    %8117 = vperm.xlu0 %8116, %v8082
    %v8118 = vpop.permute.xlu0 %8117
    %8119 = vset.pattern.permute.xlu0 0
    %8120 = vperm.xlu0 %8119, %v8083
    %v8121 = vpop.permute.xlu0 %8120
    %8122 = vset.pattern.permute.xlu0 0
    %8123 = vperm.xlu0 %8122, %v8084
    %v8124 = vpop.permute.xlu0 %8123
    %8125 = vset.pattern.permute.xlu0 0
    %8126 = vperm.xlu0 %8125, %v8085
    %v8127 = vpop.permute.xlu0 %8126
    %8128 = vset.pattern.permute.xlu0 0
    %8129 = vperm.xlu0 %8128, %v8086
    %v8130 = vpop.permute.xlu0 %8129
    %8131 = vset.pattern.permute.xlu0 0
    %8132 = vperm.xlu0 %8131, %v8087
    %v8133 = vpop.permute.xlu0 %8132
    %8134 = vset.pattern.permute.xlu0 0
    %8135 = vperm.xlu0 %8134, %v8088
    %v8136 = vpop.permute.xlu0 %8135
    %8137 = vset.pattern.permute.xlu0 0
    %8138 = vperm.xlu0 %8137, %v8089
    %v8139 = vpop.permute.xlu0 %8138
    %8140 = vset.pattern.permute.xlu0 0
    %8141 = vperm.xlu0 %8140, %v8090
    %v8142 = vpop.permute.xlu0 %8141
    %8143 = vset.pattern.permute.xlu0 0
    %8144 = vperm.xlu0 %8143, %v8091
    %v8145 = vpop.permute.xlu0 %8144
    %8146 = vset.pattern.permute.xlu0 0
    %8147 = vperm.xlu0 %8146, %v8092
    %v8148 = vpop.permute.xlu0 %8147
    %8149 = vset.pattern.permute.xlu0 0
    %8150 = vperm.xlu0 %8149, %v8093
    %v8151 = vpop.permute.xlu0 %8150
    %8152 = vset.pattern.permute.xlu0 0
    %8153 = vperm.xlu0 %8152, %v8094
    %v8154 = vpop.permute.xlu0 %8153
    %8155 = vset.pattern.permute.xlu0 0
    %8156 = vperm.xlu0 %8155, %v8095
    %v8157 = vpop.permute.xlu0 %8156
    %8158 = vset.pattern.permute.xlu0 0
    %8159 = vperm.xlu0 %8158, %v8096
    %v8160 = vpop.permute.xlu0 %8159
    %v8161 = vlaneseq
    %v8162 = vshrl.u32 %v8161, 7
    %v8163 = vsub.s32 %v298, %v8162
    %v8164 = vrot.slane %v8115, %v8163
    %v8165 = vlaneseq
    %v8166 = vshrl.u32 %v8165, 7
    %v8167 = vsub.s32 %v638, %v8166
    %v8168 = vrot.slane %v8118, %v8167
    %v8169 = vsel %vm643, %v8168, %v8164
    %v8170 = vlaneseq
    %v8171 = vshrl.u32 %v8170, 7
    %v8172 = vsub.s32 %v298, %v8171
    %v8173 = vrot.slane %v8121, %v8172
    %v8174 = vlaneseq
    %v8175 = vshrl.u32 %v8174, 7
    %v8176 = vsub.s32 %v638, %v8175
    %v8177 = vrot.slane %v8124, %v8176
    %v8178 = vsel %vm643, %v8177, %v8173
    %v8179 = vlaneseq
    %v8180 = vshrl.u32 %v8179, 7
    %v8181 = vsub.s32 %v298, %v8180
    %v8182 = vrot.slane %v8127, %v8181
    %v8183 = vlaneseq
    %v8184 = vshrl.u32 %v8183, 7
    %v8185 = vsub.s32 %v638, %v8184
    %v8186 = vrot.slane %v8130, %v8185
    %v8187 = vsel %vm643, %v8186, %v8182
    %v8188 = vlaneseq
    %v8189 = vshrl.u32 %v8188, 7
    %v8190 = vsub.s32 %v298, %v8189
    %v8191 = vrot.slane %v8133, %v8190
    %v8192 = vlaneseq
    %v8193 = vshrl.u32 %v8192, 7
    %v8194 = vsub.s32 %v638, %v8193
    %v8195 = vrot.slane %v8136, %v8194
    %v8196 = vsel %vm643, %v8195, %v8191
    %v8197 = vlaneseq
    %v8198 = vshrl.u32 %v8197, 7
    %v8199 = vsub.s32 %v298, %v8198
    %v8200 = vrot.slane %v8139, %v8199
    %v8201 = vlaneseq
    %v8202 = vshrl.u32 %v8201, 7
    %v8203 = vsub.s32 %v638, %v8202
    %v8204 = vrot.slane %v8142, %v8203
    %v8205 = vsel %vm643, %v8204, %v8200
    %v8206 = vlaneseq
    %v8207 = vshrl.u32 %v8206, 7
    %v8208 = vsub.s32 %v298, %v8207
    %v8209 = vrot.slane %v8145, %v8208
    %v8210 = vlaneseq
    %v8211 = vshrl.u32 %v8210, 7
    %v8212 = vsub.s32 %v638, %v8211
    %v8213 = vrot.slane %v8148, %v8212
    %v8214 = vsel %vm643, %v8213, %v8209
    %v8215 = vlaneseq
    %v8216 = vshrl.u32 %v8215, 7
    %v8217 = vsub.s32 %v298, %v8216
    %v8218 = vrot.slane %v8151, %v8217
    %v8219 = vlaneseq
    %v8220 = vshrl.u32 %v8219, 7
    %v8221 = vsub.s32 %v638, %v8220
    %v8222 = vrot.slane %v8154, %v8221
    %v8223 = vsel %vm643, %v8222, %v8218
    %v8224 = vlaneseq
    %v8225 = vshrl.u32 %v8224, 7
    %v8226 = vsub.s32 %v298, %v8225
    %v8227 = vrot.slane %v8157, %v8226
    %v8228 = vlaneseq
    %v8229 = vshrl.u32 %v8228, 7
    %v8230 = vsub.s32 %v638, %v8229
    %v8231 = vrot.slane %v8160, %v8230
    %v8232 = vsel %vm643, %v8231, %v8227
    %v8233 = vsel %vm356, %v8178, %v8169
    %v8234 = vsel %vm359, %v8187, %v8233
    %v8235 = vsel %vm362, %v8196, %v8234
    %v8236 = vsel %vm365, %v8205, %v8235
    %v8237 = vsel %vm368, %v8214, %v8236
    %v8238 = vsel %vm371, %v8223, %v8237
    %v8239 = vsel %vm374, %v8232, %v8238
    %v8241 = vsel %vm716, %v8239, -inf
    %8242 = vmax.xlane.f32.xlu0 %v8241
    %v8243 = vpop.xlane.xlu0 %8242
    %v8245 = vlaneseq
    %v8246 = vshrl.u32 %v8245, 7
    %v8247 = vsub.s32 0, %v8246
    %v8248 = vrot.slane %v8243, %v8247
    %v8249 = vlaneseq
    %v8250 = vshrl.u32 %v8249, 7
    %v8251 = vsub.s32 1, %v8250
    %v8252 = vrot.slane %v8243, %v8251
    %v8253 = vlaneseq
    %v8254 = vshrl.u32 %v8253, 7
    %v8255 = vsub.s32 2, %v8254
    %v8256 = vrot.slane %v8243, %v8255
    %v8257 = vlaneseq
    %v8258 = vshrl.u32 %v8257, 7
    %v8259 = vsub.s32 3, %v8258
    %v8260 = vrot.slane %v8243, %v8259
    %v8261 = vlaneseq
    %v8262 = vshrl.u32 %v8261, 7
    %v8263 = vsub.s32 4, %v8262
    %v8264 = vrot.slane %v8243, %v8263
    %v8265 = vlaneseq
    %v8266 = vshrl.u32 %v8265, 7
    %v8267 = vsub.s32 5, %v8266
    %v8268 = vrot.slane %v8243, %v8267
    %v8269 = vlaneseq
    %v8270 = vshrl.u32 %v8269, 7
    %v8271 = vsub.s32 6, %v8270
    %v8272 = vrot.slane %v8243, %v8271
    %v8273 = vlaneseq
    %v8274 = vshrl.u32 %v8273, 7
    %v8275 = vsub.s32 7, %v8274
    %v8276 = vrot.slane %v8243, %v8275
    %vm8285 = vcmp.eq.f32.partialorder %v8081, %v8248
    %vm8286 = vcmp.eq.f32.partialorder %v8082, %v8248
    %vm8287 = vcmp.eq.f32.partialorder %v8083, %v8252
    %vm8288 = vcmp.eq.f32.partialorder %v8084, %v8252
    %vm8289 = vcmp.eq.f32.partialorder %v8085, %v8256
    %vm8290 = vcmp.eq.f32.partialorder %v8086, %v8256
    %vm8291 = vcmp.eq.f32.partialorder %v8087, %v8260
    %vm8292 = vcmp.eq.f32.partialorder %v8088, %v8260
    %vm8293 = vcmp.eq.f32.partialorder %v8089, %v8264
    %vm8294 = vcmp.eq.f32.partialorder %v8090, %v8264
    %vm8295 = vcmp.eq.f32.partialorder %v8091, %v8268
    %vm8296 = vcmp.eq.f32.partialorder %v8092, %v8268
    %vm8297 = vcmp.eq.f32.partialorder %v8093, %v8272
    %vm8298 = vcmp.eq.f32.partialorder %v8094, %v8272
    %vm8299 = vcmp.eq.f32.partialorder %v8095, %v8276
    %vm8300 = vcmp.eq.f32.partialorder %v8096, %v8276
    %v8301 = vsel %vm8285, %v779, 9
    %v8302 = vsel %vm8286, %v783, 9
    %v8303 = vsel %vm8287, %v779, 9
    %v8304 = vsel %vm8288, %v783, 9
    %v8305 = vsel %vm8289, %v779, 9
    %v8306 = vsel %vm8290, %v783, 9
    %v8307 = vsel %vm8291, %v779, 9
    %v8308 = vsel %vm8292, %v783, 9
    %v8309 = vsel %vm8293, %v779, 9
    %v8310 = vsel %vm8294, %v783, 9
    %v8311 = vsel %vm8295, %v779, 9
    %v8312 = vsel %vm8296, %v783, 9
    %v8313 = vsel %vm8297, %v779, 9
    %v8314 = vsel %vm8298, %v783, 9
    %v8315 = vsel %vm8299, %v779, 9
    %v8316 = vsel %vm8300, %v783, 9
    %8317 = vset.pattern.permute.xlu0 0
    %8318 = vperm.xlu0 %8317, %v8301
    %v8319 = vpop.permute.xlu0 %8318
    %8320 = vset.pattern.permute.xlu0 0
    %8321 = vperm.xlu0 %8320, %v8302
    %v8322 = vpop.permute.xlu0 %8321
    %8323 = vset.pattern.permute.xlu0 0
    %8324 = vperm.xlu0 %8323, %v8303
    %v8325 = vpop.permute.xlu0 %8324
    %8326 = vset.pattern.permute.xlu0 0
    %8327 = vperm.xlu0 %8326, %v8304
    %v8328 = vpop.permute.xlu0 %8327
    %8329 = vset.pattern.permute.xlu0 0
    %8330 = vperm.xlu0 %8329, %v8305
    %v8331 = vpop.permute.xlu0 %8330
    %8332 = vset.pattern.permute.xlu0 0
    %8333 = vperm.xlu0 %8332, %v8306
    %v8334 = vpop.permute.xlu0 %8333
    %8335 = vset.pattern.permute.xlu0 0
    %8336 = vperm.xlu0 %8335, %v8307
    %v8337 = vpop.permute.xlu0 %8336
    %8338 = vset.pattern.permute.xlu0 0
    %8339 = vperm.xlu0 %8338, %v8308
    %v8340 = vpop.permute.xlu0 %8339
    %8341 = vset.pattern.permute.xlu0 0
    %8342 = vperm.xlu0 %8341, %v8309
    %v8343 = vpop.permute.xlu0 %8342
    %8344 = vset.pattern.permute.xlu0 0
    %8345 = vperm.xlu0 %8344, %v8310
    %v8346 = vpop.permute.xlu0 %8345
    %8347 = vset.pattern.permute.xlu0 0
    %8348 = vperm.xlu0 %8347, %v8311
    %v8349 = vpop.permute.xlu0 %8348
    %8350 = vset.pattern.permute.xlu0 0
    %8351 = vperm.xlu0 %8350, %v8312
    %v8352 = vpop.permute.xlu0 %8351
    %8353 = vset.pattern.permute.xlu0 0
    %8354 = vperm.xlu0 %8353, %v8313
    %v8355 = vpop.permute.xlu0 %8354
    %8356 = vset.pattern.permute.xlu0 0
    %8357 = vperm.xlu0 %8356, %v8314
    %v8358 = vpop.permute.xlu0 %8357
    %8359 = vset.pattern.permute.xlu0 0
    %8360 = vperm.xlu0 %8359, %v8315
    %v8361 = vpop.permute.xlu0 %8360
    %8362 = vset.pattern.permute.xlu0 0
    %8363 = vperm.xlu0 %8362, %v8316
    %v8364 = vpop.permute.xlu0 %8363
    %v8365 = vlaneseq
    %v8366 = vshrl.u32 %v8365, 7
    %v8367 = vsub.s32 %v298, %v8366
    %v8368 = vrot.slane %v8319, %v8367
    %v8369 = vlaneseq
    %v8370 = vshrl.u32 %v8369, 7
    %v8371 = vsub.s32 %v638, %v8370
    %v8372 = vrot.slane %v8322, %v8371
    %v8373 = vsel %vm643, %v8372, %v8368
    %v8374 = vlaneseq
    %v8375 = vshrl.u32 %v8374, 7
    %v8376 = vsub.s32 %v298, %v8375
    %v8377 = vrot.slane %v8325, %v8376
    %v8378 = vlaneseq
    %v8379 = vshrl.u32 %v8378, 7
    %v8380 = vsub.s32 %v638, %v8379
    %v8381 = vrot.slane %v8328, %v8380
    %v8382 = vsel %vm643, %v8381, %v8377
    %v8383 = vlaneseq
    %v8384 = vshrl.u32 %v8383, 7
    %v8385 = vsub.s32 %v298, %v8384
    %v8386 = vrot.slane %v8331, %v8385
    %v8387 = vlaneseq
    %v8388 = vshrl.u32 %v8387, 7
    %v8389 = vsub.s32 %v638, %v8388
    %v8390 = vrot.slane %v8334, %v8389
    %v8391 = vsel %vm643, %v8390, %v8386
    %v8392 = vlaneseq
    %v8393 = vshrl.u32 %v8392, 7
    %v8394 = vsub.s32 %v298, %v8393
    %v8395 = vrot.slane %v8337, %v8394
    %v8396 = vlaneseq
    %v8397 = vshrl.u32 %v8396, 7
    %v8398 = vsub.s32 %v638, %v8397
    %v8399 = vrot.slane %v8340, %v8398
    %v8400 = vsel %vm643, %v8399, %v8395
    %v8401 = vlaneseq
    %v8402 = vshrl.u32 %v8401, 7
    %v8403 = vsub.s32 %v298, %v8402
    %v8404 = vrot.slane %v8343, %v8403
    %v8405 = vlaneseq
    %v8406 = vshrl.u32 %v8405, 7
    %v8407 = vsub.s32 %v638, %v8406
    %v8408 = vrot.slane %v8346, %v8407
    %v8409 = vsel %vm643, %v8408, %v8404
    %v8410 = vlaneseq
    %v8411 = vshrl.u32 %v8410, 7
    %v8412 = vsub.s32 %v298, %v8411
    %v8413 = vrot.slane %v8349, %v8412
    %v8414 = vlaneseq
    %v8415 = vshrl.u32 %v8414, 7
    %v8416 = vsub.s32 %v638, %v8415
    %v8417 = vrot.slane %v8352, %v8416
    %v8418 = vsel %vm643, %v8417, %v8413
    %v8419 = vlaneseq
    %v8420 = vshrl.u32 %v8419, 7
    %v8421 = vsub.s32 %v298, %v8420
    %v8422 = vrot.slane %v8355, %v8421
    %v8423 = vlaneseq
    %v8424 = vshrl.u32 %v8423, 7
    %v8425 = vsub.s32 %v638, %v8424
    %v8426 = vrot.slane %v8358, %v8425
    %v8427 = vsel %vm643, %v8426, %v8422
    %v8428 = vlaneseq
    %v8429 = vshrl.u32 %v8428, 7
    %v8430 = vsub.s32 %v298, %v8429
    %v8431 = vrot.slane %v8361, %v8430
    %v8432 = vlaneseq
    %v8433 = vshrl.u32 %v8432, 7
    %v8434 = vsub.s32 %v638, %v8433
    %v8435 = vrot.slane %v8364, %v8434
    %v8436 = vsel %vm643, %v8435, %v8431
    %v8437 = vsel %vm356, %v8382, %v8373
    %v8438 = vsel %vm359, %v8391, %v8437
    %v8439 = vsel %vm362, %v8400, %v8438
    %v8440 = vsel %vm365, %v8409, %v8439
    %v8441 = vsel %vm368, %v8418, %v8440
    %v8442 = vsel %vm371, %v8427, %v8441
    %v8443 = vsel %vm374, %v8436, %v8442
    %v8444 = vsel %vm716, %v8443, 2147483647
    %v8445 = vand.u32 %v8444, 65535
    %v8446 = vshra.s32 %v8444, 16
    %v8447 = vcvt.s32.f32 %v8445
    %v8448 = vcvt.s32.f32 %v8446
    %8449 = vmin.xlane.f32.xlu0 %v8448
    %v8450 = vpop.xlane.xlu0 %8449
    %vm8451 = vcmp.eq.f32.partialorder %v8448, %v8450
    %v8452 = vsel %vm8451, %v8447, inf
    %8453 = vmin.xlane.f32.xlu0 %v8452
    %v8454 = vpop.xlane.xlu0 %8453
    %v8455 = vcvt.f32.s32 %v8454
    %v8456 = vcvt.f32.s32 %v8450
    %v8457 = vshll.u32 %v8456, 16
    %v8458 = vadd.s32 %v8457, %v8455
    %vm8459 = vcmp.eq.s32.totalorder %v298, %v8458
    %v8460 = vsel %vm8459, 1, 0
    %v8461 = vcvt.s32.f32 %v8460
    %v8462 = vlaneseq
    %v8463 = vshrl.u32 %v8462, 7
    %v8464 = vsub.s32 0, %v8463
    %v8465 = vrot.slane %v8461, %v8464
    %8467 = vbcast.lane.b32.xlu0 %v8465, 256
    %v8468 = vpop.permute.xlu0 %8467
    %s8470 = sor.u32 256, 8
    %8471 = vbcast.lane.b32.xlu0 %v8465, %s8470
    %v8472 = vpop.permute.xlu0 %8471
    %v8473 = vlaneseq
    %v8474 = vshrl.u32 %v8473, 7
    %v8475 = vsub.s32 1, %v8474
    %v8476 = vrot.slane %v8461, %v8475
    %8478 = vbcast.lane.b32.xlu0 %v8476, 256
    %v8479 = vpop.permute.xlu0 %8478
    %s8481 = sor.u32 256, 8
    %8482 = vbcast.lane.b32.xlu0 %v8476, %s8481
    %v8483 = vpop.permute.xlu0 %8482
    %v8484 = vlaneseq
    %v8485 = vshrl.u32 %v8484, 7
    %v8486 = vsub.s32 2, %v8485
    %v8487 = vrot.slane %v8461, %v8486
    %8489 = vbcast.lane.b32.xlu0 %v8487, 256
    %v8490 = vpop.permute.xlu0 %8489
    %s8492 = sor.u32 256, 8
    %8493 = vbcast.lane.b32.xlu0 %v8487, %s8492
    %v8494 = vpop.permute.xlu0 %8493
    %v8495 = vlaneseq
    %v8496 = vshrl.u32 %v8495, 7
    %v8497 = vsub.s32 3, %v8496
    %v8498 = vrot.slane %v8461, %v8497
    %8500 = vbcast.lane.b32.xlu0 %v8498, 256
    %v8501 = vpop.permute.xlu0 %8500
    %s8503 = sor.u32 256, 8
    %8504 = vbcast.lane.b32.xlu0 %v8498, %s8503
    %v8505 = vpop.permute.xlu0 %8504
    %v8506 = vlaneseq
    %v8507 = vshrl.u32 %v8506, 7
    %v8508 = vsub.s32 4, %v8507
    %v8509 = vrot.slane %v8461, %v8508
    %8511 = vbcast.lane.b32.xlu0 %v8509, 256
    %v8512 = vpop.permute.xlu0 %8511
    %s8514 = sor.u32 256, 8
    %8515 = vbcast.lane.b32.xlu0 %v8509, %s8514
    %v8516 = vpop.permute.xlu0 %8515
    %v8517 = vlaneseq
    %v8518 = vshrl.u32 %v8517, 7
    %v8519 = vsub.s32 5, %v8518
    %v8520 = vrot.slane %v8461, %v8519
    %8522 = vbcast.lane.b32.xlu0 %v8520, 256
    %v8523 = vpop.permute.xlu0 %8522
    %s8525 = sor.u32 256, 8
    %8526 = vbcast.lane.b32.xlu0 %v8520, %s8525
    %v8527 = vpop.permute.xlu0 %8526
    %v8528 = vlaneseq
    %v8529 = vshrl.u32 %v8528, 7
    %v8530 = vsub.s32 6, %v8529
    %v8531 = vrot.slane %v8461, %v8530
    %8533 = vbcast.lane.b32.xlu0 %v8531, 256
    %v8534 = vpop.permute.xlu0 %8533
    %s8536 = sor.u32 256, 8
    %8537 = vbcast.lane.b32.xlu0 %v8531, %s8536
    %v8538 = vpop.permute.xlu0 %8537
    %v8539 = vlaneseq
    %v8540 = vshrl.u32 %v8539, 7
    %v8541 = vsub.s32 7, %v8540
    %v8542 = vrot.slane %v8461, %v8541
    %8544 = vbcast.lane.b32.xlu0 %v8542, 256
    %v8545 = vpop.permute.xlu0 %8544
    %s8547 = sor.u32 256, 8
    %8548 = vbcast.lane.b32.xlu0 %v8542, %s8547
    %v8549 = vpop.permute.xlu0 %8548
    %v8550 = vmul.f32 %v7825, %v8468
    %v8551 = vmul.f32 %v7826, %v8472
    %v8552 = vmul.f32 %v7827, %v8479
    %v8553 = vmul.f32 %v7828, %v8483
    %v8554 = vmul.f32 %v7829, %v8490
    %v8555 = vmul.f32 %v7830, %v8494
    %v8556 = vmul.f32 %v7831, %v8501
    %v8557 = vmul.f32 %v7832, %v8505
    %v8558 = vmul.f32 %v7833, %v8512
    %v8559 = vmul.f32 %v7834, %v8516
    %v8560 = vmul.f32 %v7835, %v8523
    %v8561 = vmul.f32 %v7836, %v8527
    %v8562 = vmul.f32 %v7837, %v8534
    %v8563 = vmul.f32 %v7838, %v8538
    %v8564 = vmul.f32 %v7839, %v8545
    %v8565 = vmul.f32 %v7840, %v8549
    %v8566 = vsel %vm2085, %v8550, 0.0
    %v8567 = vsel %vm2087, %v8551, 0.0
    %v8568 = vadd.f32 %v8566, %v8567
    %v8569 = vrot.slane %v8568, 4
    %v8570 = vadd.f32 %v8568, %v8569
    %v8571 = vrot.slane %v8570, 2
    %v8572 = vadd.f32 %v8570, %v8571
    %v8573 = vrot.slane %v8572, 1
    %v8574 = vadd.f32 %v8572, %v8573
    %v8575 = vsel %vm2085, %v8552, 0.0
    %v8576 = vsel %vm2087, %v8553, 0.0
    %v8577 = vadd.f32 %v8575, %v8576
    %v8578 = vrot.slane %v8577, 4
    %v8579 = vadd.f32 %v8577, %v8578
    %v8580 = vrot.slane %v8579, 2
    %v8581 = vadd.f32 %v8579, %v8580
    %v8582 = vrot.slane %v8581, 1
    %v8583 = vadd.f32 %v8581, %v8582
    %v8584 = vsel %vm2085, %v8554, 0.0
    %v8585 = vsel %vm2087, %v8555, 0.0
    %v8586 = vadd.f32 %v8584, %v8585
    %v8587 = vrot.slane %v8586, 4
    %v8588 = vadd.f32 %v8586, %v8587
    %v8589 = vrot.slane %v8588, 2
    %v8590 = vadd.f32 %v8588, %v8589
    %v8591 = vrot.slane %v8590, 1
    %v8592 = vadd.f32 %v8590, %v8591
    %v8593 = vsel %vm2085, %v8556, 0.0
    %v8594 = vsel %vm2087, %v8557, 0.0
    %v8595 = vadd.f32 %v8593, %v8594
    %v8596 = vrot.slane %v8595, 4
    %v8597 = vadd.f32 %v8595, %v8596
    %v8598 = vrot.slane %v8597, 2
    %v8599 = vadd.f32 %v8597, %v8598
    %v8600 = vrot.slane %v8599, 1
    %v8601 = vadd.f32 %v8599, %v8600
    %v8602 = vsel %vm2085, %v8558, 0.0
    %v8603 = vsel %vm2087, %v8559, 0.0
    %v8604 = vadd.f32 %v8602, %v8603
    %v8605 = vrot.slane %v8604, 4
    %v8606 = vadd.f32 %v8604, %v8605
    %v8607 = vrot.slane %v8606, 2
    %v8608 = vadd.f32 %v8606, %v8607
    %v8609 = vrot.slane %v8608, 1
    %v8610 = vadd.f32 %v8608, %v8609
    %v8611 = vsel %vm2085, %v8560, 0.0
    %v8612 = vsel %vm2087, %v8561, 0.0
    %v8613 = vadd.f32 %v8611, %v8612
    %v8614 = vrot.slane %v8613, 4
    %v8615 = vadd.f32 %v8613, %v8614
    %v8616 = vrot.slane %v8615, 2
    %v8617 = vadd.f32 %v8615, %v8616
    %v8618 = vrot.slane %v8617, 1
    %v8619 = vadd.f32 %v8617, %v8618
    %v8620 = vsel %vm2085, %v8562, 0.0
    %v8621 = vsel %vm2087, %v8563, 0.0
    %v8622 = vadd.f32 %v8620, %v8621
    %v8623 = vrot.slane %v8622, 4
    %v8624 = vadd.f32 %v8622, %v8623
    %v8625 = vrot.slane %v8624, 2
    %v8626 = vadd.f32 %v8624, %v8625
    %v8627 = vrot.slane %v8626, 1
    %v8628 = vadd.f32 %v8626, %v8627
    %v8629 = vsel %vm2085, %v8564, 0.0
    %v8630 = vsel %vm2087, %v8565, 0.0
    %v8631 = vadd.f32 %v8629, %v8630
    %v8632 = vrot.slane %v8631, 4
    %v8633 = vadd.f32 %v8631, %v8632
    %v8634 = vrot.slane %v8633, 2
    %v8635 = vadd.f32 %v8633, %v8634
    %v8636 = vrot.slane %v8635, 1
    %v8637 = vadd.f32 %v8635, %v8636
    %v8638 = vmul.f32 %v7841, %v8461
    %v8639 = vsel %vm716, %v8638, 0.0
    %8640 = vadd.xlane.f32.xlu0 %v8639
    %v8641 = vpop.xlane.xlu0 %8640
    %vm8642 = vcmp.gt.f32.partialorder %v8641, 0.5
    %vm8643 = vcmp.gt.s32.totalorder %v8458, 0
    %vm8644 = vmand %vm8643, %vm8642
    %v8645 = vrot.slane %v7884, 7
    %v8646 = vrot.slane %v7885, 6
    %v8647 = vsel %vm356, %v8646, %v8645
    %v8648 = vrot.slane %v7886, 5
    %v8649 = vsel %vm359, %v8648, %v8647
    %v8650 = vrot.slane %v7887, 4
    %v8651 = vsel %vm362, %v8650, %v8649
    %v8652 = vrot.slane %v7888, 3
    %v8653 = vsel %vm365, %v8652, %v8651
    %v8654 = vrot.slane %v7889, 2
    %v8655 = vsel %vm368, %v8654, %v8653
    %v8656 = vrot.slane %v7890, 1
    %v8657 = vsel %vm371, %v8656, %v8655
    %v8661 = vrot.slane %v7982, 1
    %8662 = vrot.lane.b32.xlu0 %v8661, 32
    %v8663 = vpop.permute.xlu0 %8662
    %v8665 = vsel %vm219, %v7883, %v8663
    %v8666 = vsel %vm219, %v8657, %v8663
    %v8667 = vsel %vm8644, 1, 0
    %vm8668 = vcmp.eq.s32.totalorder %v8667, 1
    %v8677 = vsel %vm356, %v8583, %v8574
    %v8678 = vsel %vm359, %v8592, %v8677
    %v8679 = vsel %vm362, %v8601, %v8678
    %v8680 = vsel %vm365, %v8610, %v8679
    %v8681 = vsel %vm368, %v8619, %v8680
    %v8682 = vsel %vm371, %v8628, %v8681
    %v8683 = vsel %vm374, %v8637, %v8682
    %v8687 = vrot.slane %v8665, 7
    %v8688 = vrot.slane %v8666, 7
    %v8689 = vsel %vm1049, %v8687, %v8688
    %v8691 = vsel %vm8668, %v8683, %v8689
    %8692 = vst.msk [vmem:[#allocation2 + $0x38] sm:$0xff] %vm219, %v8691
    %v8693 = vld [vmem:[#allocation2] sm:$0xff]
    %v8694 = vld [vmem:[#allocation2 + $0x8] sm:$0xff]
    %v8695 = vld [vmem:[#allocation2 + $0x10] sm:$0xff]
    %v8696 = vld [vmem:[#allocation2 + $0x18] sm:$0xff]
    %v8697 = vld [vmem:[#allocation2 + $0x20] sm:$0xff]
    %v8698 = vld [vmem:[#allocation2 + $0x28] sm:$0xff]
    %v8699 = vld [vmem:[#allocation2 + $0x30] sm:$0xff]
    %v8700 = vld [vmem:[#allocation2 + $0x38] sm:$0xff]
    %v8702 = vlaneseq
    %v8703 = vshrl.u32 %v8702, 7
    %v8704 = vsub.s32 0, %v8703
    %v8705 = vrot.slane %v73, %v8704
    %v8708 = vsel %vm219, %v8693, 0
    %v8711 = vsel %vm219, %v8694, 0
    %v8714 = vsel %vm219, %v8695, 0
    %v8717 = vsel %vm219, %v8696, 0
    %v8720 = vsel %vm219, %v8697, 0
    %v8723 = vsel %vm219, %v8698, 0
    %v8726 = vsel %vm219, %v8699, 0
    %v8729 = vsel %vm219, %v8700, 0
    %8731 = vmatprep.subr.mxu0 0.0
    %8732 = vmatpush1.msra.mxu0 0.0
    %8733 = vmatprep.subr.mxu0 0.0
    %8734 = vmatpush1.msra.mxu0 0.0
    %8735 = vmatprep.subr.mxu0 0.0
    %8736 = vmatpush1.msra.mxu0 0.0
    %8737 = vmatprep.subr.mxu0 0.0
    %8738 = vmatpush1.msra.mxu0 0.0
    %8739 = vmatprep.subr.mxu0 0.0
    %8740 = vmatpush1.msra.mxu0 0.0
    %8741 = vmatprep.subr.mxu0 0.0
    %8742 = vmatpush1.msra.mxu0 0.0
    %8743 = vmatprep.subr.mxu0 0.0
    %8744 = vmatpush1.msra.mxu0 0.0
    %8745 = vmatprep.subr.mxu0 0.0
    %8746 = vmatpush1.msra.mxu0 0.0
    %8747 = vmatprep.subr.mxu0 0.0
    %8748 = vmatpush1.msra.mxu0 0.0
    %8749 = vmatprep.subr.mxu0 0.0
    %8750 = vmatpush1.msra.mxu0 0.0
    %8751 = vmatprep.subr.mxu0 0.0
    %8752 = vmatpush1.msra.mxu0 0.0
    %8753 = vmatprep.subr.mxu0 0.0
    %8754 = vmatpush1.msra.mxu0 0.0
    %8755 = vmatprep.subr.mxu0 0.0
    %8756 = vmatpush1.msra.mxu0 %v72
    %8757 = vmatprep.subr.mxu0 0.0
    %8758 = vmatpush1.msra.mxu0 %v71
    %8759 = vmatprep.subr.mxu0 0.0
    %8760 = vmatpush1.msra.mxu0 %v70
    %8761 = vmatprep.subr.mxu0 0.0
    %8762 = vmatpush1.msra.mxu0 %v69
    %8763 = vmatprep.subr.mxu0 0.0
    %8764 = vmatpush2.msra.mxu0 0.0
    %8765 = vmatprep.subr.mxu0 0.0
    %8766 = vmatpush2.msra.mxu0 0.0
    %8767 = vmatprep.subr.mxu0 0.0
    %8768 = vmatpush2.msra.mxu0 0.0
    %8769 = vmatprep.subr.mxu0 0.0
    %8770 = vmatpush2.msra.mxu0 0.0
    %8771 = vmatprep.subr.mxu0 0.0
    %8772 = vmatpush2.msra.mxu0 0.0
    %8773 = vmatprep.subr.mxu0 0.0
    %8774 = vmatpush2.msra.mxu0 0.0
    %8775 = vmatprep.subr.mxu0 0.0
    %8776 = vmatpush2.msra.mxu0 0.0
    %8777 = vmatprep.subr.mxu0 0.0
    %8778 = vmatpush2.msra.mxu0 0.0
    %8779 = vmatprep.subr.mxu0 0.0
    %8780 = vmatpush2.msra.mxu0 0.0
    %8781 = vmatprep.subr.mxu0 0.0
    %8782 = vmatpush2.msra.mxu0 0.0
    %8783 = vmatprep.subr.mxu0 0.0
    %8784 = vmatpush2.msra.mxu0 0.0
    %8785 = vmatprep.subr.mxu0 0.0
    %8786 = vmatpush2.msra.mxu0 0.0
    %8787 = vmatprep.subr.mxu0 0.0
    %8788 = vmatpush2.msra.mxu0 0.0
    %8789 = vmatprep.subr.mxu0 0.0
    %8790 = vmatpush2.msra.mxu0 0.0
    %8791 = vmatprep.subr.mxu0 0.0
    %8792 = vmatpush2.msra.mxu0 0.0
    %8793 = vmatprep.subr.mxu0 0.0
    %8794 = vmatpush2.msra.mxu0 0.0
    %8795 = vmatprep.mubr.f32.mxu0 0.0
    %8796 = vmatmul.mubr.f32.gmra.mxu0 %v8708
    %v8797 = vpop.f32.mrf.mxu0
    %v8798 = vadd.f32 %v8705, %v8797
    %v8799 = vpop.f32.mrf.mxu0
    %8800 = vmatprep.mubr.f32.mxu0 0.0
    %8801 = vmatmul.mubr.f32.gmra.mxu0 %v8711
    %v8802 = vpop.f32.mrf.mxu0
    %v8803 = vadd.f32 %v8705, %v8802
    %v8804 = vpop.f32.mrf.mxu0
    %8805 = vmatprep.mubr.f32.mxu0 0.0
    %8806 = vmatmul.mubr.f32.gmra.mxu0 %v8714
    %v8807 = vpop.f32.mrf.mxu0
    %v8808 = vadd.f32 %v8705, %v8807
    %v8809 = vpop.f32.mrf.mxu0
    %8810 = vmatprep.mubr.f32.mxu0 0.0
    %8811 = vmatmul.mubr.f32.gmra.mxu0 %v8717
    %v8812 = vpop.f32.mrf.mxu0
    %v8813 = vadd.f32 %v8705, %v8812
    %v8814 = vpop.f32.mrf.mxu0
    %8815 = vmatprep.mubr.f32.mxu0 0.0
    %8816 = vmatmul.mubr.f32.gmra.mxu0 %v8720
    %v8817 = vpop.f32.mrf.mxu0
    %v8818 = vadd.f32 %v8705, %v8817
    %v8819 = vpop.f32.mrf.mxu0
    %8820 = vmatprep.mubr.f32.mxu0 0.0
    %8821 = vmatmul.mubr.f32.gmra.mxu0 %v8723
    %v8822 = vpop.f32.mrf.mxu0
    %v8823 = vadd.f32 %v8705, %v8822
    %v8824 = vpop.f32.mrf.mxu0
    %8825 = vmatprep.mubr.f32.mxu0 0.0
    %8826 = vmatmul.mubr.f32.gmra.mxu0 %v8726
    %v8827 = vpop.f32.mrf.mxu0
    %v8828 = vadd.f32 %v8705, %v8827
    %v8829 = vpop.f32.mrf.mxu0
    %8830 = vmatprep.mubr.f32.mxu0 0.0
    %8831 = vmatmul.mubr.f32.gmra.mxu0 %v8729
    %v8832 = vpop.f32.mrf.mxu0
    %v8833 = vadd.f32 %v8705, %v8832
    %v8834 = vpop.f32.mrf.mxu0
    %8835 = vdwg.mxu0
    %8837 = vrot.lane.b32.xlu0 %v8803, 16
    %v8838 = vpop.permute.xlu0 %8837
    %8841 = vrot.lane.b32.xlu0 %v8808, 32
    %v8842 = vpop.permute.xlu0 %8841
    %8845 = vrot.lane.b32.xlu0 %v8813, 48
    %v8846 = vpop.permute.xlu0 %8845
    %8849 = vrot.lane.b32.xlu0 %v8818, 64
    %v8850 = vpop.permute.xlu0 %8849
    %8853 = vrot.lane.b32.xlu0 %v8823, 80
    %v8854 = vpop.permute.xlu0 %8853
    %8857 = vrot.lane.b32.xlu0 %v8828, 96
    %v8858 = vpop.permute.xlu0 %8857
    %8861 = vrot.lane.b32.xlu0 %v8833, 112
    %v8862 = vpop.permute.xlu0 %8861
    %vm8864 = vcmask 130048
    %v8865 = vsel %vm8864, %v8798, %v8838
    %v8866 = vsel %vm219, %v8865, %v8842
    %vm8867 = vcmask 392192
    %v8868 = vsel %vm8867, %v8866, %v8846
    %v8869 = vsel %vm2085, %v8868, %v8850
    %vm8870 = vcmask 654336
    %v8871 = vsel %vm8870, %v8869, %v8854
    %vm8872 = vcmask 785408
    %v8873 = vsel %vm8872, %v8871, %v8858
    %vm8874 = vcmask 916480
    %v8875 = vsel %vm8874, %v8873, %v8862
    %8876 = vst [vmem:[#allocation8] sm:$0xff] %v8875
    // Predicated region
    $region42: #{tpu_custom_call.1} parent=1 // pred_check
      _
    $region43: #{tpu_custom_call.1} parent=1 // pred_check_branch
      %8878 = sbr.rel (0) target = $region45
    $region44: #{tpu_custom_call.1} parent=1 // pred_region
      %s8880 = ssub.s32 128, 128
      %8881 = vsyncadd [#allocation5], %s8880
      %s8883 = sshll.u32 [#allocation8], 4
      %s8884 = int_to_ptr.vmem [resolvable:$true] %s8883
      %8886 = dma.vmem_to_hbm [thread:$0]  %s8884, 128, %s8, [#allocation5]
    $region45: #{tpu_custom_call.1} parent=1 // pred_fallthru
      _
    // Predicated region
    $region46: #{tpu_custom_call.1} parent=1 // pred_check
      _
    $region47: #{tpu_custom_call.1} parent=1 // pred_check_branch
      %8888 = sbr.rel (0) target = $region49
    $region48: #{tpu_custom_call.1} parent=1 // pred_region
      %8889 = dma.done [#allocation5], 128
    $region49: #{tpu_custom_call.1} parent=1 // pred_fallthru
      _
    %8890 = vsyncpa [#allocation4], 1
    %8891 = vsyncpa [#allocation7], 1
    %8892 = vsyncpa [#allocation5], 1

</llo_original>
